<compile_context>
chip_gen: v7x
topology: tpu7x:2x2x1
jax: 0.10.0
libtpu: 0.0.40
codegen_flags: <defaults>
</compile_context>

<pallas_src>
import math
import jax
import jax.numpy as jnp
from jax.experimental import pallas as pl
from jax.experimental.pallas import tpu as pltpu

BN_EPS = 1e-5
BN_SCALE = 1.0 / math.sqrt(1.0 + BN_EPS)   # eval BN: (x-0)/sqrt(1+eps)*1+0
_VMEM_LIMIT = 48 * 1024 * 1024
_TM_MAX = 1024


def _round_up(n, m):
    return (n + m - 1) // m * m


def _row_tile(n, tm_max=_TM_MAX):
    # Cap the tile so the 'parallel' row axis has >= 2 grid steps whenever
    # possible (both v7x TensorCores get work); keep it a multiple of 8.
    half = _round_up((n + 1) // 2, 8)
    return max(8, min(tm_max, half))


def _const_spec(a):
    # Grid-invariant operand (weights / biases): single-buffered VMEM residency.
    return pl.BlockSpec(a.shape, lambda i: (0, 0),
                        pipeline_mode=pl.Buffered(buffer_count=1))


# ---------------------------------------------------------------------------
# Pallas kernels: fused Linear(+folded eval-BN)->ReLU chains, bf16 MXU / f32 acc
# ---------------------------------------------------------------------------
def _coarse_kernel(x_ref, w1_ref, b1_ref, w2_ref, b2_ref, w3_ref, b3_ref, o_ref):
    # seg_net[0] (Linear+BN+ReLU x2) followed by seg_net[2][cls] (Linear).
    h = jnp.dot(x_ref[...], w1_ref[...], preferred_element_type=jnp.float32) + b1_ref[...]
    h = jnp.maximum(h, 0.0).astype(jnp.bfloat16)
    h = jnp.dot(h, w2_ref[...], preferred_element_type=jnp.float32) + b2_ref[...]
    h = jnp.maximum(h, 0.0).astype(jnp.bfloat16)
    o = jnp.dot(h, w3_ref[...], preferred_element_type=jnp.float32) + b3_ref[...]
    o_ref[...] = o.astype(o_ref.dtype)            # bf16 lane-dense output


def _fine_kernel(x1_ref, x2_ref, w1a_ref, w1b_ref, b1_ref, w2_ref, b2_ref,
                 w3_ref, b3_ref, w4_ref, b4_ref, o_ref):
    # seg_net[1] (Linear+BN+ReLU x2) then seg_net[3][cls] (Linear+BN+ReLU, Linear).
    # First matmul's K is split: x1 = feat_concat rows, x2 = coarse-output rows
    # (seg_feat columns are selected by the pre-built w1b layout) -> no (k,607)
    # concat is ever materialized in HBM.
    h = (jnp.dot(x1_ref[...], w1a_ref[...], preferred_element_type=jnp.float32)
         + jnp.dot(x2_ref[...], w1b_ref[...], preferred_element_type=jnp.float32)
         + b1_ref[...])
    h = jnp.maximum(h, 0.0).astype(jnp.bfloat16)
    h = jnp.dot(h, w2_ref[...], preferred_element_type=jnp.float32) + b2_ref[...]
    h = jnp.maximum(h, 0.0).astype(jnp.bfloat16)
    h = jnp.dot(h, w3_ref[...], preferred_element_type=jnp.float32) + b3_ref[...]
    h = jnp.maximum(h, 0.0).astype(jnp.bfloat16)
    o_ref[...] = (jnp.dot(h, w4_ref[...], preferred_element_type=jnp.float32)
                  + b4_ref[...])


def coarse_forward(x_p, coarse_w, tm_max=_TM_MAX):
    """x_p: (n, 384) bf16 padded feat_concat -> (n, 384) bf16 coarse output."""
    n = x_p.shape[0]
    w1, b1, w2, b2, w3, b3 = coarse_w
    tm = _row_tile(n, tm_max)
    return pl.pallas_call(
        _coarse_kernel,
        out_shape=jax.ShapeDtypeStruct((n, w3.shape[1]), jnp.bfloat16),
        grid=(pl.cdiv(n, tm),),
        in_specs=[pl.BlockSpec((tm, x_p.shape[1]), lambda i: (i, 0)),
                  _const_spec(w1), _const_spec(b1),
                  _const_spec(w2), _const_spec(b2),
                  _const_spec(w3), _const_spec(b3)],
        out_specs=pl.BlockSpec((tm, w3.shape[1]), lambda i: (i, 0)),
        compiler_params=pltpu.CompilerParams(
            dimension_semantics=("parallel",),
            vmem_limit_bytes=_VMEM_LIMIT),
    )(x_p, w1, b1, w2, b2, w3, b3)


def fine_forward(feat_p, coarse_out, fine_w, k, tm_max=_TM_MAX):
    """Run the fine MLP on the first k rows of feat_p / coarse_out.

    No gather / concat: the grid only walks the first ceil(k/tm) row tiles of
    the full (n, ...) arrays; rows beyond k in a partial last tile are never
    written (out_shape is (k, 128))."""
    w1a, w1b, b1, w2, b2, w3, b3, w4, b4 = fine_w
    tm = _row_tile(k, tm_max)
    return pl.pallas_call(
        _fine_kernel,
        out_shape=jax.ShapeDtypeStruct((k, w4.shape[1]), jnp.float32),
        grid=(pl.cdiv(k, tm),),
        in_specs=[pl.BlockSpec((tm, feat_p.shape[1]), lambda i: (i, 0)),
                  pl.BlockSpec((tm, coarse_out.shape[1]), lambda i: (i, 0)),
                  _const_spec(w1a), _const_spec(w1b), _const_spec(b1),
                  _const_spec(w2), _const_spec(b2),
                  _const_spec(w3), _const_spec(b3),
                  _const_spec(w4), _const_spec(b4)],
        out_specs=pl.BlockSpec((tm, w4.shape[1]), lambda i: (i, 0)),
        compiler_params=pltpu.CompilerParams(
            dimension_semantics=("parallel",),
            vmem_limit_bytes=_VMEM_LIMIT),
    )(feat_p, coarse_out, w1a, w1b, b1, w2, b2, w3, b3, w4, b4)


# ---------------------------------------------------------------------------
# One-time parameter prep: fold eval-BN, pad to 128 multiples, cast to bf16
# ---------------------------------------------------------------------------
def prepare_params(params, out_channel=1):
    def prep(w, b, scale, k_pad=None):
        kk, mm = w.shape
        kp = kk if k_pad is None else k_pad
        mp = _round_up(mm, 128)
        wq = jnp.pad(w * scale, ((0, kp - kk), (0, mp - mm))).astype(jnp.bfloat16)
        bq = jnp.pad(b * scale, ((0, mp - mm),)).reshape(1, -1).astype(jnp.float32)
        return wq, bq

    (cw1, cb1), (cw2, cb2), (cw3, cb3) = params["coarse"]
    in_dim = cw1.shape[0]                              # 351
    in_pad = _round_up(in_dim, 128)                    # 384
    c1 = prep(cw1, cb1, BN_SCALE, k_pad=in_pad)        # (384, 1024)
    c2 = prep(cw2, cb2, BN_SCALE)                      # (1024, 512)
    c3 = prep(cw3, cb3, 1.0)                           # (512, 384)  257 valid cols
    coarse_out_pad = c3[0].shape[1]                    # 384

    (fw1, fb1), (fw2, fb2), (fw3, fb3), (fw4, fb4) = params["fine"]
    seg_w = fw1.shape[0] - in_dim                      # 256 seg_feat columns
    # Split fine layer-1 K: rows [0, in_dim) multiply feat_concat; rows
    # [in_dim, in_dim+seg_w) multiply seg_feat, which lives at columns
    # [out_channel, out_channel+seg_w) of the padded coarse output -> build
    # w1b so padded/seg_coarse columns carry zero weights.
    w1a = jnp.pad(fw1[:in_dim] * BN_SCALE,
                  ((0, in_pad - in_dim), (0, 0))).astype(jnp.bfloat16)      # (384, 256)
    w1b = jnp.pad(fw1[in_dim:] * BN_SCALE,
                  ((out_channel, coarse_out_pad - seg_w - out_channel),
                   (0, 0))).astype(jnp.bfloat16)                            # (384, 256)
    b1 = (fb1 * BN_SCALE).reshape(1, -1).astype(jnp.float32)
    f2 = prep(fw2, fb2, BN_SCALE)                      # (256, 256)
    f3 = prep(fw3, fb3, BN_SCALE)                      # (256, 128)
    f4 = prep(fw4, fb4, 1.0)                           # (128, 128)  1 valid col

    return {
        "in_dim": in_dim, "in_pad": in_pad, "out_channel": out_channel,
        "coarse": (c1[0], c1[1], c2[0], c2[1], c3[0], c3[1]),
        "fine": (w1a, w1b, b1, f2[0], f2[1], f3[0], f3[1], f4[0], f4[1]),
    }


# ---------------------------------------------------------------------------
# Glue: frequency encoding, bilinear resize, parameter init, forward
# ---------------------------------------------------------------------------
def frequency_encoding(coords, num_freq=10, min_f=0.0, max_f=10.0):
    # coords: (..., 3) -> (..., 3*num_freq*2 + 3)
    scaled = 2.0 * jnp.pi * coords
    freqs = 2.0 ** jnp.linspace(min_f, max_f, num_freq)
    si = scaled[..., None] * freqs                               # (..., 3, F)
    si = si.reshape(*si.shape[:-2], -1)                          # (..., 3F)
    enc = jnp.sin(jnp.concatenate([si, si + jnp.pi / 2.0], axis=-1))
    return jnp.concatenate([enc, coords], axis=-1)


def _kaiming_uniform(key, fan_in, fan_out, a=math.sqrt(5)):
    # matches nn.init.kaiming_uniform_(weight, a=sqrt(5)) for a (fan_out, fan_in) weight
    gain = math.sqrt(2.0 / (1.0 + a * a))
    bound = gain * math.sqrt(3.0 / fan_in)
    return jax.random.uniform(key, (fan_in, fan_out), minval=-bound, maxval=bound,
                              dtype=jnp.float32)


def init_params(key, features=256, coords_out=63, emb_c=32, pe_c=256, out_channel=1):
    input_dim = emb_c + pe_c + coords_out                # 351
    fine_input_dim = features + input_dim                # 607
    keys = jax.random.split(key, 14)

    def lin(kw, kb, din, dout):
        w = _kaiming_uniform(kw, din, dout)
        bb = 1.0 / math.sqrt(din)
        b = jax.random.uniform(kb, (dout,), minval=-bb, maxval=bb, dtype=jnp.float32)
        return (w, b)

    coarse = [lin(keys[0], keys[1], input_dim, features * 4),
              lin(keys[2], keys[3], features * 4, features * 2),
              lin(keys[4], keys[5], features * 2, features + out_channel)]
    fine = [lin(keys[6], keys[7], fine_input_dim, features),
            lin(keys[8], keys[9], features, features),
            lin(keys[10], keys[11], features, features // 2),
            lin(keys[12], keys[13], features // 2, out_channel)]
    return {"coarse": coarse, "fine": fine}


def seg_field_forward(prep, image_embedding, image_pe, original_shape,
                      epoch_T=1.0, cls=0, top_k_ratio=0.125):
    del cls  # cls_channel == 1 -> single head
    out_channel = prep["out_channel"]
    b = image_pe.shape[0]
    h, w = original_shape
    d = 1

    # --- coordinates + frequency encoding ---
    lin = lambda n_: jnp.linspace(-1.0, 1.0, n_)
    cz, cy, cx = jnp.meshgrid(lin(d), lin(h), lin(w), indexing="ij")
    coords = jnp.stack([cz, cy, cx], axis=-1)            # (1, h, w, 3)
    coords = jnp.repeat(coords, b, axis=0)               # (b, h, w, 3)
    coords = frequency_encoding(coords)                  # (b, h, w, 63)
    coords = coords.reshape(b * h * w, -1)
    mask_c = min(int(epoch_T * coords.shape[-1]) + 3, coords.shape[-1])
    coords = coords.at[:, mask_c:].set(0.0)

    # --- bilinear resize of embeddings / PE (align_corners=False half-pixel) ---
    s = image_embedding.shape[1]
    h0 = w0 = int(math.sqrt(s))
    c_emb = image_embedding.shape[2]
    emb_nhwc = image_embedding.reshape(b, h0, w0, c_emb)
    emb_r = jax.image.resize(emb_nhwc, (b, h, w, c_emb), method="bilinear")
    emb_flat = emb_r.reshape(b * h * w, c_emb)

    c_pe = image_pe.shape[1]
    pe_nhwc = jnp.transpose(image_pe, (0, 2, 3, 1))
    pe_r = jax.image.resize(pe_nhwc, (b, h, w, c_pe), method="bilinear")
    pe_flat = pe_r.reshape(b * h * w, c_pe)

    n = b * h * w
    feat_dim = c_emb + c_pe + coords.shape[-1]
    pad_cols = prep["in_pad"] - feat_dim
    # concat materializes anyway: pad K to a 128 multiple and cast to bf16 here
    parts = [emb_flat, pe_flat, coords]
    if pad_cols:
        parts.append(jnp.zeros((n, pad_cols), jnp.float32))
    feat_concat = jnp.concatenate(parts, axis=1).astype(jnp.bfloat16)   # (n, 384)

    # --- coarse branch (single pass; eval-mode passes are bit-identical) ---
    coarse_out = coarse_forward(feat_concat, prep["coarse"])            # (n, 384) bf16
    seg_coarse = coarse_out[:, 0:out_channel].astype(jnp.float32)       # (n, 1)

    # exact (odd) coarse reshuffle: '(b h w) c -> (h w) b c' -> transpose(1,2) -> view(b,c,h,w)
    sc = seg_coarse.reshape(b, h * w, out_channel)
    sc = jnp.transpose(sc, (1, 0, 2))                                    # (hw, b, c)
    sc = jnp.transpose(sc, (0, 2, 1))                                    # (hw, c, b)
    seg_coarse_out = sc.reshape(b, out_channel, h, w)

    # --- fine branch ---
    # Variance is identically zero -> topk is pure tie-breaking -> fine branch
    # runs on the first k rows (contiguous; no top_k / gather / scatter).
    k = max(int(n * top_k_ratio), 1)
    fine_out = fine_forward(feat_concat, coarse_out, prep["fine"], k)    # (k, 128)
    seg_fine = seg_coarse.at[:k, :].set(fine_out[:, 0:out_channel])

    sf = seg_fine.reshape(b, h * w, out_channel)                         # 'b (h w) c'
    sf = jnp.transpose(sf, (0, 2, 1))                                    # (b, c, hw)
    seg_fine_out = sf.reshape(b, out_channel, h, w)

    return [seg_coarse_out, seg_fine_out]


if __name__ == "__main__":
    key = jax.random.PRNGKey(0)
    k_emb, k_pe, k_par = jax.random.split(key, 3)

    b = 2
    emb_c, pe_c = 32, 256
    h0 = w0 = 8
    original_shape = (16, 16)

    image_embedding = jax.random.normal(k_emb, (b, h0 * w0, emb_c), dtype=jnp.float32)
    image_pe = jax.random.normal(k_pe, (b, pe_c, h0, w0), dtype=jnp.float32)
    params = init_params(k_par)
    prep = prepare_params(params)                       # one-time weight prep

    outs = seg_field_forward(prep, image_embedding, image_pe, original_shape,
                             epoch_T=1.0, cls=0)
    outs = [jax.block_until_ready(o) for o in outs]

    assert outs[0].shape == (b, 1, original_shape[0], original_shape[1])
    assert outs[1].shape == (b, 1, original_shape[0], original_shape[1])
    assert all(bool(jnp.all(jnp.isfinite(o))) for o in outs)
    print("KERNEL_OK")
</pallas_src>

<mosaic_0001>
module attributes {stable_mosaic.version = 11 : i64} {
  func.func @_coarse_kernel(%arg0: i32, %arg1: memref<256x384xbf16, #tpu.memory_space<vmem>>, %arg2: memref<384x1024xbf16, #tpu.memory_space<vmem>>, %arg3: memref<1x1024xf32, #tpu.memory_space<vmem>>, %arg4: memref<1024x512xbf16, #tpu.memory_space<vmem>>, %arg5: memref<1x512xf32, #tpu.memory_space<vmem>>, %arg6: memref<512x384xbf16, #tpu.memory_space<vmem>>, %arg7: memref<1x384xf32, #tpu.memory_space<vmem>>, %arg8: memref<256x384xbf16, #tpu.memory_space<vmem>>) attributes {dimension_semantics = [#tpu.dimension_semantics<parallel>], iteration_bounds = array<i64: 2>, scalar_prefetch = 0 : i64, scratch_operands = 0 : i64, tpu.core_type = #tpu.core_type<tc>, window_params = [{transform_indices = @transform_0, window_bounds = array<i64: 256, 384>}, {pipeline_mode = #tpu.pipeline_mode<synchronous>, transform_indices = @transform_1, window_bounds = array<i64: 384, 1024>}, {pipeline_mode = #tpu.pipeline_mode<synchronous>, transform_indices = @transform_2, window_bounds = array<i64: 1, 1024>}, {pipeline_mode = #tpu.pipeline_mode<synchronous>, transform_indices = @transform_3, window_bounds = array<i64: 1024, 512>}, {pipeline_mode = #tpu.pipeline_mode<synchronous>, transform_indices = @transform_4, window_bounds = array<i64: 1, 512>}, {pipeline_mode = #tpu.pipeline_mode<synchronous>, transform_indices = @transform_5, window_bounds = array<i64: 512, 384>}, {pipeline_mode = #tpu.pipeline_mode<synchronous>, transform_indices = @transform_6, window_bounds = array<i64: 1, 384>}, {transform_indices = @transform_7, window_bounds = array<i64: 256, 384>}]} {
    %c0 = arith.constant 0 : index
    %c0_0 = arith.constant 0 : index
    %0 = vector.load %arg1[%c0, %c0_0] : memref<256x384xbf16, #tpu.memory_space<vmem>>, vector<256x384xbf16>
    %c0_1 = arith.constant 0 : index
    %c0_2 = arith.constant 0 : index
    %1 = vector.load %arg2[%c0_1, %c0_2] : memref<384x1024xbf16, #tpu.memory_space<vmem>>, vector<384x1024xbf16>
    %cst = arith.constant dense<0.000000e+00> : vector<256x1024xf32>
    %2 = tpu.matmul %0, %1, %cst {dimension_numbers = #tpu.dot_dimension_numbers<[1], [0], [0], [1], [0, 0, 1, 1], [], []>} : vector<256x384xbf16>, vector<384x1024xbf16>, vector<256x1024xf32> -> vector<256x1024xf32>
    %c0_3 = arith.constant 0 : index
    %c0_4 = arith.constant 0 : index
    %3 = vector.load %arg3[%c0_3, %c0_4] : memref<1x1024xf32, #tpu.memory_space<vmem>>, vector<1x1024xf32>
    %4 = vector.broadcast %3 : vector<1x1024xf32> to vector<256x1024xf32>
    %5 = arith.addf %2, %4 : vector<256x1024xf32>
    %cst_5 = arith.constant 0.000000e+00 : f32
    %6 = vector.broadcast %cst_5 : f32 to vector<256x1024xf32>
    %7 = arith.maximumf %5, %6 : vector<256x1024xf32>
    %8 = arith.truncf %7 : vector<256x1024xf32> to vector<256x1024xbf16>
    %c0_6 = arith.constant 0 : index
    %c0_7 = arith.constant 0 : index
    %9 = vector.load %arg4[%c0_6, %c0_7] : memref<1024x512xbf16, #tpu.memory_space<vmem>>, vector<1024x512xbf16>
    %cst_8 = arith.constant dense<0.000000e+00> : vector<256x512xf32>
    %10 = tpu.matmul %8, %9, %cst_8 {dimension_numbers = #tpu.dot_dimension_numbers<[1], [0], [0], [1], [0, 0, 1, 1], [], []>} : vector<256x1024xbf16>, vector<1024x512xbf16>, vector<256x512xf32> -> vector<256x512xf32>
    %c0_9 = arith.constant 0 : index
    %c0_10 = arith.constant 0 : index
    %11 = vector.load %arg5[%c0_9, %c0_10] : memref<1x512xf32, #tpu.memory_space<vmem>>, vector<1x512xf32>
    %12 = vector.broadcast %11 : vector<1x512xf32> to vector<256x512xf32>
    %13 = arith.addf %10, %12 : vector<256x512xf32>
    %cst_11 = arith.constant 0.000000e+00 : f32
    %14 = vector.broadcast %cst_11 : f32 to vector<256x512xf32>
    %15 = arith.maximumf %13, %14 : vector<256x512xf32>
    %16 = arith.truncf %15 : vector<256x512xf32> to vector<256x512xbf16>
    %c0_12 = arith.constant 0 : index
    %c0_13 = arith.constant 0 : index
    %17 = vector.load %arg6[%c0_12, %c0_13] : memref<512x384xbf16, #tpu.memory_space<vmem>>, vector<512x384xbf16>
    %cst_14 = arith.constant dense<0.000000e+00> : vector<256x384xf32>
    %18 = tpu.matmul %16, %17, %cst_14 {dimension_numbers = #tpu.dot_dimension_numbers<[1], [0], [0], [1], [0, 0, 1, 1], [], []>} : vector<256x512xbf16>, vector<512x384xbf16>, vector<256x384xf32> -> vector<256x384xf32>
    %c0_15 = arith.constant 0 : index
    %c0_16 = arith.constant 0 : index
    %19 = vector.load %arg7[%c0_15, %c0_16] : memref<1x384xf32, #tpu.memory_space<vmem>>, vector<1x384xf32>
    %20 = vector.broadcast %19 : vector<1x384xf32> to vector<256x384xf32>
    %21 = arith.addf %18, %20 : vector<256x384xf32>
    %22 = arith.truncf %21 : vector<256x384xf32> to vector<256x384xbf16>
    %c0_17 = arith.constant 0 : index
    %c0_18 = arith.constant 0 : index
    %23 = vector.load %arg8[%c0_17, %c0_18] : memref<256x384xbf16, #tpu.memory_space<vmem>>, vector<256x384xbf16>
    tpu.vector_store %arg8[%c0_17, %c0_18], %22 {strides = array<i32>} : memref<256x384xbf16, #tpu.memory_space<vmem>>, vector<256x384xbf16>,
    return
  }
  func.func @transform_0(%arg0: i32) -> (i32, i32) {
    %c0_i32 = arith.constant 0 : i32
    %c0_i32_0 = arith.constant 0 : i32
    return %arg0, %c0_i32 : i32, i32
  }
  func.func @transform_1(%arg0: i32) -> (i32, i32) {
    %c0_i32 = arith.constant 0 : i32
    %c0_i32_0 = arith.constant 0 : i32
    %c0_i32_1 = arith.constant 0 : i32
    return %c0_i32, %c0_i32_0 : i32, i32
  }
  func.func @transform_2(%arg0: i32) -> (i32, i32) {
    %c0_i32 = arith.constant 0 : i32
    %c0_i32_0 = arith.constant 0 : i32
    %c0_i32_1 = arith.constant 0 : i32
    return %c0_i32, %c0_i32_0 : i32, i32
  }
  func.func @transform_3(%arg0: i32) -> (i32, i32) {
    %c0_i32 = arith.constant 0 : i32
    %c0_i32_0 = arith.constant 0 : i32
    %c0_i32_1 = arith.constant 0 : i32
    return %c0_i32, %c0_i32_0 : i32, i32
  }
  func.func @transform_4(%arg0: i32) -> (i32, i32) {
    %c0_i32 = arith.constant 0 : i32
    %c0_i32_0 = arith.constant 0 : i32
    %c0_i32_1 = arith.constant 0 : i32
    return %c0_i32, %c0_i32_0 : i32, i32
  }
  func.func @transform_5(%arg0: i32) -> (i32, i32) {
    %c0_i32 = arith.constant 0 : i32
    %c0_i32_0 = arith.constant 0 : i32
    %c0_i32_1 = arith.constant 0 : i32
    return %c0_i32, %c0_i32_0 : i32, i32
  }
  func.func @transform_6(%arg0: i32) -> (i32, i32) {
    %c0_i32 = arith.constant 0 : i32
    %c0_i32_0 = arith.constant 0 : i32
    %c0_i32_1 = arith.constant 0 : i32
    return %c0_i32, %c0_i32_0 : i32, i32
  }
  func.func @transform_7(%arg0: i32) -> (i32, i32) {
    %c0_i32 = arith.constant 0 : i32
    %c0_i32_0 = arith.constant 0 : i32
    return %arg0, %c0_i32 : i32, i32
  }
}

</mosaic_0001>

<llo_original>
// kernel: tpu_custom_call.1
$region0: #{tpu_custom_call.1}
  #allocation0 [shape = 'u32[]', space=smem, size = 0x4, offset = 0x4, fixed_abs, tag = 'smem constant byte address 0x4 - core index']
  #allocation1 [shape = 'u32[144,128]{1,0:T(1,128)}', space=vmem, size = 0x12000, scoped, tag = 'internal scratch']
  %s0 = inlined_call_operand.hbm [shape: bf16[512,384], index: 0, kind: input, shape index: {}]
  %s1 = inlined_call_operand.hbm [shape: bf16[384,1024], index: 1, kind: input, shape index: {}]
  %s2 = inlined_call_operand.hbm [shape: f32[1,1024], index: 2, kind: input, shape index: {}]
  %s3 = inlined_call_operand.hbm [shape: bf16[1024,512], index: 3, kind: input, shape index: {}]
  %s4 = inlined_call_operand.vmem [shape: f32[1,512], index: 4, kind: input, shape index: {}]
  %s5 = inlined_call_operand.hbm [shape: bf16[512,384], index: 5, kind: input, shape index: {}]
  %s6 = inlined_call_operand.vmem [shape: f32[1,384], index: 6, kind: input, shape index: {}]
  %s7 = inlined_call_operand.hbm [shape: bf16[512,384], index: 7, kind: output, shape index: {}]
  %s8 = sld [smem:[#allocation0]]
  $region81: #{tpu_custom_call.1} parent=0
    _
  %s10 = ssub.s32 1, %s8
  %s11 = scalar_select 0, %s10, %s8
  $region1: #{tpu_custom_call.1} parent=0
    #allocation2 [shape = 'u8[393216]{0}', space=vmem, size = 0x60000, scoped, tag = 'input window, operand 0']
    #allocation3 [shape = 's32[2]{0}', space=sflag, size = 0x8, scoped, tag = 'scoped memory for tpu_custom_call.1']
    #allocation4 [shape = 's32[2]{0}', space=sflag, size = 0x8, scoped, tag = 'scoped memory for tpu_custom_call.1']
    #allocation5 [shape = 'u8[786432]{0}', space=vmem, size = 0xc0000, scoped, tag = 'input window, operand 1, single buffered']
    #allocation6 [shape = 's32[1]{0}', space=sflag, size = 0x4, scoped, tag = 'scoped memory for tpu_custom_call.1']
    #allocation7 [shape = 'u8[4096]{0}', space=vmem, size = 0x1000, scoped, tag = 'input window, operand 2, single buffered']
    #allocation8 [shape = 'u8[1048576]{0}', space=vmem, size = 0x100000, scoped, tag = 'input window, operand 3, single buffered']
    #allocation9 [shape = 's32[1]{0}', space=sflag, size = 0x4, scoped, tag = 'scoped memory for tpu_custom_call.1']
    #allocation10 [shape = 'u8[393216]{0}', space=vmem, size = 0x60000, scoped, tag = 'input window, operand 5, single buffered']
    #allocation11 [shape = 'u8[393216]{0}', space=vmem, size = 0x60000, scoped, tag = 'output window, operand 0']
    %12 = vsyncpa [#allocation3], 0
    %s13 = scalar_lea.sflag [#allocation3], 1
    %14 = vsyncpa %s13, 0
    %15 = vsyncpa [#allocation6], 0
    %16 = vsyncpa [#allocation9], 0
    %17 = vsyncpa [#allocation4], 0
    %s18 = scalar_lea.sflag [#allocation4], 1
    %19 = vsyncpa %s18, 0
    loop: start=0, step=1, limit=4
    $region2: #{tpu_custom_call.1} parent=1 // loop_pre_header
      _
    $region3: #{tpu_custom_call.1} parent=1 // loop_header
      %s21 = sphi 0, %s25
      %p22 = scmp.ge.s32.totalorder %s21, 4
      %s31 = sphi 0, %s33
      %s34 = sphi 0, %s31
      %s35 = sphi 0, %s34
      %s51 = sphi 0, %s35
      %s55 = sphi 0, %s55
      %s57 = sphi 0, %s55
      %s58 = sphi 0, %s57
      %s72 = sphi 0, %s58
      %s76 = sphi 0, %s76
      %s78 = sphi 0, %s76
      %s79 = sphi 0, %s78
      %s93 = sphi 0, %s79
      %s97 = sphi 0, %s97
      %s99 = sphi 0, %s97
      %s100 = sphi 0, %s99
      %s114 = sphi 0, %s100
      %s118 = sphi 0, %s118
      %s120 = sphi 0, %s118
      %s121 = sphi 0, %s120
      %s135 = sphi 0, %s121
      %s139 = sphi 0, %s139
      %s141 = sphi 0, %s139
      %s142 = sphi 0, %s141
      %s156 = sphi 0, %s142
      %s160 = sphi 0, %s160
      %s162 = sphi 0, %s160
      %s163 = sphi 0, %s162
      %s177 = sphi 0, %s163
      %s183 = sphi 0, %s185
      %s186 = sphi 0, %s183
      %s187 = sphi 0, %s186
      %s203 = sphi 0, %s187
    $region4: #{tpu_custom_call.1} parent=1 // loop_header_branch
      %24 = sbr.rel (%p22) target = $region8
    $region5: #{tpu_custom_call.1} parent=1 // loop_body
      %s26 = ssub.s32 %s21, 1
      %s27 = ssub.s32 %s21, 2
      %s28 = sadd.s32 %s21, 1
      %s29 = ssub.s32 %s21, %s28
      %p30 = scmp.eq.s32.totalorder %s29, 0
      %s32 = sadd.s32 %s31, 1
      %s33 = scalar_select %p30, %s31, %s32
      %p36 = pneg %p30
      %p37 = scmp.eq.s32.totalorder %s21, 1
      %p38 = por %p36, %p37
      %p39 = scmp.ne.s32.totalorder %s31, %s34
      %p40 = scmp.eq.s32.totalorder %s21, 0
      %p41 = por %p39, %p40
      %p42 = scmp.ne.s32.totalorder %s31, %s34
      %p43 = scmp.eq.s32.totalorder %s26, 1
      %p44 = por %p42, %p43
      %p45 = scmp.ne.s32.totalorder %s34, %s35
      %p46 = scmp.eq.s32.totalorder %s26, 0
      %p47 = por %p45, %p46
      %p48 = scmp.ne.s32.totalorder %s34, %s35
      %p49 = scmp.eq.s32.totalorder %s27, 1
      %p50 = por %p48, %p49
      %p52 = scmp.ne.s32.totalorder %s35, %s51
      %p53 = scmp.eq.s32.totalorder %s27, 0
      %p54 = por %p52, %p53
      %s56 = sadd.s32 %s55, 1
      %p59 = scmp.eq.s32.totalorder %s21, 1
      %p60 = scmp.ne.s32.totalorder %s55, %s57
      %p61 = scmp.eq.s32.totalorder %s21, 0
      %p62 = por %p60, %p61
      %p63 = scmp.ne.s32.totalorder %s55, %s57
      %p64 = scmp.eq.s32.totalorder %s26, 1
      %p65 = por %p63, %p64
      %p66 = scmp.ne.s32.totalorder %s57, %s58
      %p67 = scmp.eq.s32.totalorder %s26, 0
      %p68 = por %p66, %p67
      %p69 = scmp.ne.s32.totalorder %s57, %s58
      %p70 = scmp.eq.s32.totalorder %s27, 1
      %p71 = por %p69, %p70
      %p73 = scmp.ne.s32.totalorder %s58, %s72
      %p74 = scmp.eq.s32.totalorder %s27, 0
      %p75 = por %p73, %p74
      %s77 = sadd.s32 %s76, 1
      %p80 = scmp.eq.s32.totalorder %s21, 1
      %p81 = scmp.ne.s32.totalorder %s76, %s78
      %p82 = scmp.eq.s32.totalorder %s21, 0
      %p83 = por %p81, %p82
      %p84 = scmp.ne.s32.totalorder %s76, %s78
      %p85 = scmp.eq.s32.totalorder %s26, 1
      %p86 = por %p84, %p85
      %p87 = scmp.ne.s32.totalorder %s78, %s79
      %p88 = scmp.eq.s32.totalorder %s26, 0
      %p89 = por %p87, %p88
      %p90 = scmp.ne.s32.totalorder %s78, %s79
      %p91 = scmp.eq.s32.totalorder %s27, 1
      %p92 = por %p90, %p91
      %p94 = scmp.ne.s32.totalorder %s79, %s93
      %p95 = scmp.eq.s32.totalorder %s27, 0
      %p96 = por %p94, %p95
      %s98 = sadd.s32 %s97, 1
      %p101 = scmp.eq.s32.totalorder %s21, 1
      %p102 = scmp.ne.s32.totalorder %s97, %s99
      %p103 = scmp.eq.s32.totalorder %s21, 0
      %p104 = por %p102, %p103
      %p105 = scmp.ne.s32.totalorder %s97, %s99
      %p106 = scmp.eq.s32.totalorder %s26, 1
      %p107 = por %p105, %p106
      %p108 = scmp.ne.s32.totalorder %s99, %s100
      %p109 = scmp.eq.s32.totalorder %s26, 0
      %p110 = por %p108, %p109
      %p111 = scmp.ne.s32.totalorder %s99, %s100
      %p112 = scmp.eq.s32.totalorder %s27, 1
      %p113 = por %p111, %p112
      %p115 = scmp.ne.s32.totalorder %s100, %s114
      %p116 = scmp.eq.s32.totalorder %s27, 0
      %p117 = por %p115, %p116
      %s119 = sadd.s32 %s118, 1
      %p122 = scmp.eq.s32.totalorder %s21, 1
      %p123 = scmp.ne.s32.totalorder %s118, %s120
      %p124 = scmp.eq.s32.totalorder %s21, 0
      %p125 = por %p123, %p124
      %p126 = scmp.ne.s32.totalorder %s118, %s120
      %p127 = scmp.eq.s32.totalorder %s26, 1
      %p128 = por %p126, %p127
      %p129 = scmp.ne.s32.totalorder %s120, %s121
      %p130 = scmp.eq.s32.totalorder %s26, 0
      %p131 = por %p129, %p130
      %p132 = scmp.ne.s32.totalorder %s120, %s121
      %p133 = scmp.eq.s32.totalorder %s27, 1
      %p134 = por %p132, %p133
      %p136 = scmp.ne.s32.totalorder %s121, %s135
      %p137 = scmp.eq.s32.totalorder %s27, 0
      %p138 = por %p136, %p137
      %s140 = sadd.s32 %s139, 1
      %p143 = scmp.eq.s32.totalorder %s21, 1
      %p144 = scmp.ne.s32.totalorder %s139, %s141
      %p145 = scmp.eq.s32.totalorder %s21, 0
      %p146 = por %p144, %p145
      %p147 = scmp.ne.s32.totalorder %s139, %s141
      %p148 = scmp.eq.s32.totalorder %s26, 1
      %p149 = por %p147, %p148
      %p150 = scmp.ne.s32.totalorder %s141, %s142
      %p151 = scmp.eq.s32.totalorder %s26, 0
      %p152 = por %p150, %p151
      %p153 = scmp.ne.s32.totalorder %s141, %s142
      %p154 = scmp.eq.s32.totalorder %s27, 1
      %p155 = por %p153, %p154
      %p157 = scmp.ne.s32.totalorder %s142, %s156
      %p158 = scmp.eq.s32.totalorder %s27, 0
      %p159 = por %p157, %p158
      %s161 = sadd.s32 %s160, 1
      %p164 = scmp.eq.s32.totalorder %s21, 1
      %p165 = scmp.ne.s32.totalorder %s160, %s162
      %p166 = scmp.eq.s32.totalorder %s21, 0
      %p167 = por %p165, %p166
      %p168 = scmp.ne.s32.totalorder %s160, %s162
      %p169 = scmp.eq.s32.totalorder %s26, 1
      %p170 = por %p168, %p169
      %p171 = scmp.ne.s32.totalorder %s162, %s163
      %p172 = scmp.eq.s32.totalorder %s26, 0
      %p173 = por %p171, %p172
      %p174 = scmp.ne.s32.totalorder %s162, %s163
      %p175 = scmp.eq.s32.totalorder %s27, 1
      %p176 = por %p174, %p175
      %p178 = scmp.ne.s32.totalorder %s163, %s177
      %p179 = scmp.eq.s32.totalorder %s27, 0
      %p180 = por %p178, %p179
      %s181 = ssub.s32 %s21, %s28
      %p182 = scmp.eq.s32.totalorder %s181, 0
      %s184 = sadd.s32 %s183, 1
      %s185 = scalar_select %p182, %s183, %s184
      %p188 = pneg %p182
      %p189 = scmp.eq.s32.totalorder %s21, 1
      %p190 = por %p188, %p189
      %p191 = scmp.ne.s32.totalorder %s183, %s186
      %p192 = scmp.eq.s32.totalorder %s21, 0
      %p193 = por %p191, %p192
      %p194 = scmp.ne.s32.totalorder %s183, %s186
      %p195 = scmp.eq.s32.totalorder %s26, 1
      %p196 = por %p194, %p195
      %p197 = scmp.ne.s32.totalorder %s186, %s187
      %p198 = scmp.eq.s32.totalorder %s26, 0
      %p199 = por %p197, %p198
      %p200 = scmp.ne.s32.totalorder %s186, %s187
      %p201 = scmp.eq.s32.totalorder %s27, 1
      %p202 = por %p200, %p201
      %p204 = scmp.ne.s32.totalorder %s187, %s203
      %p205 = scmp.eq.s32.totalorder %s27, 0
      %p206 = por %p204, %p205
      %p207 = scmp.le.s32.totalorder 1, %s21
      %p208 = scmp.lt.s32.totalorder %s21, 3
      %p209 = pnand %p207, %p208
      %p210 = pneg %p209
      // Predicated region
      $region9: #{tpu_custom_call.1} parent=5 // pred_check
        _
      $region10: #{tpu_custom_call.1} parent=5 // pred_check_branch
        %212 = sbr.rel (%p209) target = $region12
      $region11: #{tpu_custom_call.1} parent=5 // pred_region
        %s213 = ssub.s32 %s21, 1
        // Predicated region
        $region13: #{tpu_custom_call.1} parent=11 // pred_check
          %p214 = pneg %p68
        $region14: #{tpu_custom_call.1} parent=11 // pred_check_branch
          %216 = sbr.rel (%p214) target = $region16
        $region15: #{tpu_custom_call.1} parent=11 // pred_region
          %s218 = ssub.s32 24576, 24576
          %219 = vsyncadd [#allocation6], %s218
          %s220 = sshll.u32 [#allocation5], 4
          %s221 = int_to_ptr.vmem [resolvable:$true] %s220
          %226 = dma.hbm_to_vmem [thread:$0]  %s1, 24576, %s221, [#allocation6], 512, 512, 32
        $region16: #{tpu_custom_call.1} parent=11 // pred_fallthru
          _
        // Predicated region
        $region17: #{tpu_custom_call.1} parent=11 // pred_check
          %p227 = pneg %p89
        $region18: #{tpu_custom_call.1} parent=11 // pred_check_branch
          %229 = sbr.rel (%p227) target = $region20
        $region19: #{tpu_custom_call.1} parent=11 // pred_region
          %s231 = ssub.s32 128, 128
          %232 = vsyncadd [#allocation6], %s231
          %s234 = sshll.u32 [#allocation7], 4
          %s235 = int_to_ptr.vmem [resolvable:$true] %s234
          %237 = dma.hbm_to_vmem [thread:$0]  %s2, 128, %s235, [#allocation6]
        $region20: #{tpu_custom_call.1} parent=11 // pred_fallthru
          _
        // Predicated region
        $region21: #{tpu_custom_call.1} parent=11 // pred_check
          %p238 = pneg %p110
        $region22: #{tpu_custom_call.1} parent=11 // pred_check_branch
          %240 = sbr.rel (%p238) target = $region24
        $region23: #{tpu_custom_call.1} parent=11 // pred_region
          %s242 = ssub.s32 32768, 32768
          %243 = vsyncadd [#allocation9], %s242
          %s244 = sshll.u32 [#allocation8], 4
          %s245 = int_to_ptr.vmem [resolvable:$true] %s244
          %250 = dma.hbm_to_vmem [thread:$0]  %s3, 32768, %s245, [#allocation9], 256, 256, 16
        $region24: #{tpu_custom_call.1} parent=11 // pred_fallthru
          _
        // Predicated region
        $region25: #{tpu_custom_call.1} parent=11 // pred_check
          %p251 = pneg %p131
        $region26: #{tpu_custom_call.1} parent=11 // pred_check_branch
          %253 = sbr.rel (%p251) target = $region28
        $region27: #{tpu_custom_call.1} parent=11 // pred_region
          _
        $region28: #{tpu_custom_call.1} parent=11 // pred_fallthru
          _
        // Predicated region
        $region29: #{tpu_custom_call.1} parent=11 // pred_check
          %p254 = pneg %p152
        $region30: #{tpu_custom_call.1} parent=11 // pred_check_branch
          %256 = sbr.rel (%p254) target = $region32
        $region31: #{tpu_custom_call.1} parent=11 // pred_region
          %s258 = ssub.s32 12288, 12288
          %259 = vsyncadd [#allocation9], %s258
          %s260 = sshll.u32 [#allocation10], 4
          %s261 = int_to_ptr.vmem [resolvable:$true] %s260
          %266 = dma.hbm_to_vmem [thread:$0]  %s5, 12288, %s261, [#allocation9], 192, 192, 12
        $region32: #{tpu_custom_call.1} parent=11 // pred_fallthru
          _
        // Predicated region
        $region33: #{tpu_custom_call.1} parent=11 // pred_check
          %p267 = pneg %p173
        $region34: #{tpu_custom_call.1} parent=11 // pred_check_branch
          %269 = sbr.rel (%p267) target = $region36
        $region35: #{tpu_custom_call.1} parent=11 // pred_region
          _
        $region36: #{tpu_custom_call.1} parent=11 // pred_fallthru
          _
      $region12: #{tpu_custom_call.1} parent=5 // pred_fallthru
        _
      %p270 = scmp.lt.s32.totalorder %s21, 2
      // Predicated region
      $region37: #{tpu_custom_call.1} parent=5 // pred_check
        %p271 = pneg %p270
      $region38: #{tpu_custom_call.1} parent=5 // pred_check_branch
        %273 = sbr.rel (%p271) target = $region40
      $region39: #{tpu_custom_call.1} parent=5 // pred_region
        // Predicated region
        $region41: #{tpu_custom_call.1} parent=39 // pred_check
          %p274 = pneg %p41
        $region42: #{tpu_custom_call.1} parent=39 // pred_check_branch
          %276 = sbr.rel (%p274) target = $region44
        $region43: #{tpu_custom_call.1} parent=39 // pred_region
          %s277 = sand.u32 %s31, 1
          %s278 = scalar_lea.sflag [#allocation3], %s277
          %s279 = sand.u32 %s31, 1
          %s280 = smul.addr %s279, 384
          %s281 = scalar_lea.vmem [#allocation2], %s280
          %s282 = smul.u32 32, %s21
          %s284 = ssub.s32 6144, 6144
          %285 = vsyncadd %s278, %s284
          %s286 = smul.addr %s282, 3
          %s287 = smul.addr %s286, 64
          %s288 = scalar_lea.hbm %s0, %s287
          %s289 = sshll.u32 %s281, 4
          %s290 = int_to_ptr.vmem [resolvable:$true] %s289
          %295 = dma.hbm_to_vmem [thread:$0]  %s288, 6144, %s290, %s278, 192, 192, 12
        $region44: #{tpu_custom_call.1} parent=39 // pred_fallthru
          _
      $region40: #{tpu_custom_call.1} parent=5 // pred_fallthru
        _
      %p296 = scmp.le.s32.totalorder 1, %s21
      %p297 = scmp.lt.s32.totalorder %s21, 3
      %p298 = pnand %p296, %p297
      %p299 = pneg %p298
      // Predicated region
      $region45: #{tpu_custom_call.1} parent=5 // pred_check
        _
      $region46: #{tpu_custom_call.1} parent=5 // pred_check_branch
        %301 = sbr.rel (%p298) target = $region48
      $region47: #{tpu_custom_call.1} parent=5 // pred_region
        %s302 = ssub.s32 %s21, 1
        %s303 = sand.u32 %s34, 1
        %s304 = scalar_lea.sflag [#allocation3], %s303
        %s305 = sand.u32 %s34, 1
        %s306 = smul.addr %s305, 384
        %s307 = scalar_lea.vmem [#allocation2], %s306
        // Predicated region
        $region49: #{tpu_custom_call.1} parent=47 // pred_check
          %p308 = pneg %p47
        $region50: #{tpu_custom_call.1} parent=47 // pred_check_branch
          %310 = sbr.rel (%p308) target = $region52
        $region51: #{tpu_custom_call.1} parent=47 // pred_region
          %311 = dma.done %s304, 6144
        $region52: #{tpu_custom_call.1} parent=47 // pred_fallthru
          _
        // Predicated region
        $region53: #{tpu_custom_call.1} parent=47 // pred_check
          %p312 = pneg %p68
        $region54: #{tpu_custom_call.1} parent=47 // pred_check_branch
          %314 = sbr.rel (%p312) target = $region56
        $region55: #{tpu_custom_call.1} parent=47 // pred_region
          %315 = dma.done [#allocation6], 24576
        $region56: #{tpu_custom_call.1} parent=47 // pred_fallthru
          _
        // Predicated region
        $region57: #{tpu_custom_call.1} parent=47 // pred_check
          %p316 = pneg %p89
        $region58: #{tpu_custom_call.1} parent=47 // pred_check_branch
          %318 = sbr.rel (%p316) target = $region60
        $region59: #{tpu_custom_call.1} parent=47 // pred_region
          %319 = dma.done [#allocation6], 128
        $region60: #{tpu_custom_call.1} parent=47 // pred_fallthru
          _
        // Predicated region
        $region61: #{tpu_custom_call.1} parent=47 // pred_check
          %p320 = pneg %p110
        $region62: #{tpu_custom_call.1} parent=47 // pred_check_branch
          %322 = sbr.rel (%p320) target = $region64
        $region63: #{tpu_custom_call.1} parent=47 // pred_region
          %323 = dma.done [#allocation9], 32768
        $region64: #{tpu_custom_call.1} parent=47 // pred_fallthru
          _
        // Predicated region
        $region65: #{tpu_custom_call.1} parent=47 // pred_check
          %p324 = pneg %p152
        $region66: #{tpu_custom_call.1} parent=47 // pred_check_branch
          %326 = sbr.rel (%p324) target = $region68
        $region67: #{tpu_custom_call.1} parent=47 // pred_region
          %327 = dma.done [#allocation9], 12288
        $region68: #{tpu_custom_call.1} parent=47 // pred_fallthru
          _
        %s328 = sand.u32 %s34, 1
        %s329 = scalar_lea.sflag [#allocation3], %s328
        %s330 = sand.u32 %s34, 1
        %s331 = smul.addr %s330, 384
        %s332 = scalar_lea.vmem [#allocation2], %s331
        %p333 = pneg %p47
        %p334 = pneg %p44
        %p335 = pneg %p68
        %p336 = pneg %p65
        %p337 = pneg %p89
        %p338 = pneg %p86
        %p339 = pneg %p110
        %p340 = pneg %p107
        %p341 = pneg %p131
        %p342 = pneg %p128
        %p343 = pneg %p152
        %p344 = pneg %p149
        %p345 = pneg %p173
        %p346 = pneg %p170
        %p347 = pneg %p199
        %p348 = pneg %p196
        %s349 = sand.u32 %s186, 1
        %s350 = scalar_lea.sflag [#allocation4], %s349
        %s351 = sand.u32 %s186, 1
        %s352 = smul.addr %s351, 384
        %s353 = scalar_lea.vmem [#allocation11], %s352
        %s354 = smul.u32 32, %s26
        %s355 = smul.u32 32, %s26
        %v357 = vld [vmem:[%s307] sm:$0xff]
        %v358 = vld [vmem:[%s307 + $0x8] sm:$0xf]
        %v359 = vld [vmem:[%s307 + $0xc] sm:$0xff]
        %v360 = vld [vmem:[%s307 + $0x14] sm:$0xf]
        %v361 = vld [vmem:[%s307 + $0x18] sm:$0xff]
        %v362 = vld [vmem:[%s307 + $0x20] sm:$0xf]
        %v363 = vld [vmem:[%s307 + $0x24] sm:$0xff]
        %v364 = vld [vmem:[%s307 + $0x2c] sm:$0xf]
        %v365 = vld [vmem:[%s307 + $0x30] sm:$0xff]
        %v366 = vld [vmem:[%s307 + $0x38] sm:$0xf]
        %v367 = vld [vmem:[%s307 + $0x3c] sm:$0xff]
        %v368 = vld [vmem:[%s307 + $0x44] sm:$0xf]
        %v369 = vld [vmem:[%s307 + $0x48] sm:$0xff]
        %v370 = vld [vmem:[%s307 + $0x50] sm:$0xf]
        %v371 = vld [vmem:[%s307 + $0x54] sm:$0xff]
        %v372 = vld [vmem:[%s307 + $0x5c] sm:$0xf]
        %v373 = vld [vmem:[%s307 + $0x60] sm:$0xff]
        %v374 = vld [vmem:[%s307 + $0x68] sm:$0xf]
        %v375 = vld [vmem:[%s307 + $0x6c] sm:$0xff]
        %v376 = vld [vmem:[%s307 + $0x74] sm:$0xf]
        %v377 = vld [vmem:[%s307 + $0x78] sm:$0xff]
        %v378 = vld [vmem:[%s307 + $0x80] sm:$0xf]
        %v379 = vld [vmem:[%s307 + $0x84] sm:$0xff]
        %v380 = vld [vmem:[%s307 + $0x8c] sm:$0xf]
        %v381 = vld [vmem:[%s307 + $0x90] sm:$0xff]
        %v382 = vld [vmem:[%s307 + $0x98] sm:$0xf]
        %v383 = vld [vmem:[%s307 + $0x9c] sm:$0xff]
        %v384 = vld [vmem:[%s307 + $0xa4] sm:$0xf]
        %v385 = vld [vmem:[%s307 + $0xa8] sm:$0xff]
        %v386 = vld [vmem:[%s307 + $0xb0] sm:$0xf]
        %v387 = vld [vmem:[%s307 + $0xb4] sm:$0xff]
        %v388 = vld [vmem:[%s307 + $0xbc] sm:$0xf]
        %v389 = vld [vmem:[%s307 + $0xc0] sm:$0xff]
        %v390 = vld [vmem:[%s307 + $0xc8] sm:$0xf]
        %v391 = vld [vmem:[%s307 + $0xcc] sm:$0xff]
        %v392 = vld [vmem:[%s307 + $0xd4] sm:$0xf]
        %v393 = vld [vmem:[%s307 + $0xd8] sm:$0xff]
        %v394 = vld [vmem:[%s307 + $0xe0] sm:$0xf]
        %v395 = vld [vmem:[%s307 + $0xe4] sm:$0xff]
        %v396 = vld [vmem:[%s307 + $0xec] sm:$0xf]
        %v397 = vld [vmem:[%s307 + $0xf0] sm:$0xff]
        %v398 = vld [vmem:[%s307 + $0xf8] sm:$0xf]
        %v399 = vld [vmem:[%s307 + $0xfc] sm:$0xff]
        %v400 = vld [vmem:[%s307 + $0x104] sm:$0xf]
        %v401 = vld [vmem:[%s307 + $0x108] sm:$0xff]
        %v402 = vld [vmem:[%s307 + $0x110] sm:$0xf]
        %v403 = vld [vmem:[%s307 + $0x114] sm:$0xff]
        %v404 = vld [vmem:[%s307 + $0x11c] sm:$0xf]
        %v405 = vld [vmem:[%s307 + $0x120] sm:$0xff]
        %v406 = vld [vmem:[%s307 + $0x128] sm:$0xf]
        %v407 = vld [vmem:[%s307 + $0x12c] sm:$0xff]
        %v408 = vld [vmem:[%s307 + $0x134] sm:$0xf]
        %v409 = vld [vmem:[%s307 + $0x138] sm:$0xff]
        %v410 = vld [vmem:[%s307 + $0x140] sm:$0xf]
        %v411 = vld [vmem:[%s307 + $0x144] sm:$0xff]
        %v412 = vld [vmem:[%s307 + $0x14c] sm:$0xf]
        %v413 = vld [vmem:[%s307 + $0x150] sm:$0xff]
        %v414 = vld [vmem:[%s307 + $0x158] sm:$0xf]
        %v415 = vld [vmem:[%s307 + $0x15c] sm:$0xff]
        %v416 = vld [vmem:[%s307 + $0x164] sm:$0xf]
        %v417 = vld [vmem:[%s307 + $0x168] sm:$0xff]
        %v418 = vld [vmem:[%s307 + $0x170] sm:$0xf]
        %v419 = vld [vmem:[%s307 + $0x174] sm:$0xff]
        %v420 = vld [vmem:[%s307 + $0x17c] sm:$0xf]
        %v421 = vld [vmem:[#allocation5] sm:$0xff]
        %v422 = vld [vmem:[#allocation5 + $0x8] sm:$0xff]
        %v423 = vld [vmem:[#allocation5 + $0x10] sm:$0xff]
        %v424 = vld [vmem:[#allocation5 + $0x18] sm:$0xff]
        %v425 = vld [vmem:[#allocation5 + $0x20] sm:$0xff]
        %v426 = vld [vmem:[#allocation5 + $0x28] sm:$0xff]
        %v427 = vld [vmem:[#allocation5 + $0x30] sm:$0xff]
        %v428 = vld [vmem:[#allocation5 + $0x38] sm:$0xff]
        %v429 = vld [vmem:[#allocation5 + $0x40] sm:$0xff]
        %v430 = vld [vmem:[#allocation5 + $0x48] sm:$0xff]
        %v431 = vld [vmem:[#allocation5 + $0x50] sm:$0xff]
        %v432 = vld [vmem:[#allocation5 + $0x58] sm:$0xff]
        %v433 = vld [vmem:[#allocation5 + $0x60] sm:$0xff]
        %v434 = vld [vmem:[#allocation5 + $0x68] sm:$0xff]
        %v435 = vld [vmem:[#allocation5 + $0x70] sm:$0xff]
        %v436 = vld [vmem:[#allocation5 + $0x78] sm:$0xff]
        %v437 = vld [vmem:[#allocation5 + $0x80] sm:$0xff]
        %v438 = vld [vmem:[#allocation5 + $0x88] sm:$0xff]
        %v439 = vld [vmem:[#allocation5 + $0x90] sm:$0xff]
        %v440 = vld [vmem:[#allocation5 + $0x98] sm:$0xff]
        %v441 = vld [vmem:[#allocation5 + $0xa0] sm:$0xff]
        %v442 = vld [vmem:[#allocation5 + $0xa8] sm:$0xff]
        %v443 = vld [vmem:[#allocation5 + $0xb0] sm:$0xff]
        %v444 = vld [vmem:[#allocation5 + $0xb8] sm:$0xff]
        %v445 = vld [vmem:[#allocation5 + $0xc0] sm:$0xff]
        %v446 = vld [vmem:[#allocation5 + $0xc8] sm:$0xff]
        %v447 = vld [vmem:[#allocation5 + $0xd0] sm:$0xff]
        %v448 = vld [vmem:[#allocation5 + $0xd8] sm:$0xff]
        %v449 = vld [vmem:[#allocation5 + $0xe0] sm:$0xff]
        %v450 = vld [vmem:[#allocation5 + $0xe8] sm:$0xff]
        %v451 = vld [vmem:[#allocation5 + $0xf0] sm:$0xff]
        %v452 = vld [vmem:[#allocation5 + $0xf8] sm:$0xff]
        %v453 = vld [vmem:[#allocation5 + $0x100] sm:$0xff]
        %v454 = vld [vmem:[#allocation5 + $0x108] sm:$0xff]
        %v455 = vld [vmem:[#allocation5 + $0x110] sm:$0xff]
        %v456 = vld [vmem:[#allocation5 + $0x118] sm:$0xff]
        %v457 = vld [vmem:[#allocation5 + $0x120] sm:$0xff]
        %v458 = vld [vmem:[#allocation5 + $0x128] sm:$0xff]
        %v459 = vld [vmem:[#allocation5 + $0x130] sm:$0xff]
        %v460 = vld [vmem:[#allocation5 + $0x138] sm:$0xff]
        %v461 = vld [vmem:[#allocation5 + $0x140] sm:$0xff]
        %v462 = vld [vmem:[#allocation5 + $0x148] sm:$0xff]
        %v463 = vld [vmem:[#allocation5 + $0x150] sm:$0xff]
        %v464 = vld [vmem:[#allocation5 + $0x158] sm:$0xff]
        %v465 = vld [vmem:[#allocation5 + $0x160] sm:$0xff]
        %v466 = vld [vmem:[#allocation5 + $0x168] sm:$0xff]
        %v467 = vld [vmem:[#allocation5 + $0x170] sm:$0xff]
        %v468 = vld [vmem:[#allocation5 + $0x178] sm:$0xff]
        %v469 = vld [vmem:[#allocation5 + $0x180] sm:$0xff]
        %v470 = vld [vmem:[#allocation5 + $0x188] sm:$0xff]
        %v471 = vld [vmem:[#allocation5 + $0x190] sm:$0xff]
        %v472 = vld [vmem:[#allocation5 + $0x198] sm:$0xff]
        %v473 = vld [vmem:[#allocation5 + $0x1a0] sm:$0xff]
        %v474 = vld [vmem:[#allocation5 + $0x1a8] sm:$0xff]
        %v475 = vld [vmem:[#allocation5 + $0x1b0] sm:$0xff]
        %v476 = vld [vmem:[#allocation5 + $0x1b8] sm:$0xff]
        %v477 = vld [vmem:[#allocation5 + $0x1c0] sm:$0xff]
        %v478 = vld [vmem:[#allocation5 + $0x1c8] sm:$0xff]
        %v479 = vld [vmem:[#allocation5 + $0x1d0] sm:$0xff]
        %v480 = vld [vmem:[#allocation5 + $0x1d8] sm:$0xff]
        %v481 = vld [vmem:[#allocation5 + $0x1e0] sm:$0xff]
        %v482 = vld [vmem:[#allocation5 + $0x1e8] sm:$0xff]
        %v483 = vld [vmem:[#allocation5 + $0x1f0] sm:$0xff]
        %v484 = vld [vmem:[#allocation5 + $0x1f8] sm:$0xff]
        %v485 = vld [vmem:[#allocation5 + $0x200] sm:$0xff]
        %v486 = vld [vmem:[#allocation5 + $0x208] sm:$0xff]
        %v487 = vld [vmem:[#allocation5 + $0x210] sm:$0xff]
        %v488 = vld [vmem:[#allocation5 + $0x218] sm:$0xff]
        %v489 = vld [vmem:[#allocation5 + $0x220] sm:$0xff]
        %v490 = vld [vmem:[#allocation5 + $0x228] sm:$0xff]
        %v491 = vld [vmem:[#allocation5 + $0x230] sm:$0xff]
        %v492 = vld [vmem:[#allocation5 + $0x238] sm:$0xff]
        %v493 = vld [vmem:[#allocation5 + $0x240] sm:$0xff]
        %v494 = vld [vmem:[#allocation5 + $0x248] sm:$0xff]
        %v495 = vld [vmem:[#allocation5 + $0x250] sm:$0xff]
        %v496 = vld [vmem:[#allocation5 + $0x258] sm:$0xff]
        %v497 = vld [vmem:[#allocation5 + $0x260] sm:$0xff]
        %v498 = vld [vmem:[#allocation5 + $0x268] sm:$0xff]
        %v499 = vld [vmem:[#allocation5 + $0x270] sm:$0xff]
        %v500 = vld [vmem:[#allocation5 + $0x278] sm:$0xff]
        %v501 = vld [vmem:[#allocation5 + $0x280] sm:$0xff]
        %v502 = vld [vmem:[#allocation5 + $0x288] sm:$0xff]
        %v503 = vld [vmem:[#allocation5 + $0x290] sm:$0xff]
        %v504 = vld [vmem:[#allocation5 + $0x298] sm:$0xff]
        %v505 = vld [vmem:[#allocation5 + $0x2a0] sm:$0xff]
        %v506 = vld [vmem:[#allocation5 + $0x2a8] sm:$0xff]
        %v507 = vld [vmem:[#allocation5 + $0x2b0] sm:$0xff]
        %v508 = vld [vmem:[#allocation5 + $0x2b8] sm:$0xff]
        %v509 = vld [vmem:[#allocation5 + $0x2c0] sm:$0xff]
        %v510 = vld [vmem:[#allocation5 + $0x2c8] sm:$0xff]
        %v511 = vld [vmem:[#allocation5 + $0x2d0] sm:$0xff]
        %v512 = vld [vmem:[#allocation5 + $0x2d8] sm:$0xff]
        %v513 = vld [vmem:[#allocation5 + $0x2e0] sm:$0xff]
        %v514 = vld [vmem:[#allocation5 + $0x2e8] sm:$0xff]
        %v515 = vld [vmem:[#allocation5 + $0x2f0] sm:$0xff]
        %v516 = vld [vmem:[#allocation5 + $0x2f8] sm:$0xff]
        %v517 = vld [vmem:[#allocation5 + $0x300] sm:$0xff]
        %v518 = vld [vmem:[#allocation5 + $0x308] sm:$0xff]
        %v519 = vld [vmem:[#allocation5 + $0x310] sm:$0xff]
        %v520 = vld [vmem:[#allocation5 + $0x318] sm:$0xff]
        %v521 = vld [vmem:[#allocation5 + $0x320] sm:$0xff]
        %v522 = vld [vmem:[#allocation5 + $0x328] sm:$0xff]
        %v523 = vld [vmem:[#allocation5 + $0x330] sm:$0xff]
        %v524 = vld [vmem:[#allocation5 + $0x338] sm:$0xff]
        %v525 = vld [vmem:[#allocation5 + $0x340] sm:$0xff]
        %v526 = vld [vmem:[#allocation5 + $0x348] sm:$0xff]
        %v527 = vld [vmem:[#allocation5 + $0x350] sm:$0xff]
        %v528 = vld [vmem:[#allocation5 + $0x358] sm:$0xff]
        %v529 = vld [vmem:[#allocation5 + $0x360] sm:$0xff]
        %v530 = vld [vmem:[#allocation5 + $0x368] sm:$0xff]
        %v531 = vld [vmem:[#allocation5 + $0x370] sm:$0xff]
        %v532 = vld [vmem:[#allocation5 + $0x378] sm:$0xff]
        %v533 = vld [vmem:[#allocation5 + $0x380] sm:$0xff]
        %v534 = vld [vmem:[#allocation5 + $0x388] sm:$0xff]
        %v535 = vld [vmem:[#allocation5 + $0x390] sm:$0xff]
        %v536 = vld [vmem:[#allocation5 + $0x398] sm:$0xff]
        %v537 = vld [vmem:[#allocation5 + $0x3a0] sm:$0xff]
        %v538 = vld [vmem:[#allocation5 + $0x3a8] sm:$0xff]
        %v539 = vld [vmem:[#allocation5 + $0x3b0] sm:$0xff]
        %v540 = vld [vmem:[#allocation5 + $0x3b8] sm:$0xff]
        %v541 = vld [vmem:[#allocation5 + $0x3c0] sm:$0xff]
        %v542 = vld [vmem:[#allocation5 + $0x3c8] sm:$0xff]
        %v543 = vld [vmem:[#allocation5 + $0x3d0] sm:$0xff]
        %v544 = vld [vmem:[#allocation5 + $0x3d8] sm:$0xff]
        %v545 = vld [vmem:[#allocation5 + $0x3e0] sm:$0xff]
        %v546 = vld [vmem:[#allocation5 + $0x3e8] sm:$0xff]
        %v547 = vld [vmem:[#allocation5 + $0x3f0] sm:$0xff]
        %v548 = vld [vmem:[#allocation5 + $0x3f8] sm:$0xff]
        %v549 = vld [vmem:[#allocation5 + $0x400] sm:$0xff]
        %v550 = vld [vmem:[#allocation5 + $0x408] sm:$0xff]
        %v551 = vld [vmem:[#allocation5 + $0x410] sm:$0xff]
        %v552 = vld [vmem:[#allocation5 + $0x418] sm:$0xff]
        %v553 = vld [vmem:[#allocation5 + $0x420] sm:$0xff]
        %v554 = vld [vmem:[#allocation5 + $0x428] sm:$0xff]
        %v555 = vld [vmem:[#allocation5 + $0x430] sm:$0xff]
        %v556 = vld [vmem:[#allocation5 + $0x438] sm:$0xff]
        %v557 = vld [vmem:[#allocation5 + $0x440] sm:$0xff]
        %v558 = vld [vmem:[#allocation5 + $0x448] sm:$0xff]
        %v559 = vld [vmem:[#allocation5 + $0x450] sm:$0xff]
        %v560 = vld [vmem:[#allocation5 + $0x458] sm:$0xff]
        %v561 = vld [vmem:[#allocation5 + $0x460] sm:$0xff]
        %v562 = vld [vmem:[#allocation5 + $0x468] sm:$0xff]
        %v563 = vld [vmem:[#allocation5 + $0x470] sm:$0xff]
        %v564 = vld [vmem:[#allocation5 + $0x478] sm:$0xff]
        %v565 = vld [vmem:[#allocation5 + $0x480] sm:$0xff]
        %v566 = vld [vmem:[#allocation5 + $0x488] sm:$0xff]
        %v567 = vld [vmem:[#allocation5 + $0x490] sm:$0xff]
        %v568 = vld [vmem:[#allocation5 + $0x498] sm:$0xff]
        %v569 = vld [vmem:[#allocation5 + $0x4a0] sm:$0xff]
        %v570 = vld [vmem:[#allocation5 + $0x4a8] sm:$0xff]
        %v571 = vld [vmem:[#allocation5 + $0x4b0] sm:$0xff]
        %v572 = vld [vmem:[#allocation5 + $0x4b8] sm:$0xff]
        %v573 = vld [vmem:[#allocation5 + $0x4c0] sm:$0xff]
        %v574 = vld [vmem:[#allocation5 + $0x4c8] sm:$0xff]
        %v575 = vld [vmem:[#allocation5 + $0x4d0] sm:$0xff]
        %v576 = vld [vmem:[#allocation5 + $0x4d8] sm:$0xff]
        %v577 = vld [vmem:[#allocation5 + $0x4e0] sm:$0xff]
        %v578 = vld [vmem:[#allocation5 + $0x4e8] sm:$0xff]
        %v579 = vld [vmem:[#allocation5 + $0x4f0] sm:$0xff]
        %v580 = vld [vmem:[#allocation5 + $0x4f8] sm:$0xff]
        %v581 = vld [vmem:[#allocation5 + $0x500] sm:$0xff]
        %v582 = vld [vmem:[#allocation5 + $0x508] sm:$0xff]
        %v583 = vld [vmem:[#allocation5 + $0x510] sm:$0xff]
        %v584 = vld [vmem:[#allocation5 + $0x518] sm:$0xff]
        %v585 = vld [vmem:[#allocation5 + $0x520] sm:$0xff]
        %v586 = vld [vmem:[#allocation5 + $0x528] sm:$0xff]
        %v587 = vld [vmem:[#allocation5 + $0x530] sm:$0xff]
        %v588 = vld [vmem:[#allocation5 + $0x538] sm:$0xff]
        %v589 = vld [vmem:[#allocation5 + $0x540] sm:$0xff]
        %v590 = vld [vmem:[#allocation5 + $0x548] sm:$0xff]
        %v591 = vld [vmem:[#allocation5 + $0x550] sm:$0xff]
        %v592 = vld [vmem:[#allocation5 + $0x558] sm:$0xff]
        %v593 = vld [vmem:[#allocation5 + $0x560] sm:$0xff]
        %v594 = vld [vmem:[#allocation5 + $0x568] sm:$0xff]
        %v595 = vld [vmem:[#allocation5 + $0x570] sm:$0xff]
        %v596 = vld [vmem:[#allocation5 + $0x578] sm:$0xff]
        %v597 = vld [vmem:[#allocation5 + $0x580] sm:$0xff]
        %v598 = vld [vmem:[#allocation5 + $0x588] sm:$0xff]
        %v599 = vld [vmem:[#allocation5 + $0x590] sm:$0xff]
        %v600 = vld [vmem:[#allocation5 + $0x598] sm:$0xff]
        %v601 = vld [vmem:[#allocation5 + $0x5a0] sm:$0xff]
        %v602 = vld [vmem:[#allocation5 + $0x5a8] sm:$0xff]
        %v603 = vld [vmem:[#allocation5 + $0x5b0] sm:$0xff]
        %v604 = vld [vmem:[#allocation5 + $0x5b8] sm:$0xff]
        %v605 = vld [vmem:[#allocation5 + $0x5c0] sm:$0xff]
        %v606 = vld [vmem:[#allocation5 + $0x5c8] sm:$0xff]
        %v607 = vld [vmem:[#allocation5 + $0x5d0] sm:$0xff]
        %v608 = vld [vmem:[#allocation5 + $0x5d8] sm:$0xff]
        %v609 = vld [vmem:[#allocation5 + $0x5e0] sm:$0xff]
        %v610 = vld [vmem:[#allocation5 + $0x5e8] sm:$0xff]
        %v611 = vld [vmem:[#allocation5 + $0x5f0] sm:$0xff]
        %v612 = vld [vmem:[#allocation5 + $0x5f8] sm:$0xff]
        %v613 = vld [vmem:[#allocation7] sm:$0xff]
        %v615 = vlaneseq
        %v616 = vshrl.u32 %v615, 7
        %v617 = vsub.s32 0, %v616
        %v618 = vrot.slane %v613, %v617
        %v619 = vlaneseq
        %v620 = vshrl.u32 %v619, 7
        %v621 = vsub.s32 1, %v620
        %v622 = vrot.slane %v613, %v621
        %v623 = vlaneseq
        %v624 = vshrl.u32 %v623, 7
        %v625 = vsub.s32 2, %v624
        %v626 = vrot.slane %v613, %v625
        %v627 = vlaneseq
        %v628 = vshrl.u32 %v627, 7
        %v629 = vsub.s32 3, %v628
        %v630 = vrot.slane %v613, %v629
        %v631 = vlaneseq
        %v632 = vshrl.u32 %v631, 7
        %v633 = vsub.s32 4, %v632
        %v634 = vrot.slane %v613, %v633
        %v635 = vlaneseq
        %v636 = vshrl.u32 %v635, 7
        %v637 = vsub.s32 5, %v636
        %v638 = vrot.slane %v613, %v637
        %v639 = vlaneseq
        %v640 = vshrl.u32 %v639, 7
        %v641 = vsub.s32 6, %v640
        %v642 = vrot.slane %v613, %v641
        %v643 = vlaneseq
        %v644 = vshrl.u32 %v643, 7
        %v645 = vsub.s32 7, %v644
        %v646 = vrot.slane %v613, %v645
        %v719 = vunpack.c.l.b16 %v357
        %v720 = vunpack.c.h.b16 %v357
        %v721 = vunpack.c.l.b16 %v358
        %v722 = vunpack.c.l.b16 %v359
        %v723 = vunpack.c.h.b16 %v359
        %v724 = vunpack.c.l.b16 %v360
        %v725 = vunpack.c.l.b16 %v361
        %v726 = vunpack.c.h.b16 %v361
        %v727 = vunpack.c.l.b16 %v362
        %v728 = vunpack.c.l.b16 %v363
        %v729 = vunpack.c.h.b16 %v363
        %v730 = vunpack.c.l.b16 %v364
        %v731 = vunpack.c.l.b16 %v365
        %v732 = vunpack.c.h.b16 %v365
        %v733 = vunpack.c.l.b16 %v366
        %v734 = vunpack.c.l.b16 %v367
        %v735 = vunpack.c.h.b16 %v367
        %v736 = vunpack.c.l.b16 %v368
        %v737 = vunpack.c.l.b16 %v369
        %v738 = vunpack.c.h.b16 %v369
        %v739 = vunpack.c.l.b16 %v370
        %v740 = vunpack.c.l.b16 %v371
        %v741 = vunpack.c.h.b16 %v371
        %v742 = vunpack.c.l.b16 %v372
        %v743 = vunpack.c.l.b16 %v373
        %v744 = vunpack.c.h.b16 %v373
        %v745 = vunpack.c.l.b16 %v374
        %v746 = vunpack.c.l.b16 %v375
        %v747 = vunpack.c.h.b16 %v375
        %v748 = vunpack.c.l.b16 %v376
        %v749 = vunpack.c.l.b16 %v377
        %v750 = vunpack.c.h.b16 %v377
        %v751 = vunpack.c.l.b16 %v378
        %v752 = vunpack.c.l.b16 %v379
        %v753 = vunpack.c.h.b16 %v379
        %v754 = vunpack.c.l.b16 %v380
        %v755 = vunpack.c.l.b16 %v381
        %v756 = vunpack.c.h.b16 %v381
        %v757 = vunpack.c.l.b16 %v382
        %v758 = vunpack.c.l.b16 %v383
        %v759 = vunpack.c.h.b16 %v383
        %v760 = vunpack.c.l.b16 %v384
        %v761 = vunpack.c.l.b16 %v385
        %v762 = vunpack.c.h.b16 %v385
        %v763 = vunpack.c.l.b16 %v386
        %v764 = vunpack.c.l.b16 %v387
        %v765 = vunpack.c.h.b16 %v387
        %v766 = vunpack.c.l.b16 %v388
        %v767 = vunpack.c.l.b16 %v389
        %v768 = vunpack.c.h.b16 %v389
        %v769 = vunpack.c.l.b16 %v390
        %v770 = vunpack.c.l.b16 %v391
        %v771 = vunpack.c.h.b16 %v391
        %v772 = vunpack.c.l.b16 %v392
        %v773 = vunpack.c.l.b16 %v393
        %v774 = vunpack.c.h.b16 %v393
        %v775 = vunpack.c.l.b16 %v394
        %v776 = vunpack.c.l.b16 %v395
        %v777 = vunpack.c.h.b16 %v395
        %v778 = vunpack.c.l.b16 %v396
        %v779 = vunpack.c.l.b16 %v397
        %v780 = vunpack.c.h.b16 %v397
        %v781 = vunpack.c.l.b16 %v398
        %v782 = vunpack.c.l.b16 %v399
        %v783 = vunpack.c.h.b16 %v399
        %v784 = vunpack.c.l.b16 %v400
        %v785 = vunpack.c.l.b16 %v401
        %v786 = vunpack.c.h.b16 %v401
        %v787 = vunpack.c.l.b16 %v402
        %v788 = vunpack.c.l.b16 %v403
        %v789 = vunpack.c.h.b16 %v403
        %v790 = vunpack.c.l.b16 %v404
        %v791 = vunpack.c.l.b16 %v405
        %v792 = vunpack.c.h.b16 %v405
        %v793 = vunpack.c.l.b16 %v406
        %v794 = vunpack.c.l.b16 %v407
        %v795 = vunpack.c.h.b16 %v407
        %v796 = vunpack.c.l.b16 %v408
        %v797 = vunpack.c.l.b16 %v409
        %v798 = vunpack.c.h.b16 %v409
        %v799 = vunpack.c.l.b16 %v410
        %v800 = vunpack.c.l.b16 %v411
        %v801 = vunpack.c.h.b16 %v411
        %v802 = vunpack.c.l.b16 %v412
        %v803 = vunpack.c.l.b16 %v413
        %v804 = vunpack.c.h.b16 %v413
        %v805 = vunpack.c.l.b16 %v414
        %v806 = vunpack.c.l.b16 %v415
        %v807 = vunpack.c.h.b16 %v415
        %v808 = vunpack.c.l.b16 %v416
        %v809 = vunpack.c.l.b16 %v417
        %v810 = vunpack.c.h.b16 %v417
        %v811 = vunpack.c.l.b16 %v418
        %v812 = vunpack.c.l.b16 %v419
        %v813 = vunpack.c.h.b16 %v419
        %v814 = vunpack.c.l.b16 %v420
        %v815 = vpack.c.b16 %v722, %v719
        %v816 = vpack.c.b16 %v723, %v720
        %v817 = vpack.c.b16 %v724, %v721
        %v818 = vpack.c.b16 %v728, %v725
        %v819 = vpack.c.b16 %v729, %v726
        %v820 = vpack.c.b16 %v730, %v727
        %v821 = vpack.c.b16 %v734, %v731
        %v822 = vpack.c.b16 %v735, %v732
        %v823 = vpack.c.b16 %v736, %v733
        %v824 = vpack.c.b16 %v740, %v737
        %v825 = vpack.c.b16 %v741, %v738
        %v826 = vpack.c.b16 %v742, %v739
        %v827 = vpack.c.b16 %v746, %v743
        %v828 = vpack.c.b16 %v747, %v744
        %v829 = vpack.c.b16 %v748, %v745
        %v830 = vpack.c.b16 %v752, %v749
        %v831 = vpack.c.b16 %v753, %v750
        %v832 = vpack.c.b16 %v754, %v751
        %v833 = vpack.c.b16 %v758, %v755
        %v834 = vpack.c.b16 %v759, %v756
        %v835 = vpack.c.b16 %v760, %v757
        %v836 = vpack.c.b16 %v764, %v761
        %v837 = vpack.c.b16 %v765, %v762
        %v838 = vpack.c.b16 %v766, %v763
        %v839 = vpack.c.b16 %v770, %v767
        %v840 = vpack.c.b16 %v771, %v768
        %v841 = vpack.c.b16 %v772, %v769
        %v842 = vpack.c.b16 %v776, %v773
        %v843 = vpack.c.b16 %v777, %v774
        %v844 = vpack.c.b16 %v778, %v775
        %v845 = vpack.c.b16 %v782, %v779
        %v846 = vpack.c.b16 %v783, %v780
        %v847 = vpack.c.b16 %v784, %v781
        %v848 = vpack.c.b16 %v788, %v785
        %v849 = vpack.c.b16 %v789, %v786
        %v850 = vpack.c.b16 %v790, %v787
        %v851 = vpack.c.b16 %v794, %v791
        %v852 = vpack.c.b16 %v795, %v792
        %v853 = vpack.c.b16 %v796, %v793
        %v854 = vpack.c.b16 %v800, %v797
        %v855 = vpack.c.b16 %v801, %v798
        %v856 = vpack.c.b16 %v802, %v799
        %v857 = vpack.c.b16 %v806, %v803
        %v858 = vpack.c.b16 %v807, %v804
        %v859 = vpack.c.b16 %v808, %v805
        %v860 = vpack.c.b16 %v812, %v809
        %v861 = vpack.c.b16 %v813, %v810
        %v862 = vpack.c.b16 %v814, %v811
        %v1103 = vunpack.c.l.b16 %v421
        %v1104 = vunpack.c.h.b16 %v421
        %v1105 = vunpack.c.l.b16 %v422
        %v1106 = vunpack.c.h.b16 %v422
        %v1107 = vunpack.c.l.b16 %v423
        %v1108 = vunpack.c.h.b16 %v423
        %v1109 = vunpack.c.l.b16 %v424
        %v1110 = vunpack.c.h.b16 %v424
        %v1111 = vunpack.c.l.b16 %v425
        %v1112 = vunpack.c.h.b16 %v425
        %v1113 = vunpack.c.l.b16 %v426
        %v1114 = vunpack.c.h.b16 %v426
        %v1115 = vunpack.c.l.b16 %v427
        %v1116 = vunpack.c.h.b16 %v427
        %v1117 = vunpack.c.l.b16 %v428
        %v1118 = vunpack.c.h.b16 %v428
        %v1119 = vunpack.c.l.b16 %v429
        %v1120 = vunpack.c.h.b16 %v429
        %v1121 = vunpack.c.l.b16 %v430
        %v1122 = vunpack.c.h.b16 %v430
        %v1123 = vunpack.c.l.b16 %v431
        %v1124 = vunpack.c.h.b16 %v431
        %v1125 = vunpack.c.l.b16 %v432
        %v1126 = vunpack.c.h.b16 %v432
        %v1127 = vunpack.c.l.b16 %v433
        %v1128 = vunpack.c.h.b16 %v433
        %v1129 = vunpack.c.l.b16 %v434
        %v1130 = vunpack.c.h.b16 %v434
        %v1131 = vunpack.c.l.b16 %v435
        %v1132 = vunpack.c.h.b16 %v435
        %v1133 = vunpack.c.l.b16 %v436
        %v1134 = vunpack.c.h.b16 %v436
        %v1135 = vunpack.c.l.b16 %v437
        %v1136 = vunpack.c.h.b16 %v437
        %v1137 = vunpack.c.l.b16 %v438
        %v1138 = vunpack.c.h.b16 %v438
        %v1139 = vunpack.c.l.b16 %v439
        %v1140 = vunpack.c.h.b16 %v439
        %v1141 = vunpack.c.l.b16 %v440
        %v1142 = vunpack.c.h.b16 %v440
        %v1143 = vunpack.c.l.b16 %v441
        %v1144 = vunpack.c.h.b16 %v441
        %v1145 = vunpack.c.l.b16 %v442
        %v1146 = vunpack.c.h.b16 %v442
        %v1147 = vunpack.c.l.b16 %v443
        %v1148 = vunpack.c.h.b16 %v443
        %v1149 = vunpack.c.l.b16 %v444
        %v1150 = vunpack.c.h.b16 %v444
        %v1151 = vunpack.c.l.b16 %v445
        %v1152 = vunpack.c.h.b16 %v445
        %v1153 = vunpack.c.l.b16 %v446
        %v1154 = vunpack.c.h.b16 %v446
        %v1155 = vunpack.c.l.b16 %v447
        %v1156 = vunpack.c.h.b16 %v447
        %v1157 = vunpack.c.l.b16 %v448
        %v1158 = vunpack.c.h.b16 %v448
        %v1159 = vunpack.c.l.b16 %v449
        %v1160 = vunpack.c.h.b16 %v449
        %v1161 = vunpack.c.l.b16 %v450
        %v1162 = vunpack.c.h.b16 %v450
        %v1163 = vunpack.c.l.b16 %v451
        %v1164 = vunpack.c.h.b16 %v451
        %v1165 = vunpack.c.l.b16 %v452
        %v1166 = vunpack.c.h.b16 %v452
        %v1167 = vunpack.c.l.b16 %v453
        %v1168 = vunpack.c.h.b16 %v453
        %v1169 = vunpack.c.l.b16 %v454
        %v1170 = vunpack.c.h.b16 %v454
        %v1171 = vunpack.c.l.b16 %v455
        %v1172 = vunpack.c.h.b16 %v455
        %v1173 = vunpack.c.l.b16 %v456
        %v1174 = vunpack.c.h.b16 %v456
        %v1175 = vunpack.c.l.b16 %v457
        %v1176 = vunpack.c.h.b16 %v457
        %v1177 = vunpack.c.l.b16 %v458
        %v1178 = vunpack.c.h.b16 %v458
        %v1179 = vunpack.c.l.b16 %v459
        %v1180 = vunpack.c.h.b16 %v459
        %v1181 = vunpack.c.l.b16 %v460
        %v1182 = vunpack.c.h.b16 %v460
        %v1183 = vunpack.c.l.b16 %v461
        %v1184 = vunpack.c.h.b16 %v461
        %v1185 = vunpack.c.l.b16 %v462
        %v1186 = vunpack.c.h.b16 %v462
        %v1187 = vunpack.c.l.b16 %v463
        %v1188 = vunpack.c.h.b16 %v463
        %v1189 = vunpack.c.l.b16 %v464
        %v1190 = vunpack.c.h.b16 %v464
        %v1191 = vunpack.c.l.b16 %v465
        %v1192 = vunpack.c.h.b16 %v465
        %v1193 = vunpack.c.l.b16 %v466
        %v1194 = vunpack.c.h.b16 %v466
        %v1195 = vunpack.c.l.b16 %v467
        %v1196 = vunpack.c.h.b16 %v467
        %v1197 = vunpack.c.l.b16 %v468
        %v1198 = vunpack.c.h.b16 %v468
        %v1199 = vunpack.c.l.b16 %v469
        %v1200 = vunpack.c.h.b16 %v469
        %v1201 = vunpack.c.l.b16 %v470
        %v1202 = vunpack.c.h.b16 %v470
        %v1203 = vunpack.c.l.b16 %v471
        %v1204 = vunpack.c.h.b16 %v471
        %v1205 = vunpack.c.l.b16 %v472
        %v1206 = vunpack.c.h.b16 %v472
        %v1207 = vunpack.c.l.b16 %v473
        %v1208 = vunpack.c.h.b16 %v473
        %v1209 = vunpack.c.l.b16 %v474
        %v1210 = vunpack.c.h.b16 %v474
        %v1211 = vunpack.c.l.b16 %v475
        %v1212 = vunpack.c.h.b16 %v475
        %v1213 = vunpack.c.l.b16 %v476
        %v1214 = vunpack.c.h.b16 %v476
        %v1215 = vunpack.c.l.b16 %v477
        %v1216 = vunpack.c.h.b16 %v477
        %v1217 = vunpack.c.l.b16 %v478
        %v1218 = vunpack.c.h.b16 %v478
        %v1219 = vunpack.c.l.b16 %v479
        %v1220 = vunpack.c.h.b16 %v479
        %v1221 = vunpack.c.l.b16 %v480
        %v1222 = vunpack.c.h.b16 %v480
        %v1223 = vunpack.c.l.b16 %v481
        %v1224 = vunpack.c.h.b16 %v481
        %v1225 = vunpack.c.l.b16 %v482
        %v1226 = vunpack.c.h.b16 %v482
        %v1227 = vunpack.c.l.b16 %v483
        %v1228 = vunpack.c.h.b16 %v483
        %v1229 = vunpack.c.l.b16 %v484
        %v1230 = vunpack.c.h.b16 %v484
        %v1231 = vunpack.c.l.b16 %v485
        %v1232 = vunpack.c.h.b16 %v485
        %v1233 = vunpack.c.l.b16 %v486
        %v1234 = vunpack.c.h.b16 %v486
        %v1235 = vunpack.c.l.b16 %v487
        %v1236 = vunpack.c.h.b16 %v487
        %v1237 = vunpack.c.l.b16 %v488
        %v1238 = vunpack.c.h.b16 %v488
        %v1239 = vunpack.c.l.b16 %v489
        %v1240 = vunpack.c.h.b16 %v489
        %v1241 = vunpack.c.l.b16 %v490
        %v1242 = vunpack.c.h.b16 %v490
        %v1243 = vunpack.c.l.b16 %v491
        %v1244 = vunpack.c.h.b16 %v491
        %v1245 = vunpack.c.l.b16 %v492
        %v1246 = vunpack.c.h.b16 %v492
        %v1247 = vunpack.c.l.b16 %v493
        %v1248 = vunpack.c.h.b16 %v493
        %v1249 = vunpack.c.l.b16 %v494
        %v1250 = vunpack.c.h.b16 %v494
        %v1251 = vunpack.c.l.b16 %v495
        %v1252 = vunpack.c.h.b16 %v495
        %v1253 = vunpack.c.l.b16 %v496
        %v1254 = vunpack.c.h.b16 %v496
        %v1255 = vunpack.c.l.b16 %v497
        %v1256 = vunpack.c.h.b16 %v497
        %v1257 = vunpack.c.l.b16 %v498
        %v1258 = vunpack.c.h.b16 %v498
        %v1259 = vunpack.c.l.b16 %v499
        %v1260 = vunpack.c.h.b16 %v499
        %v1261 = vunpack.c.l.b16 %v500
        %v1262 = vunpack.c.h.b16 %v500
        %v1263 = vunpack.c.l.b16 %v501
        %v1264 = vunpack.c.h.b16 %v501
        %v1265 = vunpack.c.l.b16 %v502
        %v1266 = vunpack.c.h.b16 %v502
        %v1267 = vunpack.c.l.b16 %v503
        %v1268 = vunpack.c.h.b16 %v503
        %v1269 = vunpack.c.l.b16 %v504
        %v1270 = vunpack.c.h.b16 %v504
        %v1271 = vunpack.c.l.b16 %v505
        %v1272 = vunpack.c.h.b16 %v505
        %v1273 = vunpack.c.l.b16 %v506
        %v1274 = vunpack.c.h.b16 %v506
        %v1275 = vunpack.c.l.b16 %v507
        %v1276 = vunpack.c.h.b16 %v507
        %v1277 = vunpack.c.l.b16 %v508
        %v1278 = vunpack.c.h.b16 %v508
        %v1279 = vunpack.c.l.b16 %v509
        %v1280 = vunpack.c.h.b16 %v509
        %v1281 = vunpack.c.l.b16 %v510
        %v1282 = vunpack.c.h.b16 %v510
        %v1283 = vunpack.c.l.b16 %v511
        %v1284 = vunpack.c.h.b16 %v511
        %v1285 = vunpack.c.l.b16 %v512
        %v1286 = vunpack.c.h.b16 %v512
        %v1287 = vunpack.c.l.b16 %v513
        %v1288 = vunpack.c.h.b16 %v513
        %v1289 = vunpack.c.l.b16 %v514
        %v1290 = vunpack.c.h.b16 %v514
        %v1291 = vunpack.c.l.b16 %v515
        %v1292 = vunpack.c.h.b16 %v515
        %v1293 = vunpack.c.l.b16 %v516
        %v1294 = vunpack.c.h.b16 %v516
        %v1295 = vunpack.c.l.b16 %v517
        %v1296 = vunpack.c.h.b16 %v517
        %v1297 = vunpack.c.l.b16 %v518
        %v1298 = vunpack.c.h.b16 %v518
        %v1299 = vunpack.c.l.b16 %v519
        %v1300 = vunpack.c.h.b16 %v519
        %v1301 = vunpack.c.l.b16 %v520
        %v1302 = vunpack.c.h.b16 %v520
        %v1303 = vunpack.c.l.b16 %v521
        %v1304 = vunpack.c.h.b16 %v521
        %v1305 = vunpack.c.l.b16 %v522
        %v1306 = vunpack.c.h.b16 %v522
        %v1307 = vunpack.c.l.b16 %v523
        %v1308 = vunpack.c.h.b16 %v523
        %v1309 = vunpack.c.l.b16 %v524
        %v1310 = vunpack.c.h.b16 %v524
        %v1311 = vunpack.c.l.b16 %v525
        %v1312 = vunpack.c.h.b16 %v525
        %v1313 = vunpack.c.l.b16 %v526
        %v1314 = vunpack.c.h.b16 %v526
        %v1315 = vunpack.c.l.b16 %v527
        %v1316 = vunpack.c.h.b16 %v527
        %v1317 = vunpack.c.l.b16 %v528
        %v1318 = vunpack.c.h.b16 %v528
        %v1319 = vunpack.c.l.b16 %v529
        %v1320 = vunpack.c.h.b16 %v529
        %v1321 = vunpack.c.l.b16 %v530
        %v1322 = vunpack.c.h.b16 %v530
        %v1323 = vunpack.c.l.b16 %v531
        %v1324 = vunpack.c.h.b16 %v531
        %v1325 = vunpack.c.l.b16 %v532
        %v1326 = vunpack.c.h.b16 %v532
        %v1327 = vunpack.c.l.b16 %v533
        %v1328 = vunpack.c.h.b16 %v533
        %v1329 = vunpack.c.l.b16 %v534
        %v1330 = vunpack.c.h.b16 %v534
        %v1331 = vunpack.c.l.b16 %v535
        %v1332 = vunpack.c.h.b16 %v535
        %v1333 = vunpack.c.l.b16 %v536
        %v1334 = vunpack.c.h.b16 %v536
        %v1335 = vunpack.c.l.b16 %v537
        %v1336 = vunpack.c.h.b16 %v537
        %v1337 = vunpack.c.l.b16 %v538
        %v1338 = vunpack.c.h.b16 %v538
        %v1339 = vunpack.c.l.b16 %v539
        %v1340 = vunpack.c.h.b16 %v539
        %v1341 = vunpack.c.l.b16 %v540
        %v1342 = vunpack.c.h.b16 %v540
        %v1343 = vunpack.c.l.b16 %v541
        %v1344 = vunpack.c.h.b16 %v541
        %v1345 = vunpack.c.l.b16 %v542
        %v1346 = vunpack.c.h.b16 %v542
        %v1347 = vunpack.c.l.b16 %v543
        %v1348 = vunpack.c.h.b16 %v543
        %v1349 = vunpack.c.l.b16 %v544
        %v1350 = vunpack.c.h.b16 %v544
        %v1351 = vunpack.c.l.b16 %v545
        %v1352 = vunpack.c.h.b16 %v545
        %v1353 = vunpack.c.l.b16 %v546
        %v1354 = vunpack.c.h.b16 %v546
        %v1355 = vunpack.c.l.b16 %v547
        %v1356 = vunpack.c.h.b16 %v547
        %v1357 = vunpack.c.l.b16 %v548
        %v1358 = vunpack.c.h.b16 %v548
        %v1359 = vunpack.c.l.b16 %v549
        %v1360 = vunpack.c.h.b16 %v549
        %v1361 = vunpack.c.l.b16 %v550
        %v1362 = vunpack.c.h.b16 %v550
        %v1363 = vunpack.c.l.b16 %v551
        %v1364 = vunpack.c.h.b16 %v551
        %v1365 = vunpack.c.l.b16 %v552
        %v1366 = vunpack.c.h.b16 %v552
        %v1367 = vunpack.c.l.b16 %v553
        %v1368 = vunpack.c.h.b16 %v553
        %v1369 = vunpack.c.l.b16 %v554
        %v1370 = vunpack.c.h.b16 %v554
        %v1371 = vunpack.c.l.b16 %v555
        %v1372 = vunpack.c.h.b16 %v555
        %v1373 = vunpack.c.l.b16 %v556
        %v1374 = vunpack.c.h.b16 %v556
        %v1375 = vunpack.c.l.b16 %v557
        %v1376 = vunpack.c.h.b16 %v557
        %v1377 = vunpack.c.l.b16 %v558
        %v1378 = vunpack.c.h.b16 %v558
        %v1379 = vunpack.c.l.b16 %v559
        %v1380 = vunpack.c.h.b16 %v559
        %v1381 = vunpack.c.l.b16 %v560
        %v1382 = vunpack.c.h.b16 %v560
        %v1383 = vunpack.c.l.b16 %v561
        %v1384 = vunpack.c.h.b16 %v561
        %v1385 = vunpack.c.l.b16 %v562
        %v1386 = vunpack.c.h.b16 %v562
        %v1387 = vunpack.c.l.b16 %v563
        %v1388 = vunpack.c.h.b16 %v563
        %v1389 = vunpack.c.l.b16 %v564
        %v1390 = vunpack.c.h.b16 %v564
        %v1391 = vunpack.c.l.b16 %v565
        %v1392 = vunpack.c.h.b16 %v565
        %v1393 = vunpack.c.l.b16 %v566
        %v1394 = vunpack.c.h.b16 %v566
        %v1395 = vunpack.c.l.b16 %v567
        %v1396 = vunpack.c.h.b16 %v567
        %v1397 = vunpack.c.l.b16 %v568
        %v1398 = vunpack.c.h.b16 %v568
        %v1399 = vunpack.c.l.b16 %v569
        %v1400 = vunpack.c.h.b16 %v569
        %v1401 = vunpack.c.l.b16 %v570
        %v1402 = vunpack.c.h.b16 %v570
        %v1403 = vunpack.c.l.b16 %v571
        %v1404 = vunpack.c.h.b16 %v571
        %v1405 = vunpack.c.l.b16 %v572
        %v1406 = vunpack.c.h.b16 %v572
        %v1407 = vunpack.c.l.b16 %v573
        %v1408 = vunpack.c.h.b16 %v573
        %v1409 = vunpack.c.l.b16 %v574
        %v1410 = vunpack.c.h.b16 %v574
        %v1411 = vunpack.c.l.b16 %v575
        %v1412 = vunpack.c.h.b16 %v575
        %v1413 = vunpack.c.l.b16 %v576
        %v1414 = vunpack.c.h.b16 %v576
        %v1415 = vunpack.c.l.b16 %v577
        %v1416 = vunpack.c.h.b16 %v577
        %v1417 = vunpack.c.l.b16 %v578
        %v1418 = vunpack.c.h.b16 %v578
        %v1419 = vunpack.c.l.b16 %v579
        %v1420 = vunpack.c.h.b16 %v579
        %v1421 = vunpack.c.l.b16 %v580
        %v1422 = vunpack.c.h.b16 %v580
        %v1423 = vunpack.c.l.b16 %v581
        %v1424 = vunpack.c.h.b16 %v581
        %v1425 = vunpack.c.l.b16 %v582
        %v1426 = vunpack.c.h.b16 %v582
        %v1427 = vunpack.c.l.b16 %v583
        %v1428 = vunpack.c.h.b16 %v583
        %v1429 = vunpack.c.l.b16 %v584
        %v1430 = vunpack.c.h.b16 %v584
        %v1431 = vunpack.c.l.b16 %v585
        %v1432 = vunpack.c.h.b16 %v585
        %v1433 = vunpack.c.l.b16 %v586
        %v1434 = vunpack.c.h.b16 %v586
        %v1435 = vunpack.c.l.b16 %v587
        %v1436 = vunpack.c.h.b16 %v587
        %v1437 = vunpack.c.l.b16 %v588
        %v1438 = vunpack.c.h.b16 %v588
        %v1439 = vunpack.c.l.b16 %v589
        %v1440 = vunpack.c.h.b16 %v589
        %v1441 = vunpack.c.l.b16 %v590
        %v1442 = vunpack.c.h.b16 %v590
        %v1443 = vunpack.c.l.b16 %v591
        %v1444 = vunpack.c.h.b16 %v591
        %v1445 = vunpack.c.l.b16 %v592
        %v1446 = vunpack.c.h.b16 %v592
        %v1447 = vunpack.c.l.b16 %v593
        %v1448 = vunpack.c.h.b16 %v593
        %v1449 = vunpack.c.l.b16 %v594
        %v1450 = vunpack.c.h.b16 %v594
        %v1451 = vunpack.c.l.b16 %v595
        %v1452 = vunpack.c.h.b16 %v595
        %v1453 = vunpack.c.l.b16 %v596
        %v1454 = vunpack.c.h.b16 %v596
        %v1455 = vunpack.c.l.b16 %v597
        %v1456 = vunpack.c.h.b16 %v597
        %v1457 = vunpack.c.l.b16 %v598
        %v1458 = vunpack.c.h.b16 %v598
        %v1459 = vunpack.c.l.b16 %v599
        %v1460 = vunpack.c.h.b16 %v599
        %v1461 = vunpack.c.l.b16 %v600
        %v1462 = vunpack.c.h.b16 %v600
        %v1463 = vunpack.c.l.b16 %v601
        %v1464 = vunpack.c.h.b16 %v601
        %v1465 = vunpack.c.l.b16 %v602
        %v1466 = vunpack.c.h.b16 %v602
        %v1467 = vunpack.c.l.b16 %v603
        %v1468 = vunpack.c.h.b16 %v603
        %v1469 = vunpack.c.l.b16 %v604
        %v1470 = vunpack.c.h.b16 %v604
        %v1471 = vunpack.c.l.b16 %v605
        %v1472 = vunpack.c.h.b16 %v605
        %v1473 = vunpack.c.l.b16 %v606
        %v1474 = vunpack.c.h.b16 %v606
        %v1475 = vunpack.c.l.b16 %v607
        %v1476 = vunpack.c.h.b16 %v607
        %v1477 = vunpack.c.l.b16 %v608
        %v1478 = vunpack.c.h.b16 %v608
        %v1479 = vunpack.c.l.b16 %v609
        %v1480 = vunpack.c.h.b16 %v609
        %v1481 = vunpack.c.l.b16 %v610
        %v1482 = vunpack.c.h.b16 %v610
        %v1483 = vunpack.c.l.b16 %v611
        %v1484 = vunpack.c.h.b16 %v611
        %v1485 = vunpack.c.l.b16 %v612
        %v1486 = vunpack.c.h.b16 %v612
        %v1487 = vpack.c.b16 %v1111, %v1103
        %v1488 = vpack.c.b16 %v1112, %v1104
        %v1489 = vpack.c.b16 %v1113, %v1105
        %v1490 = vpack.c.b16 %v1114, %v1106
        %v1491 = vpack.c.b16 %v1115, %v1107
        %v1492 = vpack.c.b16 %v1116, %v1108
        %v1493 = vpack.c.b16 %v1117, %v1109
        %v1494 = vpack.c.b16 %v1118, %v1110
        %v1495 = vpack.c.b16 %v1127, %v1119
        %v1496 = vpack.c.b16 %v1128, %v1120
        %v1497 = vpack.c.b16 %v1129, %v1121
        %v1498 = vpack.c.b16 %v1130, %v1122
        %v1499 = vpack.c.b16 %v1131, %v1123
        %v1500 = vpack.c.b16 %v1132, %v1124
        %v1501 = vpack.c.b16 %v1133, %v1125
        %v1502 = vpack.c.b16 %v1134, %v1126
        %v1503 = vpack.c.b16 %v1143, %v1135
        %v1504 = vpack.c.b16 %v1144, %v1136
        %v1505 = vpack.c.b16 %v1145, %v1137
        %v1506 = vpack.c.b16 %v1146, %v1138
        %v1507 = vpack.c.b16 %v1147, %v1139
        %v1508 = vpack.c.b16 %v1148, %v1140
        %v1509 = vpack.c.b16 %v1149, %v1141
        %v1510 = vpack.c.b16 %v1150, %v1142
        %v1511 = vpack.c.b16 %v1159, %v1151
        %v1512 = vpack.c.b16 %v1160, %v1152
        %v1513 = vpack.c.b16 %v1161, %v1153
        %v1514 = vpack.c.b16 %v1162, %v1154
        %v1515 = vpack.c.b16 %v1163, %v1155
        %v1516 = vpack.c.b16 %v1164, %v1156
        %v1517 = vpack.c.b16 %v1165, %v1157
        %v1518 = vpack.c.b16 %v1166, %v1158
        %v1519 = vpack.c.b16 %v1175, %v1167
        %v1520 = vpack.c.b16 %v1176, %v1168
        %v1521 = vpack.c.b16 %v1177, %v1169
        %v1522 = vpack.c.b16 %v1178, %v1170
        %v1523 = vpack.c.b16 %v1179, %v1171
        %v1524 = vpack.c.b16 %v1180, %v1172
        %v1525 = vpack.c.b16 %v1181, %v1173
        %v1526 = vpack.c.b16 %v1182, %v1174
        %v1527 = vpack.c.b16 %v1191, %v1183
        %v1528 = vpack.c.b16 %v1192, %v1184
        %v1529 = vpack.c.b16 %v1193, %v1185
        %v1530 = vpack.c.b16 %v1194, %v1186
        %v1531 = vpack.c.b16 %v1195, %v1187
        %v1532 = vpack.c.b16 %v1196, %v1188
        %v1533 = vpack.c.b16 %v1197, %v1189
        %v1534 = vpack.c.b16 %v1198, %v1190
        %v1535 = vpack.c.b16 %v1207, %v1199
        %v1536 = vpack.c.b16 %v1208, %v1200
        %v1537 = vpack.c.b16 %v1209, %v1201
        %v1538 = vpack.c.b16 %v1210, %v1202
        %v1539 = vpack.c.b16 %v1211, %v1203
        %v1540 = vpack.c.b16 %v1212, %v1204
        %v1541 = vpack.c.b16 %v1213, %v1205
        %v1542 = vpack.c.b16 %v1214, %v1206
        %v1543 = vpack.c.b16 %v1223, %v1215
        %v1544 = vpack.c.b16 %v1224, %v1216
        %v1545 = vpack.c.b16 %v1225, %v1217
        %v1546 = vpack.c.b16 %v1226, %v1218
        %v1547 = vpack.c.b16 %v1227, %v1219
        %v1548 = vpack.c.b16 %v1228, %v1220
        %v1549 = vpack.c.b16 %v1229, %v1221
        %v1550 = vpack.c.b16 %v1230, %v1222
        %v1551 = vpack.c.b16 %v1239, %v1231
        %v1552 = vpack.c.b16 %v1240, %v1232
        %v1553 = vpack.c.b16 %v1241, %v1233
        %v1554 = vpack.c.b16 %v1242, %v1234
        %v1555 = vpack.c.b16 %v1243, %v1235
        %v1556 = vpack.c.b16 %v1244, %v1236
        %v1557 = vpack.c.b16 %v1245, %v1237
        %v1558 = vpack.c.b16 %v1246, %v1238
        %v1559 = vpack.c.b16 %v1255, %v1247
        %v1560 = vpack.c.b16 %v1256, %v1248
        %v1561 = vpack.c.b16 %v1257, %v1249
        %v1562 = vpack.c.b16 %v1258, %v1250
        %v1563 = vpack.c.b16 %v1259, %v1251
        %v1564 = vpack.c.b16 %v1260, %v1252
        %v1565 = vpack.c.b16 %v1261, %v1253
        %v1566 = vpack.c.b16 %v1262, %v1254
        %v1567 = vpack.c.b16 %v1271, %v1263
        %v1568 = vpack.c.b16 %v1272, %v1264
        %v1569 = vpack.c.b16 %v1273, %v1265
        %v1570 = vpack.c.b16 %v1274, %v1266
        %v1571 = vpack.c.b16 %v1275, %v1267
        %v1572 = vpack.c.b16 %v1276, %v1268
        %v1573 = vpack.c.b16 %v1277, %v1269
        %v1574 = vpack.c.b16 %v1278, %v1270
        %v1575 = vpack.c.b16 %v1287, %v1279
        %v1576 = vpack.c.b16 %v1288, %v1280
        %v1577 = vpack.c.b16 %v1289, %v1281
        %v1578 = vpack.c.b16 %v1290, %v1282
        %v1579 = vpack.c.b16 %v1291, %v1283
        %v1580 = vpack.c.b16 %v1292, %v1284
        %v1581 = vpack.c.b16 %v1293, %v1285
        %v1582 = vpack.c.b16 %v1294, %v1286
        %v1583 = vpack.c.b16 %v1303, %v1295
        %v1584 = vpack.c.b16 %v1304, %v1296
        %v1585 = vpack.c.b16 %v1305, %v1297
        %v1586 = vpack.c.b16 %v1306, %v1298
        %v1587 = vpack.c.b16 %v1307, %v1299
        %v1588 = vpack.c.b16 %v1308, %v1300
        %v1589 = vpack.c.b16 %v1309, %v1301
        %v1590 = vpack.c.b16 %v1310, %v1302
        %v1591 = vpack.c.b16 %v1319, %v1311
        %v1592 = vpack.c.b16 %v1320, %v1312
        %v1593 = vpack.c.b16 %v1321, %v1313
        %v1594 = vpack.c.b16 %v1322, %v1314
        %v1595 = vpack.c.b16 %v1323, %v1315
        %v1596 = vpack.c.b16 %v1324, %v1316
        %v1597 = vpack.c.b16 %v1325, %v1317
        %v1598 = vpack.c.b16 %v1326, %v1318
        %v1599 = vpack.c.b16 %v1335, %v1327
        %v1600 = vpack.c.b16 %v1336, %v1328
        %v1601 = vpack.c.b16 %v1337, %v1329
        %v1602 = vpack.c.b16 %v1338, %v1330
        %v1603 = vpack.c.b16 %v1339, %v1331
        %v1604 = vpack.c.b16 %v1340, %v1332
        %v1605 = vpack.c.b16 %v1341, %v1333
        %v1606 = vpack.c.b16 %v1342, %v1334
        %v1607 = vpack.c.b16 %v1351, %v1343
        %v1608 = vpack.c.b16 %v1352, %v1344
        %v1609 = vpack.c.b16 %v1353, %v1345
        %v1610 = vpack.c.b16 %v1354, %v1346
        %v1611 = vpack.c.b16 %v1355, %v1347
        %v1612 = vpack.c.b16 %v1356, %v1348
        %v1613 = vpack.c.b16 %v1357, %v1349
        %v1614 = vpack.c.b16 %v1358, %v1350
        %v1615 = vpack.c.b16 %v1367, %v1359
        %v1616 = vpack.c.b16 %v1368, %v1360
        %v1617 = vpack.c.b16 %v1369, %v1361
        %v1618 = vpack.c.b16 %v1370, %v1362
        %v1619 = vpack.c.b16 %v1371, %v1363
        %v1620 = vpack.c.b16 %v1372, %v1364
        %v1621 = vpack.c.b16 %v1373, %v1365
        %v1622 = vpack.c.b16 %v1374, %v1366
        %v1623 = vpack.c.b16 %v1383, %v1375
        %v1624 = vpack.c.b16 %v1384, %v1376
        %v1625 = vpack.c.b16 %v1385, %v1377
        %v1626 = vpack.c.b16 %v1386, %v1378
        %v1627 = vpack.c.b16 %v1387, %v1379
        %v1628 = vpack.c.b16 %v1388, %v1380
        %v1629 = vpack.c.b16 %v1389, %v1381
        %v1630 = vpack.c.b16 %v1390, %v1382
        %v1631 = vpack.c.b16 %v1399, %v1391
        %v1632 = vpack.c.b16 %v1400, %v1392
        %v1633 = vpack.c.b16 %v1401, %v1393
        %v1634 = vpack.c.b16 %v1402, %v1394
        %v1635 = vpack.c.b16 %v1403, %v1395
        %v1636 = vpack.c.b16 %v1404, %v1396
        %v1637 = vpack.c.b16 %v1405, %v1397
        %v1638 = vpack.c.b16 %v1406, %v1398
        %v1639 = vpack.c.b16 %v1415, %v1407
        %v1640 = vpack.c.b16 %v1416, %v1408
        %v1641 = vpack.c.b16 %v1417, %v1409
        %v1642 = vpack.c.b16 %v1418, %v1410
        %v1643 = vpack.c.b16 %v1419, %v1411
        %v1644 = vpack.c.b16 %v1420, %v1412
        %v1645 = vpack.c.b16 %v1421, %v1413
        %v1646 = vpack.c.b16 %v1422, %v1414
        %v1647 = vpack.c.b16 %v1431, %v1423
        %v1648 = vpack.c.b16 %v1432, %v1424
        %v1649 = vpack.c.b16 %v1433, %v1425
        %v1650 = vpack.c.b16 %v1434, %v1426
        %v1651 = vpack.c.b16 %v1435, %v1427
        %v1652 = vpack.c.b16 %v1436, %v1428
        %v1653 = vpack.c.b16 %v1437, %v1429
        %v1654 = vpack.c.b16 %v1438, %v1430
        %v1655 = vpack.c.b16 %v1447, %v1439
        %v1656 = vpack.c.b16 %v1448, %v1440
        %v1657 = vpack.c.b16 %v1449, %v1441
        %v1658 = vpack.c.b16 %v1450, %v1442
        %v1659 = vpack.c.b16 %v1451, %v1443
        %v1660 = vpack.c.b16 %v1452, %v1444
        %v1661 = vpack.c.b16 %v1453, %v1445
        %v1662 = vpack.c.b16 %v1454, %v1446
        %v1663 = vpack.c.b16 %v1463, %v1455
        %v1664 = vpack.c.b16 %v1464, %v1456
        %v1665 = vpack.c.b16 %v1465, %v1457
        %v1666 = vpack.c.b16 %v1466, %v1458
        %v1667 = vpack.c.b16 %v1467, %v1459
        %v1668 = vpack.c.b16 %v1468, %v1460
        %v1669 = vpack.c.b16 %v1469, %v1461
        %v1670 = vpack.c.b16 %v1470, %v1462
        %v1671 = vpack.c.b16 %v1479, %v1471
        %v1672 = vpack.c.b16 %v1480, %v1472
        %v1673 = vpack.c.b16 %v1481, %v1473
        %v1674 = vpack.c.b16 %v1482, %v1474
        %v1675 = vpack.c.b16 %v1483, %v1475
        %v1676 = vpack.c.b16 %v1484, %v1476
        %v1677 = vpack.c.b16 %v1485, %v1477
        %v1678 = vpack.c.b16 %v1486, %v1478
        %1871 = vmatprep.subr.bf16.mxu0 %v1488
        %1872 = vmatpush1.bf16.msra.mxu0 %v1487
        %1873 = vmatprep.subr.bf16.mxu0 %v1496
        %1874 = vmatpush1.bf16.msra.mxu0 %v1495
        %1875 = vmatprep.subr.bf16.mxu0 %v1504
        %1876 = vmatpush1.bf16.msra.mxu0 %v1503
        %1877 = vmatprep.subr.bf16.mxu0 %v1512
        %1878 = vmatpush1.bf16.msra.mxu0 %v1511
        %1879 = vmatprep.subr.bf16.mxu0 %v1520
        %1880 = vmatpush1.bf16.msra.mxu0 %v1519
        %1881 = vmatprep.subr.bf16.mxu0 %v1528
        %1882 = vmatpush1.bf16.msra.mxu0 %v1527
        %1883 = vmatprep.subr.bf16.mxu0 %v1536
        %1884 = vmatpush1.bf16.msra.mxu0 %v1535
        %1885 = vmatprep.subr.bf16.mxu0 %v1544
        %1886 = vmatpush1.bf16.msra.mxu0 %v1543
        %1887 = vmatprep.subr.bf16.mxu0 %v1552
        %1888 = vmatpush1.bf16.msra.mxu0 %v1551
        %1889 = vmatprep.subr.bf16.mxu0 %v1560
        %1890 = vmatpush1.bf16.msra.mxu0 %v1559
        %1891 = vmatprep.subr.bf16.mxu0 %v1568
        %1892 = vmatpush1.bf16.msra.mxu0 %v1567
        %1893 = vmatprep.subr.bf16.mxu0 %v1576
        %1894 = vmatpush1.bf16.msra.mxu0 %v1575
        %1895 = vmatprep.subr.bf16.mxu0 %v1584
        %1896 = vmatpush1.bf16.msra.mxu0 %v1583
        %1897 = vmatprep.subr.bf16.mxu0 %v1592
        %1898 = vmatpush1.bf16.msra.mxu0 %v1591
        %1899 = vmatprep.subr.bf16.mxu0 %v1600
        %1900 = vmatpush1.bf16.msra.mxu0 %v1599
        %1901 = vmatprep.subr.bf16.mxu0 %v1608
        %1902 = vmatpush1.bf16.msra.mxu0 %v1607
        %1903 = vmatprep.mubr.bf16.mxu0 %v816
        %1904 = vmatmul.mubr.bf16.gmra.mrb[0].mxu0 %v815
        %v1905 = vpop.f32.mrb[0].mxu0
        %v1906 = vadd.f32 %v618, %v1905
        %v1907 = vpop.f32.mrb[0].mxu0
        %v1908 = vadd.f32 %v622, %v1907
        %v1909 = vpop.f32.mrb[0].mxu0
        %v1910 = vadd.f32 %v618, %v1909
        %v1911 = vpop.f32.mrb[0].mxu0
        %v1912 = vadd.f32 %v622, %v1911
        %1913 = vmatprep.mubr.bf16.mxu0 %v819
        %1914 = vmatmul.mubr.bf16.gmra.mrb[0].mxu0 %v818
        %v1915 = vpop.f32.mrb[0].mxu0
        %v1916 = vadd.f32 %v618, %v1915
        %v1917 = vpop.f32.mrb[0].mxu0
        %v1918 = vadd.f32 %v622, %v1917
        %v1919 = vpop.f32.mrb[0].mxu0
        %v1920 = vadd.f32 %v618, %v1919
        %v1921 = vpop.f32.mrb[0].mxu0
        %v1922 = vadd.f32 %v622, %v1921
        %1923 = vmatprep.mubr.bf16.mxu0 %v822
        %1924 = vmatmul.mubr.bf16.gmra.mrb[0].mxu0 %v821
        %v1925 = vpop.f32.mrb[0].mxu0
        %v1926 = vadd.f32 %v618, %v1925
        %v1927 = vpop.f32.mrb[0].mxu0
        %v1928 = vadd.f32 %v622, %v1927
        %v1929 = vpop.f32.mrb[0].mxu0
        %v1930 = vadd.f32 %v618, %v1929
        %v1931 = vpop.f32.mrb[0].mxu0
        %v1932 = vadd.f32 %v622, %v1931
        %1933 = vmatprep.mubr.bf16.mxu0 %v825
        %1934 = vmatmul.mubr.bf16.gmra.mrb[0].mxu0 %v824
        %v1935 = vpop.f32.mrb[0].mxu0
        %v1936 = vadd.f32 %v618, %v1935
        %v1937 = vpop.f32.mrb[0].mxu0
        %v1938 = vadd.f32 %v622, %v1937
        %v1939 = vpop.f32.mrb[0].mxu0
        %v1940 = vadd.f32 %v618, %v1939
        %v1941 = vpop.f32.mrb[0].mxu0
        %v1942 = vadd.f32 %v622, %v1941
        %1943 = vmatprep.mubr.bf16.mxu0 %v828
        %1944 = vmatmul.mubr.bf16.gmra.mrb[0].mxu0 %v827
        %v1945 = vpop.f32.mrb[0].mxu0
        %v1946 = vadd.f32 %v618, %v1945
        %v1947 = vpop.f32.mrb[0].mxu0
        %v1948 = vadd.f32 %v622, %v1947
        %v1949 = vpop.f32.mrb[0].mxu0
        %v1950 = vadd.f32 %v618, %v1949
        %v1951 = vpop.f32.mrb[0].mxu0
        %v1952 = vadd.f32 %v622, %v1951
        %1953 = vmatprep.mubr.bf16.mxu0 %v831
        %1954 = vmatmul.mubr.bf16.gmra.mrb[0].mxu0 %v830
        %v1955 = vpop.f32.mrb[0].mxu0
        %v1956 = vadd.f32 %v618, %v1955
        %v1957 = vpop.f32.mrb[0].mxu0
        %v1958 = vadd.f32 %v622, %v1957
        %v1959 = vpop.f32.mrb[0].mxu0
        %v1960 = vadd.f32 %v618, %v1959
        %v1961 = vpop.f32.mrb[0].mxu0
        %v1962 = vadd.f32 %v622, %v1961
        %1963 = vmatprep.mubr.bf16.mxu0 %v834
        %1964 = vmatmul.mubr.bf16.gmra.mrb[0].mxu0 %v833
        %v1965 = vpop.f32.mrb[0].mxu0
        %v1966 = vadd.f32 %v618, %v1965
        %v1967 = vpop.f32.mrb[0].mxu0
        %v1968 = vadd.f32 %v622, %v1967
        %v1969 = vpop.f32.mrb[0].mxu0
        %v1970 = vadd.f32 %v618, %v1969
        %v1971 = vpop.f32.mrb[0].mxu0
        %v1972 = vadd.f32 %v622, %v1971
        %1973 = vmatprep.mubr.bf16.mxu0 %v837
        %1974 = vmatmul.mubr.bf16.gmra.mrb[0].mxu0 %v836
        %v1975 = vpop.f32.mrb[0].mxu0
        %v1976 = vadd.f32 %v618, %v1975
        %v1977 = vpop.f32.mrb[0].mxu0
        %v1978 = vadd.f32 %v622, %v1977
        %v1979 = vpop.f32.mrb[0].mxu0
        %v1980 = vadd.f32 %v618, %v1979
        %v1981 = vpop.f32.mrb[0].mxu0
        %v1982 = vadd.f32 %v622, %v1981
        %1983 = vmatprep.mubr.bf16.mxu0 %v840
        %1984 = vmatmul.mubr.bf16.gmra.mrb[0].mxu0 %v839
        %v1985 = vpop.f32.mrb[0].mxu0
        %v1986 = vadd.f32 %v618, %v1985
        %v1987 = vpop.f32.mrb[0].mxu0
        %v1988 = vadd.f32 %v622, %v1987
        %v1989 = vpop.f32.mrb[0].mxu0
        %v1990 = vadd.f32 %v618, %v1989
        %v1991 = vpop.f32.mrb[0].mxu0
        %v1992 = vadd.f32 %v622, %v1991
        %1993 = vmatprep.mubr.bf16.mxu0 %v843
        %1994 = vmatmul.mubr.bf16.gmra.mrb[0].mxu0 %v842
        %v1995 = vpop.f32.mrb[0].mxu0
        %v1996 = vadd.f32 %v618, %v1995
        %v1997 = vpop.f32.mrb[0].mxu0
        %v1998 = vadd.f32 %v622, %v1997
        %v1999 = vpop.f32.mrb[0].mxu0
        %v2000 = vadd.f32 %v618, %v1999
        %v2001 = vpop.f32.mrb[0].mxu0
        %v2002 = vadd.f32 %v622, %v2001
        %2003 = vmatprep.mubr.bf16.mxu0 %v846
        %2004 = vmatmul.mubr.bf16.gmra.mrb[0].mxu0 %v845
        %v2005 = vpop.f32.mrb[0].mxu0
        %v2006 = vadd.f32 %v618, %v2005
        %v2007 = vpop.f32.mrb[0].mxu0
        %v2008 = vadd.f32 %v622, %v2007
        %v2009 = vpop.f32.mrb[0].mxu0
        %v2010 = vadd.f32 %v618, %v2009
        %v2011 = vpop.f32.mrb[0].mxu0
        %v2012 = vadd.f32 %v622, %v2011
        %2013 = vmatprep.mubr.bf16.mxu0 %v849
        %2014 = vmatmul.mubr.bf16.gmra.mrb[0].mxu0 %v848
        %v2015 = vpop.f32.mrb[0].mxu0
        %v2016 = vadd.f32 %v618, %v2015
        %v2017 = vpop.f32.mrb[0].mxu0
        %v2018 = vadd.f32 %v622, %v2017
        %v2019 = vpop.f32.mrb[0].mxu0
        %v2020 = vadd.f32 %v618, %v2019
        %v2021 = vpop.f32.mrb[0].mxu0
        %v2022 = vadd.f32 %v622, %v2021
        %2023 = vmatprep.mubr.bf16.mxu0 %v852
        %2024 = vmatmul.mubr.bf16.gmra.mrb[0].mxu0 %v851
        %v2025 = vpop.f32.mrb[0].mxu0
        %v2026 = vadd.f32 %v618, %v2025
        %v2027 = vpop.f32.mrb[0].mxu0
        %v2028 = vadd.f32 %v622, %v2027
        %v2029 = vpop.f32.mrb[0].mxu0
        %v2030 = vadd.f32 %v618, %v2029
        %v2031 = vpop.f32.mrb[0].mxu0
        %v2032 = vadd.f32 %v622, %v2031
        %2033 = vmatprep.mubr.bf16.mxu0 %v855
        %2034 = vmatmul.mubr.bf16.gmra.mrb[0].mxu0 %v854
        %v2035 = vpop.f32.mrb[0].mxu0
        %v2036 = vadd.f32 %v618, %v2035
        %v2037 = vpop.f32.mrb[0].mxu0
        %v2038 = vadd.f32 %v622, %v2037
        %v2039 = vpop.f32.mrb[0].mxu0
        %v2040 = vadd.f32 %v618, %v2039
        %v2041 = vpop.f32.mrb[0].mxu0
        %v2042 = vadd.f32 %v622, %v2041
        %2043 = vmatprep.mubr.bf16.mxu0 %v858
        %2044 = vmatmul.mubr.bf16.gmra.mrb[0].mxu0 %v857
        %v2045 = vpop.f32.mrb[0].mxu0
        %v2046 = vadd.f32 %v618, %v2045
        %v2047 = vpop.f32.mrb[0].mxu0
        %v2048 = vadd.f32 %v622, %v2047
        %v2049 = vpop.f32.mrb[0].mxu0
        %v2050 = vadd.f32 %v618, %v2049
        %v2051 = vpop.f32.mrb[0].mxu0
        %v2052 = vadd.f32 %v622, %v2051
        %2053 = vmatprep.mubr.bf16.mxu0 %v861
        %2054 = vmatmul.mubr.bf16.gmra.mrb[0].mxu0 %v860
        %v2055 = vpop.f32.mrb[0].mxu0
        %v2056 = vadd.f32 %v618, %v2055
        %v2057 = vpop.f32.mrb[0].mxu0
        %v2058 = vadd.f32 %v622, %v2057
        %v2059 = vpop.f32.mrb[0].mxu0
        %v2060 = vadd.f32 %v618, %v2059
        %v2061 = vpop.f32.mrb[0].mxu0
        %v2062 = vadd.f32 %v622, %v2061
        %2063 = vdwg.mxu0
        %2064 = vmatprep.subr.bf16.mxu0 %v1616
        %2065 = vmatpush1.bf16.msra.mxu0 %v1615
        %2066 = vmatprep.subr.bf16.mxu0 %v1624
        %2067 = vmatpush1.bf16.msra.mxu0 %v1623
        %2068 = vmatprep.subr.bf16.mxu0 %v1632
        %2069 = vmatpush1.bf16.msra.mxu0 %v1631
        %2070 = vmatprep.subr.bf16.mxu0 %v1640
        %2071 = vmatpush1.bf16.msra.mxu0 %v1639
        %2072 = vmatprep.subr.bf16.mxu0 %v1648
        %2073 = vmatpush1.bf16.msra.mxu0 %v1647
        %2074 = vmatprep.subr.bf16.mxu0 %v1656
        %2075 = vmatpush1.bf16.msra.mxu0 %v1655
        %2076 = vmatprep.subr.bf16.mxu0 %v1664
        %2077 = vmatpush1.bf16.msra.mxu0 %v1663
        %2078 = vmatprep.subr.bf16.mxu0 %v1672
        %2079 = vmatpush1.bf16.msra.mxu0 %v1671
        %2080 = vmatprep.subr.bf16.mxu0 0
        %2081 = vmatpush1.bf16.msra.mxu0 0
        %2082 = vmatprep.subr.bf16.mxu0 0
        %2083 = vmatpush1.bf16.msra.mxu0 0
        %2084 = vmatprep.subr.bf16.mxu0 0
        %2085 = vmatpush1.bf16.msra.mxu0 0
        %2086 = vmatprep.subr.bf16.mxu0 0
        %2087 = vmatpush1.bf16.msra.mxu0 0
        %2088 = vmatprep.subr.bf16.mxu0 0
        %2089 = vmatpush1.bf16.msra.mxu0 0
        %2090 = vmatprep.subr.bf16.mxu0 0
        %2091 = vmatpush1.bf16.msra.mxu0 0
        %2092 = vmatprep.subr.bf16.mxu0 0
        %2093 = vmatpush1.bf16.msra.mxu0 0
        %2094 = vmatprep.subr.bf16.mxu0 0
        %2095 = vmatpush1.bf16.msra.mxu0 0
        %2096 = vmatprep.mubr.bf16.mxu0 0
        %2097 = vmatmul.mubr.bf16.gmra.mrb[0].mxu0 %v817
        %v2098 = vpop.f32.mrb[0].mxu0
        %v2099 = vadd.f32 %v1906, %v2098
        %v2100 = vpop.f32.mrb[0].mxu0
        %v2101 = vadd.f32 %v1908, %v2100
        %v2102 = vpop.f32.mrb[0].mxu0
        %v2103 = vadd.f32 %v1910, %v2102
        %v2104 = vpop.f32.mrb[0].mxu0
        %v2105 = vadd.f32 %v1912, %v2104
        %2106 = vmatprep.mubr.bf16.mxu0 0
        %2107 = vmatmul.mubr.bf16.gmra.mrb[0].mxu0 %v820
        %v2108 = vpop.f32.mrb[0].mxu0
        %v2109 = vadd.f32 %v1916, %v2108
        %v2110 = vpop.f32.mrb[0].mxu0
        %v2111 = vadd.f32 %v1918, %v2110
        %v2112 = vpop.f32.mrb[0].mxu0
        %v2113 = vadd.f32 %v1920, %v2112
        %v2114 = vpop.f32.mrb[0].mxu0
        %v2115 = vadd.f32 %v1922, %v2114
        %2116 = vmatprep.mubr.bf16.mxu0 0
        %2117 = vmatmul.mubr.bf16.gmra.mrb[0].mxu0 %v823
        %v2118 = vpop.f32.mrb[0].mxu0
        %v2119 = vadd.f32 %v1926, %v2118
        %v2120 = vpop.f32.mrb[0].mxu0
        %v2121 = vadd.f32 %v1928, %v2120
        %v2122 = vpop.f32.mrb[0].mxu0
        %v2123 = vadd.f32 %v1930, %v2122
        %v2124 = vpop.f32.mrb[0].mxu0
        %v2125 = vadd.f32 %v1932, %v2124
        %2126 = vmatprep.mubr.bf16.mxu0 0
        %2127 = vmatmul.mubr.bf16.gmra.mrb[0].mxu0 %v826
        %v2128 = vpop.f32.mrb[0].mxu0
        %v2129 = vadd.f32 %v1936, %v2128
        %v2130 = vpop.f32.mrb[0].mxu0
        %v2131 = vadd.f32 %v1938, %v2130
        %v2132 = vpop.f32.mrb[0].mxu0
        %v2133 = vadd.f32 %v1940, %v2132
        %v2134 = vpop.f32.mrb[0].mxu0
        %v2135 = vadd.f32 %v1942, %v2134
        %2136 = vmatprep.mubr.bf16.mxu0 0
        %2137 = vmatmul.mubr.bf16.gmra.mrb[0].mxu0 %v829
        %v2138 = vpop.f32.mrb[0].mxu0
        %v2139 = vadd.f32 %v1946, %v2138
        %v2140 = vpop.f32.mrb[0].mxu0
        %v2141 = vadd.f32 %v1948, %v2140
        %v2142 = vpop.f32.mrb[0].mxu0
        %v2143 = vadd.f32 %v1950, %v2142
        %v2144 = vpop.f32.mrb[0].mxu0
        %v2145 = vadd.f32 %v1952, %v2144
        %2146 = vmatprep.mubr.bf16.mxu0 0
        %2147 = vmatmul.mubr.bf16.gmra.mrb[0].mxu0 %v832
        %v2148 = vpop.f32.mrb[0].mxu0
        %v2149 = vadd.f32 %v1956, %v2148
        %v2150 = vpop.f32.mrb[0].mxu0
        %v2151 = vadd.f32 %v1958, %v2150
        %v2152 = vpop.f32.mrb[0].mxu0
        %v2153 = vadd.f32 %v1960, %v2152
        %v2154 = vpop.f32.mrb[0].mxu0
        %v2155 = vadd.f32 %v1962, %v2154
        %2156 = vmatprep.mubr.bf16.mxu0 0
        %2157 = vmatmul.mubr.bf16.gmra.mrb[0].mxu0 %v835
        %v2158 = vpop.f32.mrb[0].mxu0
        %v2159 = vadd.f32 %v1966, %v2158
        %v2160 = vpop.f32.mrb[0].mxu0
        %v2161 = vadd.f32 %v1968, %v2160
        %v2162 = vpop.f32.mrb[0].mxu0
        %v2163 = vadd.f32 %v1970, %v2162
        %v2164 = vpop.f32.mrb[0].mxu0
        %v2165 = vadd.f32 %v1972, %v2164
        %2166 = vmatprep.mubr.bf16.mxu0 0
        %2167 = vmatmul.mubr.bf16.gmra.mrb[0].mxu0 %v838
        %v2168 = vpop.f32.mrb[0].mxu0
        %v2169 = vadd.f32 %v1976, %v2168
        %v2170 = vpop.f32.mrb[0].mxu0
        %v2171 = vadd.f32 %v1978, %v2170
        %v2172 = vpop.f32.mrb[0].mxu0
        %v2173 = vadd.f32 %v1980, %v2172
        %v2174 = vpop.f32.mrb[0].mxu0
        %v2175 = vadd.f32 %v1982, %v2174
        %2176 = vmatprep.mubr.bf16.mxu0 0
        %2177 = vmatmul.mubr.bf16.gmra.mrb[0].mxu0 %v841
        %v2178 = vpop.f32.mrb[0].mxu0
        %v2179 = vadd.f32 %v1986, %v2178
        %v2180 = vpop.f32.mrb[0].mxu0
        %v2181 = vadd.f32 %v1988, %v2180
        %v2182 = vpop.f32.mrb[0].mxu0
        %v2183 = vadd.f32 %v1990, %v2182
        %v2184 = vpop.f32.mrb[0].mxu0
        %v2185 = vadd.f32 %v1992, %v2184
        %2186 = vmatprep.mubr.bf16.mxu0 0
        %2187 = vmatmul.mubr.bf16.gmra.mrb[0].mxu0 %v844
        %v2188 = vpop.f32.mrb[0].mxu0
        %v2189 = vadd.f32 %v1996, %v2188
        %v2190 = vpop.f32.mrb[0].mxu0
        %v2191 = vadd.f32 %v1998, %v2190
        %v2192 = vpop.f32.mrb[0].mxu0
        %v2193 = vadd.f32 %v2000, %v2192
        %v2194 = vpop.f32.mrb[0].mxu0
        %v2195 = vadd.f32 %v2002, %v2194
        %2196 = vmatprep.mubr.bf16.mxu0 0
        %2197 = vmatmul.mubr.bf16.gmra.mrb[0].mxu0 %v847
        %v2198 = vpop.f32.mrb[0].mxu0
        %v2199 = vadd.f32 %v2006, %v2198
        %v2200 = vpop.f32.mrb[0].mxu0
        %v2201 = vadd.f32 %v2008, %v2200
        %v2202 = vpop.f32.mrb[0].mxu0
        %v2203 = vadd.f32 %v2010, %v2202
        %v2204 = vpop.f32.mrb[0].mxu0
        %v2205 = vadd.f32 %v2012, %v2204
        %2206 = vmatprep.mubr.bf16.mxu0 0
        %2207 = vmatmul.mubr.bf16.gmra.mrb[0].mxu0 %v850
        %v2208 = vpop.f32.mrb[0].mxu0
        %v2209 = vadd.f32 %v2016, %v2208
        %v2210 = vpop.f32.mrb[0].mxu0
        %v2211 = vadd.f32 %v2018, %v2210
        %v2212 = vpop.f32.mrb[0].mxu0
        %v2213 = vadd.f32 %v2020, %v2212
        %v2214 = vpop.f32.mrb[0].mxu0
        %v2215 = vadd.f32 %v2022, %v2214
        %2216 = vmatprep.mubr.bf16.mxu0 0
        %2217 = vmatmul.mubr.bf16.gmra.mrb[0].mxu0 %v853
        %v2218 = vpop.f32.mrb[0].mxu0
        %v2219 = vadd.f32 %v2026, %v2218
        %v2220 = vpop.f32.mrb[0].mxu0
        %v2221 = vadd.f32 %v2028, %v2220
        %v2222 = vpop.f32.mrb[0].mxu0
        %v2223 = vadd.f32 %v2030, %v2222
        %v2224 = vpop.f32.mrb[0].mxu0
        %v2225 = vadd.f32 %v2032, %v2224
        %2226 = vmatprep.mubr.bf16.mxu0 0
        %2227 = vmatmul.mubr.bf16.gmra.mrb[0].mxu0 %v856
        %v2228 = vpop.f32.mrb[0].mxu0
        %v2229 = vadd.f32 %v2036, %v2228
        %v2230 = vpop.f32.mrb[0].mxu0
        %v2231 = vadd.f32 %v2038, %v2230
        %v2232 = vpop.f32.mrb[0].mxu0
        %v2233 = vadd.f32 %v2040, %v2232
        %v2234 = vpop.f32.mrb[0].mxu0
        %v2235 = vadd.f32 %v2042, %v2234
        %2236 = vmatprep.mubr.bf16.mxu0 0
        %2237 = vmatmul.mubr.bf16.gmra.mrb[0].mxu0 %v859
        %v2238 = vpop.f32.mrb[0].mxu0
        %v2239 = vadd.f32 %v2046, %v2238
        %v2240 = vpop.f32.mrb[0].mxu0
        %v2241 = vadd.f32 %v2048, %v2240
        %v2242 = vpop.f32.mrb[0].mxu0
        %v2243 = vadd.f32 %v2050, %v2242
        %v2244 = vpop.f32.mrb[0].mxu0
        %v2245 = vadd.f32 %v2052, %v2244
        %2246 = vmatprep.mubr.bf16.mxu0 0
        %2247 = vmatmul.mubr.bf16.gmra.mrb[0].mxu0 %v862
        %v2248 = vpop.f32.mrb[0].mxu0
        %v2249 = vadd.f32 %v2056, %v2248
        %v2250 = vpop.f32.mrb[0].mxu0
        %v2251 = vadd.f32 %v2058, %v2250
        %v2252 = vpop.f32.mrb[0].mxu0
        %v2253 = vadd.f32 %v2060, %v2252
        %v2254 = vpop.f32.mrb[0].mxu0
        %v2255 = vadd.f32 %v2062, %v2254
        %2256 = vdwg.mxu0
        %2257 = vmatprep.subr.bf16.mxu0 %v1490
        %2258 = vmatpush1.bf16.msra.mxu0 %v1489
        %2259 = vmatprep.subr.bf16.mxu0 %v1498
        %2260 = vmatpush1.bf16.msra.mxu0 %v1497
        %2261 = vmatprep.subr.bf16.mxu0 %v1506
        %2262 = vmatpush1.bf16.msra.mxu0 %v1505
        %2263 = vmatprep.subr.bf16.mxu0 %v1514
        %2264 = vmatpush1.bf16.msra.mxu0 %v1513
        %2265 = vmatprep.subr.bf16.mxu0 %v1522
        %2266 = vmatpush1.bf16.msra.mxu0 %v1521
        %2267 = vmatprep.subr.bf16.mxu0 %v1530
        %2268 = vmatpush1.bf16.msra.mxu0 %v1529
        %2269 = vmatprep.subr.bf16.mxu0 %v1538
        %2270 = vmatpush1.bf16.msra.mxu0 %v1537
        %2271 = vmatprep.subr.bf16.mxu0 %v1546
        %2272 = vmatpush1.bf16.msra.mxu0 %v1545
        %2273 = vmatprep.subr.bf16.mxu0 %v1554
        %2274 = vmatpush1.bf16.msra.mxu0 %v1553
        %2275 = vmatprep.subr.bf16.mxu0 %v1562
        %2276 = vmatpush1.bf16.msra.mxu0 %v1561
        %2277 = vmatprep.subr.bf16.mxu0 %v1570
        %2278 = vmatpush1.bf16.msra.mxu0 %v1569
        %2279 = vmatprep.subr.bf16.mxu0 %v1578
        %2280 = vmatpush1.bf16.msra.mxu0 %v1577
        %2281 = vmatprep.subr.bf16.mxu0 %v1586
        %2282 = vmatpush1.bf16.msra.mxu0 %v1585
        %2283 = vmatprep.subr.bf16.mxu0 %v1594
        %2284 = vmatpush1.bf16.msra.mxu0 %v1593
        %2285 = vmatprep.subr.bf16.mxu0 %v1602
        %2286 = vmatpush1.bf16.msra.mxu0 %v1601
        %2287 = vmatprep.subr.bf16.mxu0 %v1610
        %2288 = vmatpush1.bf16.msra.mxu0 %v1609
        %2289 = vmatprep.mubr.bf16.mxu0 %v816
        %2290 = vmatmul.mubr.bf16.gmra.mrb[0].mxu0 %v815
        %v2291 = vpop.f32.mrb[0].mxu0
        %v2292 = vadd.f32 %v626, %v2291
        %v2293 = vpop.f32.mrb[0].mxu0
        %v2294 = vadd.f32 %v630, %v2293
        %v2295 = vpop.f32.mrb[0].mxu0
        %v2296 = vadd.f32 %v626, %v2295
        %v2297 = vpop.f32.mrb[0].mxu0
        %v2298 = vadd.f32 %v630, %v2297
        %2299 = vmatprep.mubr.bf16.mxu0 %v819
        %2300 = vmatmul.mubr.bf16.gmra.mrb[0].mxu0 %v818
        %v2301 = vpop.f32.mrb[0].mxu0
        %v2302 = vadd.f32 %v626, %v2301
        %v2303 = vpop.f32.mrb[0].mxu0
        %v2304 = vadd.f32 %v630, %v2303
        %v2305 = vpop.f32.mrb[0].mxu0
        %v2306 = vadd.f32 %v626, %v2305
        %v2307 = vpop.f32.mrb[0].mxu0
        %v2308 = vadd.f32 %v630, %v2307
        %2309 = vmatprep.mubr.bf16.mxu0 %v822
        %2310 = vmatmul.mubr.bf16.gmra.mrb[0].mxu0 %v821
        %v2311 = vpop.f32.mrb[0].mxu0
        %v2312 = vadd.f32 %v626, %v2311
        %v2313 = vpop.f32.mrb[0].mxu0
        %v2314 = vadd.f32 %v630, %v2313
        %v2315 = vpop.f32.mrb[0].mxu0
        %v2316 = vadd.f32 %v626, %v2315
        %v2317 = vpop.f32.mrb[0].mxu0
        %v2318 = vadd.f32 %v630, %v2317
        %2319 = vmatprep.mubr.bf16.mxu0 %v825
        %2320 = vmatmul.mubr.bf16.gmra.mrb[0].mxu0 %v824
        %v2321 = vpop.f32.mrb[0].mxu0
        %v2322 = vadd.f32 %v626, %v2321
        %v2323 = vpop.f32.mrb[0].mxu0
        %v2324 = vadd.f32 %v630, %v2323
        %v2325 = vpop.f32.mrb[0].mxu0
        %v2326 = vadd.f32 %v626, %v2325
        %v2327 = vpop.f32.mrb[0].mxu0
        %v2328 = vadd.f32 %v630, %v2327
        %2329 = vmatprep.mubr.bf16.mxu0 %v828
        %2330 = vmatmul.mubr.bf16.gmra.mrb[0].mxu0 %v827
        %v2331 = vpop.f32.mrb[0].mxu0
        %v2332 = vadd.f32 %v626, %v2331
        %v2333 = vpop.f32.mrb[0].mxu0
        %v2334 = vadd.f32 %v630, %v2333
        %v2335 = vpop.f32.mrb[0].mxu0
        %v2336 = vadd.f32 %v626, %v2335
        %v2337 = vpop.f32.mrb[0].mxu0
        %v2338 = vadd.f32 %v630, %v2337
        %2339 = vmatprep.mubr.bf16.mxu0 %v831
        %2340 = vmatmul.mubr.bf16.gmra.mrb[0].mxu0 %v830
        %v2341 = vpop.f32.mrb[0].mxu0
        %v2342 = vadd.f32 %v626, %v2341
        %v2343 = vpop.f32.mrb[0].mxu0
        %v2344 = vadd.f32 %v630, %v2343
        %v2345 = vpop.f32.mrb[0].mxu0
        %v2346 = vadd.f32 %v626, %v2345
        %v2347 = vpop.f32.mrb[0].mxu0
        %v2348 = vadd.f32 %v630, %v2347
        %2349 = vmatprep.mubr.bf16.mxu0 %v834
        %2350 = vmatmul.mubr.bf16.gmra.mrb[0].mxu0 %v833
        %v2351 = vpop.f32.mrb[0].mxu0
        %v2352 = vadd.f32 %v626, %v2351
        %v2353 = vpop.f32.mrb[0].mxu0
        %v2354 = vadd.f32 %v630, %v2353
        %v2355 = vpop.f32.mrb[0].mxu0
        %v2356 = vadd.f32 %v626, %v2355
        %v2357 = vpop.f32.mrb[0].mxu0
        %v2358 = vadd.f32 %v630, %v2357
        %2359 = vmatprep.mubr.bf16.mxu0 %v837
        %2360 = vmatmul.mubr.bf16.gmra.mrb[0].mxu0 %v836
        %v2361 = vpop.f32.mrb[0].mxu0
        %v2362 = vadd.f32 %v626, %v2361
        %v2363 = vpop.f32.mrb[0].mxu0
        %v2364 = vadd.f32 %v630, %v2363
        %v2365 = vpop.f32.mrb[0].mxu0
        %v2366 = vadd.f32 %v626, %v2365
        %v2367 = vpop.f32.mrb[0].mxu0
        %v2368 = vadd.f32 %v630, %v2367
        %2369 = vmatprep.mubr.bf16.mxu0 %v840
        %2370 = vmatmul.mubr.bf16.gmra.mrb[0].mxu0 %v839
        %v2371 = vpop.f32.mrb[0].mxu0
        %v2372 = vadd.f32 %v626, %v2371
        %v2373 = vpop.f32.mrb[0].mxu0
        %v2374 = vadd.f32 %v630, %v2373
        %v2375 = vpop.f32.mrb[0].mxu0
        %v2376 = vadd.f32 %v626, %v2375
        %v2377 = vpop.f32.mrb[0].mxu0
        %v2378 = vadd.f32 %v630, %v2377
        %2379 = vmatprep.mubr.bf16.mxu0 %v843
        %2380 = vmatmul.mubr.bf16.gmra.mrb[0].mxu0 %v842
        %v2381 = vpop.f32.mrb[0].mxu0
        %v2382 = vadd.f32 %v626, %v2381
        %v2383 = vpop.f32.mrb[0].mxu0
        %v2384 = vadd.f32 %v630, %v2383
        %v2385 = vpop.f32.mrb[0].mxu0
        %v2386 = vadd.f32 %v626, %v2385
        %v2387 = vpop.f32.mrb[0].mxu0
        %v2388 = vadd.f32 %v630, %v2387
        %2389 = vmatprep.mubr.bf16.mxu0 %v846
        %2390 = vmatmul.mubr.bf16.gmra.mrb[0].mxu0 %v845
        %v2391 = vpop.f32.mrb[0].mxu0
        %v2392 = vadd.f32 %v626, %v2391
        %v2393 = vpop.f32.mrb[0].mxu0
        %v2394 = vadd.f32 %v630, %v2393
        %v2395 = vpop.f32.mrb[0].mxu0
        %v2396 = vadd.f32 %v626, %v2395
        %v2397 = vpop.f32.mrb[0].mxu0
        %v2398 = vadd.f32 %v630, %v2397
        %2399 = vmatprep.mubr.bf16.mxu0 %v849
        %2400 = vmatmul.mubr.bf16.gmra.mrb[0].mxu0 %v848
        %v2401 = vpop.f32.mrb[0].mxu0
        %v2402 = vadd.f32 %v626, %v2401
        %v2403 = vpop.f32.mrb[0].mxu0
        %v2404 = vadd.f32 %v630, %v2403
        %v2405 = vpop.f32.mrb[0].mxu0
        %v2406 = vadd.f32 %v626, %v2405
        %v2407 = vpop.f32.mrb[0].mxu0
        %v2408 = vadd.f32 %v630, %v2407
        %2409 = vmatprep.mubr.bf16.mxu0 %v852
        %2410 = vmatmul.mubr.bf16.gmra.mrb[0].mxu0 %v851
        %v2411 = vpop.f32.mrb[0].mxu0
        %v2412 = vadd.f32 %v626, %v2411
        %v2413 = vpop.f32.mrb[0].mxu0
        %v2414 = vadd.f32 %v630, %v2413
        %v2415 = vpop.f32.mrb[0].mxu0
        %v2416 = vadd.f32 %v626, %v2415
        %v2417 = vpop.f32.mrb[0].mxu0
        %v2418 = vadd.f32 %v630, %v2417
        %2419 = vmatprep.mubr.bf16.mxu0 %v855
        %2420 = vmatmul.mubr.bf16.gmra.mrb[0].mxu0 %v854
        %v2421 = vpop.f32.mrb[0].mxu0
        %v2422 = vadd.f32 %v626, %v2421
        %v2423 = vpop.f32.mrb[0].mxu0
        %v2424 = vadd.f32 %v630, %v2423
        %v2425 = vpop.f32.mrb[0].mxu0
        %v2426 = vadd.f32 %v626, %v2425
        %v2427 = vpop.f32.mrb[0].mxu0
        %v2428 = vadd.f32 %v630, %v2427
        %2429 = vmatprep.mubr.bf16.mxu0 %v858
        %2430 = vmatmul.mubr.bf16.gmra.mrb[0].mxu0 %v857
        %v2431 = vpop.f32.mrb[0].mxu0
        %v2432 = vadd.f32 %v626, %v2431
        %v2433 = vpop.f32.mrb[0].mxu0
        %v2434 = vadd.f32 %v630, %v2433
        %v2435 = vpop.f32.mrb[0].mxu0
        %v2436 = vadd.f32 %v626, %v2435
        %v2437 = vpop.f32.mrb[0].mxu0
        %v2438 = vadd.f32 %v630, %v2437
        %2439 = vmatprep.mubr.bf16.mxu0 %v861
        %2440 = vmatmul.mubr.bf16.gmra.mrb[0].mxu0 %v860
        %v2441 = vpop.f32.mrb[0].mxu0
        %v2442 = vadd.f32 %v626, %v2441
        %v2443 = vpop.f32.mrb[0].mxu0
        %v2444 = vadd.f32 %v630, %v2443
        %v2445 = vpop.f32.mrb[0].mxu0
        %v2446 = vadd.f32 %v626, %v2445
        %v2447 = vpop.f32.mrb[0].mxu0
        %v2448 = vadd.f32 %v630, %v2447
        %2449 = vdwg.mxu0
        %2450 = vmatprep.subr.bf16.mxu0 %v1618
        %2451 = vmatpush1.bf16.msra.mxu0 %v1617
        %2452 = vmatprep.subr.bf16.mxu0 %v1626
        %2453 = vmatpush1.bf16.msra.mxu0 %v1625
        %2454 = vmatprep.subr.bf16.mxu0 %v1634
        %2455 = vmatpush1.bf16.msra.mxu0 %v1633
        %2456 = vmatprep.subr.bf16.mxu0 %v1642
        %2457 = vmatpush1.bf16.msra.mxu0 %v1641
        %2458 = vmatprep.subr.bf16.mxu0 %v1650
        %2459 = vmatpush1.bf16.msra.mxu0 %v1649
        %2460 = vmatprep.subr.bf16.mxu0 %v1658
        %2461 = vmatpush1.bf16.msra.mxu0 %v1657
        %2462 = vmatprep.subr.bf16.mxu0 %v1666
        %2463 = vmatpush1.bf16.msra.mxu0 %v1665
        %2464 = vmatprep.subr.bf16.mxu0 %v1674
        %2465 = vmatpush1.bf16.msra.mxu0 %v1673
        %2466 = vmatprep.subr.bf16.mxu0 0
        %2467 = vmatpush1.bf16.msra.mxu0 0
        %2468 = vmatprep.subr.bf16.mxu0 0
        %2469 = vmatpush1.bf16.msra.mxu0 0
        %2470 = vmatprep.subr.bf16.mxu0 0
        %2471 = vmatpush1.bf16.msra.mxu0 0
        %2472 = vmatprep.subr.bf16.mxu0 0
        %2473 = vmatpush1.bf16.msra.mxu0 0
        %2474 = vmatprep.subr.bf16.mxu0 0
        %2475 = vmatpush1.bf16.msra.mxu0 0
        %2476 = vmatprep.subr.bf16.mxu0 0
        %2477 = vmatpush1.bf16.msra.mxu0 0
        %2478 = vmatprep.subr.bf16.mxu0 0
        %2479 = vmatpush1.bf16.msra.mxu0 0
        %2480 = vmatprep.subr.bf16.mxu0 0
        %2481 = vmatpush1.bf16.msra.mxu0 0
        %2482 = vmatprep.mubr.bf16.mxu0 0
        %2483 = vmatmul.mubr.bf16.gmra.mrb[0].mxu0 %v817
        %v2484 = vpop.f32.mrb[0].mxu0
        %v2485 = vadd.f32 %v2292, %v2484
        %v2486 = vpop.f32.mrb[0].mxu0
        %v2487 = vadd.f32 %v2294, %v2486
        %v2488 = vpop.f32.mrb[0].mxu0
        %v2489 = vadd.f32 %v2296, %v2488
        %v2490 = vpop.f32.mrb[0].mxu0
        %v2491 = vadd.f32 %v2298, %v2490
        %2492 = vmatprep.mubr.bf16.mxu0 0
        %2493 = vmatmul.mubr.bf16.gmra.mrb[0].mxu0 %v820
        %v2494 = vpop.f32.mrb[0].mxu0
        %v2495 = vadd.f32 %v2302, %v2494
        %v2496 = vpop.f32.mrb[0].mxu0
        %v2497 = vadd.f32 %v2304, %v2496
        %v2498 = vpop.f32.mrb[0].mxu0
        %v2499 = vadd.f32 %v2306, %v2498
        %v2500 = vpop.f32.mrb[0].mxu0
        %v2501 = vadd.f32 %v2308, %v2500
        %2502 = vmatprep.mubr.bf16.mxu0 0
        %2503 = vmatmul.mubr.bf16.gmra.mrb[0].mxu0 %v823
        %v2504 = vpop.f32.mrb[0].mxu0
        %v2505 = vadd.f32 %v2312, %v2504
        %v2506 = vpop.f32.mrb[0].mxu0
        %v2507 = vadd.f32 %v2314, %v2506
        %v2508 = vpop.f32.mrb[0].mxu0
        %v2509 = vadd.f32 %v2316, %v2508
        %v2510 = vpop.f32.mrb[0].mxu0
        %v2511 = vadd.f32 %v2318, %v2510
        %2512 = vmatprep.mubr.bf16.mxu0 0
        %2513 = vmatmul.mubr.bf16.gmra.mrb[0].mxu0 %v826
        %v2514 = vpop.f32.mrb[0].mxu0
        %v2515 = vadd.f32 %v2322, %v2514
        %v2516 = vpop.f32.mrb[0].mxu0
        %v2517 = vadd.f32 %v2324, %v2516
        %v2518 = vpop.f32.mrb[0].mxu0
        %v2519 = vadd.f32 %v2326, %v2518
        %v2520 = vpop.f32.mrb[0].mxu0
        %v2521 = vadd.f32 %v2328, %v2520
        %2522 = vmatprep.mubr.bf16.mxu0 0
        %2523 = vmatmul.mubr.bf16.gmra.mrb[0].mxu0 %v829
        %v2524 = vpop.f32.mrb[0].mxu0
        %v2525 = vadd.f32 %v2332, %v2524
        %v2526 = vpop.f32.mrb[0].mxu0
        %v2527 = vadd.f32 %v2334, %v2526
        %v2528 = vpop.f32.mrb[0].mxu0
        %v2529 = vadd.f32 %v2336, %v2528
        %v2530 = vpop.f32.mrb[0].mxu0
        %v2531 = vadd.f32 %v2338, %v2530
        %2532 = vmatprep.mubr.bf16.mxu0 0
        %2533 = vmatmul.mubr.bf16.gmra.mrb[0].mxu0 %v832
        %v2534 = vpop.f32.mrb[0].mxu0
        %v2535 = vadd.f32 %v2342, %v2534
        %v2536 = vpop.f32.mrb[0].mxu0
        %v2537 = vadd.f32 %v2344, %v2536
        %v2538 = vpop.f32.mrb[0].mxu0
        %v2539 = vadd.f32 %v2346, %v2538
        %v2540 = vpop.f32.mrb[0].mxu0
        %v2541 = vadd.f32 %v2348, %v2540
        %2542 = vmatprep.mubr.bf16.mxu0 0
        %2543 = vmatmul.mubr.bf16.gmra.mrb[0].mxu0 %v835
        %v2544 = vpop.f32.mrb[0].mxu0
        %v2545 = vadd.f32 %v2352, %v2544
        %v2546 = vpop.f32.mrb[0].mxu0
        %v2547 = vadd.f32 %v2354, %v2546
        %v2548 = vpop.f32.mrb[0].mxu0
        %v2549 = vadd.f32 %v2356, %v2548
        %v2550 = vpop.f32.mrb[0].mxu0
        %v2551 = vadd.f32 %v2358, %v2550
        %2552 = vmatprep.mubr.bf16.mxu0 0
        %2553 = vmatmul.mubr.bf16.gmra.mrb[0].mxu0 %v838
        %v2554 = vpop.f32.mrb[0].mxu0
        %v2555 = vadd.f32 %v2362, %v2554
        %v2556 = vpop.f32.mrb[0].mxu0
        %v2557 = vadd.f32 %v2364, %v2556
        %v2558 = vpop.f32.mrb[0].mxu0
        %v2559 = vadd.f32 %v2366, %v2558
        %v2560 = vpop.f32.mrb[0].mxu0
        %v2561 = vadd.f32 %v2368, %v2560
        %2562 = vmatprep.mubr.bf16.mxu0 0
        %2563 = vmatmul.mubr.bf16.gmra.mrb[0].mxu0 %v841
        %v2564 = vpop.f32.mrb[0].mxu0
        %v2565 = vadd.f32 %v2372, %v2564
        %v2566 = vpop.f32.mrb[0].mxu0
        %v2567 = vadd.f32 %v2374, %v2566
        %v2568 = vpop.f32.mrb[0].mxu0
        %v2569 = vadd.f32 %v2376, %v2568
        %v2570 = vpop.f32.mrb[0].mxu0
        %v2571 = vadd.f32 %v2378, %v2570
        %2572 = vmatprep.mubr.bf16.mxu0 0
        %2573 = vmatmul.mubr.bf16.gmra.mrb[0].mxu0 %v844
        %v2574 = vpop.f32.mrb[0].mxu0
        %v2575 = vadd.f32 %v2382, %v2574
        %v2576 = vpop.f32.mrb[0].mxu0
        %v2577 = vadd.f32 %v2384, %v2576
        %v2578 = vpop.f32.mrb[0].mxu0
        %v2579 = vadd.f32 %v2386, %v2578
        %v2580 = vpop.f32.mrb[0].mxu0
        %v2581 = vadd.f32 %v2388, %v2580
        %2582 = vmatprep.mubr.bf16.mxu0 0
        %2583 = vmatmul.mubr.bf16.gmra.mrb[0].mxu0 %v847
        %v2584 = vpop.f32.mrb[0].mxu0
        %v2585 = vadd.f32 %v2392, %v2584
        %v2586 = vpop.f32.mrb[0].mxu0
        %v2587 = vadd.f32 %v2394, %v2586
        %v2588 = vpop.f32.mrb[0].mxu0
        %v2589 = vadd.f32 %v2396, %v2588
        %v2590 = vpop.f32.mrb[0].mxu0
        %v2591 = vadd.f32 %v2398, %v2590
        %2592 = vmatprep.mubr.bf16.mxu0 0
        %2593 = vmatmul.mubr.bf16.gmra.mrb[0].mxu0 %v850
        %v2594 = vpop.f32.mrb[0].mxu0
        %v2595 = vadd.f32 %v2402, %v2594
        %v2596 = vpop.f32.mrb[0].mxu0
        %v2597 = vadd.f32 %v2404, %v2596
        %v2598 = vpop.f32.mrb[0].mxu0
        %v2599 = vadd.f32 %v2406, %v2598
        %v2600 = vpop.f32.mrb[0].mxu0
        %v2601 = vadd.f32 %v2408, %v2600
        %2602 = vmatprep.mubr.bf16.mxu0 0
        %2603 = vmatmul.mubr.bf16.gmra.mrb[0].mxu0 %v853
        %v2604 = vpop.f32.mrb[0].mxu0
        %v2605 = vadd.f32 %v2412, %v2604
        %v2606 = vpop.f32.mrb[0].mxu0
        %v2607 = vadd.f32 %v2414, %v2606
        %v2608 = vpop.f32.mrb[0].mxu0
        %v2609 = vadd.f32 %v2416, %v2608
        %v2610 = vpop.f32.mrb[0].mxu0
        %v2611 = vadd.f32 %v2418, %v2610
        %2612 = vmatprep.mubr.bf16.mxu0 0
        %2613 = vmatmul.mubr.bf16.gmra.mrb[0].mxu0 %v856
        %v2614 = vpop.f32.mrb[0].mxu0
        %v2615 = vadd.f32 %v2422, %v2614
        %v2616 = vpop.f32.mrb[0].mxu0
        %v2617 = vadd.f32 %v2424, %v2616
        %v2618 = vpop.f32.mrb[0].mxu0
        %v2619 = vadd.f32 %v2426, %v2618
        %v2620 = vpop.f32.mrb[0].mxu0
        %v2621 = vadd.f32 %v2428, %v2620
        %2622 = vmatprep.mubr.bf16.mxu0 0
        %2623 = vmatmul.mubr.bf16.gmra.mrb[0].mxu0 %v859
        %v2624 = vpop.f32.mrb[0].mxu0
        %v2625 = vadd.f32 %v2432, %v2624
        %v2626 = vpop.f32.mrb[0].mxu0
        %v2627 = vadd.f32 %v2434, %v2626
        %v2628 = vpop.f32.mrb[0].mxu0
        %v2629 = vadd.f32 %v2436, %v2628
        %v2630 = vpop.f32.mrb[0].mxu0
        %v2631 = vadd.f32 %v2438, %v2630
        %2632 = vmatprep.mubr.bf16.mxu0 0
        %2633 = vmatmul.mubr.bf16.gmra.mrb[0].mxu0 %v862
        %v2634 = vpop.f32.mrb[0].mxu0
        %v2635 = vadd.f32 %v2442, %v2634
        %v2636 = vpop.f32.mrb[0].mxu0
        %v2637 = vadd.f32 %v2444, %v2636
        %v2638 = vpop.f32.mrb[0].mxu0
        %v2639 = vadd.f32 %v2446, %v2638
        %v2640 = vpop.f32.mrb[0].mxu0
        %v2641 = vadd.f32 %v2448, %v2640
        %2642 = vdwg.mxu0
        %2643 = vmatprep.subr.bf16.mxu0 %v1492
        %2644 = vmatpush1.bf16.msra.mxu0 %v1491
        %2645 = vmatprep.subr.bf16.mxu0 %v1500
        %2646 = vmatpush1.bf16.msra.mxu0 %v1499
        %2647 = vmatprep.subr.bf16.mxu0 %v1508
        %2648 = vmatpush1.bf16.msra.mxu0 %v1507
        %2649 = vmatprep.subr.bf16.mxu0 %v1516
        %2650 = vmatpush1.bf16.msra.mxu0 %v1515
        %2651 = vmatprep.subr.bf16.mxu0 %v1524
        %2652 = vmatpush1.bf16.msra.mxu0 %v1523
        %2653 = vmatprep.subr.bf16.mxu0 %v1532
        %2654 = vmatpush1.bf16.msra.mxu0 %v1531
        %2655 = vmatprep.subr.bf16.mxu0 %v1540
        %2656 = vmatpush1.bf16.msra.mxu0 %v1539
        %2657 = vmatprep.subr.bf16.mxu0 %v1548
        %2658 = vmatpush1.bf16.msra.mxu0 %v1547
        %2659 = vmatprep.subr.bf16.mxu0 %v1556
        %2660 = vmatpush1.bf16.msra.mxu0 %v1555
        %2661 = vmatprep.subr.bf16.mxu0 %v1564
        %2662 = vmatpush1.bf16.msra.mxu0 %v1563
        %2663 = vmatprep.subr.bf16.mxu0 %v1572
        %2664 = vmatpush1.bf16.msra.mxu0 %v1571
        %2665 = vmatprep.subr.bf16.mxu0 %v1580
        %2666 = vmatpush1.bf16.msra.mxu0 %v1579
        %2667 = vmatprep.subr.bf16.mxu0 %v1588
        %2668 = vmatpush1.bf16.msra.mxu0 %v1587
        %2669 = vmatprep.subr.bf16.mxu0 %v1596
        %2670 = vmatpush1.bf16.msra.mxu0 %v1595
        %2671 = vmatprep.subr.bf16.mxu0 %v1604
        %2672 = vmatpush1.bf16.msra.mxu0 %v1603
        %2673 = vmatprep.subr.bf16.mxu0 %v1612
        %2674 = vmatpush1.bf16.msra.mxu0 %v1611
        %2675 = vmatprep.mubr.bf16.mxu0 %v816
        %2676 = vmatmul.mubr.bf16.gmra.mrb[0].mxu0 %v815
        %v2677 = vpop.f32.mrb[0].mxu0
        %v2678 = vadd.f32 %v634, %v2677
        %v2679 = vpop.f32.mrb[0].mxu0
        %v2680 = vadd.f32 %v638, %v2679
        %v2681 = vpop.f32.mrb[0].mxu0
        %v2682 = vadd.f32 %v634, %v2681
        %v2683 = vpop.f32.mrb[0].mxu0
        %v2684 = vadd.f32 %v638, %v2683
        %2685 = vmatprep.mubr.bf16.mxu0 %v819
        %2686 = vmatmul.mubr.bf16.gmra.mrb[0].mxu0 %v818
        %v2687 = vpop.f32.mrb[0].mxu0
        %v2688 = vadd.f32 %v634, %v2687
        %v2689 = vpop.f32.mrb[0].mxu0
        %v2690 = vadd.f32 %v638, %v2689
        %v2691 = vpop.f32.mrb[0].mxu0
        %v2692 = vadd.f32 %v634, %v2691
        %v2693 = vpop.f32.mrb[0].mxu0
        %v2694 = vadd.f32 %v638, %v2693
        %2695 = vmatprep.mubr.bf16.mxu0 %v822
        %2696 = vmatmul.mubr.bf16.gmra.mrb[0].mxu0 %v821
        %v2697 = vpop.f32.mrb[0].mxu0
        %v2698 = vadd.f32 %v634, %v2697
        %v2699 = vpop.f32.mrb[0].mxu0
        %v2700 = vadd.f32 %v638, %v2699
        %v2701 = vpop.f32.mrb[0].mxu0
        %v2702 = vadd.f32 %v634, %v2701
        %v2703 = vpop.f32.mrb[0].mxu0
        %v2704 = vadd.f32 %v638, %v2703
        %2705 = vmatprep.mubr.bf16.mxu0 %v825
        %2706 = vmatmul.mubr.bf16.gmra.mrb[0].mxu0 %v824
        %v2707 = vpop.f32.mrb[0].mxu0
        %v2708 = vadd.f32 %v634, %v2707
        %v2709 = vpop.f32.mrb[0].mxu0
        %v2710 = vadd.f32 %v638, %v2709
        %v2711 = vpop.f32.mrb[0].mxu0
        %v2712 = vadd.f32 %v634, %v2711
        %v2713 = vpop.f32.mrb[0].mxu0
        %v2714 = vadd.f32 %v638, %v2713
        %2715 = vmatprep.mubr.bf16.mxu0 %v828
        %2716 = vmatmul.mubr.bf16.gmra.mrb[0].mxu0 %v827
        %v2717 = vpop.f32.mrb[0].mxu0
        %v2718 = vadd.f32 %v634, %v2717
        %v2719 = vpop.f32.mrb[0].mxu0
        %v2720 = vadd.f32 %v638, %v2719
        %v2721 = vpop.f32.mrb[0].mxu0
        %v2722 = vadd.f32 %v634, %v2721
        %v2723 = vpop.f32.mrb[0].mxu0
        %v2724 = vadd.f32 %v638, %v2723
        %2725 = vmatprep.mubr.bf16.mxu0 %v831
        %2726 = vmatmul.mubr.bf16.gmra.mrb[0].mxu0 %v830
        %v2727 = vpop.f32.mrb[0].mxu0
        %v2728 = vadd.f32 %v634, %v2727
        %v2729 = vpop.f32.mrb[0].mxu0
        %v2730 = vadd.f32 %v638, %v2729
        %v2731 = vpop.f32.mrb[0].mxu0
        %v2732 = vadd.f32 %v634, %v2731
        %v2733 = vpop.f32.mrb[0].mxu0
        %v2734 = vadd.f32 %v638, %v2733
        %2735 = vmatprep.mubr.bf16.mxu0 %v834
        %2736 = vmatmul.mubr.bf16.gmra.mrb[0].mxu0 %v833
        %v2737 = vpop.f32.mrb[0].mxu0
        %v2738 = vadd.f32 %v634, %v2737
        %v2739 = vpop.f32.mrb[0].mxu0
        %v2740 = vadd.f32 %v638, %v2739
        %v2741 = vpop.f32.mrb[0].mxu0
        %v2742 = vadd.f32 %v634, %v2741
        %v2743 = vpop.f32.mrb[0].mxu0
        %v2744 = vadd.f32 %v638, %v2743
        %2745 = vmatprep.mubr.bf16.mxu0 %v837
        %2746 = vmatmul.mubr.bf16.gmra.mrb[0].mxu0 %v836
        %v2747 = vpop.f32.mrb[0].mxu0
        %v2748 = vadd.f32 %v634, %v2747
        %v2749 = vpop.f32.mrb[0].mxu0
        %v2750 = vadd.f32 %v638, %v2749
        %v2751 = vpop.f32.mrb[0].mxu0
        %v2752 = vadd.f32 %v634, %v2751
        %v2753 = vpop.f32.mrb[0].mxu0
        %v2754 = vadd.f32 %v638, %v2753
        %2755 = vmatprep.mubr.bf16.mxu0 %v840
        %2756 = vmatmul.mubr.bf16.gmra.mrb[0].mxu0 %v839
        %v2757 = vpop.f32.mrb[0].mxu0
        %v2758 = vadd.f32 %v634, %v2757
        %v2759 = vpop.f32.mrb[0].mxu0
        %v2760 = vadd.f32 %v638, %v2759
        %v2761 = vpop.f32.mrb[0].mxu0
        %v2762 = vadd.f32 %v634, %v2761
        %v2763 = vpop.f32.mrb[0].mxu0
        %v2764 = vadd.f32 %v638, %v2763
        %2765 = vmatprep.mubr.bf16.mxu0 %v843
        %2766 = vmatmul.mubr.bf16.gmra.mrb[0].mxu0 %v842
        %v2767 = vpop.f32.mrb[0].mxu0
        %v2768 = vadd.f32 %v634, %v2767
        %v2769 = vpop.f32.mrb[0].mxu0
        %v2770 = vadd.f32 %v638, %v2769
        %v2771 = vpop.f32.mrb[0].mxu0
        %v2772 = vadd.f32 %v634, %v2771
        %v2773 = vpop.f32.mrb[0].mxu0
        %v2774 = vadd.f32 %v638, %v2773
        %2775 = vmatprep.mubr.bf16.mxu0 %v846
        %2776 = vmatmul.mubr.bf16.gmra.mrb[0].mxu0 %v845
        %v2777 = vpop.f32.mrb[0].mxu0
        %v2778 = vadd.f32 %v634, %v2777
        %v2779 = vpop.f32.mrb[0].mxu0
        %v2780 = vadd.f32 %v638, %v2779
        %v2781 = vpop.f32.mrb[0].mxu0
        %v2782 = vadd.f32 %v634, %v2781
        %v2783 = vpop.f32.mrb[0].mxu0
        %v2784 = vadd.f32 %v638, %v2783
        %2785 = vmatprep.mubr.bf16.mxu0 %v849
        %2786 = vmatmul.mubr.bf16.gmra.mrb[0].mxu0 %v848
        %v2787 = vpop.f32.mrb[0].mxu0
        %v2788 = vadd.f32 %v634, %v2787
        %v2789 = vpop.f32.mrb[0].mxu0
        %v2790 = vadd.f32 %v638, %v2789
        %v2791 = vpop.f32.mrb[0].mxu0
        %v2792 = vadd.f32 %v634, %v2791
        %v2793 = vpop.f32.mrb[0].mxu0
        %v2794 = vadd.f32 %v638, %v2793
        %2795 = vmatprep.mubr.bf16.mxu0 %v852
        %2796 = vmatmul.mubr.bf16.gmra.mrb[0].mxu0 %v851
        %v2797 = vpop.f32.mrb[0].mxu0
        %v2798 = vadd.f32 %v634, %v2797
        %v2799 = vpop.f32.mrb[0].mxu0
        %v2800 = vadd.f32 %v638, %v2799
        %v2801 = vpop.f32.mrb[0].mxu0
        %v2802 = vadd.f32 %v634, %v2801
        %v2803 = vpop.f32.mrb[0].mxu0
        %v2804 = vadd.f32 %v638, %v2803
        %2805 = vmatprep.mubr.bf16.mxu0 %v855
        %2806 = vmatmul.mubr.bf16.gmra.mrb[0].mxu0 %v854
        %v2807 = vpop.f32.mrb[0].mxu0
        %v2808 = vadd.f32 %v634, %v2807
        %v2809 = vpop.f32.mrb[0].mxu0
        %v2810 = vadd.f32 %v638, %v2809
        %v2811 = vpop.f32.mrb[0].mxu0
        %v2812 = vadd.f32 %v634, %v2811
        %v2813 = vpop.f32.mrb[0].mxu0
        %v2814 = vadd.f32 %v638, %v2813
        %2815 = vmatprep.mubr.bf16.mxu0 %v858
        %2816 = vmatmul.mubr.bf16.gmra.mrb[0].mxu0 %v857
        %v2817 = vpop.f32.mrb[0].mxu0
        %v2818 = vadd.f32 %v634, %v2817
        %v2819 = vpop.f32.mrb[0].mxu0
        %v2820 = vadd.f32 %v638, %v2819
        %v2821 = vpop.f32.mrb[0].mxu0
        %v2822 = vadd.f32 %v634, %v2821
        %v2823 = vpop.f32.mrb[0].mxu0
        %v2824 = vadd.f32 %v638, %v2823
        %2825 = vmatprep.mubr.bf16.mxu0 %v861
        %2826 = vmatmul.mubr.bf16.gmra.mrb[0].mxu0 %v860
        %v2827 = vpop.f32.mrb[0].mxu0
        %v2828 = vadd.f32 %v634, %v2827
        %v2829 = vpop.f32.mrb[0].mxu0
        %v2830 = vadd.f32 %v638, %v2829
        %v2831 = vpop.f32.mrb[0].mxu0
        %v2832 = vadd.f32 %v634, %v2831
        %v2833 = vpop.f32.mrb[0].mxu0
        %v2834 = vadd.f32 %v638, %v2833
        %2835 = vdwg.mxu0
        %2836 = vmatprep.subr.bf16.mxu0 %v1620
        %2837 = vmatpush1.bf16.msra.mxu0 %v1619
        %2838 = vmatprep.subr.bf16.mxu0 %v1628
        %2839 = vmatpush1.bf16.msra.mxu0 %v1627
        %2840 = vmatprep.subr.bf16.mxu0 %v1636
        %2841 = vmatpush1.bf16.msra.mxu0 %v1635
        %2842 = vmatprep.subr.bf16.mxu0 %v1644
        %2843 = vmatpush1.bf16.msra.mxu0 %v1643
        %2844 = vmatprep.subr.bf16.mxu0 %v1652
        %2845 = vmatpush1.bf16.msra.mxu0 %v1651
        %2846 = vmatprep.subr.bf16.mxu0 %v1660
        %2847 = vmatpush1.bf16.msra.mxu0 %v1659
        %2848 = vmatprep.subr.bf16.mxu0 %v1668
        %2849 = vmatpush1.bf16.msra.mxu0 %v1667
        %2850 = vmatprep.subr.bf16.mxu0 %v1676
        %2851 = vmatpush1.bf16.msra.mxu0 %v1675
        %2852 = vmatprep.subr.bf16.mxu0 0
        %2853 = vmatpush1.bf16.msra.mxu0 0
        %2854 = vmatprep.subr.bf16.mxu0 0
        %2855 = vmatpush1.bf16.msra.mxu0 0
        %2856 = vmatprep.subr.bf16.mxu0 0
        %2857 = vmatpush1.bf16.msra.mxu0 0
        %2858 = vmatprep.subr.bf16.mxu0 0
        %2859 = vmatpush1.bf16.msra.mxu0 0
        %2860 = vmatprep.subr.bf16.mxu0 0
        %2861 = vmatpush1.bf16.msra.mxu0 0
        %2862 = vmatprep.subr.bf16.mxu0 0
        %2863 = vmatpush1.bf16.msra.mxu0 0
        %2864 = vmatprep.subr.bf16.mxu0 0
        %2865 = vmatpush1.bf16.msra.mxu0 0
        %2866 = vmatprep.subr.bf16.mxu0 0
        %2867 = vmatpush1.bf16.msra.mxu0 0
        %2868 = vmatprep.mubr.bf16.mxu0 0
        %2869 = vmatmul.mubr.bf16.gmra.mrb[0].mxu0 %v817
        %v2870 = vpop.f32.mrb[0].mxu0
        %v2871 = vadd.f32 %v2678, %v2870
        %v2872 = vpop.f32.mrb[0].mxu0
        %v2873 = vadd.f32 %v2680, %v2872
        %v2874 = vpop.f32.mrb[0].mxu0
        %v2875 = vadd.f32 %v2682, %v2874
        %v2876 = vpop.f32.mrb[0].mxu0
        %v2877 = vadd.f32 %v2684, %v2876
        %2878 = vmatprep.mubr.bf16.mxu0 0
        %2879 = vmatmul.mubr.bf16.gmra.mrb[0].mxu0 %v820
        %v2880 = vpop.f32.mrb[0].mxu0
        %v2881 = vadd.f32 %v2688, %v2880
        %v2882 = vpop.f32.mrb[0].mxu0
        %v2883 = vadd.f32 %v2690, %v2882
        %v2884 = vpop.f32.mrb[0].mxu0
        %v2885 = vadd.f32 %v2692, %v2884
        %v2886 = vpop.f32.mrb[0].mxu0
        %v2887 = vadd.f32 %v2694, %v2886
        %2888 = vmatprep.mubr.bf16.mxu0 0
        %2889 = vmatmul.mubr.bf16.gmra.mrb[0].mxu0 %v823
        %v2890 = vpop.f32.mrb[0].mxu0
        %v2891 = vadd.f32 %v2698, %v2890
        %v2892 = vpop.f32.mrb[0].mxu0
        %v2893 = vadd.f32 %v2700, %v2892
        %v2894 = vpop.f32.mrb[0].mxu0
        %v2895 = vadd.f32 %v2702, %v2894
        %v2896 = vpop.f32.mrb[0].mxu0
        %v2897 = vadd.f32 %v2704, %v2896
        %2898 = vmatprep.mubr.bf16.mxu0 0
        %2899 = vmatmul.mubr.bf16.gmra.mrb[0].mxu0 %v826
        %v2900 = vpop.f32.mrb[0].mxu0
        %v2901 = vadd.f32 %v2708, %v2900
        %v2902 = vpop.f32.mrb[0].mxu0
        %v2903 = vadd.f32 %v2710, %v2902
        %v2904 = vpop.f32.mrb[0].mxu0
        %v2905 = vadd.f32 %v2712, %v2904
        %v2906 = vpop.f32.mrb[0].mxu0
        %v2907 = vadd.f32 %v2714, %v2906
        %2908 = vmatprep.mubr.bf16.mxu0 0
        %2909 = vmatmul.mubr.bf16.gmra.mrb[0].mxu0 %v829
        %v2910 = vpop.f32.mrb[0].mxu0
        %v2911 = vadd.f32 %v2718, %v2910
        %v2912 = vpop.f32.mrb[0].mxu0
        %v2913 = vadd.f32 %v2720, %v2912
        %v2914 = vpop.f32.mrb[0].mxu0
        %v2915 = vadd.f32 %v2722, %v2914
        %v2916 = vpop.f32.mrb[0].mxu0
        %v2917 = vadd.f32 %v2724, %v2916
        %2918 = vmatprep.mubr.bf16.mxu0 0
        %2919 = vmatmul.mubr.bf16.gmra.mrb[0].mxu0 %v832
        %v2920 = vpop.f32.mrb[0].mxu0
        %v2921 = vadd.f32 %v2728, %v2920
        %v2922 = vpop.f32.mrb[0].mxu0
        %v2923 = vadd.f32 %v2730, %v2922
        %v2924 = vpop.f32.mrb[0].mxu0
        %v2925 = vadd.f32 %v2732, %v2924
        %v2926 = vpop.f32.mrb[0].mxu0
        %v2927 = vadd.f32 %v2734, %v2926
        %2928 = vmatprep.mubr.bf16.mxu0 0
        %2929 = vmatmul.mubr.bf16.gmra.mrb[0].mxu0 %v835
        %v2930 = vpop.f32.mrb[0].mxu0
        %v2931 = vadd.f32 %v2738, %v2930
        %v2932 = vpop.f32.mrb[0].mxu0
        %v2933 = vadd.f32 %v2740, %v2932
        %v2934 = vpop.f32.mrb[0].mxu0
        %v2935 = vadd.f32 %v2742, %v2934
        %v2936 = vpop.f32.mrb[0].mxu0
        %v2937 = vadd.f32 %v2744, %v2936
        %2938 = vmatprep.mubr.bf16.mxu0 0
        %2939 = vmatmul.mubr.bf16.gmra.mrb[0].mxu0 %v838
        %v2940 = vpop.f32.mrb[0].mxu0
        %v2941 = vadd.f32 %v2748, %v2940
        %v2942 = vpop.f32.mrb[0].mxu0
        %v2943 = vadd.f32 %v2750, %v2942
        %v2944 = vpop.f32.mrb[0].mxu0
        %v2945 = vadd.f32 %v2752, %v2944
        %v2946 = vpop.f32.mrb[0].mxu0
        %v2947 = vadd.f32 %v2754, %v2946
        %2948 = vmatprep.mubr.bf16.mxu0 0
        %2949 = vmatmul.mubr.bf16.gmra.mrb[0].mxu0 %v841
        %v2950 = vpop.f32.mrb[0].mxu0
        %v2951 = vadd.f32 %v2758, %v2950
        %v2952 = vpop.f32.mrb[0].mxu0
        %v2953 = vadd.f32 %v2760, %v2952
        %v2954 = vpop.f32.mrb[0].mxu0
        %v2955 = vadd.f32 %v2762, %v2954
        %v2956 = vpop.f32.mrb[0].mxu0
        %v2957 = vadd.f32 %v2764, %v2956
        %2958 = vmatprep.mubr.bf16.mxu0 0
        %2959 = vmatmul.mubr.bf16.gmra.mrb[0].mxu0 %v844
        %v2960 = vpop.f32.mrb[0].mxu0
        %v2961 = vadd.f32 %v2768, %v2960
        %v2962 = vpop.f32.mrb[0].mxu0
        %v2963 = vadd.f32 %v2770, %v2962
        %v2964 = vpop.f32.mrb[0].mxu0
        %v2965 = vadd.f32 %v2772, %v2964
        %v2966 = vpop.f32.mrb[0].mxu0
        %v2967 = vadd.f32 %v2774, %v2966
        %2968 = vmatprep.mubr.bf16.mxu0 0
        %2969 = vmatmul.mubr.bf16.gmra.mrb[0].mxu0 %v847
        %v2970 = vpop.f32.mrb[0].mxu0
        %v2971 = vadd.f32 %v2778, %v2970
        %v2972 = vpop.f32.mrb[0].mxu0
        %v2973 = vadd.f32 %v2780, %v2972
        %v2974 = vpop.f32.mrb[0].mxu0
        %v2975 = vadd.f32 %v2782, %v2974
        %v2976 = vpop.f32.mrb[0].mxu0
        %v2977 = vadd.f32 %v2784, %v2976
        %2978 = vmatprep.mubr.bf16.mxu0 0
        %2979 = vmatmul.mubr.bf16.gmra.mrb[0].mxu0 %v850
        %v2980 = vpop.f32.mrb[0].mxu0
        %v2981 = vadd.f32 %v2788, %v2980
        %v2982 = vpop.f32.mrb[0].mxu0
        %v2983 = vadd.f32 %v2790, %v2982
        %v2984 = vpop.f32.mrb[0].mxu0
        %v2985 = vadd.f32 %v2792, %v2984
        %v2986 = vpop.f32.mrb[0].mxu0
        %v2987 = vadd.f32 %v2794, %v2986
        %2988 = vmatprep.mubr.bf16.mxu0 0
        %2989 = vmatmul.mubr.bf16.gmra.mrb[0].mxu0 %v853
        %v2990 = vpop.f32.mrb[0].mxu0
        %v2991 = vadd.f32 %v2798, %v2990
        %v2992 = vpop.f32.mrb[0].mxu0
        %v2993 = vadd.f32 %v2800, %v2992
        %v2994 = vpop.f32.mrb[0].mxu0
        %v2995 = vadd.f32 %v2802, %v2994
        %v2996 = vpop.f32.mrb[0].mxu0
        %v2997 = vadd.f32 %v2804, %v2996
        %2998 = vmatprep.mubr.bf16.mxu0 0
        %2999 = vmatmul.mubr.bf16.gmra.mrb[0].mxu0 %v856
        %v3000 = vpop.f32.mrb[0].mxu0
        %v3001 = vadd.f32 %v2808, %v3000
        %v3002 = vpop.f32.mrb[0].mxu0
        %v3003 = vadd.f32 %v2810, %v3002
        %v3004 = vpop.f32.mrb[0].mxu0
        %v3005 = vadd.f32 %v2812, %v3004
        %v3006 = vpop.f32.mrb[0].mxu0
        %v3007 = vadd.f32 %v2814, %v3006
        %3008 = vmatprep.mubr.bf16.mxu0 0
        %3009 = vmatmul.mubr.bf16.gmra.mrb[0].mxu0 %v859
        %v3010 = vpop.f32.mrb[0].mxu0
        %v3011 = vadd.f32 %v2818, %v3010
        %v3012 = vpop.f32.mrb[0].mxu0
        %v3013 = vadd.f32 %v2820, %v3012
        %v3014 = vpop.f32.mrb[0].mxu0
        %v3015 = vadd.f32 %v2822, %v3014
        %v3016 = vpop.f32.mrb[0].mxu0
        %v3017 = vadd.f32 %v2824, %v3016
        %3018 = vmatprep.mubr.bf16.mxu0 0
        %3019 = vmatmul.mubr.bf16.gmra.mrb[0].mxu0 %v862
        %v3020 = vpop.f32.mrb[0].mxu0
        %v3021 = vadd.f32 %v2828, %v3020
        %v3022 = vpop.f32.mrb[0].mxu0
        %v3023 = vadd.f32 %v2830, %v3022
        %v3024 = vpop.f32.mrb[0].mxu0
        %v3025 = vadd.f32 %v2832, %v3024
        %v3026 = vpop.f32.mrb[0].mxu0
        %v3027 = vadd.f32 %v2834, %v3026
        %3028 = vdwg.mxu0
        %3029 = vmatprep.subr.bf16.mxu0 %v1494
        %3030 = vmatpush1.bf16.msra.mxu0 %v1493
        %3031 = vmatprep.subr.bf16.mxu0 %v1502
        %3032 = vmatpush1.bf16.msra.mxu0 %v1501
        %3033 = vmatprep.subr.bf16.mxu0 %v1510
        %3034 = vmatpush1.bf16.msra.mxu0 %v1509
        %3035 = vmatprep.subr.bf16.mxu0 %v1518
        %3036 = vmatpush1.bf16.msra.mxu0 %v1517
        %3037 = vmatprep.subr.bf16.mxu0 %v1526
        %3038 = vmatpush1.bf16.msra.mxu0 %v1525
        %3039 = vmatprep.subr.bf16.mxu0 %v1534
        %3040 = vmatpush1.bf16.msra.mxu0 %v1533
        %3041 = vmatprep.subr.bf16.mxu0 %v1542
        %3042 = vmatpush1.bf16.msra.mxu0 %v1541
        %3043 = vmatprep.subr.bf16.mxu0 %v1550
        %3044 = vmatpush1.bf16.msra.mxu0 %v1549
        %3045 = vmatprep.subr.bf16.mxu0 %v1558
        %3046 = vmatpush1.bf16.msra.mxu0 %v1557
        %3047 = vmatprep.subr.bf16.mxu0 %v1566
        %3048 = vmatpush1.bf16.msra.mxu0 %v1565
        %3049 = vmatprep.subr.bf16.mxu0 %v1574
        %3050 = vmatpush1.bf16.msra.mxu0 %v1573
        %3051 = vmatprep.subr.bf16.mxu0 %v1582
        %3052 = vmatpush1.bf16.msra.mxu0 %v1581
        %3053 = vmatprep.subr.bf16.mxu0 %v1590
        %3054 = vmatpush1.bf16.msra.mxu0 %v1589
        %3055 = vmatprep.subr.bf16.mxu0 %v1598
        %3056 = vmatpush1.bf16.msra.mxu0 %v1597
        %3057 = vmatprep.subr.bf16.mxu0 %v1606
        %3058 = vmatpush1.bf16.msra.mxu0 %v1605
        %3059 = vmatprep.subr.bf16.mxu0 %v1614
        %3060 = vmatpush1.bf16.msra.mxu0 %v1613
        %3061 = vmatprep.mubr.bf16.mxu0 %v816
        %3062 = vmatmul.mubr.bf16.gmra.mrb[0].mxu0 %v815
        %v3063 = vpop.f32.mrb[0].mxu0
        %v3064 = vadd.f32 %v642, %v3063
        %v3065 = vpop.f32.mrb[0].mxu0
        %v3066 = vadd.f32 %v646, %v3065
        %v3067 = vpop.f32.mrb[0].mxu0
        %v3068 = vadd.f32 %v642, %v3067
        %v3069 = vpop.f32.mrb[0].mxu0
        %v3070 = vadd.f32 %v646, %v3069
        %3071 = vmatprep.mubr.bf16.mxu0 %v819
        %3072 = vmatmul.mubr.bf16.gmra.mrb[0].mxu0 %v818
        %v3073 = vpop.f32.mrb[0].mxu0
        %v3074 = vadd.f32 %v642, %v3073
        %v3075 = vpop.f32.mrb[0].mxu0
        %v3076 = vadd.f32 %v646, %v3075
        %v3077 = vpop.f32.mrb[0].mxu0
        %v3078 = vadd.f32 %v642, %v3077
        %v3079 = vpop.f32.mrb[0].mxu0
        %v3080 = vadd.f32 %v646, %v3079
        %3081 = vmatprep.mubr.bf16.mxu0 %v822
        %3082 = vmatmul.mubr.bf16.gmra.mrb[0].mxu0 %v821
        %v3083 = vpop.f32.mrb[0].mxu0
        %v3084 = vadd.f32 %v642, %v3083
        %v3085 = vpop.f32.mrb[0].mxu0
        %v3086 = vadd.f32 %v646, %v3085
        %v3087 = vpop.f32.mrb[0].mxu0
        %v3088 = vadd.f32 %v642, %v3087
        %v3089 = vpop.f32.mrb[0].mxu0
        %v3090 = vadd.f32 %v646, %v3089
        %3091 = vmatprep.mubr.bf16.mxu0 %v825
        %3092 = vmatmul.mubr.bf16.gmra.mrb[0].mxu0 %v824
        %v3093 = vpop.f32.mrb[0].mxu0
        %v3094 = vadd.f32 %v642, %v3093
        %v3095 = vpop.f32.mrb[0].mxu0
        %v3096 = vadd.f32 %v646, %v3095
        %v3097 = vpop.f32.mrb[0].mxu0
        %v3098 = vadd.f32 %v642, %v3097
        %v3099 = vpop.f32.mrb[0].mxu0
        %v3100 = vadd.f32 %v646, %v3099
        %3101 = vmatprep.mubr.bf16.mxu0 %v828
        %3102 = vmatmul.mubr.bf16.gmra.mrb[0].mxu0 %v827
        %v3103 = vpop.f32.mrb[0].mxu0
        %v3104 = vadd.f32 %v642, %v3103
        %v3105 = vpop.f32.mrb[0].mxu0
        %v3106 = vadd.f32 %v646, %v3105
        %v3107 = vpop.f32.mrb[0].mxu0
        %v3108 = vadd.f32 %v642, %v3107
        %v3109 = vpop.f32.mrb[0].mxu0
        %v3110 = vadd.f32 %v646, %v3109
        %3111 = vmatprep.mubr.bf16.mxu0 %v831
        %3112 = vmatmul.mubr.bf16.gmra.mrb[0].mxu0 %v830
        %v3113 = vpop.f32.mrb[0].mxu0
        %v3114 = vadd.f32 %v642, %v3113
        %v3115 = vpop.f32.mrb[0].mxu0
        %v3116 = vadd.f32 %v646, %v3115
        %v3117 = vpop.f32.mrb[0].mxu0
        %v3118 = vadd.f32 %v642, %v3117
        %v3119 = vpop.f32.mrb[0].mxu0
        %v3120 = vadd.f32 %v646, %v3119
        %3121 = vmatprep.mubr.bf16.mxu0 %v834
        %3122 = vmatmul.mubr.bf16.gmra.mrb[0].mxu0 %v833
        %v3123 = vpop.f32.mrb[0].mxu0
        %v3124 = vadd.f32 %v642, %v3123
        %v3125 = vpop.f32.mrb[0].mxu0
        %v3126 = vadd.f32 %v646, %v3125
        %v3127 = vpop.f32.mrb[0].mxu0
        %v3128 = vadd.f32 %v642, %v3127
        %v3129 = vpop.f32.mrb[0].mxu0
        %v3130 = vadd.f32 %v646, %v3129
        %3131 = vmatprep.mubr.bf16.mxu0 %v837
        %3132 = vmatmul.mubr.bf16.gmra.mrb[0].mxu0 %v836
        %v3133 = vpop.f32.mrb[0].mxu0
        %v3134 = vadd.f32 %v642, %v3133
        %v3135 = vpop.f32.mrb[0].mxu0
        %v3136 = vadd.f32 %v646, %v3135
        %v3137 = vpop.f32.mrb[0].mxu0
        %v3138 = vadd.f32 %v642, %v3137
        %v3139 = vpop.f32.mrb[0].mxu0
        %v3140 = vadd.f32 %v646, %v3139
        %3141 = vmatprep.mubr.bf16.mxu0 %v840
        %3142 = vmatmul.mubr.bf16.gmra.mrb[0].mxu0 %v839
        %v3143 = vpop.f32.mrb[0].mxu0
        %v3144 = vadd.f32 %v642, %v3143
        %v3145 = vpop.f32.mrb[0].mxu0
        %v3146 = vadd.f32 %v646, %v3145
        %v3147 = vpop.f32.mrb[0].mxu0
        %v3148 = vadd.f32 %v642, %v3147
        %v3149 = vpop.f32.mrb[0].mxu0
        %v3150 = vadd.f32 %v646, %v3149
        %3151 = vmatprep.mubr.bf16.mxu0 %v843
        %3152 = vmatmul.mubr.bf16.gmra.mrb[0].mxu0 %v842
        %v3153 = vpop.f32.mrb[0].mxu0
        %v3154 = vadd.f32 %v642, %v3153
        %v3155 = vpop.f32.mrb[0].mxu0
        %v3156 = vadd.f32 %v646, %v3155
        %v3157 = vpop.f32.mrb[0].mxu0
        %v3158 = vadd.f32 %v642, %v3157
        %v3159 = vpop.f32.mrb[0].mxu0
        %v3160 = vadd.f32 %v646, %v3159
        %3161 = vmatprep.mubr.bf16.mxu0 %v846
        %3162 = vmatmul.mubr.bf16.gmra.mrb[0].mxu0 %v845
        %v3163 = vpop.f32.mrb[0].mxu0
        %v3164 = vadd.f32 %v642, %v3163
        %v3165 = vpop.f32.mrb[0].mxu0
        %v3166 = vadd.f32 %v646, %v3165
        %v3167 = vpop.f32.mrb[0].mxu0
        %v3168 = vadd.f32 %v642, %v3167
        %v3169 = vpop.f32.mrb[0].mxu0
        %v3170 = vadd.f32 %v646, %v3169
        %3171 = vmatprep.mubr.bf16.mxu0 %v849
        %3172 = vmatmul.mubr.bf16.gmra.mrb[0].mxu0 %v848
        %v3173 = vpop.f32.mrb[0].mxu0
        %v3174 = vadd.f32 %v642, %v3173
        %v3175 = vpop.f32.mrb[0].mxu0
        %v3176 = vadd.f32 %v646, %v3175
        %v3177 = vpop.f32.mrb[0].mxu0
        %v3178 = vadd.f32 %v642, %v3177
        %v3179 = vpop.f32.mrb[0].mxu0
        %v3180 = vadd.f32 %v646, %v3179
        %3181 = vmatprep.mubr.bf16.mxu0 %v852
        %3182 = vmatmul.mubr.bf16.gmra.mrb[0].mxu0 %v851
        %v3183 = vpop.f32.mrb[0].mxu0
        %v3184 = vadd.f32 %v642, %v3183
        %v3185 = vpop.f32.mrb[0].mxu0
        %v3186 = vadd.f32 %v646, %v3185
        %v3187 = vpop.f32.mrb[0].mxu0
        %v3188 = vadd.f32 %v642, %v3187
        %v3189 = vpop.f32.mrb[0].mxu0
        %v3190 = vadd.f32 %v646, %v3189
        %3191 = vmatprep.mubr.bf16.mxu0 %v855
        %3192 = vmatmul.mubr.bf16.gmra.mrb[0].mxu0 %v854
        %v3193 = vpop.f32.mrb[0].mxu0
        %v3194 = vadd.f32 %v642, %v3193
        %v3195 = vpop.f32.mrb[0].mxu0
        %v3196 = vadd.f32 %v646, %v3195
        %v3197 = vpop.f32.mrb[0].mxu0
        %v3198 = vadd.f32 %v642, %v3197
        %v3199 = vpop.f32.mrb[0].mxu0
        %v3200 = vadd.f32 %v646, %v3199
        %3201 = vmatprep.mubr.bf16.mxu0 %v858
        %3202 = vmatmul.mubr.bf16.gmra.mrb[0].mxu0 %v857
        %v3203 = vpop.f32.mrb[0].mxu0
        %v3204 = vadd.f32 %v642, %v3203
        %v3205 = vpop.f32.mrb[0].mxu0
        %v3206 = vadd.f32 %v646, %v3205
        %v3207 = vpop.f32.mrb[0].mxu0
        %v3208 = vadd.f32 %v642, %v3207
        %v3209 = vpop.f32.mrb[0].mxu0
        %v3210 = vadd.f32 %v646, %v3209
        %3211 = vmatprep.mubr.bf16.mxu0 %v861
        %3212 = vmatmul.mubr.bf16.gmra.mrb[0].mxu0 %v860
        %v3213 = vpop.f32.mrb[0].mxu0
        %v3214 = vadd.f32 %v642, %v3213
        %v3215 = vpop.f32.mrb[0].mxu0
        %v3216 = vadd.f32 %v646, %v3215
        %v3217 = vpop.f32.mrb[0].mxu0
        %v3218 = vadd.f32 %v642, %v3217
        %v3219 = vpop.f32.mrb[0].mxu0
        %v3220 = vadd.f32 %v646, %v3219
        %3221 = vdwg.mxu0
        %3222 = vmatprep.subr.bf16.mxu0 %v1622
        %3223 = vmatpush1.bf16.msra.mxu0 %v1621
        %3224 = vmatprep.subr.bf16.mxu0 %v1630
        %3225 = vmatpush1.bf16.msra.mxu0 %v1629
        %3226 = vmatprep.subr.bf16.mxu0 %v1638
        %3227 = vmatpush1.bf16.msra.mxu0 %v1637
        %3228 = vmatprep.subr.bf16.mxu0 %v1646
        %3229 = vmatpush1.bf16.msra.mxu0 %v1645
        %3230 = vmatprep.subr.bf16.mxu0 %v1654
        %3231 = vmatpush1.bf16.msra.mxu0 %v1653
        %3232 = vmatprep.subr.bf16.mxu0 %v1662
        %3233 = vmatpush1.bf16.msra.mxu0 %v1661
        %3234 = vmatprep.subr.bf16.mxu0 %v1670
        %3235 = vmatpush1.bf16.msra.mxu0 %v1669
        %3236 = vmatprep.subr.bf16.mxu0 %v1678
        %3237 = vmatpush1.bf16.msra.mxu0 %v1677
        %3238 = vmatprep.subr.bf16.mxu0 0
        %3239 = vmatpush1.bf16.msra.mxu0 0
        %3240 = vmatprep.subr.bf16.mxu0 0
        %3241 = vmatpush1.bf16.msra.mxu0 0
        %3242 = vmatprep.subr.bf16.mxu0 0
        %3243 = vmatpush1.bf16.msra.mxu0 0
        %3244 = vmatprep.subr.bf16.mxu0 0
        %3245 = vmatpush1.bf16.msra.mxu0 0
        %3246 = vmatprep.subr.bf16.mxu0 0
        %3247 = vmatpush1.bf16.msra.mxu0 0
        %3248 = vmatprep.subr.bf16.mxu0 0
        %3249 = vmatpush1.bf16.msra.mxu0 0
        %3250 = vmatprep.subr.bf16.mxu0 0
        %3251 = vmatpush1.bf16.msra.mxu0 0
        %3252 = vmatprep.subr.bf16.mxu0 0
        %3253 = vmatpush1.bf16.msra.mxu0 0
        %3254 = vmatprep.mubr.bf16.mxu0 0
        %3255 = vmatmul.mubr.bf16.gmra.mrb[0].mxu0 %v817
        %v3256 = vpop.f32.mrb[0].mxu0
        %v3257 = vadd.f32 %v3064, %v3256
        %v3258 = vpop.f32.mrb[0].mxu0
        %v3259 = vadd.f32 %v3066, %v3258
        %v3260 = vpop.f32.mrb[0].mxu0
        %v3261 = vadd.f32 %v3068, %v3260
        %v3262 = vpop.f32.mrb[0].mxu0
        %v3263 = vadd.f32 %v3070, %v3262
        %3264 = vmatprep.mubr.bf16.mxu0 0
        %3265 = vmatmul.mubr.bf16.gmra.mrb[0].mxu0 %v820
        %v3266 = vpop.f32.mrb[0].mxu0
        %v3267 = vadd.f32 %v3074, %v3266
        %v3268 = vpop.f32.mrb[0].mxu0
        %v3269 = vadd.f32 %v3076, %v3268
        %v3270 = vpop.f32.mrb[0].mxu0
        %v3271 = vadd.f32 %v3078, %v3270
        %v3272 = vpop.f32.mrb[0].mxu0
        %v3273 = vadd.f32 %v3080, %v3272
        %3274 = vmatprep.mubr.bf16.mxu0 0
        %3275 = vmatmul.mubr.bf16.gmra.mrb[0].mxu0 %v823
        %v3276 = vpop.f32.mrb[0].mxu0
        %v3277 = vadd.f32 %v3084, %v3276
        %v3278 = vpop.f32.mrb[0].mxu0
        %v3279 = vadd.f32 %v3086, %v3278
        %v3280 = vpop.f32.mrb[0].mxu0
        %v3281 = vadd.f32 %v3088, %v3280
        %v3282 = vpop.f32.mrb[0].mxu0
        %v3283 = vadd.f32 %v3090, %v3282
        %3284 = vmatprep.mubr.bf16.mxu0 0
        %3285 = vmatmul.mubr.bf16.gmra.mrb[0].mxu0 %v826
        %v3286 = vpop.f32.mrb[0].mxu0
        %v3287 = vadd.f32 %v3094, %v3286
        %v3288 = vpop.f32.mrb[0].mxu0
        %v3289 = vadd.f32 %v3096, %v3288
        %v3290 = vpop.f32.mrb[0].mxu0
        %v3291 = vadd.f32 %v3098, %v3290
        %v3292 = vpop.f32.mrb[0].mxu0
        %v3293 = vadd.f32 %v3100, %v3292
        %3294 = vmatprep.mubr.bf16.mxu0 0
        %3295 = vmatmul.mubr.bf16.gmra.mrb[0].mxu0 %v829
        %v3296 = vpop.f32.mrb[0].mxu0
        %v3297 = vadd.f32 %v3104, %v3296
        %v3298 = vpop.f32.mrb[0].mxu0
        %v3299 = vadd.f32 %v3106, %v3298
        %v3300 = vpop.f32.mrb[0].mxu0
        %v3301 = vadd.f32 %v3108, %v3300
        %v3302 = vpop.f32.mrb[0].mxu0
        %v3303 = vadd.f32 %v3110, %v3302
        %3304 = vmatprep.mubr.bf16.mxu0 0
        %3305 = vmatmul.mubr.bf16.gmra.mrb[0].mxu0 %v832
        %v3306 = vpop.f32.mrb[0].mxu0
        %v3307 = vadd.f32 %v3114, %v3306
        %v3308 = vpop.f32.mrb[0].mxu0
        %v3309 = vadd.f32 %v3116, %v3308
        %v3310 = vpop.f32.mrb[0].mxu0
        %v3311 = vadd.f32 %v3118, %v3310
        %v3312 = vpop.f32.mrb[0].mxu0
        %v3313 = vadd.f32 %v3120, %v3312
        %3314 = vmatprep.mubr.bf16.mxu0 0
        %3315 = vmatmul.mubr.bf16.gmra.mrb[0].mxu0 %v835
        %v3316 = vpop.f32.mrb[0].mxu0
        %v3317 = vadd.f32 %v3124, %v3316
        %v3318 = vpop.f32.mrb[0].mxu0
        %v3319 = vadd.f32 %v3126, %v3318
        %v3320 = vpop.f32.mrb[0].mxu0
        %v3321 = vadd.f32 %v3128, %v3320
        %v3322 = vpop.f32.mrb[0].mxu0
        %v3323 = vadd.f32 %v3130, %v3322
        %3324 = vmatprep.mubr.bf16.mxu0 0
        %3325 = vmatmul.mubr.bf16.gmra.mrb[0].mxu0 %v838
        %v3326 = vpop.f32.mrb[0].mxu0
        %v3327 = vadd.f32 %v3134, %v3326
        %v3328 = vpop.f32.mrb[0].mxu0
        %v3329 = vadd.f32 %v3136, %v3328
        %v3330 = vpop.f32.mrb[0].mxu0
        %v3331 = vadd.f32 %v3138, %v3330
        %v3332 = vpop.f32.mrb[0].mxu0
        %v3333 = vadd.f32 %v3140, %v3332
        %3334 = vmatprep.mubr.bf16.mxu0 0
        %3335 = vmatmul.mubr.bf16.gmra.mrb[0].mxu0 %v841
        %v3336 = vpop.f32.mrb[0].mxu0
        %v3337 = vadd.f32 %v3144, %v3336
        %v3338 = vpop.f32.mrb[0].mxu0
        %v3339 = vadd.f32 %v3146, %v3338
        %v3340 = vpop.f32.mrb[0].mxu0
        %v3341 = vadd.f32 %v3148, %v3340
        %v3342 = vpop.f32.mrb[0].mxu0
        %v3343 = vadd.f32 %v3150, %v3342
        %3344 = vmatprep.mubr.bf16.mxu0 0
        %3345 = vmatmul.mubr.bf16.gmra.mrb[0].mxu0 %v844
        %v3346 = vpop.f32.mrb[0].mxu0
        %v3347 = vadd.f32 %v3154, %v3346
        %v3348 = vpop.f32.mrb[0].mxu0
        %v3349 = vadd.f32 %v3156, %v3348
        %v3350 = vpop.f32.mrb[0].mxu0
        %v3351 = vadd.f32 %v3158, %v3350
        %v3352 = vpop.f32.mrb[0].mxu0
        %v3353 = vadd.f32 %v3160, %v3352
        %3354 = vmatprep.mubr.bf16.mxu0 0
        %3355 = vmatmul.mubr.bf16.gmra.mrb[0].mxu0 %v847
        %v3356 = vpop.f32.mrb[0].mxu0
        %v3357 = vadd.f32 %v3164, %v3356
        %v3358 = vpop.f32.mrb[0].mxu0
        %v3359 = vadd.f32 %v3166, %v3358
        %v3360 = vpop.f32.mrb[0].mxu0
        %v3361 = vadd.f32 %v3168, %v3360
        %v3362 = vpop.f32.mrb[0].mxu0
        %v3363 = vadd.f32 %v3170, %v3362
        %3364 = vmatprep.mubr.bf16.mxu0 0
        %3365 = vmatmul.mubr.bf16.gmra.mrb[0].mxu0 %v850
        %v3366 = vpop.f32.mrb[0].mxu0
        %v3367 = vadd.f32 %v3174, %v3366
        %v3368 = vpop.f32.mrb[0].mxu0
        %v3369 = vadd.f32 %v3176, %v3368
        %v3370 = vpop.f32.mrb[0].mxu0
        %v3371 = vadd.f32 %v3178, %v3370
        %v3372 = vpop.f32.mrb[0].mxu0
        %v3373 = vadd.f32 %v3180, %v3372
        %3374 = vmatprep.mubr.bf16.mxu0 0
        %3375 = vmatmul.mubr.bf16.gmra.mrb[0].mxu0 %v853
        %v3376 = vpop.f32.mrb[0].mxu0
        %v3377 = vadd.f32 %v3184, %v3376
        %v3378 = vpop.f32.mrb[0].mxu0
        %v3379 = vadd.f32 %v3186, %v3378
        %v3380 = vpop.f32.mrb[0].mxu0
        %v3381 = vadd.f32 %v3188, %v3380
        %v3382 = vpop.f32.mrb[0].mxu0
        %v3383 = vadd.f32 %v3190, %v3382
        %3384 = vmatprep.mubr.bf16.mxu0 0
        %3385 = vmatmul.mubr.bf16.gmra.mrb[0].mxu0 %v856
        %v3386 = vpop.f32.mrb[0].mxu0
        %v3387 = vadd.f32 %v3194, %v3386
        %v3388 = vpop.f32.mrb[0].mxu0
        %v3389 = vadd.f32 %v3196, %v3388
        %v3390 = vpop.f32.mrb[0].mxu0
        %v3391 = vadd.f32 %v3198, %v3390
        %v3392 = vpop.f32.mrb[0].mxu0
        %v3393 = vadd.f32 %v3200, %v3392
        %3394 = vmatprep.mubr.bf16.mxu0 0
        %3395 = vmatmul.mubr.bf16.gmra.mrb[0].mxu0 %v859
        %v3396 = vpop.f32.mrb[0].mxu0
        %v3397 = vadd.f32 %v3204, %v3396
        %v3398 = vpop.f32.mrb[0].mxu0
        %v3399 = vadd.f32 %v3206, %v3398
        %v3400 = vpop.f32.mrb[0].mxu0
        %v3401 = vadd.f32 %v3208, %v3400
        %v3402 = vpop.f32.mrb[0].mxu0
        %v3403 = vadd.f32 %v3210, %v3402
        %3404 = vmatprep.mubr.bf16.mxu0 0
        %3405 = vmatmul.mubr.bf16.gmra.mrb[0].mxu0 %v862
        %v3406 = vpop.f32.mrb[0].mxu0
        %v3407 = vadd.f32 %v3214, %v3406
        %v3408 = vpop.f32.mrb[0].mxu0
        %v3409 = vadd.f32 %v3216, %v3408
        %v3410 = vpop.f32.mrb[0].mxu0
        %v3411 = vadd.f32 %v3218, %v3410
        %v3412 = vpop.f32.mrb[0].mxu0
        %v3413 = vadd.f32 %v3220, %v3412
        %3414 = vdwg.mxu0
        %v3415 = vmax.f32 %v2099, 0.0
        %v3416 = vmax.f32 %v2101, 0.0
        %v3417 = vmax.f32 %v2485, 0.0
        %v3418 = vmax.f32 %v2487, 0.0
        %v3419 = vmax.f32 %v2871, 0.0
        %v3420 = vmax.f32 %v2873, 0.0
        %v3421 = vmax.f32 %v3257, 0.0
        %v3422 = vmax.f32 %v3259, 0.0
        %v3423 = vmax.f32 %v2103, 0.0
        %v3424 = vmax.f32 %v2105, 0.0
        %v3425 = vmax.f32 %v2489, 0.0
        %v3426 = vmax.f32 %v2491, 0.0
        %v3427 = vmax.f32 %v2875, 0.0
        %v3428 = vmax.f32 %v2877, 0.0
        %v3429 = vmax.f32 %v3261, 0.0
        %v3430 = vmax.f32 %v3263, 0.0
        %v3431 = vmax.f32 %v2109, 0.0
        %v3432 = vmax.f32 %v2111, 0.0
        %v3433 = vmax.f32 %v2495, 0.0
        %v3434 = vmax.f32 %v2497, 0.0
        %v3435 = vmax.f32 %v2881, 0.0
        %v3436 = vmax.f32 %v2883, 0.0
        %v3437 = vmax.f32 %v3267, 0.0
        %v3438 = vmax.f32 %v3269, 0.0
        %v3439 = vmax.f32 %v2113, 0.0
        %v3440 = vmax.f32 %v2115, 0.0
        %v3441 = vmax.f32 %v2499, 0.0
        %v3442 = vmax.f32 %v2501, 0.0
        %v3443 = vmax.f32 %v2885, 0.0
        %v3444 = vmax.f32 %v2887, 0.0
        %v3445 = vmax.f32 %v3271, 0.0
        %v3446 = vmax.f32 %v3273, 0.0
        %v3447 = vmax.f32 %v2119, 0.0
        %v3448 = vmax.f32 %v2121, 0.0
        %v3449 = vmax.f32 %v2505, 0.0
        %v3450 = vmax.f32 %v2507, 0.0
        %v3451 = vmax.f32 %v2891, 0.0
        %v3452 = vmax.f32 %v2893, 0.0
        %v3453 = vmax.f32 %v3277, 0.0
        %v3454 = vmax.f32 %v3279, 0.0
        %v3455 = vmax.f32 %v2123, 0.0
        %v3456 = vmax.f32 %v2125, 0.0
        %v3457 = vmax.f32 %v2509, 0.0
        %v3458 = vmax.f32 %v2511, 0.0
        %v3459 = vmax.f32 %v2895, 0.0
        %v3460 = vmax.f32 %v2897, 0.0
        %v3461 = vmax.f32 %v3281, 0.0
        %v3462 = vmax.f32 %v3283, 0.0
        %v3463 = vmax.f32 %v2129, 0.0
        %v3464 = vmax.f32 %v2131, 0.0
        %v3465 = vmax.f32 %v2515, 0.0
        %v3466 = vmax.f32 %v2517, 0.0
        %v3467 = vmax.f32 %v2901, 0.0
        %v3468 = vmax.f32 %v2903, 0.0
        %v3469 = vmax.f32 %v3287, 0.0
        %v3470 = vmax.f32 %v3289, 0.0
        %v3471 = vmax.f32 %v2133, 0.0
        %v3472 = vmax.f32 %v2135, 0.0
        %v3473 = vmax.f32 %v2519, 0.0
        %v3474 = vmax.f32 %v2521, 0.0
        %v3475 = vmax.f32 %v2905, 0.0
        %v3476 = vmax.f32 %v2907, 0.0
        %v3477 = vmax.f32 %v3291, 0.0
        %v3478 = vmax.f32 %v3293, 0.0
        %v3479 = vmax.f32 %v2139, 0.0
        %v3480 = vmax.f32 %v2141, 0.0
        %v3481 = vmax.f32 %v2525, 0.0
        %v3482 = vmax.f32 %v2527, 0.0
        %v3483 = vmax.f32 %v2911, 0.0
        %v3484 = vmax.f32 %v2913, 0.0
        %v3485 = vmax.f32 %v3297, 0.0
        %v3486 = vmax.f32 %v3299, 0.0
        %v3487 = vmax.f32 %v2143, 0.0
        %v3488 = vmax.f32 %v2145, 0.0
        %v3489 = vmax.f32 %v2529, 0.0
        %v3490 = vmax.f32 %v2531, 0.0
        %v3491 = vmax.f32 %v2915, 0.0
        %v3492 = vmax.f32 %v2917, 0.0
        %v3493 = vmax.f32 %v3301, 0.0
        %v3494 = vmax.f32 %v3303, 0.0
        %v3495 = vmax.f32 %v2149, 0.0
        %v3496 = vmax.f32 %v2151, 0.0
        %v3497 = vmax.f32 %v2535, 0.0
        %v3498 = vmax.f32 %v2537, 0.0
        %v3499 = vmax.f32 %v2921, 0.0
        %v3500 = vmax.f32 %v2923, 0.0
        %v3501 = vmax.f32 %v3307, 0.0
        %v3502 = vmax.f32 %v3309, 0.0
        %v3503 = vmax.f32 %v2153, 0.0
        %v3504 = vmax.f32 %v2155, 0.0
        %v3505 = vmax.f32 %v2539, 0.0
        %v3506 = vmax.f32 %v2541, 0.0
        %v3507 = vmax.f32 %v2925, 0.0
        %v3508 = vmax.f32 %v2927, 0.0
        %v3509 = vmax.f32 %v3311, 0.0
        %v3510 = vmax.f32 %v3313, 0.0
        %v3511 = vmax.f32 %v2159, 0.0
        %v3512 = vmax.f32 %v2161, 0.0
        %v3513 = vmax.f32 %v2545, 0.0
        %v3514 = vmax.f32 %v2547, 0.0
        %v3515 = vmax.f32 %v2931, 0.0
        %v3516 = vmax.f32 %v2933, 0.0
        %v3517 = vmax.f32 %v3317, 0.0
        %v3518 = vmax.f32 %v3319, 0.0
        %v3519 = vmax.f32 %v2163, 0.0
        %v3520 = vmax.f32 %v2165, 0.0
        %v3521 = vmax.f32 %v2549, 0.0
        %v3522 = vmax.f32 %v2551, 0.0
        %v3523 = vmax.f32 %v2935, 0.0
        %v3524 = vmax.f32 %v2937, 0.0
        %v3525 = vmax.f32 %v3321, 0.0
        %v3526 = vmax.f32 %v3323, 0.0
        %v3527 = vmax.f32 %v2169, 0.0
        %v3528 = vmax.f32 %v2171, 0.0
        %v3529 = vmax.f32 %v2555, 0.0
        %v3530 = vmax.f32 %v2557, 0.0
        %v3531 = vmax.f32 %v2941, 0.0
        %v3532 = vmax.f32 %v2943, 0.0
        %v3533 = vmax.f32 %v3327, 0.0
        %v3534 = vmax.f32 %v3329, 0.0
        %v3535 = vmax.f32 %v2173, 0.0
        %v3536 = vmax.f32 %v2175, 0.0
        %v3537 = vmax.f32 %v2559, 0.0
        %v3538 = vmax.f32 %v2561, 0.0
        %v3539 = vmax.f32 %v2945, 0.0
        %v3540 = vmax.f32 %v2947, 0.0
        %v3541 = vmax.f32 %v3331, 0.0
        %v3542 = vmax.f32 %v3333, 0.0
        %v3543 = vmax.f32 %v2179, 0.0
        %v3544 = vmax.f32 %v2181, 0.0
        %v3545 = vmax.f32 %v2565, 0.0
        %v3546 = vmax.f32 %v2567, 0.0
        %v3547 = vmax.f32 %v2951, 0.0
        %v3548 = vmax.f32 %v2953, 0.0
        %v3549 = vmax.f32 %v3337, 0.0
        %v3550 = vmax.f32 %v3339, 0.0
        %v3551 = vmax.f32 %v2183, 0.0
        %v3552 = vmax.f32 %v2185, 0.0
        %v3553 = vmax.f32 %v2569, 0.0
        %v3554 = vmax.f32 %v2571, 0.0
        %v3555 = vmax.f32 %v2955, 0.0
        %v3556 = vmax.f32 %v2957, 0.0
        %v3557 = vmax.f32 %v3341, 0.0
        %v3558 = vmax.f32 %v3343, 0.0
        %v3559 = vmax.f32 %v2189, 0.0
        %v3560 = vmax.f32 %v2191, 0.0
        %v3561 = vmax.f32 %v2575, 0.0
        %v3562 = vmax.f32 %v2577, 0.0
        %v3563 = vmax.f32 %v2961, 0.0
        %v3564 = vmax.f32 %v2963, 0.0
        %v3565 = vmax.f32 %v3347, 0.0
        %v3566 = vmax.f32 %v3349, 0.0
        %v3567 = vmax.f32 %v2193, 0.0
        %v3568 = vmax.f32 %v2195, 0.0
        %v3569 = vmax.f32 %v2579, 0.0
        %v3570 = vmax.f32 %v2581, 0.0
        %v3571 = vmax.f32 %v2965, 0.0
        %v3572 = vmax.f32 %v2967, 0.0
        %v3573 = vmax.f32 %v3351, 0.0
        %v3574 = vmax.f32 %v3353, 0.0
        %v3575 = vmax.f32 %v2199, 0.0
        %v3576 = vmax.f32 %v2201, 0.0
        %v3577 = vmax.f32 %v2585, 0.0
        %v3578 = vmax.f32 %v2587, 0.0
        %v3579 = vmax.f32 %v2971, 0.0
        %v3580 = vmax.f32 %v2973, 0.0
        %v3581 = vmax.f32 %v3357, 0.0
        %v3582 = vmax.f32 %v3359, 0.0
        %v3583 = vmax.f32 %v2203, 0.0
        %v3584 = vmax.f32 %v2205, 0.0
        %v3585 = vmax.f32 %v2589, 0.0
        %v3586 = vmax.f32 %v2591, 0.0
        %v3587 = vmax.f32 %v2975, 0.0
        %v3588 = vmax.f32 %v2977, 0.0
        %v3589 = vmax.f32 %v3361, 0.0
        %v3590 = vmax.f32 %v3363, 0.0
        %v3591 = vmax.f32 %v2209, 0.0
        %v3592 = vmax.f32 %v2211, 0.0
        %v3593 = vmax.f32 %v2595, 0.0
        %v3594 = vmax.f32 %v2597, 0.0
        %v3595 = vmax.f32 %v2981, 0.0
        %v3596 = vmax.f32 %v2983, 0.0
        %v3597 = vmax.f32 %v3367, 0.0
        %v3598 = vmax.f32 %v3369, 0.0
        %v3599 = vmax.f32 %v2213, 0.0
        %v3600 = vmax.f32 %v2215, 0.0
        %v3601 = vmax.f32 %v2599, 0.0
        %v3602 = vmax.f32 %v2601, 0.0
        %v3603 = vmax.f32 %v2985, 0.0
        %v3604 = vmax.f32 %v2987, 0.0
        %v3605 = vmax.f32 %v3371, 0.0
        %v3606 = vmax.f32 %v3373, 0.0
        %v3607 = vmax.f32 %v2219, 0.0
        %v3608 = vmax.f32 %v2221, 0.0
        %v3609 = vmax.f32 %v2605, 0.0
        %v3610 = vmax.f32 %v2607, 0.0
        %v3611 = vmax.f32 %v2991, 0.0
        %v3612 = vmax.f32 %v2993, 0.0
        %v3613 = vmax.f32 %v3377, 0.0
        %v3614 = vmax.f32 %v3379, 0.0
        %v3615 = vmax.f32 %v2223, 0.0
        %v3616 = vmax.f32 %v2225, 0.0
        %v3617 = vmax.f32 %v2609, 0.0
        %v3618 = vmax.f32 %v2611, 0.0
        %v3619 = vmax.f32 %v2995, 0.0
        %v3620 = vmax.f32 %v2997, 0.0
        %v3621 = vmax.f32 %v3381, 0.0
        %v3622 = vmax.f32 %v3383, 0.0
        %v3623 = vmax.f32 %v2229, 0.0
        %v3624 = vmax.f32 %v2231, 0.0
        %v3625 = vmax.f32 %v2615, 0.0
        %v3626 = vmax.f32 %v2617, 0.0
        %v3627 = vmax.f32 %v3001, 0.0
        %v3628 = vmax.f32 %v3003, 0.0
        %v3629 = vmax.f32 %v3387, 0.0
        %v3630 = vmax.f32 %v3389, 0.0
        %v3631 = vmax.f32 %v2233, 0.0
        %v3632 = vmax.f32 %v2235, 0.0
        %v3633 = vmax.f32 %v2619, 0.0
        %v3634 = vmax.f32 %v2621, 0.0
        %v3635 = vmax.f32 %v3005, 0.0
        %v3636 = vmax.f32 %v3007, 0.0
        %v3637 = vmax.f32 %v3391, 0.0
        %v3638 = vmax.f32 %v3393, 0.0
        %v3639 = vmax.f32 %v2239, 0.0
        %v3640 = vmax.f32 %v2241, 0.0
        %v3641 = vmax.f32 %v2625, 0.0
        %v3642 = vmax.f32 %v2627, 0.0
        %v3643 = vmax.f32 %v3011, 0.0
        %v3644 = vmax.f32 %v3013, 0.0
        %v3645 = vmax.f32 %v3397, 0.0
        %v3646 = vmax.f32 %v3399, 0.0
        %v3647 = vmax.f32 %v2243, 0.0
        %v3648 = vmax.f32 %v2245, 0.0
        %v3649 = vmax.f32 %v2629, 0.0
        %v3650 = vmax.f32 %v2631, 0.0
        %v3651 = vmax.f32 %v3015, 0.0
        %v3652 = vmax.f32 %v3017, 0.0
        %v3653 = vmax.f32 %v3401, 0.0
        %v3654 = vmax.f32 %v3403, 0.0
        %v3655 = vmax.f32 %v2249, 0.0
        %v3656 = vmax.f32 %v2251, 0.0
        %v3657 = vmax.f32 %v2635, 0.0
        %v3658 = vmax.f32 %v2637, 0.0
        %v3659 = vmax.f32 %v3021, 0.0
        %v3660 = vmax.f32 %v3023, 0.0
        %v3661 = vmax.f32 %v3407, 0.0
        %v3662 = vmax.f32 %v3409, 0.0
        %v3663 = vmax.f32 %v2253, 0.0
        %v3664 = vmax.f32 %v2255, 0.0
        %v3665 = vmax.f32 %v2639, 0.0
        %v3666 = vmax.f32 %v2641, 0.0
        %v3667 = vmax.f32 %v3025, 0.0
        %v3668 = vmax.f32 %v3027, 0.0
        %v3669 = vmax.f32 %v3411, 0.0
        %v3670 = vmax.f32 %v3413, 0.0
        %v3671 = vpack.c.bf16 %v3423, %v3415
        %v3672 = vpack.c.bf16 %v3424, %v3416
        %v3673 = vpack.c.bf16 %v3425, %v3417
        %v3674 = vpack.c.bf16 %v3426, %v3418
        %v3675 = vpack.c.bf16 %v3427, %v3419
        %v3676 = vpack.c.bf16 %v3428, %v3420
        %v3677 = vpack.c.bf16 %v3429, %v3421
        %v3678 = vpack.c.bf16 %v3430, %v3422
        %v3679 = vpack.c.bf16 %v3439, %v3431
        %v3680 = vpack.c.bf16 %v3440, %v3432
        %v3681 = vpack.c.bf16 %v3441, %v3433
        %v3682 = vpack.c.bf16 %v3442, %v3434
        %v3683 = vpack.c.bf16 %v3443, %v3435
        %v3684 = vpack.c.bf16 %v3444, %v3436
        %v3685 = vpack.c.bf16 %v3445, %v3437
        %v3686 = vpack.c.bf16 %v3446, %v3438
        %v3687 = vpack.c.bf16 %v3455, %v3447
        %v3688 = vpack.c.bf16 %v3456, %v3448
        %v3689 = vpack.c.bf16 %v3457, %v3449
        %v3690 = vpack.c.bf16 %v3458, %v3450
        %v3691 = vpack.c.bf16 %v3459, %v3451
        %v3692 = vpack.c.bf16 %v3460, %v3452
        %v3693 = vpack.c.bf16 %v3461, %v3453
        %v3694 = vpack.c.bf16 %v3462, %v3454
        %v3695 = vpack.c.bf16 %v3471, %v3463
        %v3696 = vpack.c.bf16 %v3472, %v3464
        %v3697 = vpack.c.bf16 %v3473, %v3465
        %v3698 = vpack.c.bf16 %v3474, %v3466
        %v3699 = vpack.c.bf16 %v3475, %v3467
        %v3700 = vpack.c.bf16 %v3476, %v3468
        %v3701 = vpack.c.bf16 %v3477, %v3469
        %v3702 = vpack.c.bf16 %v3478, %v3470
        %v3703 = vpack.c.bf16 %v3487, %v3479
        %v3704 = vpack.c.bf16 %v3488, %v3480
        %v3705 = vpack.c.bf16 %v3489, %v3481
        %v3706 = vpack.c.bf16 %v3490, %v3482
        %v3707 = vpack.c.bf16 %v3491, %v3483
        %v3708 = vpack.c.bf16 %v3492, %v3484
        %v3709 = vpack.c.bf16 %v3493, %v3485
        %v3710 = vpack.c.bf16 %v3494, %v3486
        %v3711 = vpack.c.bf16 %v3503, %v3495
        %v3712 = vpack.c.bf16 %v3504, %v3496
        %v3713 = vpack.c.bf16 %v3505, %v3497
        %v3714 = vpack.c.bf16 %v3506, %v3498
        %v3715 = vpack.c.bf16 %v3507, %v3499
        %v3716 = vpack.c.bf16 %v3508, %v3500
        %v3717 = vpack.c.bf16 %v3509, %v3501
        %v3718 = vpack.c.bf16 %v3510, %v3502
        %v3719 = vpack.c.bf16 %v3519, %v3511
        %v3720 = vpack.c.bf16 %v3520, %v3512
        %v3721 = vpack.c.bf16 %v3521, %v3513
        %v3722 = vpack.c.bf16 %v3522, %v3514
        %v3723 = vpack.c.bf16 %v3523, %v3515
        %v3724 = vpack.c.bf16 %v3524, %v3516
        %v3725 = vpack.c.bf16 %v3525, %v3517
        %v3726 = vpack.c.bf16 %v3526, %v3518
        %v3727 = vpack.c.bf16 %v3535, %v3527
        %v3728 = vpack.c.bf16 %v3536, %v3528
        %v3729 = vpack.c.bf16 %v3537, %v3529
        %v3730 = vpack.c.bf16 %v3538, %v3530
        %v3731 = vpack.c.bf16 %v3539, %v3531
        %v3732 = vpack.c.bf16 %v3540, %v3532
        %v3733 = vpack.c.bf16 %v3541, %v3533
        %v3734 = vpack.c.bf16 %v3542, %v3534
        %v3735 = vpack.c.bf16 %v3551, %v3543
        %v3736 = vpack.c.bf16 %v3552, %v3544
        %v3737 = vpack.c.bf16 %v3553, %v3545
        %v3738 = vpack.c.bf16 %v3554, %v3546
        %v3739 = vpack.c.bf16 %v3555, %v3547
        %v3740 = vpack.c.bf16 %v3556, %v3548
        %v3741 = vpack.c.bf16 %v3557, %v3549
        %v3742 = vpack.c.bf16 %v3558, %v3550
        %v3743 = vpack.c.bf16 %v3567, %v3559
        %v3744 = vpack.c.bf16 %v3568, %v3560
        %v3745 = vpack.c.bf16 %v3569, %v3561
        %v3746 = vpack.c.bf16 %v3570, %v3562
        %v3747 = vpack.c.bf16 %v3571, %v3563
        %v3748 = vpack.c.bf16 %v3572, %v3564
        %v3749 = vpack.c.bf16 %v3573, %v3565
        %v3750 = vpack.c.bf16 %v3574, %v3566
        %v3751 = vpack.c.bf16 %v3583, %v3575
        %v3752 = vpack.c.bf16 %v3584, %v3576
        %v3753 = vpack.c.bf16 %v3585, %v3577
        %v3754 = vpack.c.bf16 %v3586, %v3578
        %v3755 = vpack.c.bf16 %v3587, %v3579
        %v3756 = vpack.c.bf16 %v3588, %v3580
        %v3757 = vpack.c.bf16 %v3589, %v3581
        %v3758 = vpack.c.bf16 %v3590, %v3582
        %v3759 = vpack.c.bf16 %v3599, %v3591
        %v3760 = vpack.c.bf16 %v3600, %v3592
        %v3761 = vpack.c.bf16 %v3601, %v3593
        %v3762 = vpack.c.bf16 %v3602, %v3594
        %v3763 = vpack.c.bf16 %v3603, %v3595
        %v3764 = vpack.c.bf16 %v3604, %v3596
        %v3765 = vpack.c.bf16 %v3605, %v3597
        %v3766 = vpack.c.bf16 %v3606, %v3598
        %v3767 = vpack.c.bf16 %v3615, %v3607
        %v3768 = vpack.c.bf16 %v3616, %v3608
        %v3769 = vpack.c.bf16 %v3617, %v3609
        %v3770 = vpack.c.bf16 %v3618, %v3610
        %v3771 = vpack.c.bf16 %v3619, %v3611
        %v3772 = vpack.c.bf16 %v3620, %v3612
        %v3773 = vpack.c.bf16 %v3621, %v3613
        %v3774 = vpack.c.bf16 %v3622, %v3614
        %v3775 = vpack.c.bf16 %v3631, %v3623
        %v3776 = vpack.c.bf16 %v3632, %v3624
        %v3777 = vpack.c.bf16 %v3633, %v3625
        %v3778 = vpack.c.bf16 %v3634, %v3626
        %v3779 = vpack.c.bf16 %v3635, %v3627
        %v3780 = vpack.c.bf16 %v3636, %v3628
        %v3781 = vpack.c.bf16 %v3637, %v3629
        %v3782 = vpack.c.bf16 %v3638, %v3630
        %v3783 = vpack.c.bf16 %v3647, %v3639
        %v3784 = vpack.c.bf16 %v3648, %v3640
        %v3785 = vpack.c.bf16 %v3649, %v3641
        %v3786 = vpack.c.bf16 %v3650, %v3642
        %v3787 = vpack.c.bf16 %v3651, %v3643
        %v3788 = vpack.c.bf16 %v3652, %v3644
        %v3789 = vpack.c.bf16 %v3653, %v3645
        %v3790 = vpack.c.bf16 %v3654, %v3646
        %v3791 = vpack.c.bf16 %v3663, %v3655
        %v3792 = vpack.c.bf16 %v3664, %v3656
        %v3793 = vpack.c.bf16 %v3665, %v3657
        %v3794 = vpack.c.bf16 %v3666, %v3658
        %v3795 = vpack.c.bf16 %v3667, %v3659
        %v3796 = vpack.c.bf16 %v3668, %v3660
        %v3797 = vpack.c.bf16 %v3669, %v3661
        %v3798 = vpack.c.bf16 %v3670, %v3662
        %v3799 = vld [vmem:[#allocation8] sm:$0xff]
        %v3800 = vld [vmem:[#allocation8 + $0x8] sm:$0xff]
        %v3801 = vld [vmem:[#allocation8 + $0x10] sm:$0xff]
        %v3802 = vld [vmem:[#allocation8 + $0x18] sm:$0xff]
        %v3803 = vld [vmem:[#allocation8 + $0x20] sm:$0xff]
        %v3804 = vld [vmem:[#allocation8 + $0x28] sm:$0xff]
        %v3805 = vld [vmem:[#allocation8 + $0x30] sm:$0xff]
        %v3806 = vld [vmem:[#allocation8 + $0x38] sm:$0xff]
        %v3807 = vld [vmem:[#allocation8 + $0x40] sm:$0xff]
        %v3808 = vld [vmem:[#allocation8 + $0x48] sm:$0xff]
        %v3809 = vld [vmem:[#allocation8 + $0x50] sm:$0xff]
        %v3810 = vld [vmem:[#allocation8 + $0x58] sm:$0xff]
        %v3811 = vld [vmem:[#allocation8 + $0x60] sm:$0xff]
        %v3812 = vld [vmem:[#allocation8 + $0x68] sm:$0xff]
        %v3813 = vld [vmem:[#allocation8 + $0x70] sm:$0xff]
        %v3814 = vld [vmem:[#allocation8 + $0x78] sm:$0xff]
        %v3815 = vld [vmem:[#allocation8 + $0x80] sm:$0xff]
        %v3816 = vld [vmem:[#allocation8 + $0x88] sm:$0xff]
        %v3817 = vld [vmem:[#allocation8 + $0x90] sm:$0xff]
        %v3818 = vld [vmem:[#allocation8 + $0x98] sm:$0xff]
        %v3819 = vld [vmem:[#allocation8 + $0xa0] sm:$0xff]
        %v3820 = vld [vmem:[#allocation8 + $0xa8] sm:$0xff]
        %v3821 = vld [vmem:[#allocation8 + $0xb0] sm:$0xff]
        %v3822 = vld [vmem:[#allocation8 + $0xb8] sm:$0xff]
        %v3823 = vld [vmem:[#allocation8 + $0xc0] sm:$0xff]
        %v3824 = vld [vmem:[#allocation8 + $0xc8] sm:$0xff]
        %v3825 = vld [vmem:[#allocation8 + $0xd0] sm:$0xff]
        %v3826 = vld [vmem:[#allocation8 + $0xd8] sm:$0xff]
        %v3827 = vld [vmem:[#allocation8 + $0xe0] sm:$0xff]
        %v3828 = vld [vmem:[#allocation8 + $0xe8] sm:$0xff]
        %v3829 = vld [vmem:[#allocation8 + $0xf0] sm:$0xff]
        %v3830 = vld [vmem:[#allocation8 + $0xf8] sm:$0xff]
        %v3831 = vld [vmem:[#allocation8 + $0x100] sm:$0xff]
        %v3832 = vld [vmem:[#allocation8 + $0x108] sm:$0xff]
        %v3833 = vld [vmem:[#allocation8 + $0x110] sm:$0xff]
        %v3834 = vld [vmem:[#allocation8 + $0x118] sm:$0xff]
        %v3835 = vld [vmem:[#allocation8 + $0x120] sm:$0xff]
        %v3836 = vld [vmem:[#allocation8 + $0x128] sm:$0xff]
        %v3837 = vld [vmem:[#allocation8 + $0x130] sm:$0xff]
        %v3838 = vld [vmem:[#allocation8 + $0x138] sm:$0xff]
        %v3839 = vld [vmem:[#allocation8 + $0x140] sm:$0xff]
        %v3840 = vld [vmem:[#allocation8 + $0x148] sm:$0xff]
        %v3841 = vld [vmem:[#allocation8 + $0x150] sm:$0xff]
        %v3842 = vld [vmem:[#allocation8 + $0x158] sm:$0xff]
        %v3843 = vld [vmem:[#allocation8 + $0x160] sm:$0xff]
        %v3844 = vld [vmem:[#allocation8 + $0x168] sm:$0xff]
        %v3845 = vld [vmem:[#allocation8 + $0x170] sm:$0xff]
        %v3846 = vld [vmem:[#allocation8 + $0x178] sm:$0xff]
        %v3847 = vld [vmem:[#allocation8 + $0x180] sm:$0xff]
        %v3848 = vld [vmem:[#allocation8 + $0x188] sm:$0xff]
        %v3849 = vld [vmem:[#allocation8 + $0x190] sm:$0xff]
        %v3850 = vld [vmem:[#allocation8 + $0x198] sm:$0xff]
        %v3851 = vld [vmem:[#allocation8 + $0x1a0] sm:$0xff]
        %v3852 = vld [vmem:[#allocation8 + $0x1a8] sm:$0xff]
        %v3853 = vld [vmem:[#allocation8 + $0x1b0] sm:$0xff]
        %v3854 = vld [vmem:[#allocation8 + $0x1b8] sm:$0xff]
        %v3855 = vld [vmem:[#allocation8 + $0x1c0] sm:$0xff]
        %v3856 = vld [vmem:[#allocation8 + $0x1c8] sm:$0xff]
        %v3857 = vld [vmem:[#allocation8 + $0x1d0] sm:$0xff]
        %v3858 = vld [vmem:[#allocation8 + $0x1d8] sm:$0xff]
        %v3859 = vld [vmem:[#allocation8 + $0x1e0] sm:$0xff]
        %v3860 = vld [vmem:[#allocation8 + $0x1e8] sm:$0xff]
        %v3861 = vld [vmem:[#allocation8 + $0x1f0] sm:$0xff]
        %v3862 = vld [vmem:[#allocation8 + $0x1f8] sm:$0xff]
        %v3863 = vld [vmem:[#allocation8 + $0x200] sm:$0xff]
        %v3864 = vld [vmem:[#allocation8 + $0x208] sm:$0xff]
        %v3865 = vld [vmem:[#allocation8 + $0x210] sm:$0xff]
        %v3866 = vld [vmem:[#allocation8 + $0x218] sm:$0xff]
        %v3867 = vld [vmem:[#allocation8 + $0x220] sm:$0xff]
        %v3868 = vld [vmem:[#allocation8 + $0x228] sm:$0xff]
        %v3869 = vld [vmem:[#allocation8 + $0x230] sm:$0xff]
        %v3870 = vld [vmem:[#allocation8 + $0x238] sm:$0xff]
        %v3871 = vld [vmem:[#allocation8 + $0x240] sm:$0xff]
        %v3872 = vld [vmem:[#allocation8 + $0x248] sm:$0xff]
        %v3873 = vld [vmem:[#allocation8 + $0x250] sm:$0xff]
        %v3874 = vld [vmem:[#allocation8 + $0x258] sm:$0xff]
        %v3875 = vld [vmem:[#allocation8 + $0x260] sm:$0xff]
        %v3876 = vld [vmem:[#allocation8 + $0x268] sm:$0xff]
        %v3877 = vld [vmem:[#allocation8 + $0x270] sm:$0xff]
        %v3878 = vld [vmem:[#allocation8 + $0x278] sm:$0xff]
        %v3879 = vld [vmem:[#allocation8 + $0x280] sm:$0xff]
        %v3880 = vld [vmem:[#allocation8 + $0x288] sm:$0xff]
        %v3881 = vld [vmem:[#allocation8 + $0x290] sm:$0xff]
        %v3882 = vld [vmem:[#allocation8 + $0x298] sm:$0xff]
        %v3883 = vld [vmem:[#allocation8 + $0x2a0] sm:$0xff]
        %v3884 = vld [vmem:[#allocation8 + $0x2a8] sm:$0xff]
        %v3885 = vld [vmem:[#allocation8 + $0x2b0] sm:$0xff]
        %v3886 = vld [vmem:[#allocation8 + $0x2b8] sm:$0xff]
        %v3887 = vld [vmem:[#allocation8 + $0x2c0] sm:$0xff]
        %v3888 = vld [vmem:[#allocation8 + $0x2c8] sm:$0xff]
        %v3889 = vld [vmem:[#allocation8 + $0x2d0] sm:$0xff]
        %v3890 = vld [vmem:[#allocation8 + $0x2d8] sm:$0xff]
        %v3891 = vld [vmem:[#allocation8 + $0x2e0] sm:$0xff]
        %v3892 = vld [vmem:[#allocation8 + $0x2e8] sm:$0xff]
        %v3893 = vld [vmem:[#allocation8 + $0x2f0] sm:$0xff]
        %v3894 = vld [vmem:[#allocation8 + $0x2f8] sm:$0xff]
        %v3895 = vld [vmem:[#allocation8 + $0x300] sm:$0xff]
        %v3896 = vld [vmem:[#allocation8 + $0x308] sm:$0xff]
        %v3897 = vld [vmem:[#allocation8 + $0x310] sm:$0xff]
        %v3898 = vld [vmem:[#allocation8 + $0x318] sm:$0xff]
        %v3899 = vld [vmem:[#allocation8 + $0x320] sm:$0xff]
        %v3900 = vld [vmem:[#allocation8 + $0x328] sm:$0xff]
        %v3901 = vld [vmem:[#allocation8 + $0x330] sm:$0xff]
        %v3902 = vld [vmem:[#allocation8 + $0x338] sm:$0xff]
        %v3903 = vld [vmem:[#allocation8 + $0x340] sm:$0xff]
        %v3904 = vld [vmem:[#allocation8 + $0x348] sm:$0xff]
        %v3905 = vld [vmem:[#allocation8 + $0x350] sm:$0xff]
        %v3906 = vld [vmem:[#allocation8 + $0x358] sm:$0xff]
        %v3907 = vld [vmem:[#allocation8 + $0x360] sm:$0xff]
        %v3908 = vld [vmem:[#allocation8 + $0x368] sm:$0xff]
        %v3909 = vld [vmem:[#allocation8 + $0x370] sm:$0xff]
        %v3910 = vld [vmem:[#allocation8 + $0x378] sm:$0xff]
        %v3911 = vld [vmem:[#allocation8 + $0x380] sm:$0xff]
        %v3912 = vld [vmem:[#allocation8 + $0x388] sm:$0xff]
        %v3913 = vld [vmem:[#allocation8 + $0x390] sm:$0xff]
        %v3914 = vld [vmem:[#allocation8 + $0x398] sm:$0xff]
        %v3915 = vld [vmem:[#allocation8 + $0x3a0] sm:$0xff]
        %v3916 = vld [vmem:[#allocation8 + $0x3a8] sm:$0xff]
        %v3917 = vld [vmem:[#allocation8 + $0x3b0] sm:$0xff]
        %v3918 = vld [vmem:[#allocation8 + $0x3b8] sm:$0xff]
        %v3919 = vld [vmem:[#allocation8 + $0x3c0] sm:$0xff]
        %v3920 = vld [vmem:[#allocation8 + $0x3c8] sm:$0xff]
        %v3921 = vld [vmem:[#allocation8 + $0x3d0] sm:$0xff]
        %v3922 = vld [vmem:[#allocation8 + $0x3d8] sm:$0xff]
        %v3923 = vld [vmem:[#allocation8 + $0x3e0] sm:$0xff]
        %v3924 = vld [vmem:[#allocation8 + $0x3e8] sm:$0xff]
        %v3925 = vld [vmem:[#allocation8 + $0x3f0] sm:$0xff]
        %v3926 = vld [vmem:[#allocation8 + $0x3f8] sm:$0xff]
        %v3927 = vld [vmem:[#allocation8 + $0x400] sm:$0xff]
        %v3928 = vld [vmem:[#allocation8 + $0x408] sm:$0xff]
        %v3929 = vld [vmem:[#allocation8 + $0x410] sm:$0xff]
        %v3930 = vld [vmem:[#allocation8 + $0x418] sm:$0xff]
        %v3931 = vld [vmem:[#allocation8 + $0x420] sm:$0xff]
        %v3932 = vld [vmem:[#allocation8 + $0x428] sm:$0xff]
        %v3933 = vld [vmem:[#allocation8 + $0x430] sm:$0xff]
        %v3934 = vld [vmem:[#allocation8 + $0x438] sm:$0xff]
        %v3935 = vld [vmem:[#allocation8 + $0x440] sm:$0xff]
        %v3936 = vld [vmem:[#allocation8 + $0x448] sm:$0xff]
        %v3937 = vld [vmem:[#allocation8 + $0x450] sm:$0xff]
        %v3938 = vld [vmem:[#allocation8 + $0x458] sm:$0xff]
        %v3939 = vld [vmem:[#allocation8 + $0x460] sm:$0xff]
        %v3940 = vld [vmem:[#allocation8 + $0x468] sm:$0xff]
        %v3941 = vld [vmem:[#allocation8 + $0x470] sm:$0xff]
        %v3942 = vld [vmem:[#allocation8 + $0x478] sm:$0xff]
        %v3943 = vld [vmem:[#allocation8 + $0x480] sm:$0xff]
        %v3944 = vld [vmem:[#allocation8 + $0x488] sm:$0xff]
        %v3945 = vld [vmem:[#allocation8 + $0x490] sm:$0xff]
        %v3946 = vld [vmem:[#allocation8 + $0x498] sm:$0xff]
        %v3947 = vld [vmem:[#allocation8 + $0x4a0] sm:$0xff]
        %v3948 = vld [vmem:[#allocation8 + $0x4a8] sm:$0xff]
        %v3949 = vld [vmem:[#allocation8 + $0x4b0] sm:$0xff]
        %v3950 = vld [vmem:[#allocation8 + $0x4b8] sm:$0xff]
        %v3951 = vld [vmem:[#allocation8 + $0x4c0] sm:$0xff]
        %v3952 = vld [vmem:[#allocation8 + $0x4c8] sm:$0xff]
        %v3953 = vld [vmem:[#allocation8 + $0x4d0] sm:$0xff]
        %v3954 = vld [vmem:[#allocation8 + $0x4d8] sm:$0xff]
        %v3955 = vld [vmem:[#allocation8 + $0x4e0] sm:$0xff]
        %v3956 = vld [vmem:[#allocation8 + $0x4e8] sm:$0xff]
        %v3957 = vld [vmem:[#allocation8 + $0x4f0] sm:$0xff]
        %v3958 = vld [vmem:[#allocation8 + $0x4f8] sm:$0xff]
        %v3959 = vld [vmem:[#allocation8 + $0x500] sm:$0xff]
        %v3960 = vld [vmem:[#allocation8 + $0x508] sm:$0xff]
        %v3961 = vld [vmem:[#allocation8 + $0x510] sm:$0xff]
        %v3962 = vld [vmem:[#allocation8 + $0x518] sm:$0xff]
        %v3963 = vld [vmem:[#allocation8 + $0x520] sm:$0xff]
        %v3964 = vld [vmem:[#allocation8 + $0x528] sm:$0xff]
        %v3965 = vld [vmem:[#allocation8 + $0x530] sm:$0xff]
        %v3966 = vld [vmem:[#allocation8 + $0x538] sm:$0xff]
        %v3967 = vld [vmem:[#allocation8 + $0x540] sm:$0xff]
        %v3968 = vld [vmem:[#allocation8 + $0x548] sm:$0xff]
        %v3969 = vld [vmem:[#allocation8 + $0x550] sm:$0xff]
        %v3970 = vld [vmem:[#allocation8 + $0x558] sm:$0xff]
        %v3971 = vld [vmem:[#allocation8 + $0x560] sm:$0xff]
        %v3972 = vld [vmem:[#allocation8 + $0x568] sm:$0xff]
        %v3973 = vld [vmem:[#allocation8 + $0x570] sm:$0xff]
        %v3974 = vld [vmem:[#allocation8 + $0x578] sm:$0xff]
        %v3975 = vld [vmem:[#allocation8 + $0x580] sm:$0xff]
        %v3976 = vld [vmem:[#allocation8 + $0x588] sm:$0xff]
        %v3977 = vld [vmem:[#allocation8 + $0x590] sm:$0xff]
        %v3978 = vld [vmem:[#allocation8 + $0x598] sm:$0xff]
        %v3979 = vld [vmem:[#allocation8 + $0x5a0] sm:$0xff]
        %v3980 = vld [vmem:[#allocation8 + $0x5a8] sm:$0xff]
        %v3981 = vld [vmem:[#allocation8 + $0x5b0] sm:$0xff]
        %v3982 = vld [vmem:[#allocation8 + $0x5b8] sm:$0xff]
        %v3983 = vld [vmem:[#allocation8 + $0x5c0] sm:$0xff]
        %v3984 = vld [vmem:[#allocation8 + $0x5c8] sm:$0xff]
        %v3985 = vld [vmem:[#allocation8 + $0x5d0] sm:$0xff]
        %v3986 = vld [vmem:[#allocation8 + $0x5d8] sm:$0xff]
        %v3987 = vld [vmem:[#allocation8 + $0x5e0] sm:$0xff]
        %v3988 = vld [vmem:[#allocation8 + $0x5e8] sm:$0xff]
        %v3989 = vld [vmem:[#allocation8 + $0x5f0] sm:$0xff]
        %v3990 = vld [vmem:[#allocation8 + $0x5f8] sm:$0xff]
        %v3991 = vld [vmem:[#allocation8 + $0x600] sm:$0xff]
        %v3992 = vld [vmem:[#allocation8 + $0x608] sm:$0xff]
        %v3993 = vld [vmem:[#allocation8 + $0x610] sm:$0xff]
        %v3994 = vld [vmem:[#allocation8 + $0x618] sm:$0xff]
        %v3995 = vld [vmem:[#allocation8 + $0x620] sm:$0xff]
        %v3996 = vld [vmem:[#allocation8 + $0x628] sm:$0xff]
        %v3997 = vld [vmem:[#allocation8 + $0x630] sm:$0xff]
        %v3998 = vld [vmem:[#allocation8 + $0x638] sm:$0xff]
        %v3999 = vld [vmem:[#allocation8 + $0x640] sm:$0xff]
        %v4000 = vld [vmem:[#allocation8 + $0x648] sm:$0xff]
        %v4001 = vld [vmem:[#allocation8 + $0x650] sm:$0xff]
        %v4002 = vld [vmem:[#allocation8 + $0x658] sm:$0xff]
        %v4003 = vld [vmem:[#allocation8 + $0x660] sm:$0xff]
        %v4004 = vld [vmem:[#allocation8 + $0x668] sm:$0xff]
        %v4005 = vld [vmem:[#allocation8 + $0x670] sm:$0xff]
        %v4006 = vld [vmem:[#allocation8 + $0x678] sm:$0xff]
        %v4007 = vld [vmem:[#allocation8 + $0x680] sm:$0xff]
        %v4008 = vld [vmem:[#allocation8 + $0x688] sm:$0xff]
        %v4009 = vld [vmem:[#allocation8 + $0x690] sm:$0xff]
        %v4010 = vld [vmem:[#allocation8 + $0x698] sm:$0xff]
        %v4011 = vld [vmem:[#allocation8 + $0x6a0] sm:$0xff]
        %v4012 = vld [vmem:[#allocation8 + $0x6a8] sm:$0xff]
        %v4013 = vld [vmem:[#allocation8 + $0x6b0] sm:$0xff]
        %v4014 = vld [vmem:[#allocation8 + $0x6b8] sm:$0xff]
        %v4015 = vld [vmem:[#allocation8 + $0x6c0] sm:$0xff]
        %v4016 = vld [vmem:[#allocation8 + $0x6c8] sm:$0xff]
        %v4017 = vld [vmem:[#allocation8 + $0x6d0] sm:$0xff]
        %v4018 = vld [vmem:[#allocation8 + $0x6d8] sm:$0xff]
        %v4019 = vld [vmem:[#allocation8 + $0x6e0] sm:$0xff]
        %v4020 = vld [vmem:[#allocation8 + $0x6e8] sm:$0xff]
        %v4021 = vld [vmem:[#allocation8 + $0x6f0] sm:$0xff]
        %v4022 = vld [vmem:[#allocation8 + $0x6f8] sm:$0xff]
        %v4023 = vld [vmem:[#allocation8 + $0x700] sm:$0xff]
        %v4024 = vld [vmem:[#allocation8 + $0x708] sm:$0xff]
        %v4025 = vld [vmem:[#allocation8 + $0x710] sm:$0xff]
        %v4026 = vld [vmem:[#allocation8 + $0x718] sm:$0xff]
        %v4027 = vld [vmem:[#allocation8 + $0x720] sm:$0xff]
        %v4028 = vld [vmem:[#allocation8 + $0x728] sm:$0xff]
        %v4029 = vld [vmem:[#allocation8 + $0x730] sm:$0xff]
        %v4030 = vld [vmem:[#allocation8 + $0x738] sm:$0xff]
        %v4031 = vld [vmem:[#allocation8 + $0x740] sm:$0xff]
        %v4032 = vld [vmem:[#allocation8 + $0x748] sm:$0xff]
        %v4033 = vld [vmem:[#allocation8 + $0x750] sm:$0xff]
        %v4034 = vld [vmem:[#allocation8 + $0x758] sm:$0xff]
        %v4035 = vld [vmem:[#allocation8 + $0x760] sm:$0xff]
        %v4036 = vld [vmem:[#allocation8 + $0x768] sm:$0xff]
        %v4037 = vld [vmem:[#allocation8 + $0x770] sm:$0xff]
        %v4038 = vld [vmem:[#allocation8 + $0x778] sm:$0xff]
        %v4039 = vld [vmem:[#allocation8 + $0x780] sm:$0xff]
        %v4040 = vld [vmem:[#allocation8 + $0x788] sm:$0xff]
        %v4041 = vld [vmem:[#allocation8 + $0x790] sm:$0xff]
        %v4042 = vld [vmem:[#allocation8 + $0x798] sm:$0xff]
        %v4043 = vld [vmem:[#allocation8 + $0x7a0] sm:$0xff]
        %v4044 = vld [vmem:[#allocation8 + $0x7a8] sm:$0xff]
        %v4045 = vld [vmem:[#allocation8 + $0x7b0] sm:$0xff]
        %v4046 = vld [vmem:[#allocation8 + $0x7b8] sm:$0xff]
        %v4047 = vld [vmem:[#allocation8 + $0x7c0] sm:$0xff]
        %v4048 = vld [vmem:[#allocation8 + $0x7c8] sm:$0xff]
        %v4049 = vld [vmem:[#allocation8 + $0x7d0] sm:$0xff]
        %v4050 = vld [vmem:[#allocation8 + $0x7d8] sm:$0xff]
        %v4051 = vld [vmem:[#allocation8 + $0x7e0] sm:$0xff]
        %v4052 = vld [vmem:[#allocation8 + $0x7e8] sm:$0xff]
        %v4053 = vld [vmem:[#allocation8 + $0x7f0] sm:$0xff]
        %v4054 = vld [vmem:[#allocation8 + $0x7f8] sm:$0xff]
        %v4055 = vld [vmem:[%s4] sm:$0xf]
        %v4057 = vlaneseq
        %v4058 = vshrl.u32 %v4057, 7
        %v4059 = vsub.s32 0, %v4058
        %v4060 = vrot.slane %v4055, %v4059
        %v4061 = vlaneseq
        %v4062 = vshrl.u32 %v4061, 7
        %v4063 = vsub.s32 1, %v4062
        %v4064 = vrot.slane %v4055, %v4063
        %v4065 = vlaneseq
        %v4066 = vshrl.u32 %v4065, 7
        %v4067 = vsub.s32 2, %v4066
        %v4068 = vrot.slane %v4055, %v4067
        %v4069 = vlaneseq
        %v4070 = vshrl.u32 %v4069, 7
        %v4071 = vsub.s32 3, %v4070
        %v4072 = vrot.slane %v4055, %v4071
        %v4333 = vunpack.c.l.b16 %v3799
        %v4334 = vunpack.c.h.b16 %v3799
        %v4335 = vunpack.c.l.b16 %v3800
        %v4336 = vunpack.c.h.b16 %v3800
        %v4337 = vunpack.c.l.b16 %v3801
        %v4338 = vunpack.c.h.b16 %v3801
        %v4339 = vunpack.c.l.b16 %v3802
        %v4340 = vunpack.c.h.b16 %v3802
        %v4341 = vunpack.c.l.b16 %v3803
        %v4342 = vunpack.c.h.b16 %v3803
        %v4343 = vunpack.c.l.b16 %v3804
        %v4344 = vunpack.c.h.b16 %v3804
        %v4345 = vunpack.c.l.b16 %v3805
        %v4346 = vunpack.c.h.b16 %v3805
        %v4347 = vunpack.c.l.b16 %v3806
        %v4348 = vunpack.c.h.b16 %v3806
        %v4349 = vunpack.c.l.b16 %v3807
        %v4350 = vunpack.c.h.b16 %v3807
        %v4351 = vunpack.c.l.b16 %v3808
        %v4352 = vunpack.c.h.b16 %v3808
        %v4353 = vunpack.c.l.b16 %v3809
        %v4354 = vunpack.c.h.b16 %v3809
        %v4355 = vunpack.c.l.b16 %v3810
        %v4356 = vunpack.c.h.b16 %v3810
        %v4357 = vunpack.c.l.b16 %v3811
        %v4358 = vunpack.c.h.b16 %v3811
        %v4359 = vunpack.c.l.b16 %v3812
        %v4360 = vunpack.c.h.b16 %v3812
        %v4361 = vunpack.c.l.b16 %v3813
        %v4362 = vunpack.c.h.b16 %v3813
        %v4363 = vunpack.c.l.b16 %v3814
        %v4364 = vunpack.c.h.b16 %v3814
        %v4365 = vunpack.c.l.b16 %v3815
        %v4366 = vunpack.c.h.b16 %v3815
        %v4367 = vunpack.c.l.b16 %v3816
        %v4368 = vunpack.c.h.b16 %v3816
        %v4369 = vunpack.c.l.b16 %v3817
        %v4370 = vunpack.c.h.b16 %v3817
        %v4371 = vunpack.c.l.b16 %v3818
        %v4372 = vunpack.c.h.b16 %v3818
        %v4373 = vunpack.c.l.b16 %v3819
        %v4374 = vunpack.c.h.b16 %v3819
        %v4375 = vunpack.c.l.b16 %v3820
        %v4376 = vunpack.c.h.b16 %v3820
        %v4377 = vunpack.c.l.b16 %v3821
        %v4378 = vunpack.c.h.b16 %v3821
        %v4379 = vunpack.c.l.b16 %v3822
        %v4380 = vunpack.c.h.b16 %v3822
        %v4381 = vunpack.c.l.b16 %v3823
        %v4382 = vunpack.c.h.b16 %v3823
        %v4383 = vunpack.c.l.b16 %v3824
        %v4384 = vunpack.c.h.b16 %v3824
        %v4385 = vunpack.c.l.b16 %v3825
        %v4386 = vunpack.c.h.b16 %v3825
        %v4387 = vunpack.c.l.b16 %v3826
        %v4388 = vunpack.c.h.b16 %v3826
        %v4389 = vunpack.c.l.b16 %v3827
        %v4390 = vunpack.c.h.b16 %v3827
        %v4391 = vunpack.c.l.b16 %v3828
        %v4392 = vunpack.c.h.b16 %v3828
        %v4393 = vunpack.c.l.b16 %v3829
        %v4394 = vunpack.c.h.b16 %v3829
        %v4395 = vunpack.c.l.b16 %v3830
        %v4396 = vunpack.c.h.b16 %v3830
        %v4397 = vunpack.c.l.b16 %v3831
        %v4398 = vunpack.c.h.b16 %v3831
        %v4399 = vunpack.c.l.b16 %v3832
        %v4400 = vunpack.c.h.b16 %v3832
        %v4401 = vunpack.c.l.b16 %v3833
        %v4402 = vunpack.c.h.b16 %v3833
        %v4403 = vunpack.c.l.b16 %v3834
        %v4404 = vunpack.c.h.b16 %v3834
        %v4405 = vunpack.c.l.b16 %v3835
        %v4406 = vunpack.c.h.b16 %v3835
        %v4407 = vunpack.c.l.b16 %v3836
        %v4408 = vunpack.c.h.b16 %v3836
        %v4409 = vunpack.c.l.b16 %v3837
        %v4410 = vunpack.c.h.b16 %v3837
        %v4411 = vunpack.c.l.b16 %v3838
        %v4412 = vunpack.c.h.b16 %v3838
        %v4413 = vunpack.c.l.b16 %v3839
        %v4414 = vunpack.c.h.b16 %v3839
        %v4415 = vunpack.c.l.b16 %v3840
        %v4416 = vunpack.c.h.b16 %v3840
        %v4417 = vunpack.c.l.b16 %v3841
        %v4418 = vunpack.c.h.b16 %v3841
        %v4419 = vunpack.c.l.b16 %v3842
        %v4420 = vunpack.c.h.b16 %v3842
        %v4421 = vunpack.c.l.b16 %v3843
        %v4422 = vunpack.c.h.b16 %v3843
        %v4423 = vunpack.c.l.b16 %v3844
        %v4424 = vunpack.c.h.b16 %v3844
        %v4425 = vunpack.c.l.b16 %v3845
        %v4426 = vunpack.c.h.b16 %v3845
        %v4427 = vunpack.c.l.b16 %v3846
        %v4428 = vunpack.c.h.b16 %v3846
        %v4429 = vunpack.c.l.b16 %v3847
        %v4430 = vunpack.c.h.b16 %v3847
        %v4431 = vunpack.c.l.b16 %v3848
        %v4432 = vunpack.c.h.b16 %v3848
        %v4433 = vunpack.c.l.b16 %v3849
        %v4434 = vunpack.c.h.b16 %v3849
        %v4435 = vunpack.c.l.b16 %v3850
        %v4436 = vunpack.c.h.b16 %v3850
        %v4437 = vunpack.c.l.b16 %v3851
        %v4438 = vunpack.c.h.b16 %v3851
        %v4439 = vunpack.c.l.b16 %v3852
        %v4440 = vunpack.c.h.b16 %v3852
        %v4441 = vunpack.c.l.b16 %v3853
        %v4442 = vunpack.c.h.b16 %v3853
        %v4443 = vunpack.c.l.b16 %v3854
        %v4444 = vunpack.c.h.b16 %v3854
        %v4445 = vunpack.c.l.b16 %v3855
        %v4446 = vunpack.c.h.b16 %v3855
        %v4447 = vunpack.c.l.b16 %v3856
        %v4448 = vunpack.c.h.b16 %v3856
        %v4449 = vunpack.c.l.b16 %v3857
        %v4450 = vunpack.c.h.b16 %v3857
        %v4451 = vunpack.c.l.b16 %v3858
        %v4452 = vunpack.c.h.b16 %v3858
        %v4453 = vunpack.c.l.b16 %v3859
        %v4454 = vunpack.c.h.b16 %v3859
        %v4455 = vunpack.c.l.b16 %v3860
        %v4456 = vunpack.c.h.b16 %v3860
        %v4457 = vunpack.c.l.b16 %v3861
        %v4458 = vunpack.c.h.b16 %v3861
        %v4459 = vunpack.c.l.b16 %v3862
        %v4460 = vunpack.c.h.b16 %v3862
        %v4461 = vunpack.c.l.b16 %v3863
        %v4462 = vunpack.c.h.b16 %v3863
        %v4463 = vunpack.c.l.b16 %v3864
        %v4464 = vunpack.c.h.b16 %v3864
        %v4465 = vunpack.c.l.b16 %v3865
        %v4466 = vunpack.c.h.b16 %v3865
        %v4467 = vunpack.c.l.b16 %v3866
        %v4468 = vunpack.c.h.b16 %v3866
        %v4469 = vunpack.c.l.b16 %v3867
        %v4470 = vunpack.c.h.b16 %v3867
        %v4471 = vunpack.c.l.b16 %v3868
        %v4472 = vunpack.c.h.b16 %v3868
        %v4473 = vunpack.c.l.b16 %v3869
        %v4474 = vunpack.c.h.b16 %v3869
        %v4475 = vunpack.c.l.b16 %v3870
        %v4476 = vunpack.c.h.b16 %v3870
        %v4477 = vunpack.c.l.b16 %v3871
        %v4478 = vunpack.c.h.b16 %v3871
        %v4479 = vunpack.c.l.b16 %v3872
        %v4480 = vunpack.c.h.b16 %v3872
        %v4481 = vunpack.c.l.b16 %v3873
        %v4482 = vunpack.c.h.b16 %v3873
        %v4483 = vunpack.c.l.b16 %v3874
        %v4484 = vunpack.c.h.b16 %v3874
        %v4485 = vunpack.c.l.b16 %v3875
        %v4486 = vunpack.c.h.b16 %v3875
        %v4487 = vunpack.c.l.b16 %v3876
        %v4488 = vunpack.c.h.b16 %v3876
        %v4489 = vunpack.c.l.b16 %v3877
        %v4490 = vunpack.c.h.b16 %v3877
        %v4491 = vunpack.c.l.b16 %v3878
        %v4492 = vunpack.c.h.b16 %v3878
        %v4493 = vunpack.c.l.b16 %v3879
        %v4494 = vunpack.c.h.b16 %v3879
        %v4495 = vunpack.c.l.b16 %v3880
        %v4496 = vunpack.c.h.b16 %v3880
        %v4497 = vunpack.c.l.b16 %v3881
        %v4498 = vunpack.c.h.b16 %v3881
        %v4499 = vunpack.c.l.b16 %v3882
        %v4500 = vunpack.c.h.b16 %v3882
        %v4501 = vunpack.c.l.b16 %v3883
        %v4502 = vunpack.c.h.b16 %v3883
        %v4503 = vunpack.c.l.b16 %v3884
        %v4504 = vunpack.c.h.b16 %v3884
        %v4505 = vunpack.c.l.b16 %v3885
        %v4506 = vunpack.c.h.b16 %v3885
        %v4507 = vunpack.c.l.b16 %v3886
        %v4508 = vunpack.c.h.b16 %v3886
        %v4509 = vunpack.c.l.b16 %v3887
        %v4510 = vunpack.c.h.b16 %v3887
        %v4511 = vunpack.c.l.b16 %v3888
        %v4512 = vunpack.c.h.b16 %v3888
        %v4513 = vunpack.c.l.b16 %v3889
        %v4514 = vunpack.c.h.b16 %v3889
        %v4515 = vunpack.c.l.b16 %v3890
        %v4516 = vunpack.c.h.b16 %v3890
        %v4517 = vunpack.c.l.b16 %v3891
        %v4518 = vunpack.c.h.b16 %v3891
        %v4519 = vunpack.c.l.b16 %v3892
        %v4520 = vunpack.c.h.b16 %v3892
        %v4521 = vunpack.c.l.b16 %v3893
        %v4522 = vunpack.c.h.b16 %v3893
        %v4523 = vunpack.c.l.b16 %v3894
        %v4524 = vunpack.c.h.b16 %v3894
        %v4525 = vunpack.c.l.b16 %v3895
        %v4526 = vunpack.c.h.b16 %v3895
        %v4527 = vunpack.c.l.b16 %v3896
        %v4528 = vunpack.c.h.b16 %v3896
        %v4529 = vunpack.c.l.b16 %v3897
        %v4530 = vunpack.c.h.b16 %v3897
        %v4531 = vunpack.c.l.b16 %v3898
        %v4532 = vunpack.c.h.b16 %v3898
        %v4533 = vunpack.c.l.b16 %v3899
        %v4534 = vunpack.c.h.b16 %v3899
        %v4535 = vunpack.c.l.b16 %v3900
        %v4536 = vunpack.c.h.b16 %v3900
        %v4537 = vunpack.c.l.b16 %v3901
        %v4538 = vunpack.c.h.b16 %v3901
        %v4539 = vunpack.c.l.b16 %v3902
        %v4540 = vunpack.c.h.b16 %v3902
        %v4541 = vunpack.c.l.b16 %v3903
        %v4542 = vunpack.c.h.b16 %v3903
        %v4543 = vunpack.c.l.b16 %v3904
        %v4544 = vunpack.c.h.b16 %v3904
        %v4545 = vunpack.c.l.b16 %v3905
        %v4546 = vunpack.c.h.b16 %v3905
        %v4547 = vunpack.c.l.b16 %v3906
        %v4548 = vunpack.c.h.b16 %v3906
        %v4549 = vunpack.c.l.b16 %v3907
        %v4550 = vunpack.c.h.b16 %v3907
        %v4551 = vunpack.c.l.b16 %v3908
        %v4552 = vunpack.c.h.b16 %v3908
        %v4553 = vunpack.c.l.b16 %v3909
        %v4554 = vunpack.c.h.b16 %v3909
        %v4555 = vunpack.c.l.b16 %v3910
        %v4556 = vunpack.c.h.b16 %v3910
        %v4557 = vunpack.c.l.b16 %v3911
        %v4558 = vunpack.c.h.b16 %v3911
        %v4559 = vunpack.c.l.b16 %v3912
        %v4560 = vunpack.c.h.b16 %v3912
        %v4561 = vunpack.c.l.b16 %v3913
        %v4562 = vunpack.c.h.b16 %v3913
        %v4563 = vunpack.c.l.b16 %v3914
        %v4564 = vunpack.c.h.b16 %v3914
        %v4565 = vunpack.c.l.b16 %v3915
        %v4566 = vunpack.c.h.b16 %v3915
        %v4567 = vunpack.c.l.b16 %v3916
        %v4568 = vunpack.c.h.b16 %v3916
        %v4569 = vunpack.c.l.b16 %v3917
        %v4570 = vunpack.c.h.b16 %v3917
        %v4571 = vunpack.c.l.b16 %v3918
        %v4572 = vunpack.c.h.b16 %v3918
        %v4573 = vunpack.c.l.b16 %v3919
        %v4574 = vunpack.c.h.b16 %v3919
        %v4575 = vunpack.c.l.b16 %v3920
        %v4576 = vunpack.c.h.b16 %v3920
        %v4577 = vunpack.c.l.b16 %v3921
        %v4578 = vunpack.c.h.b16 %v3921
        %v4579 = vunpack.c.l.b16 %v3922
        %v4580 = vunpack.c.h.b16 %v3922
        %v4581 = vunpack.c.l.b16 %v3923
        %v4582 = vunpack.c.h.b16 %v3923
        %v4583 = vunpack.c.l.b16 %v3924
        %v4584 = vunpack.c.h.b16 %v3924
        %v4585 = vunpack.c.l.b16 %v3925
        %v4586 = vunpack.c.h.b16 %v3925
        %v4587 = vunpack.c.l.b16 %v3926
        %v4588 = vunpack.c.h.b16 %v3926
        %v4589 = vunpack.c.l.b16 %v3927
        %v4590 = vunpack.c.h.b16 %v3927
        %v4591 = vunpack.c.l.b16 %v3928
        %v4592 = vunpack.c.h.b16 %v3928
        %v4593 = vunpack.c.l.b16 %v3929
        %v4594 = vunpack.c.h.b16 %v3929
        %v4595 = vunpack.c.l.b16 %v3930
        %v4596 = vunpack.c.h.b16 %v3930
        %v4597 = vunpack.c.l.b16 %v3931
        %v4598 = vunpack.c.h.b16 %v3931
        %v4599 = vunpack.c.l.b16 %v3932
        %v4600 = vunpack.c.h.b16 %v3932
        %v4601 = vunpack.c.l.b16 %v3933
        %v4602 = vunpack.c.h.b16 %v3933
        %v4603 = vunpack.c.l.b16 %v3934
        %v4604 = vunpack.c.h.b16 %v3934
        %v4605 = vunpack.c.l.b16 %v3935
        %v4606 = vunpack.c.h.b16 %v3935
        %v4607 = vunpack.c.l.b16 %v3936
        %v4608 = vunpack.c.h.b16 %v3936
        %v4609 = vunpack.c.l.b16 %v3937
        %v4610 = vunpack.c.h.b16 %v3937
        %v4611 = vunpack.c.l.b16 %v3938
        %v4612 = vunpack.c.h.b16 %v3938
        %v4613 = vunpack.c.l.b16 %v3939
        %v4614 = vunpack.c.h.b16 %v3939
        %v4615 = vunpack.c.l.b16 %v3940
        %v4616 = vunpack.c.h.b16 %v3940
        %v4617 = vunpack.c.l.b16 %v3941
        %v4618 = vunpack.c.h.b16 %v3941
        %v4619 = vunpack.c.l.b16 %v3942
        %v4620 = vunpack.c.h.b16 %v3942
        %v4621 = vunpack.c.l.b16 %v3943
        %v4622 = vunpack.c.h.b16 %v3943
        %v4623 = vunpack.c.l.b16 %v3944
        %v4624 = vunpack.c.h.b16 %v3944
        %v4625 = vunpack.c.l.b16 %v3945
        %v4626 = vunpack.c.h.b16 %v3945
        %v4627 = vunpack.c.l.b16 %v3946
        %v4628 = vunpack.c.h.b16 %v3946
        %v4629 = vunpack.c.l.b16 %v3947
        %v4630 = vunpack.c.h.b16 %v3947
        %v4631 = vunpack.c.l.b16 %v3948
        %v4632 = vunpack.c.h.b16 %v3948
        %v4633 = vunpack.c.l.b16 %v3949
        %v4634 = vunpack.c.h.b16 %v3949
        %v4635 = vunpack.c.l.b16 %v3950
        %v4636 = vunpack.c.h.b16 %v3950
        %v4637 = vunpack.c.l.b16 %v3951
        %v4638 = vunpack.c.h.b16 %v3951
        %v4639 = vunpack.c.l.b16 %v3952
        %v4640 = vunpack.c.h.b16 %v3952
        %v4641 = vunpack.c.l.b16 %v3953
        %v4642 = vunpack.c.h.b16 %v3953
        %v4643 = vunpack.c.l.b16 %v3954
        %v4644 = vunpack.c.h.b16 %v3954
        %v4645 = vunpack.c.l.b16 %v3955
        %v4646 = vunpack.c.h.b16 %v3955
        %v4647 = vunpack.c.l.b16 %v3956
        %v4648 = vunpack.c.h.b16 %v3956
        %v4649 = vunpack.c.l.b16 %v3957
        %v4650 = vunpack.c.h.b16 %v3957
        %v4651 = vunpack.c.l.b16 %v3958
        %v4652 = vunpack.c.h.b16 %v3958
        %v4653 = vunpack.c.l.b16 %v3959
        %v4654 = vunpack.c.h.b16 %v3959
        %v4655 = vunpack.c.l.b16 %v3960
        %v4656 = vunpack.c.h.b16 %v3960
        %v4657 = vunpack.c.l.b16 %v3961
        %v4658 = vunpack.c.h.b16 %v3961
        %v4659 = vunpack.c.l.b16 %v3962
        %v4660 = vunpack.c.h.b16 %v3962
        %v4661 = vunpack.c.l.b16 %v3963
        %v4662 = vunpack.c.h.b16 %v3963
        %v4663 = vunpack.c.l.b16 %v3964
        %v4664 = vunpack.c.h.b16 %v3964
        %v4665 = vunpack.c.l.b16 %v3965
        %v4666 = vunpack.c.h.b16 %v3965
        %v4667 = vunpack.c.l.b16 %v3966
        %v4668 = vunpack.c.h.b16 %v3966
        %v4669 = vunpack.c.l.b16 %v3967
        %v4670 = vunpack.c.h.b16 %v3967
        %v4671 = vunpack.c.l.b16 %v3968
        %v4672 = vunpack.c.h.b16 %v3968
        %v4673 = vunpack.c.l.b16 %v3969
        %v4674 = vunpack.c.h.b16 %v3969
        %v4675 = vunpack.c.l.b16 %v3970
        %v4676 = vunpack.c.h.b16 %v3970
        %v4677 = vunpack.c.l.b16 %v3971
        %v4678 = vunpack.c.h.b16 %v3971
        %v4679 = vunpack.c.l.b16 %v3972
        %v4680 = vunpack.c.h.b16 %v3972
        %v4681 = vunpack.c.l.b16 %v3973
        %v4682 = vunpack.c.h.b16 %v3973
        %v4683 = vunpack.c.l.b16 %v3974
        %v4684 = vunpack.c.h.b16 %v3974
        %v4685 = vunpack.c.l.b16 %v3975
        %v4686 = vunpack.c.h.b16 %v3975
        %v4687 = vunpack.c.l.b16 %v3976
        %v4688 = vunpack.c.h.b16 %v3976
        %v4689 = vunpack.c.l.b16 %v3977
        %v4690 = vunpack.c.h.b16 %v3977
        %v4691 = vunpack.c.l.b16 %v3978
        %v4692 = vunpack.c.h.b16 %v3978
        %v4693 = vunpack.c.l.b16 %v3979
        %v4694 = vunpack.c.h.b16 %v3979
        %v4695 = vunpack.c.l.b16 %v3980
        %v4696 = vunpack.c.h.b16 %v3980
        %v4697 = vunpack.c.l.b16 %v3981
        %v4698 = vunpack.c.h.b16 %v3981
        %v4699 = vunpack.c.l.b16 %v3982
        %v4700 = vunpack.c.h.b16 %v3982
        %v4701 = vunpack.c.l.b16 %v3983
        %v4702 = vunpack.c.h.b16 %v3983
        %v4703 = vunpack.c.l.b16 %v3984
        %v4704 = vunpack.c.h.b16 %v3984
        %v4705 = vunpack.c.l.b16 %v3985
        %v4706 = vunpack.c.h.b16 %v3985
        %v4707 = vunpack.c.l.b16 %v3986
        %v4708 = vunpack.c.h.b16 %v3986
        %v4709 = vunpack.c.l.b16 %v3987
        %v4710 = vunpack.c.h.b16 %v3987
        %v4711 = vunpack.c.l.b16 %v3988
        %v4712 = vunpack.c.h.b16 %v3988
        %v4713 = vunpack.c.l.b16 %v3989
        %v4714 = vunpack.c.h.b16 %v3989
        %v4715 = vunpack.c.l.b16 %v3990
        %v4716 = vunpack.c.h.b16 %v3990
        %v4717 = vunpack.c.l.b16 %v3991
        %v4718 = vunpack.c.h.b16 %v3991
        %v4719 = vunpack.c.l.b16 %v3992
        %v4720 = vunpack.c.h.b16 %v3992
        %v4721 = vunpack.c.l.b16 %v3993
        %v4722 = vunpack.c.h.b16 %v3993
        %v4723 = vunpack.c.l.b16 %v3994
        %v4724 = vunpack.c.h.b16 %v3994
        %v4725 = vunpack.c.l.b16 %v3995
        %v4726 = vunpack.c.h.b16 %v3995
        %v4727 = vunpack.c.l.b16 %v3996
        %v4728 = vunpack.c.h.b16 %v3996
        %v4729 = vunpack.c.l.b16 %v3997
        %v4730 = vunpack.c.h.b16 %v3997
        %v4731 = vunpack.c.l.b16 %v3998
        %v4732 = vunpack.c.h.b16 %v3998
        %v4733 = vunpack.c.l.b16 %v3999
        %v4734 = vunpack.c.h.b16 %v3999
        %v4735 = vunpack.c.l.b16 %v4000
        %v4736 = vunpack.c.h.b16 %v4000
        %v4737 = vunpack.c.l.b16 %v4001
        %v4738 = vunpack.c.h.b16 %v4001
        %v4739 = vunpack.c.l.b16 %v4002
        %v4740 = vunpack.c.h.b16 %v4002
        %v4741 = vunpack.c.l.b16 %v4003
        %v4742 = vunpack.c.h.b16 %v4003
        %v4743 = vunpack.c.l.b16 %v4004
        %v4744 = vunpack.c.h.b16 %v4004
        %v4745 = vunpack.c.l.b16 %v4005
        %v4746 = vunpack.c.h.b16 %v4005
        %v4747 = vunpack.c.l.b16 %v4006
        %v4748 = vunpack.c.h.b16 %v4006
        %v4749 = vunpack.c.l.b16 %v4007
        %v4750 = vunpack.c.h.b16 %v4007
        %v4751 = vunpack.c.l.b16 %v4008
        %v4752 = vunpack.c.h.b16 %v4008
        %v4753 = vunpack.c.l.b16 %v4009
        %v4754 = vunpack.c.h.b16 %v4009
        %v4755 = vunpack.c.l.b16 %v4010
        %v4756 = vunpack.c.h.b16 %v4010
        %v4757 = vunpack.c.l.b16 %v4011
        %v4758 = vunpack.c.h.b16 %v4011
        %v4759 = vunpack.c.l.b16 %v4012
        %v4760 = vunpack.c.h.b16 %v4012
        %v4761 = vunpack.c.l.b16 %v4013
        %v4762 = vunpack.c.h.b16 %v4013
        %v4763 = vunpack.c.l.b16 %v4014
        %v4764 = vunpack.c.h.b16 %v4014
        %v4765 = vunpack.c.l.b16 %v4015
        %v4766 = vunpack.c.h.b16 %v4015
        %v4767 = vunpack.c.l.b16 %v4016
        %v4768 = vunpack.c.h.b16 %v4016
        %v4769 = vunpack.c.l.b16 %v4017
        %v4770 = vunpack.c.h.b16 %v4017
        %v4771 = vunpack.c.l.b16 %v4018
        %v4772 = vunpack.c.h.b16 %v4018
        %v4773 = vunpack.c.l.b16 %v4019
        %v4774 = vunpack.c.h.b16 %v4019
        %v4775 = vunpack.c.l.b16 %v4020
        %v4776 = vunpack.c.h.b16 %v4020
        %v4777 = vunpack.c.l.b16 %v4021
        %v4778 = vunpack.c.h.b16 %v4021
        %v4779 = vunpack.c.l.b16 %v4022
        %v4780 = vunpack.c.h.b16 %v4022
        %v4781 = vunpack.c.l.b16 %v4023
        %v4782 = vunpack.c.h.b16 %v4023
        %v4783 = vunpack.c.l.b16 %v4024
        %v4784 = vunpack.c.h.b16 %v4024
        %v4785 = vunpack.c.l.b16 %v4025
        %v4786 = vunpack.c.h.b16 %v4025
        %v4787 = vunpack.c.l.b16 %v4026
        %v4788 = vunpack.c.h.b16 %v4026
        %v4789 = vunpack.c.l.b16 %v4027
        %v4790 = vunpack.c.h.b16 %v4027
        %v4791 = vunpack.c.l.b16 %v4028
        %v4792 = vunpack.c.h.b16 %v4028
        %v4793 = vunpack.c.l.b16 %v4029
        %v4794 = vunpack.c.h.b16 %v4029
        %v4795 = vunpack.c.l.b16 %v4030
        %v4796 = vunpack.c.h.b16 %v4030
        %v4797 = vunpack.c.l.b16 %v4031
        %v4798 = vunpack.c.h.b16 %v4031
        %v4799 = vunpack.c.l.b16 %v4032
        %v4800 = vunpack.c.h.b16 %v4032
        %v4801 = vunpack.c.l.b16 %v4033
        %v4802 = vunpack.c.h.b16 %v4033
        %v4803 = vunpack.c.l.b16 %v4034
        %v4804 = vunpack.c.h.b16 %v4034
        %v4805 = vunpack.c.l.b16 %v4035
        %v4806 = vunpack.c.h.b16 %v4035
        %v4807 = vunpack.c.l.b16 %v4036
        %v4808 = vunpack.c.h.b16 %v4036
        %v4809 = vunpack.c.l.b16 %v4037
        %v4810 = vunpack.c.h.b16 %v4037
        %v4811 = vunpack.c.l.b16 %v4038
        %v4812 = vunpack.c.h.b16 %v4038
        %v4813 = vunpack.c.l.b16 %v4039
        %v4814 = vunpack.c.h.b16 %v4039
        %v4815 = vunpack.c.l.b16 %v4040
        %v4816 = vunpack.c.h.b16 %v4040
        %v4817 = vunpack.c.l.b16 %v4041
        %v4818 = vunpack.c.h.b16 %v4041
        %v4819 = vunpack.c.l.b16 %v4042
        %v4820 = vunpack.c.h.b16 %v4042
        %v4821 = vunpack.c.l.b16 %v4043
        %v4822 = vunpack.c.h.b16 %v4043
        %v4823 = vunpack.c.l.b16 %v4044
        %v4824 = vunpack.c.h.b16 %v4044
        %v4825 = vunpack.c.l.b16 %v4045
        %v4826 = vunpack.c.h.b16 %v4045
        %v4827 = vunpack.c.l.b16 %v4046
        %v4828 = vunpack.c.h.b16 %v4046
        %v4829 = vunpack.c.l.b16 %v4047
        %v4830 = vunpack.c.h.b16 %v4047
        %v4831 = vunpack.c.l.b16 %v4048
        %v4832 = vunpack.c.h.b16 %v4048
        %v4833 = vunpack.c.l.b16 %v4049
        %v4834 = vunpack.c.h.b16 %v4049
        %v4835 = vunpack.c.l.b16 %v4050
        %v4836 = vunpack.c.h.b16 %v4050
        %v4837 = vunpack.c.l.b16 %v4051
        %v4838 = vunpack.c.h.b16 %v4051
        %v4839 = vunpack.c.l.b16 %v4052
        %v4840 = vunpack.c.h.b16 %v4052
        %v4841 = vunpack.c.l.b16 %v4053
        %v4842 = vunpack.c.h.b16 %v4053
        %v4843 = vunpack.c.l.b16 %v4054
        %v4844 = vunpack.c.h.b16 %v4054
        %v4845 = vpack.c.b16 %v4337, %v4333
        %v4846 = vpack.c.b16 %v4338, %v4334
        %v4847 = vpack.c.b16 %v4339, %v4335
        %v4848 = vpack.c.b16 %v4340, %v4336
        %v4849 = vpack.c.b16 %v4345, %v4341
        %v4850 = vpack.c.b16 %v4346, %v4342
        %v4851 = vpack.c.b16 %v4347, %v4343
        %v4852 = vpack.c.b16 %v4348, %v4344
        %v4853 = vpack.c.b16 %v4353, %v4349
        %v4854 = vpack.c.b16 %v4354, %v4350
        %v4855 = vpack.c.b16 %v4355, %v4351
        %v4856 = vpack.c.b16 %v4356, %v4352
        %v4857 = vpack.c.b16 %v4361, %v4357
        %v4858 = vpack.c.b16 %v4362, %v4358
        %v4859 = vpack.c.b16 %v4363, %v4359
        %v4860 = vpack.c.b16 %v4364, %v4360
        %v4861 = vpack.c.b16 %v4369, %v4365
        %v4862 = vpack.c.b16 %v4370, %v4366
        %v4863 = vpack.c.b16 %v4371, %v4367
        %v4864 = vpack.c.b16 %v4372, %v4368
        %v4865 = vpack.c.b16 %v4377, %v4373
        %v4866 = vpack.c.b16 %v4378, %v4374
        %v4867 = vpack.c.b16 %v4379, %v4375
        %v4868 = vpack.c.b16 %v4380, %v4376
        %v4869 = vpack.c.b16 %v4385, %v4381
        %v4870 = vpack.c.b16 %v4386, %v4382
        %v4871 = vpack.c.b16 %v4387, %v4383
        %v4872 = vpack.c.b16 %v4388, %v4384
        %v4873 = vpack.c.b16 %v4393, %v4389
        %v4874 = vpack.c.b16 %v4394, %v4390
        %v4875 = vpack.c.b16 %v4395, %v4391
        %v4876 = vpack.c.b16 %v4396, %v4392
        %v4877 = vpack.c.b16 %v4401, %v4397
        %v4878 = vpack.c.b16 %v4402, %v4398
        %v4879 = vpack.c.b16 %v4403, %v4399
        %v4880 = vpack.c.b16 %v4404, %v4400
        %v4881 = vpack.c.b16 %v4409, %v4405
        %v4882 = vpack.c.b16 %v4410, %v4406
        %v4883 = vpack.c.b16 %v4411, %v4407
        %v4884 = vpack.c.b16 %v4412, %v4408
        %v4885 = vpack.c.b16 %v4417, %v4413
        %v4886 = vpack.c.b16 %v4418, %v4414
        %v4887 = vpack.c.b16 %v4419, %v4415
        %v4888 = vpack.c.b16 %v4420, %v4416
        %v4889 = vpack.c.b16 %v4425, %v4421
        %v4890 = vpack.c.b16 %v4426, %v4422
        %v4891 = vpack.c.b16 %v4427, %v4423
        %v4892 = vpack.c.b16 %v4428, %v4424
        %v4893 = vpack.c.b16 %v4433, %v4429
        %v4894 = vpack.c.b16 %v4434, %v4430
        %v4895 = vpack.c.b16 %v4435, %v4431
        %v4896 = vpack.c.b16 %v4436, %v4432
        %v4897 = vpack.c.b16 %v4441, %v4437
        %v4898 = vpack.c.b16 %v4442, %v4438
        %v4899 = vpack.c.b16 %v4443, %v4439
        %v4900 = vpack.c.b16 %v4444, %v4440
        %v4901 = vpack.c.b16 %v4449, %v4445
        %v4902 = vpack.c.b16 %v4450, %v4446
        %v4903 = vpack.c.b16 %v4451, %v4447
        %v4904 = vpack.c.b16 %v4452, %v4448
        %v4905 = vpack.c.b16 %v4457, %v4453
        %v4906 = vpack.c.b16 %v4458, %v4454
        %v4907 = vpack.c.b16 %v4459, %v4455
        %v4908 = vpack.c.b16 %v4460, %v4456
        %v4909 = vpack.c.b16 %v4465, %v4461
        %v4910 = vpack.c.b16 %v4466, %v4462
        %v4911 = vpack.c.b16 %v4467, %v4463
        %v4912 = vpack.c.b16 %v4468, %v4464
        %v4913 = vpack.c.b16 %v4473, %v4469
        %v4914 = vpack.c.b16 %v4474, %v4470
        %v4915 = vpack.c.b16 %v4475, %v4471
        %v4916 = vpack.c.b16 %v4476, %v4472
        %v4917 = vpack.c.b16 %v4481, %v4477
        %v4918 = vpack.c.b16 %v4482, %v4478
        %v4919 = vpack.c.b16 %v4483, %v4479
        %v4920 = vpack.c.b16 %v4484, %v4480
        %v4921 = vpack.c.b16 %v4489, %v4485
        %v4922 = vpack.c.b16 %v4490, %v4486
        %v4923 = vpack.c.b16 %v4491, %v4487
        %v4924 = vpack.c.b16 %v4492, %v4488
        %v4925 = vpack.c.b16 %v4497, %v4493
        %v4926 = vpack.c.b16 %v4498, %v4494
        %v4927 = vpack.c.b16 %v4499, %v4495
        %v4928 = vpack.c.b16 %v4500, %v4496
        %v4929 = vpack.c.b16 %v4505, %v4501
        %v4930 = vpack.c.b16 %v4506, %v4502
        %v4931 = vpack.c.b16 %v4507, %v4503
        %v4932 = vpack.c.b16 %v4508, %v4504
        %v4933 = vpack.c.b16 %v4513, %v4509
        %v4934 = vpack.c.b16 %v4514, %v4510
        %v4935 = vpack.c.b16 %v4515, %v4511
        %v4936 = vpack.c.b16 %v4516, %v4512
        %v4937 = vpack.c.b16 %v4521, %v4517
        %v4938 = vpack.c.b16 %v4522, %v4518
        %v4939 = vpack.c.b16 %v4523, %v4519
        %v4940 = vpack.c.b16 %v4524, %v4520
        %v4941 = vpack.c.b16 %v4529, %v4525
        %v4942 = vpack.c.b16 %v4530, %v4526
        %v4943 = vpack.c.b16 %v4531, %v4527
        %v4944 = vpack.c.b16 %v4532, %v4528
        %v4945 = vpack.c.b16 %v4537, %v4533
        %v4946 = vpack.c.b16 %v4538, %v4534
        %v4947 = vpack.c.b16 %v4539, %v4535
        %v4948 = vpack.c.b16 %v4540, %v4536
        %v4949 = vpack.c.b16 %v4545, %v4541
        %v4950 = vpack.c.b16 %v4546, %v4542
        %v4951 = vpack.c.b16 %v4547, %v4543
        %v4952 = vpack.c.b16 %v4548, %v4544
        %v4953 = vpack.c.b16 %v4553, %v4549
        %v4954 = vpack.c.b16 %v4554, %v4550
        %v4955 = vpack.c.b16 %v4555, %v4551
        %v4956 = vpack.c.b16 %v4556, %v4552
        %v4957 = vpack.c.b16 %v4561, %v4557
        %v4958 = vpack.c.b16 %v4562, %v4558
        %v4959 = vpack.c.b16 %v4563, %v4559
        %v4960 = vpack.c.b16 %v4564, %v4560
        %v4961 = vpack.c.b16 %v4569, %v4565
        %v4962 = vpack.c.b16 %v4570, %v4566
        %v4963 = vpack.c.b16 %v4571, %v4567
        %v4964 = vpack.c.b16 %v4572, %v4568
        %v4965 = vpack.c.b16 %v4577, %v4573
        %v4966 = vpack.c.b16 %v4578, %v4574
        %v4967 = vpack.c.b16 %v4579, %v4575
        %v4968 = vpack.c.b16 %v4580, %v4576
        %v4969 = vpack.c.b16 %v4585, %v4581
        %v4970 = vpack.c.b16 %v4586, %v4582
        %v4971 = vpack.c.b16 %v4587, %v4583
        %v4972 = vpack.c.b16 %v4588, %v4584
        %v4973 = vpack.c.b16 %v4593, %v4589
        %v4974 = vpack.c.b16 %v4594, %v4590
        %v4975 = vpack.c.b16 %v4595, %v4591
        %v4976 = vpack.c.b16 %v4596, %v4592
        %v4977 = vpack.c.b16 %v4601, %v4597
        %v4978 = vpack.c.b16 %v4602, %v4598
        %v4979 = vpack.c.b16 %v4603, %v4599
        %v4980 = vpack.c.b16 %v4604, %v4600
        %v4981 = vpack.c.b16 %v4609, %v4605
        %v4982 = vpack.c.b16 %v4610, %v4606
        %v4983 = vpack.c.b16 %v4611, %v4607
        %v4984 = vpack.c.b16 %v4612, %v4608
        %v4985 = vpack.c.b16 %v4617, %v4613
        %v4986 = vpack.c.b16 %v4618, %v4614
        %v4987 = vpack.c.b16 %v4619, %v4615
        %v4988 = vpack.c.b16 %v4620, %v4616
        %v4989 = vpack.c.b16 %v4625, %v4621
        %v4990 = vpack.c.b16 %v4626, %v4622
        %v4991 = vpack.c.b16 %v4627, %v4623
        %v4992 = vpack.c.b16 %v4628, %v4624
        %v4993 = vpack.c.b16 %v4633, %v4629
        %v4994 = vpack.c.b16 %v4634, %v4630
        %v4995 = vpack.c.b16 %v4635, %v4631
        %v4996 = vpack.c.b16 %v4636, %v4632
        %v4997 = vpack.c.b16 %v4641, %v4637
        %v4998 = vpack.c.b16 %v4642, %v4638
        %v4999 = vpack.c.b16 %v4643, %v4639
        %v5000 = vpack.c.b16 %v4644, %v4640
        %v5001 = vpack.c.b16 %v4649, %v4645
        %v5002 = vpack.c.b16 %v4650, %v4646
        %v5003 = vpack.c.b16 %v4651, %v4647
        %v5004 = vpack.c.b16 %v4652, %v4648
        %v5005 = vpack.c.b16 %v4657, %v4653
        %v5006 = vpack.c.b16 %v4658, %v4654
        %v5007 = vpack.c.b16 %v4659, %v4655
        %v5008 = vpack.c.b16 %v4660, %v4656
        %v5009 = vpack.c.b16 %v4665, %v4661
        %v5010 = vpack.c.b16 %v4666, %v4662
        %v5011 = vpack.c.b16 %v4667, %v4663
        %v5012 = vpack.c.b16 %v4668, %v4664
        %v5013 = vpack.c.b16 %v4673, %v4669
        %v5014 = vpack.c.b16 %v4674, %v4670
        %v5015 = vpack.c.b16 %v4675, %v4671
        %v5016 = vpack.c.b16 %v4676, %v4672
        %v5017 = vpack.c.b16 %v4681, %v4677
        %v5018 = vpack.c.b16 %v4682, %v4678
        %v5019 = vpack.c.b16 %v4683, %v4679
        %v5020 = vpack.c.b16 %v4684, %v4680
        %v5021 = vpack.c.b16 %v4689, %v4685
        %v5022 = vpack.c.b16 %v4690, %v4686
        %v5023 = vpack.c.b16 %v4691, %v4687
        %v5024 = vpack.c.b16 %v4692, %v4688
        %v5025 = vpack.c.b16 %v4697, %v4693
        %v5026 = vpack.c.b16 %v4698, %v4694
        %v5027 = vpack.c.b16 %v4699, %v4695
        %v5028 = vpack.c.b16 %v4700, %v4696
        %v5029 = vpack.c.b16 %v4705, %v4701
        %v5030 = vpack.c.b16 %v4706, %v4702
        %v5031 = vpack.c.b16 %v4707, %v4703
        %v5032 = vpack.c.b16 %v4708, %v4704
        %v5033 = vpack.c.b16 %v4713, %v4709
        %v5034 = vpack.c.b16 %v4714, %v4710
        %v5035 = vpack.c.b16 %v4715, %v4711
        %v5036 = vpack.c.b16 %v4716, %v4712
        %v5037 = vpack.c.b16 %v4721, %v4717
        %v5038 = vpack.c.b16 %v4722, %v4718
        %v5039 = vpack.c.b16 %v4723, %v4719
        %v5040 = vpack.c.b16 %v4724, %v4720
        %v5041 = vpack.c.b16 %v4729, %v4725
        %v5042 = vpack.c.b16 %v4730, %v4726
        %v5043 = vpack.c.b16 %v4731, %v4727
        %v5044 = vpack.c.b16 %v4732, %v4728
        %v5045 = vpack.c.b16 %v4737, %v4733
        %v5046 = vpack.c.b16 %v4738, %v4734
        %v5047 = vpack.c.b16 %v4739, %v4735
        %v5048 = vpack.c.b16 %v4740, %v4736
        %v5049 = vpack.c.b16 %v4745, %v4741
        %v5050 = vpack.c.b16 %v4746, %v4742
        %v5051 = vpack.c.b16 %v4747, %v4743
        %v5052 = vpack.c.b16 %v4748, %v4744
        %v5053 = vpack.c.b16 %v4753, %v4749
        %v5054 = vpack.c.b16 %v4754, %v4750
        %v5055 = vpack.c.b16 %v4755, %v4751
        %v5056 = vpack.c.b16 %v4756, %v4752
        %v5057 = vpack.c.b16 %v4761, %v4757
        %v5058 = vpack.c.b16 %v4762, %v4758
        %v5059 = vpack.c.b16 %v4763, %v4759
        %v5060 = vpack.c.b16 %v4764, %v4760
        %v5061 = vpack.c.b16 %v4769, %v4765
        %v5062 = vpack.c.b16 %v4770, %v4766
        %v5063 = vpack.c.b16 %v4771, %v4767
        %v5064 = vpack.c.b16 %v4772, %v4768
        %v5065 = vpack.c.b16 %v4777, %v4773
        %v5066 = vpack.c.b16 %v4778, %v4774
        %v5067 = vpack.c.b16 %v4779, %v4775
        %v5068 = vpack.c.b16 %v4780, %v4776
        %v5069 = vpack.c.b16 %v4785, %v4781
        %v5070 = vpack.c.b16 %v4786, %v4782
        %v5071 = vpack.c.b16 %v4787, %v4783
        %v5072 = vpack.c.b16 %v4788, %v4784
        %v5073 = vpack.c.b16 %v4793, %v4789
        %v5074 = vpack.c.b16 %v4794, %v4790
        %v5075 = vpack.c.b16 %v4795, %v4791
        %v5076 = vpack.c.b16 %v4796, %v4792
        %v5077 = vpack.c.b16 %v4801, %v4797
        %v5078 = vpack.c.b16 %v4802, %v4798
        %v5079 = vpack.c.b16 %v4803, %v4799
        %v5080 = vpack.c.b16 %v4804, %v4800
        %v5081 = vpack.c.b16 %v4809, %v4805
        %v5082 = vpack.c.b16 %v4810, %v4806
        %v5083 = vpack.c.b16 %v4811, %v4807
        %v5084 = vpack.c.b16 %v4812, %v4808
        %v5085 = vpack.c.b16 %v4817, %v4813
        %v5086 = vpack.c.b16 %v4818, %v4814
        %v5087 = vpack.c.b16 %v4819, %v4815
        %v5088 = vpack.c.b16 %v4820, %v4816
        %v5089 = vpack.c.b16 %v4825, %v4821
        %v5090 = vpack.c.b16 %v4826, %v4822
        %v5091 = vpack.c.b16 %v4827, %v4823
        %v5092 = vpack.c.b16 %v4828, %v4824
        %v5093 = vpack.c.b16 %v4833, %v4829
        %v5094 = vpack.c.b16 %v4834, %v4830
        %v5095 = vpack.c.b16 %v4835, %v4831
        %v5096 = vpack.c.b16 %v4836, %v4832
        %v5097 = vpack.c.b16 %v4841, %v4837
        %v5098 = vpack.c.b16 %v4842, %v4838
        %v5099 = vpack.c.b16 %v4843, %v4839
        %v5100 = vpack.c.b16 %v4844, %v4840
        %5357 = vmatprep.subr.bf16.mxu0 %v4846
        %5358 = vmatpush1.bf16.msra.mxu0 %v4845
        %5359 = vmatprep.subr.bf16.mxu0 %v4850
        %5360 = vmatpush1.bf16.msra.mxu0 %v4849
        %5361 = vmatprep.subr.bf16.mxu0 %v4854
        %5362 = vmatpush1.bf16.msra.mxu0 %v4853
        %5363 = vmatprep.subr.bf16.mxu0 %v4858
        %5364 = vmatpush1.bf16.msra.mxu0 %v4857
        %5365 = vmatprep.subr.bf16.mxu0 %v4862
        %5366 = vmatpush1.bf16.msra.mxu0 %v4861
        %5367 = vmatprep.subr.bf16.mxu0 %v4866
        %5368 = vmatpush1.bf16.msra.mxu0 %v4865
        %5369 = vmatprep.subr.bf16.mxu0 %v4870
        %5370 = vmatpush1.bf16.msra.mxu0 %v4869
        %5371 = vmatprep.subr.bf16.mxu0 %v4874
        %5372 = vmatpush1.bf16.msra.mxu0 %v4873
        %5373 = vmatprep.subr.bf16.mxu0 %v4878
        %5374 = vmatpush1.bf16.msra.mxu0 %v4877
        %5375 = vmatprep.subr.bf16.mxu0 %v4882
        %5376 = vmatpush1.bf16.msra.mxu0 %v4881
        %5377 = vmatprep.subr.bf16.mxu0 %v4886
        %5378 = vmatpush1.bf16.msra.mxu0 %v4885
        %5379 = vmatprep.subr.bf16.mxu0 %v4890
        %5380 = vmatpush1.bf16.msra.mxu0 %v4889
        %5381 = vmatprep.subr.bf16.mxu0 %v4894
        %5382 = vmatpush1.bf16.msra.mxu0 %v4893
        %5383 = vmatprep.subr.bf16.mxu0 %v4898
        %5384 = vmatpush1.bf16.msra.mxu0 %v4897
        %5385 = vmatprep.subr.bf16.mxu0 %v4902
        %5386 = vmatpush1.bf16.msra.mxu0 %v4901
        %5387 = vmatprep.subr.bf16.mxu0 %v4906
        %5388 = vmatpush1.bf16.msra.mxu0 %v4905
        %5389 = vmatprep.mubr.bf16.mxu0 %v3672
        %5390 = vmatmul.mubr.bf16.gmra.mrb[0].mxu0 %v3671
        %v5391 = vpop.f32.mrb[0].mxu0
        %v5392 = vadd.f32 %v4060, %v5391
        %v5393 = vpop.f32.mrb[0].mxu0
        %v5394 = vadd.f32 %v4064, %v5393
        %v5395 = vpop.f32.mrb[0].mxu0
        %v5396 = vadd.f32 %v4060, %v5395
        %v5397 = vpop.f32.mrb[0].mxu0
        %v5398 = vadd.f32 %v4064, %v5397
        %5399 = vmatprep.mubr.bf16.mxu0 %v3680
        %5400 = vmatmul.mubr.bf16.gmra.mrb[0].mxu0 %v3679
        %v5401 = vpop.f32.mrb[0].mxu0
        %v5402 = vadd.f32 %v4060, %v5401
        %v5403 = vpop.f32.mrb[0].mxu0
        %v5404 = vadd.f32 %v4064, %v5403
        %v5405 = vpop.f32.mrb[0].mxu0
        %v5406 = vadd.f32 %v4060, %v5405
        %v5407 = vpop.f32.mrb[0].mxu0
        %v5408 = vadd.f32 %v4064, %v5407
        %5409 = vmatprep.mubr.bf16.mxu0 %v3688
        %5410 = vmatmul.mubr.bf16.gmra.mrb[0].mxu0 %v3687
        %v5411 = vpop.f32.mrb[0].mxu0
        %v5412 = vadd.f32 %v4060, %v5411
        %v5413 = vpop.f32.mrb[0].mxu0
        %v5414 = vadd.f32 %v4064, %v5413
        %v5415 = vpop.f32.mrb[0].mxu0
        %v5416 = vadd.f32 %v4060, %v5415
        %v5417 = vpop.f32.mrb[0].mxu0
        %v5418 = vadd.f32 %v4064, %v5417
        %5419 = vmatprep.mubr.bf16.mxu0 %v3696
        %5420 = vmatmul.mubr.bf16.gmra.mrb[0].mxu0 %v3695
        %v5421 = vpop.f32.mrb[0].mxu0
        %v5422 = vadd.f32 %v4060, %v5421
        %v5423 = vpop.f32.mrb[0].mxu0
        %v5424 = vadd.f32 %v4064, %v5423
        %v5425 = vpop.f32.mrb[0].mxu0
        %v5426 = vadd.f32 %v4060, %v5425
        %v5427 = vpop.f32.mrb[0].mxu0
        %v5428 = vadd.f32 %v4064, %v5427
        %5429 = vmatprep.mubr.bf16.mxu0 %v3704
        %5430 = vmatmul.mubr.bf16.gmra.mrb[0].mxu0 %v3703
        %v5431 = vpop.f32.mrb[0].mxu0
        %v5432 = vadd.f32 %v4060, %v5431
        %v5433 = vpop.f32.mrb[0].mxu0
        %v5434 = vadd.f32 %v4064, %v5433
        %v5435 = vpop.f32.mrb[0].mxu0
        %v5436 = vadd.f32 %v4060, %v5435
        %v5437 = vpop.f32.mrb[0].mxu0
        %v5438 = vadd.f32 %v4064, %v5437
        %5439 = vmatprep.mubr.bf16.mxu0 %v3712
        %5440 = vmatmul.mubr.bf16.gmra.mrb[0].mxu0 %v3711
        %v5441 = vpop.f32.mrb[0].mxu0
        %v5442 = vadd.f32 %v4060, %v5441
        %v5443 = vpop.f32.mrb[0].mxu0
        %v5444 = vadd.f32 %v4064, %v5443
        %v5445 = vpop.f32.mrb[0].mxu0
        %v5446 = vadd.f32 %v4060, %v5445
        %v5447 = vpop.f32.mrb[0].mxu0
        %v5448 = vadd.f32 %v4064, %v5447
        %5449 = vmatprep.mubr.bf16.mxu0 %v3720
        %5450 = vmatmul.mubr.bf16.gmra.mrb[0].mxu0 %v3719
        %v5451 = vpop.f32.mrb[0].mxu0
        %v5452 = vadd.f32 %v4060, %v5451
        %v5453 = vpop.f32.mrb[0].mxu0
        %v5454 = vadd.f32 %v4064, %v5453
        %v5455 = vpop.f32.mrb[0].mxu0
        %v5456 = vadd.f32 %v4060, %v5455
        %v5457 = vpop.f32.mrb[0].mxu0
        %v5458 = vadd.f32 %v4064, %v5457
        %5459 = vmatprep.mubr.bf16.mxu0 %v3728
        %5460 = vmatmul.mubr.bf16.gmra.mrb[0].mxu0 %v3727
        %v5461 = vpop.f32.mrb[0].mxu0
        %v5462 = vadd.f32 %v4060, %v5461
        %v5463 = vpop.f32.mrb[0].mxu0
        %v5464 = vadd.f32 %v4064, %v5463
        %v5465 = vpop.f32.mrb[0].mxu0
        %v5466 = vadd.f32 %v4060, %v5465
        %v5467 = vpop.f32.mrb[0].mxu0
        %v5468 = vadd.f32 %v4064, %v5467
        %5469 = vmatprep.mubr.bf16.mxu0 %v3736
        %5470 = vmatmul.mubr.bf16.gmra.mrb[0].mxu0 %v3735
        %v5471 = vpop.f32.mrb[0].mxu0
        %v5472 = vadd.f32 %v4060, %v5471
        %v5473 = vpop.f32.mrb[0].mxu0
        %v5474 = vadd.f32 %v4064, %v5473
        %v5475 = vpop.f32.mrb[0].mxu0
        %v5476 = vadd.f32 %v4060, %v5475
        %v5477 = vpop.f32.mrb[0].mxu0
        %v5478 = vadd.f32 %v4064, %v5477
        %5479 = vmatprep.mubr.bf16.mxu0 %v3744
        %5480 = vmatmul.mubr.bf16.gmra.mrb[0].mxu0 %v3743
        %v5481 = vpop.f32.mrb[0].mxu0
        %v5482 = vadd.f32 %v4060, %v5481
        %v5483 = vpop.f32.mrb[0].mxu0
        %v5484 = vadd.f32 %v4064, %v5483
        %v5485 = vpop.f32.mrb[0].mxu0
        %v5486 = vadd.f32 %v4060, %v5485
        %v5487 = vpop.f32.mrb[0].mxu0
        %v5488 = vadd.f32 %v4064, %v5487
        %5489 = vmatprep.mubr.bf16.mxu0 %v3752
        %5490 = vmatmul.mubr.bf16.gmra.mrb[0].mxu0 %v3751
        %v5491 = vpop.f32.mrb[0].mxu0
        %v5492 = vadd.f32 %v4060, %v5491
        %v5493 = vpop.f32.mrb[0].mxu0
        %v5494 = vadd.f32 %v4064, %v5493
        %v5495 = vpop.f32.mrb[0].mxu0
        %v5496 = vadd.f32 %v4060, %v5495
        %v5497 = vpop.f32.mrb[0].mxu0
        %v5498 = vadd.f32 %v4064, %v5497
        %5499 = vmatprep.mubr.bf16.mxu0 %v3760
        %5500 = vmatmul.mubr.bf16.gmra.mrb[0].mxu0 %v3759
        %v5501 = vpop.f32.mrb[0].mxu0
        %v5502 = vadd.f32 %v4060, %v5501
        %v5503 = vpop.f32.mrb[0].mxu0
        %v5504 = vadd.f32 %v4064, %v5503
        %v5505 = vpop.f32.mrb[0].mxu0
        %v5506 = vadd.f32 %v4060, %v5505
        %v5507 = vpop.f32.mrb[0].mxu0
        %v5508 = vadd.f32 %v4064, %v5507
        %5509 = vmatprep.mubr.bf16.mxu0 %v3768
        %5510 = vmatmul.mubr.bf16.gmra.mrb[0].mxu0 %v3767
        %v5511 = vpop.f32.mrb[0].mxu0
        %v5512 = vadd.f32 %v4060, %v5511
        %v5513 = vpop.f32.mrb[0].mxu0
        %v5514 = vadd.f32 %v4064, %v5513
        %v5515 = vpop.f32.mrb[0].mxu0
        %v5516 = vadd.f32 %v4060, %v5515
        %v5517 = vpop.f32.mrb[0].mxu0
        %v5518 = vadd.f32 %v4064, %v5517
        %5519 = vmatprep.mubr.bf16.mxu0 %v3776
        %5520 = vmatmul.mubr.bf16.gmra.mrb[0].mxu0 %v3775
        %v5521 = vpop.f32.mrb[0].mxu0
        %v5522 = vadd.f32 %v4060, %v5521
        %v5523 = vpop.f32.mrb[0].mxu0
        %v5524 = vadd.f32 %v4064, %v5523
        %v5525 = vpop.f32.mrb[0].mxu0
        %v5526 = vadd.f32 %v4060, %v5525
        %v5527 = vpop.f32.mrb[0].mxu0
        %v5528 = vadd.f32 %v4064, %v5527
        %5529 = vmatprep.mubr.bf16.mxu0 %v3784
        %5530 = vmatmul.mubr.bf16.gmra.mrb[0].mxu0 %v3783
        %v5531 = vpop.f32.mrb[0].mxu0
        %v5532 = vadd.f32 %v4060, %v5531
        %v5533 = vpop.f32.mrb[0].mxu0
        %v5534 = vadd.f32 %v4064, %v5533
        %v5535 = vpop.f32.mrb[0].mxu0
        %v5536 = vadd.f32 %v4060, %v5535
        %v5537 = vpop.f32.mrb[0].mxu0
        %v5538 = vadd.f32 %v4064, %v5537
        %5539 = vmatprep.mubr.bf16.mxu0 %v3792
        %5540 = vmatmul.mubr.bf16.gmra.mrb[0].mxu0 %v3791
        %v5541 = vpop.f32.mrb[0].mxu0
        %v5542 = vadd.f32 %v4060, %v5541
        %v5543 = vpop.f32.mrb[0].mxu0
        %v5544 = vadd.f32 %v4064, %v5543
        %v5545 = vpop.f32.mrb[0].mxu0
        %v5546 = vadd.f32 %v4060, %v5545
        %v5547 = vpop.f32.mrb[0].mxu0
        %v5548 = vadd.f32 %v4064, %v5547
        %5549 = vdwg.mxu0
        %5550 = vmatprep.subr.bf16.mxu0 %v4910
        %5551 = vmatpush1.bf16.msra.mxu0 %v4909
        %5552 = vmatprep.subr.bf16.mxu0 %v4914
        %5553 = vmatpush1.bf16.msra.mxu0 %v4913
        %5554 = vmatprep.subr.bf16.mxu0 %v4918
        %5555 = vmatpush1.bf16.msra.mxu0 %v4917
        %5556 = vmatprep.subr.bf16.mxu0 %v4922
        %5557 = vmatpush1.bf16.msra.mxu0 %v4921
        %5558 = vmatprep.subr.bf16.mxu0 %v4926
        %5559 = vmatpush1.bf16.msra.mxu0 %v4925
        %5560 = vmatprep.subr.bf16.mxu0 %v4930
        %5561 = vmatpush1.bf16.msra.mxu0 %v4929
        %5562 = vmatprep.subr.bf16.mxu0 %v4934
        %5563 = vmatpush1.bf16.msra.mxu0 %v4933
        %5564 = vmatprep.subr.bf16.mxu0 %v4938
        %5565 = vmatpush1.bf16.msra.mxu0 %v4937
        %5566 = vmatprep.subr.bf16.mxu0 %v4942
        %5567 = vmatpush1.bf16.msra.mxu0 %v4941
        %5568 = vmatprep.subr.bf16.mxu0 %v4946
        %5569 = vmatpush1.bf16.msra.mxu0 %v4945
        %5570 = vmatprep.subr.bf16.mxu0 %v4950
        %5571 = vmatpush1.bf16.msra.mxu0 %v4949
        %5572 = vmatprep.subr.bf16.mxu0 %v4954
        %5573 = vmatpush1.bf16.msra.mxu0 %v4953
        %5574 = vmatprep.subr.bf16.mxu0 %v4958
        %5575 = vmatpush1.bf16.msra.mxu0 %v4957
        %5576 = vmatprep.subr.bf16.mxu0 %v4962
        %5577 = vmatpush1.bf16.msra.mxu0 %v4961
        %5578 = vmatprep.subr.bf16.mxu0 %v4966
        %5579 = vmatpush1.bf16.msra.mxu0 %v4965
        %5580 = vmatprep.subr.bf16.mxu0 %v4970
        %5581 = vmatpush1.bf16.msra.mxu0 %v4969
        %5582 = vmatprep.mubr.bf16.mxu0 %v3674
        %5583 = vmatmul.mubr.bf16.gmra.mrb[0].mxu0 %v3673
        %v5584 = vpop.f32.mrb[0].mxu0
        %v5585 = vadd.f32 %v5392, %v5584
        %v5586 = vpop.f32.mrb[0].mxu0
        %v5587 = vadd.f32 %v5394, %v5586
        %v5588 = vpop.f32.mrb[0].mxu0
        %v5589 = vadd.f32 %v5396, %v5588
        %v5590 = vpop.f32.mrb[0].mxu0
        %v5591 = vadd.f32 %v5398, %v5590
        %5592 = vmatprep.mubr.bf16.mxu0 %v3682
        %5593 = vmatmul.mubr.bf16.gmra.mrb[0].mxu0 %v3681
        %v5594 = vpop.f32.mrb[0].mxu0
        %v5595 = vadd.f32 %v5402, %v5594
        %v5596 = vpop.f32.mrb[0].mxu0
        %v5597 = vadd.f32 %v5404, %v5596
        %v5598 = vpop.f32.mrb[0].mxu0
        %v5599 = vadd.f32 %v5406, %v5598
        %v5600 = vpop.f32.mrb[0].mxu0
        %v5601 = vadd.f32 %v5408, %v5600
        %5602 = vmatprep.mubr.bf16.mxu0 %v3690
        %5603 = vmatmul.mubr.bf16.gmra.mrb[0].mxu0 %v3689
        %v5604 = vpop.f32.mrb[0].mxu0
        %v5605 = vadd.f32 %v5412, %v5604
        %v5606 = vpop.f32.mrb[0].mxu0
        %v5607 = vadd.f32 %v5414, %v5606
        %v5608 = vpop.f32.mrb[0].mxu0
        %v5609 = vadd.f32 %v5416, %v5608
        %v5610 = vpop.f32.mrb[0].mxu0
        %v5611 = vadd.f32 %v5418, %v5610
        %5612 = vmatprep.mubr.bf16.mxu0 %v3698
        %5613 = vmatmul.mubr.bf16.gmra.mrb[0].mxu0 %v3697
        %v5614 = vpop.f32.mrb[0].mxu0
        %v5615 = vadd.f32 %v5422, %v5614
        %v5616 = vpop.f32.mrb[0].mxu0
        %v5617 = vadd.f32 %v5424, %v5616
        %v5618 = vpop.f32.mrb[0].mxu0
        %v5619 = vadd.f32 %v5426, %v5618
        %v5620 = vpop.f32.mrb[0].mxu0
        %v5621 = vadd.f32 %v5428, %v5620
        %5622 = vmatprep.mubr.bf16.mxu0 %v3706
        %5623 = vmatmul.mubr.bf16.gmra.mrb[0].mxu0 %v3705
        %v5624 = vpop.f32.mrb[0].mxu0
        %v5625 = vadd.f32 %v5432, %v5624
        %v5626 = vpop.f32.mrb[0].mxu0
        %v5627 = vadd.f32 %v5434, %v5626
        %v5628 = vpop.f32.mrb[0].mxu0
        %v5629 = vadd.f32 %v5436, %v5628
        %v5630 = vpop.f32.mrb[0].mxu0
        %v5631 = vadd.f32 %v5438, %v5630
        %5632 = vmatprep.mubr.bf16.mxu0 %v3714
        %5633 = vmatmul.mubr.bf16.gmra.mrb[0].mxu0 %v3713
        %v5634 = vpop.f32.mrb[0].mxu0
        %v5635 = vadd.f32 %v5442, %v5634
        %v5636 = vpop.f32.mrb[0].mxu0
        %v5637 = vadd.f32 %v5444, %v5636
        %v5638 = vpop.f32.mrb[0].mxu0
        %v5639 = vadd.f32 %v5446, %v5638
        %v5640 = vpop.f32.mrb[0].mxu0
        %v5641 = vadd.f32 %v5448, %v5640
        %5642 = vmatprep.mubr.bf16.mxu0 %v3722
        %5643 = vmatmul.mubr.bf16.gmra.mrb[0].mxu0 %v3721
        %v5644 = vpop.f32.mrb[0].mxu0
        %v5645 = vadd.f32 %v5452, %v5644
        %v5646 = vpop.f32.mrb[0].mxu0
        %v5647 = vadd.f32 %v5454, %v5646
        %v5648 = vpop.f32.mrb[0].mxu0
        %v5649 = vadd.f32 %v5456, %v5648
        %v5650 = vpop.f32.mrb[0].mxu0
        %v5651 = vadd.f32 %v5458, %v5650
        %5652 = vmatprep.mubr.bf16.mxu0 %v3730
        %5653 = vmatmul.mubr.bf16.gmra.mrb[0].mxu0 %v3729
        %v5654 = vpop.f32.mrb[0].mxu0
        %v5655 = vadd.f32 %v5462, %v5654
        %v5656 = vpop.f32.mrb[0].mxu0
        %v5657 = vadd.f32 %v5464, %v5656
        %v5658 = vpop.f32.mrb[0].mxu0
        %v5659 = vadd.f32 %v5466, %v5658
        %v5660 = vpop.f32.mrb[0].mxu0
        %v5661 = vadd.f32 %v5468, %v5660
        %5662 = vmatprep.mubr.bf16.mxu0 %v3738
        %5663 = vmatmul.mubr.bf16.gmra.mrb[0].mxu0 %v3737
        %v5664 = vpop.f32.mrb[0].mxu0
        %v5665 = vadd.f32 %v5472, %v5664
        %v5666 = vpop.f32.mrb[0].mxu0
        %v5667 = vadd.f32 %v5474, %v5666
        %v5668 = vpop.f32.mrb[0].mxu0
        %v5669 = vadd.f32 %v5476, %v5668
        %v5670 = vpop.f32.mrb[0].mxu0
        %v5671 = vadd.f32 %v5478, %v5670
        %5672 = vmatprep.mubr.bf16.mxu0 %v3746
        %5673 = vmatmul.mubr.bf16.gmra.mrb[0].mxu0 %v3745
        %v5674 = vpop.f32.mrb[0].mxu0
        %v5675 = vadd.f32 %v5482, %v5674
        %v5676 = vpop.f32.mrb[0].mxu0
        %v5677 = vadd.f32 %v5484, %v5676
        %v5678 = vpop.f32.mrb[0].mxu0
        %v5679 = vadd.f32 %v5486, %v5678
        %v5680 = vpop.f32.mrb[0].mxu0
        %v5681 = vadd.f32 %v5488, %v5680
        %5682 = vmatprep.mubr.bf16.mxu0 %v3754
        %5683 = vmatmul.mubr.bf16.gmra.mrb[0].mxu0 %v3753
        %v5684 = vpop.f32.mrb[0].mxu0
        %v5685 = vadd.f32 %v5492, %v5684
        %v5686 = vpop.f32.mrb[0].mxu0
        %v5687 = vadd.f32 %v5494, %v5686
        %v5688 = vpop.f32.mrb[0].mxu0
        %v5689 = vadd.f32 %v5496, %v5688
        %v5690 = vpop.f32.mrb[0].mxu0
        %v5691 = vadd.f32 %v5498, %v5690
        %5692 = vmatprep.mubr.bf16.mxu0 %v3762
        %5693 = vmatmul.mubr.bf16.gmra.mrb[0].mxu0 %v3761
        %v5694 = vpop.f32.mrb[0].mxu0
        %v5695 = vadd.f32 %v5502, %v5694
        %v5696 = vpop.f32.mrb[0].mxu0
        %v5697 = vadd.f32 %v5504, %v5696
        %v5698 = vpop.f32.mrb[0].mxu0
        %v5699 = vadd.f32 %v5506, %v5698
        %v5700 = vpop.f32.mrb[0].mxu0
        %v5701 = vadd.f32 %v5508, %v5700
        %5702 = vmatprep.mubr.bf16.mxu0 %v3770
        %5703 = vmatmul.mubr.bf16.gmra.mrb[0].mxu0 %v3769
        %v5704 = vpop.f32.mrb[0].mxu0
        %v5705 = vadd.f32 %v5512, %v5704
        %v5706 = vpop.f32.mrb[0].mxu0
        %v5707 = vadd.f32 %v5514, %v5706
        %v5708 = vpop.f32.mrb[0].mxu0
        %v5709 = vadd.f32 %v5516, %v5708
        %v5710 = vpop.f32.mrb[0].mxu0
        %v5711 = vadd.f32 %v5518, %v5710
        %5712 = vmatprep.mubr.bf16.mxu0 %v3778
        %5713 = vmatmul.mubr.bf16.gmra.mrb[0].mxu0 %v3777
        %v5714 = vpop.f32.mrb[0].mxu0
        %v5715 = vadd.f32 %v5522, %v5714
        %v5716 = vpop.f32.mrb[0].mxu0
        %v5717 = vadd.f32 %v5524, %v5716
        %v5718 = vpop.f32.mrb[0].mxu0
        %v5719 = vadd.f32 %v5526, %v5718
        %v5720 = vpop.f32.mrb[0].mxu0
        %v5721 = vadd.f32 %v5528, %v5720
        %5722 = vmatprep.mubr.bf16.mxu0 %v3786
        %5723 = vmatmul.mubr.bf16.gmra.mrb[0].mxu0 %v3785
        %v5724 = vpop.f32.mrb[0].mxu0
        %v5725 = vadd.f32 %v5532, %v5724
        %v5726 = vpop.f32.mrb[0].mxu0
        %v5727 = vadd.f32 %v5534, %v5726
        %v5728 = vpop.f32.mrb[0].mxu0
        %v5729 = vadd.f32 %v5536, %v5728
        %v5730 = vpop.f32.mrb[0].mxu0
        %v5731 = vadd.f32 %v5538, %v5730
        %5732 = vmatprep.mubr.bf16.mxu0 %v3794
        %5733 = vmatmul.mubr.bf16.gmra.mrb[0].mxu0 %v3793
        %v5734 = vpop.f32.mrb[0].mxu0
        %v5735 = vadd.f32 %v5542, %v5734
        %v5736 = vpop.f32.mrb[0].mxu0
        %v5737 = vadd.f32 %v5544, %v5736
        %v5738 = vpop.f32.mrb[0].mxu0
        %v5739 = vadd.f32 %v5546, %v5738
        %v5740 = vpop.f32.mrb[0].mxu0
        %v5741 = vadd.f32 %v5548, %v5740
        %5742 = vdwg.mxu0
        %5743 = vmatprep.subr.bf16.mxu0 %v4974
        %5744 = vmatpush1.bf16.msra.mxu0 %v4973
        %5745 = vmatprep.subr.bf16.mxu0 %v4978
        %5746 = vmatpush1.bf16.msra.mxu0 %v4977
        %5747 = vmatprep.subr.bf16.mxu0 %v4982
        %5748 = vmatpush1.bf16.msra.mxu0 %v4981
        %5749 = vmatprep.subr.bf16.mxu0 %v4986
        %5750 = vmatpush1.bf16.msra.mxu0 %v4985
        %5751 = vmatprep.subr.bf16.mxu0 %v4990
        %5752 = vmatpush1.bf16.msra.mxu0 %v4989
        %5753 = vmatprep.subr.bf16.mxu0 %v4994
        %5754 = vmatpush1.bf16.msra.mxu0 %v4993
        %5755 = vmatprep.subr.bf16.mxu0 %v4998
        %5756 = vmatpush1.bf16.msra.mxu0 %v4997
        %5757 = vmatprep.subr.bf16.mxu0 %v5002
        %5758 = vmatpush1.bf16.msra.mxu0 %v5001
        %5759 = vmatprep.subr.bf16.mxu0 %v5006
        %5760 = vmatpush1.bf16.msra.mxu0 %v5005
        %5761 = vmatprep.subr.bf16.mxu0 %v5010
        %5762 = vmatpush1.bf16.msra.mxu0 %v5009
        %5763 = vmatprep.subr.bf16.mxu0 %v5014
        %5764 = vmatpush1.bf16.msra.mxu0 %v5013
        %5765 = vmatprep.subr.bf16.mxu0 %v5018
        %5766 = vmatpush1.bf16.msra.mxu0 %v5017
        %5767 = vmatprep.subr.bf16.mxu0 %v5022
        %5768 = vmatpush1.bf16.msra.mxu0 %v5021
        %5769 = vmatprep.subr.bf16.mxu0 %v5026
        %5770 = vmatpush1.bf16.msra.mxu0 %v5025
        %5771 = vmatprep.subr.bf16.mxu0 %v5030
        %5772 = vmatpush1.bf16.msra.mxu0 %v5029
        %5773 = vmatprep.subr.bf16.mxu0 %v5034
        %5774 = vmatpush1.bf16.msra.mxu0 %v5033
        %5775 = vmatprep.mubr.bf16.mxu0 %v3676
        %5776 = vmatmul.mubr.bf16.gmra.mrb[0].mxu0 %v3675
        %v5777 = vpop.f32.mrb[0].mxu0
        %v5778 = vadd.f32 %v5585, %v5777
        %v5779 = vpop.f32.mrb[0].mxu0
        %v5780 = vadd.f32 %v5587, %v5779
        %v5781 = vpop.f32.mrb[0].mxu0
        %v5782 = vadd.f32 %v5589, %v5781
        %v5783 = vpop.f32.mrb[0].mxu0
        %v5784 = vadd.f32 %v5591, %v5783
        %5785 = vmatprep.mubr.bf16.mxu0 %v3684
        %5786 = vmatmul.mubr.bf16.gmra.mrb[0].mxu0 %v3683
        %v5787 = vpop.f32.mrb[0].mxu0
        %v5788 = vadd.f32 %v5595, %v5787
        %v5789 = vpop.f32.mrb[0].mxu0
        %v5790 = vadd.f32 %v5597, %v5789
        %v5791 = vpop.f32.mrb[0].mxu0
        %v5792 = vadd.f32 %v5599, %v5791
        %v5793 = vpop.f32.mrb[0].mxu0
        %v5794 = vadd.f32 %v5601, %v5793
        %5795 = vmatprep.mubr.bf16.mxu0 %v3692
        %5796 = vmatmul.mubr.bf16.gmra.mrb[0].mxu0 %v3691
        %v5797 = vpop.f32.mrb[0].mxu0
        %v5798 = vadd.f32 %v5605, %v5797
        %v5799 = vpop.f32.mrb[0].mxu0
        %v5800 = vadd.f32 %v5607, %v5799
        %v5801 = vpop.f32.mrb[0].mxu0
        %v5802 = vadd.f32 %v5609, %v5801
        %v5803 = vpop.f32.mrb[0].mxu0
        %v5804 = vadd.f32 %v5611, %v5803
        %5805 = vmatprep.mubr.bf16.mxu0 %v3700
        %5806 = vmatmul.mubr.bf16.gmra.mrb[0].mxu0 %v3699
        %v5807 = vpop.f32.mrb[0].mxu0
        %v5808 = vadd.f32 %v5615, %v5807
        %v5809 = vpop.f32.mrb[0].mxu0
        %v5810 = vadd.f32 %v5617, %v5809
        %v5811 = vpop.f32.mrb[0].mxu0
        %v5812 = vadd.f32 %v5619, %v5811
        %v5813 = vpop.f32.mrb[0].mxu0
        %v5814 = vadd.f32 %v5621, %v5813
        %5815 = vmatprep.mubr.bf16.mxu0 %v3708
        %5816 = vmatmul.mubr.bf16.gmra.mrb[0].mxu0 %v3707
        %v5817 = vpop.f32.mrb[0].mxu0
        %v5818 = vadd.f32 %v5625, %v5817
        %v5819 = vpop.f32.mrb[0].mxu0
        %v5820 = vadd.f32 %v5627, %v5819
        %v5821 = vpop.f32.mrb[0].mxu0
        %v5822 = vadd.f32 %v5629, %v5821
        %v5823 = vpop.f32.mrb[0].mxu0
        %v5824 = vadd.f32 %v5631, %v5823
        %5825 = vmatprep.mubr.bf16.mxu0 %v3716
        %5826 = vmatmul.mubr.bf16.gmra.mrb[0].mxu0 %v3715
        %v5827 = vpop.f32.mrb[0].mxu0
        %v5828 = vadd.f32 %v5635, %v5827
        %v5829 = vpop.f32.mrb[0].mxu0
        %v5830 = vadd.f32 %v5637, %v5829
        %v5831 = vpop.f32.mrb[0].mxu0
        %v5832 = vadd.f32 %v5639, %v5831
        %v5833 = vpop.f32.mrb[0].mxu0
        %v5834 = vadd.f32 %v5641, %v5833
        %5835 = vmatprep.mubr.bf16.mxu0 %v3724
        %5836 = vmatmul.mubr.bf16.gmra.mrb[0].mxu0 %v3723
        %v5837 = vpop.f32.mrb[0].mxu0
        %v5838 = vadd.f32 %v5645, %v5837
        %v5839 = vpop.f32.mrb[0].mxu0
        %v5840 = vadd.f32 %v5647, %v5839
        %v5841 = vpop.f32.mrb[0].mxu0
        %v5842 = vadd.f32 %v5649, %v5841
        %v5843 = vpop.f32.mrb[0].mxu0
        %v5844 = vadd.f32 %v5651, %v5843
        %5845 = vmatprep.mubr.bf16.mxu0 %v3732
        %5846 = vmatmul.mubr.bf16.gmra.mrb[0].mxu0 %v3731
        %v5847 = vpop.f32.mrb[0].mxu0
        %v5848 = vadd.f32 %v5655, %v5847
        %v5849 = vpop.f32.mrb[0].mxu0
        %v5850 = vadd.f32 %v5657, %v5849
        %v5851 = vpop.f32.mrb[0].mxu0
        %v5852 = vadd.f32 %v5659, %v5851
        %v5853 = vpop.f32.mrb[0].mxu0
        %v5854 = vadd.f32 %v5661, %v5853
        %5855 = vmatprep.mubr.bf16.mxu0 %v3740
        %5856 = vmatmul.mubr.bf16.gmra.mrb[0].mxu0 %v3739
        %v5857 = vpop.f32.mrb[0].mxu0
        %v5858 = vadd.f32 %v5665, %v5857
        %v5859 = vpop.f32.mrb[0].mxu0
        %v5860 = vadd.f32 %v5667, %v5859
        %v5861 = vpop.f32.mrb[0].mxu0
        %v5862 = vadd.f32 %v5669, %v5861
        %v5863 = vpop.f32.mrb[0].mxu0
        %v5864 = vadd.f32 %v5671, %v5863
        %5865 = vmatprep.mubr.bf16.mxu0 %v3748
        %5866 = vmatmul.mubr.bf16.gmra.mrb[0].mxu0 %v3747
        %v5867 = vpop.f32.mrb[0].mxu0
        %v5868 = vadd.f32 %v5675, %v5867
        %v5869 = vpop.f32.mrb[0].mxu0
        %v5870 = vadd.f32 %v5677, %v5869
        %v5871 = vpop.f32.mrb[0].mxu0
        %v5872 = vadd.f32 %v5679, %v5871
        %v5873 = vpop.f32.mrb[0].mxu0
        %v5874 = vadd.f32 %v5681, %v5873
        %5875 = vmatprep.mubr.bf16.mxu0 %v3756
        %5876 = vmatmul.mubr.bf16.gmra.mrb[0].mxu0 %v3755
        %v5877 = vpop.f32.mrb[0].mxu0
        %v5878 = vadd.f32 %v5685, %v5877
        %v5879 = vpop.f32.mrb[0].mxu0
        %v5880 = vadd.f32 %v5687, %v5879
        %v5881 = vpop.f32.mrb[0].mxu0
        %v5882 = vadd.f32 %v5689, %v5881
        %v5883 = vpop.f32.mrb[0].mxu0
        %v5884 = vadd.f32 %v5691, %v5883
        %5885 = vmatprep.mubr.bf16.mxu0 %v3764
        %5886 = vmatmul.mubr.bf16.gmra.mrb[0].mxu0 %v3763
        %v5887 = vpop.f32.mrb[0].mxu0
        %v5888 = vadd.f32 %v5695, %v5887
        %v5889 = vpop.f32.mrb[0].mxu0
        %v5890 = vadd.f32 %v5697, %v5889
        %v5891 = vpop.f32.mrb[0].mxu0
        %v5892 = vadd.f32 %v5699, %v5891
        %v5893 = vpop.f32.mrb[0].mxu0
        %v5894 = vadd.f32 %v5701, %v5893
        %5895 = vmatprep.mubr.bf16.mxu0 %v3772
        %5896 = vmatmul.mubr.bf16.gmra.mrb[0].mxu0 %v3771
        %v5897 = vpop.f32.mrb[0].mxu0
        %v5898 = vadd.f32 %v5705, %v5897
        %v5899 = vpop.f32.mrb[0].mxu0
        %v5900 = vadd.f32 %v5707, %v5899
        %v5901 = vpop.f32.mrb[0].mxu0
        %v5902 = vadd.f32 %v5709, %v5901
        %v5903 = vpop.f32.mrb[0].mxu0
        %v5904 = vadd.f32 %v5711, %v5903
        %5905 = vmatprep.mubr.bf16.mxu0 %v3780
        %5906 = vmatmul.mubr.bf16.gmra.mrb[0].mxu0 %v3779
        %v5907 = vpop.f32.mrb[0].mxu0
        %v5908 = vadd.f32 %v5715, %v5907
        %v5909 = vpop.f32.mrb[0].mxu0
        %v5910 = vadd.f32 %v5717, %v5909
        %v5911 = vpop.f32.mrb[0].mxu0
        %v5912 = vadd.f32 %v5719, %v5911
        %v5913 = vpop.f32.mrb[0].mxu0
        %v5914 = vadd.f32 %v5721, %v5913
        %5915 = vmatprep.mubr.bf16.mxu0 %v3788
        %5916 = vmatmul.mubr.bf16.gmra.mrb[0].mxu0 %v3787
        %v5917 = vpop.f32.mrb[0].mxu0
        %v5918 = vadd.f32 %v5725, %v5917
        %v5919 = vpop.f32.mrb[0].mxu0
        %v5920 = vadd.f32 %v5727, %v5919
        %v5921 = vpop.f32.mrb[0].mxu0
        %v5922 = vadd.f32 %v5729, %v5921
        %v5923 = vpop.f32.mrb[0].mxu0
        %v5924 = vadd.f32 %v5731, %v5923
        %5925 = vmatprep.mubr.bf16.mxu0 %v3796
        %5926 = vmatmul.mubr.bf16.gmra.mrb[0].mxu0 %v3795
        %v5927 = vpop.f32.mrb[0].mxu0
        %v5928 = vadd.f32 %v5735, %v5927
        %v5929 = vpop.f32.mrb[0].mxu0
        %v5930 = vadd.f32 %v5737, %v5929
        %v5931 = vpop.f32.mrb[0].mxu0
        %v5932 = vadd.f32 %v5739, %v5931
        %v5933 = vpop.f32.mrb[0].mxu0
        %v5934 = vadd.f32 %v5741, %v5933
        %5935 = vdwg.mxu0
        %5936 = vmatprep.subr.bf16.mxu0 %v5038
        %5937 = vmatpush1.bf16.msra.mxu0 %v5037
        %5938 = vmatprep.subr.bf16.mxu0 %v5042
        %5939 = vmatpush1.bf16.msra.mxu0 %v5041
        %5940 = vmatprep.subr.bf16.mxu0 %v5046
        %5941 = vmatpush1.bf16.msra.mxu0 %v5045
        %5942 = vmatprep.subr.bf16.mxu0 %v5050
        %5943 = vmatpush1.bf16.msra.mxu0 %v5049
        %5944 = vmatprep.subr.bf16.mxu0 %v5054
        %5945 = vmatpush1.bf16.msra.mxu0 %v5053
        %5946 = vmatprep.subr.bf16.mxu0 %v5058
        %5947 = vmatpush1.bf16.msra.mxu0 %v5057
        %5948 = vmatprep.subr.bf16.mxu0 %v5062
        %5949 = vmatpush1.bf16.msra.mxu0 %v5061
        %5950 = vmatprep.subr.bf16.mxu0 %v5066
        %5951 = vmatpush1.bf16.msra.mxu0 %v5065
        %5952 = vmatprep.subr.bf16.mxu0 %v5070
        %5953 = vmatpush1.bf16.msra.mxu0 %v5069
        %5954 = vmatprep.subr.bf16.mxu0 %v5074
        %5955 = vmatpush1.bf16.msra.mxu0 %v5073
        %5956 = vmatprep.subr.bf16.mxu0 %v5078
        %5957 = vmatpush1.bf16.msra.mxu0 %v5077
        %5958 = vmatprep.subr.bf16.mxu0 %v5082
        %5959 = vmatpush1.bf16.msra.mxu0 %v5081
        %5960 = vmatprep.subr.bf16.mxu0 %v5086
        %5961 = vmatpush1.bf16.msra.mxu0 %v5085
        %5962 = vmatprep.subr.bf16.mxu0 %v5090
        %5963 = vmatpush1.bf16.msra.mxu0 %v5089
        %5964 = vmatprep.subr.bf16.mxu0 %v5094
        %5965 = vmatpush1.bf16.msra.mxu0 %v5093
        %5966 = vmatprep.subr.bf16.mxu0 %v5098
        %5967 = vmatpush1.bf16.msra.mxu0 %v5097
        %5968 = vmatprep.mubr.bf16.mxu0 %v3678
        %5969 = vmatmul.mubr.bf16.gmra.mrb[0].mxu0 %v3677
        %v5970 = vpop.f32.mrb[0].mxu0
        %v5971 = vadd.f32 %v5778, %v5970
        %v5972 = vpop.f32.mrb[0].mxu0
        %v5973 = vadd.f32 %v5780, %v5972
        %v5974 = vpop.f32.mrb[0].mxu0
        %v5975 = vadd.f32 %v5782, %v5974
        %v5976 = vpop.f32.mrb[0].mxu0
        %v5977 = vadd.f32 %v5784, %v5976
        %5978 = vmatprep.mubr.bf16.mxu0 %v3686
        %5979 = vmatmul.mubr.bf16.gmra.mrb[0].mxu0 %v3685
        %v5980 = vpop.f32.mrb[0].mxu0
        %v5981 = vadd.f32 %v5788, %v5980
        %v5982 = vpop.f32.mrb[0].mxu0
        %v5983 = vadd.f32 %v5790, %v5982
        %v5984 = vpop.f32.mrb[0].mxu0
        %v5985 = vadd.f32 %v5792, %v5984
        %v5986 = vpop.f32.mrb[0].mxu0
        %v5987 = vadd.f32 %v5794, %v5986
        %5988 = vmatprep.mubr.bf16.mxu0 %v3694
        %5989 = vmatmul.mubr.bf16.gmra.mrb[0].mxu0 %v3693
        %v5990 = vpop.f32.mrb[0].mxu0
        %v5991 = vadd.f32 %v5798, %v5990
        %v5992 = vpop.f32.mrb[0].mxu0
        %v5993 = vadd.f32 %v5800, %v5992
        %v5994 = vpop.f32.mrb[0].mxu0
        %v5995 = vadd.f32 %v5802, %v5994
        %v5996 = vpop.f32.mrb[0].mxu0
        %v5997 = vadd.f32 %v5804, %v5996
        %5998 = vmatprep.mubr.bf16.mxu0 %v3702
        %5999 = vmatmul.mubr.bf16.gmra.mrb[0].mxu0 %v3701
        %v6000 = vpop.f32.mrb[0].mxu0
        %v6001 = vadd.f32 %v5808, %v6000
        %v6002 = vpop.f32.mrb[0].mxu0
        %v6003 = vadd.f32 %v5810, %v6002
        %v6004 = vpop.f32.mrb[0].mxu0
        %v6005 = vadd.f32 %v5812, %v6004
        %v6006 = vpop.f32.mrb[0].mxu0
        %v6007 = vadd.f32 %v5814, %v6006
        %6008 = vmatprep.mubr.bf16.mxu0 %v3710
        %6009 = vmatmul.mubr.bf16.gmra.mrb[0].mxu0 %v3709
        %v6010 = vpop.f32.mrb[0].mxu0
        %v6011 = vadd.f32 %v5818, %v6010
        %v6012 = vpop.f32.mrb[0].mxu0
        %v6013 = vadd.f32 %v5820, %v6012
        %v6014 = vpop.f32.mrb[0].mxu0
        %v6015 = vadd.f32 %v5822, %v6014
        %v6016 = vpop.f32.mrb[0].mxu0
        %v6017 = vadd.f32 %v5824, %v6016
        %6018 = vmatprep.mubr.bf16.mxu0 %v3718
        %6019 = vmatmul.mubr.bf16.gmra.mrb[0].mxu0 %v3717
        %v6020 = vpop.f32.mrb[0].mxu0
        %v6021 = vadd.f32 %v5828, %v6020
        %v6022 = vpop.f32.mrb[0].mxu0
        %v6023 = vadd.f32 %v5830, %v6022
        %v6024 = vpop.f32.mrb[0].mxu0
        %v6025 = vadd.f32 %v5832, %v6024
        %v6026 = vpop.f32.mrb[0].mxu0
        %v6027 = vadd.f32 %v5834, %v6026
        %6028 = vmatprep.mubr.bf16.mxu0 %v3726
        %6029 = vmatmul.mubr.bf16.gmra.mrb[0].mxu0 %v3725
        %v6030 = vpop.f32.mrb[0].mxu0
        %v6031 = vadd.f32 %v5838, %v6030
        %v6032 = vpop.f32.mrb[0].mxu0
        %v6033 = vadd.f32 %v5840, %v6032
        %v6034 = vpop.f32.mrb[0].mxu0
        %v6035 = vadd.f32 %v5842, %v6034
        %v6036 = vpop.f32.mrb[0].mxu0
        %v6037 = vadd.f32 %v5844, %v6036
        %6038 = vmatprep.mubr.bf16.mxu0 %v3734
        %6039 = vmatmul.mubr.bf16.gmra.mrb[0].mxu0 %v3733
        %v6040 = vpop.f32.mrb[0].mxu0
        %v6041 = vadd.f32 %v5848, %v6040
        %v6042 = vpop.f32.mrb[0].mxu0
        %v6043 = vadd.f32 %v5850, %v6042
        %v6044 = vpop.f32.mrb[0].mxu0
        %v6045 = vadd.f32 %v5852, %v6044
        %v6046 = vpop.f32.mrb[0].mxu0
        %v6047 = vadd.f32 %v5854, %v6046
        %6048 = vmatprep.mubr.bf16.mxu0 %v3742
        %6049 = vmatmul.mubr.bf16.gmra.mrb[0].mxu0 %v3741
        %v6050 = vpop.f32.mrb[0].mxu0
        %v6051 = vadd.f32 %v5858, %v6050
        %v6052 = vpop.f32.mrb[0].mxu0
        %v6053 = vadd.f32 %v5860, %v6052
        %v6054 = vpop.f32.mrb[0].mxu0
        %v6055 = vadd.f32 %v5862, %v6054
        %v6056 = vpop.f32.mrb[0].mxu0
        %v6057 = vadd.f32 %v5864, %v6056
        %6058 = vmatprep.mubr.bf16.mxu0 %v3750
        %6059 = vmatmul.mubr.bf16.gmra.mrb[0].mxu0 %v3749
        %v6060 = vpop.f32.mrb[0].mxu0
        %v6061 = vadd.f32 %v5868, %v6060
        %v6062 = vpop.f32.mrb[0].mxu0
        %v6063 = vadd.f32 %v5870, %v6062
        %v6064 = vpop.f32.mrb[0].mxu0
        %v6065 = vadd.f32 %v5872, %v6064
        %v6066 = vpop.f32.mrb[0].mxu0
        %v6067 = vadd.f32 %v5874, %v6066
        %6068 = vmatprep.mubr.bf16.mxu0 %v3758
        %6069 = vmatmul.mubr.bf16.gmra.mrb[0].mxu0 %v3757
        %v6070 = vpop.f32.mrb[0].mxu0
        %v6071 = vadd.f32 %v5878, %v6070
        %v6072 = vpop.f32.mrb[0].mxu0
        %v6073 = vadd.f32 %v5880, %v6072
        %v6074 = vpop.f32.mrb[0].mxu0
        %v6075 = vadd.f32 %v5882, %v6074
        %v6076 = vpop.f32.mrb[0].mxu0
        %v6077 = vadd.f32 %v5884, %v6076
        %6078 = vmatprep.mubr.bf16.mxu0 %v3766
        %6079 = vmatmul.mubr.bf16.gmra.mrb[0].mxu0 %v3765
        %v6080 = vpop.f32.mrb[0].mxu0
        %v6081 = vadd.f32 %v5888, %v6080
        %v6082 = vpop.f32.mrb[0].mxu0
        %v6083 = vadd.f32 %v5890, %v6082
        %v6084 = vpop.f32.mrb[0].mxu0
        %v6085 = vadd.f32 %v5892, %v6084
        %v6086 = vpop.f32.mrb[0].mxu0
        %v6087 = vadd.f32 %v5894, %v6086
        %6088 = vmatprep.mubr.bf16.mxu0 %v3774
        %6089 = vmatmul.mubr.bf16.gmra.mrb[0].mxu0 %v3773
        %v6090 = vpop.f32.mrb[0].mxu0
        %v6091 = vadd.f32 %v5898, %v6090
        %v6092 = vpop.f32.mrb[0].mxu0
        %v6093 = vadd.f32 %v5900, %v6092
        %v6094 = vpop.f32.mrb[0].mxu0
        %v6095 = vadd.f32 %v5902, %v6094
        %v6096 = vpop.f32.mrb[0].mxu0
        %v6097 = vadd.f32 %v5904, %v6096
        %6098 = vmatprep.mubr.bf16.mxu0 %v3782
        %6099 = vmatmul.mubr.bf16.gmra.mrb[0].mxu0 %v3781
        %v6100 = vpop.f32.mrb[0].mxu0
        %v6101 = vadd.f32 %v5908, %v6100
        %v6102 = vpop.f32.mrb[0].mxu0
        %v6103 = vadd.f32 %v5910, %v6102
        %v6104 = vpop.f32.mrb[0].mxu0
        %v6105 = vadd.f32 %v5912, %v6104
        %v6106 = vpop.f32.mrb[0].mxu0
        %v6107 = vadd.f32 %v5914, %v6106
        %6108 = vmatprep.mubr.bf16.mxu0 %v3790
        %6109 = vmatmul.mubr.bf16.gmra.mrb[0].mxu0 %v3789
        %v6110 = vpop.f32.mrb[0].mxu0
        %v6111 = vadd.f32 %v5918, %v6110
        %v6112 = vpop.f32.mrb[0].mxu0
        %v6113 = vadd.f32 %v5920, %v6112
        %v6114 = vpop.f32.mrb[0].mxu0
        %v6115 = vadd.f32 %v5922, %v6114
        %v6116 = vpop.f32.mrb[0].mxu0
        %v6117 = vadd.f32 %v5924, %v6116
        %6118 = vmatprep.mubr.bf16.mxu0 %v3798
        %6119 = vmatmul.mubr.bf16.gmra.mrb[0].mxu0 %v3797
        %v6120 = vpop.f32.mrb[0].mxu0
        %v6121 = vadd.f32 %v5928, %v6120
        %v6122 = vpop.f32.mrb[0].mxu0
        %v6123 = vadd.f32 %v5930, %v6122
        %v6124 = vpop.f32.mrb[0].mxu0
        %v6125 = vadd.f32 %v5932, %v6124
        %v6126 = vpop.f32.mrb[0].mxu0
        %v6127 = vadd.f32 %v5934, %v6126
        %6128 = vdwg.mxu0
        %6129 = vmatprep.subr.bf16.mxu0 %v4848
        %6130 = vmatpush1.bf16.msra.mxu0 %v4847
        %6131 = vmatprep.subr.bf16.mxu0 %v4852
        %6132 = vmatpush1.bf16.msra.mxu0 %v4851
        %6133 = vmatprep.subr.bf16.mxu0 %v4856
        %6134 = vmatpush1.bf16.msra.mxu0 %v4855
        %6135 = vmatprep.subr.bf16.mxu0 %v4860
        %6136 = vmatpush1.bf16.msra.mxu0 %v4859
        %6137 = vmatprep.subr.bf16.mxu0 %v4864
        %6138 = vmatpush1.bf16.msra.mxu0 %v4863
        %6139 = vmatprep.subr.bf16.mxu0 %v4868
        %6140 = vmatpush1.bf16.msra.mxu0 %v4867
        %6141 = vmatprep.subr.bf16.mxu0 %v4872
        %6142 = vmatpush1.bf16.msra.mxu0 %v4871
        %6143 = vmatprep.subr.bf16.mxu0 %v4876
        %6144 = vmatpush1.bf16.msra.mxu0 %v4875
        %6145 = vmatprep.subr.bf16.mxu0 %v4880
        %6146 = vmatpush1.bf16.msra.mxu0 %v4879
        %6147 = vmatprep.subr.bf16.mxu0 %v4884
        %6148 = vmatpush1.bf16.msra.mxu0 %v4883
        %6149 = vmatprep.subr.bf16.mxu0 %v4888
        %6150 = vmatpush1.bf16.msra.mxu0 %v4887
        %6151 = vmatprep.subr.bf16.mxu0 %v4892
        %6152 = vmatpush1.bf16.msra.mxu0 %v4891
        %6153 = vmatprep.subr.bf16.mxu0 %v4896
        %6154 = vmatpush1.bf16.msra.mxu0 %v4895
        %6155 = vmatprep.subr.bf16.mxu0 %v4900
        %6156 = vmatpush1.bf16.msra.mxu0 %v4899
        %6157 = vmatprep.subr.bf16.mxu0 %v4904
        %6158 = vmatpush1.bf16.msra.mxu0 %v4903
        %6159 = vmatprep.subr.bf16.mxu0 %v4908
        %6160 = vmatpush1.bf16.msra.mxu0 %v4907
        %6161 = vmatprep.mubr.bf16.mxu0 %v3672
        %6162 = vmatmul.mubr.bf16.gmra.mrb[0].mxu0 %v3671
        %v6163 = vpop.f32.mrb[0].mxu0
        %v6164 = vadd.f32 %v4068, %v6163
        %v6165 = vpop.f32.mrb[0].mxu0
        %v6166 = vadd.f32 %v4072, %v6165
        %v6167 = vpop.f32.mrb[0].mxu0
        %v6168 = vadd.f32 %v4068, %v6167
        %v6169 = vpop.f32.mrb[0].mxu0
        %v6170 = vadd.f32 %v4072, %v6169
        %6171 = vmatprep.mubr.bf16.mxu0 %v3680
        %6172 = vmatmul.mubr.bf16.gmra.mrb[0].mxu0 %v3679
        %v6173 = vpop.f32.mrb[0].mxu0
        %v6174 = vadd.f32 %v4068, %v6173
        %v6175 = vpop.f32.mrb[0].mxu0
        %v6176 = vadd.f32 %v4072, %v6175
        %v6177 = vpop.f32.mrb[0].mxu0
        %v6178 = vadd.f32 %v4068, %v6177
        %v6179 = vpop.f32.mrb[0].mxu0
        %v6180 = vadd.f32 %v4072, %v6179
        %6181 = vmatprep.mubr.bf16.mxu0 %v3688
        %6182 = vmatmul.mubr.bf16.gmra.mrb[0].mxu0 %v3687
        %v6183 = vpop.f32.mrb[0].mxu0
        %v6184 = vadd.f32 %v4068, %v6183
        %v6185 = vpop.f32.mrb[0].mxu0
        %v6186 = vadd.f32 %v4072, %v6185
        %v6187 = vpop.f32.mrb[0].mxu0
        %v6188 = vadd.f32 %v4068, %v6187
        %v6189 = vpop.f32.mrb[0].mxu0
        %v6190 = vadd.f32 %v4072, %v6189
        %6191 = vmatprep.mubr.bf16.mxu0 %v3696
        %6192 = vmatmul.mubr.bf16.gmra.mrb[0].mxu0 %v3695
        %v6193 = vpop.f32.mrb[0].mxu0
        %v6194 = vadd.f32 %v4068, %v6193
        %v6195 = vpop.f32.mrb[0].mxu0
        %v6196 = vadd.f32 %v4072, %v6195
        %v6197 = vpop.f32.mrb[0].mxu0
        %v6198 = vadd.f32 %v4068, %v6197
        %v6199 = vpop.f32.mrb[0].mxu0
        %v6200 = vadd.f32 %v4072, %v6199
        %6201 = vmatprep.mubr.bf16.mxu0 %v3704
        %6202 = vmatmul.mubr.bf16.gmra.mrb[0].mxu0 %v3703
        %v6203 = vpop.f32.mrb[0].mxu0
        %v6204 = vadd.f32 %v4068, %v6203
        %v6205 = vpop.f32.mrb[0].mxu0
        %v6206 = vadd.f32 %v4072, %v6205
        %v6207 = vpop.f32.mrb[0].mxu0
        %v6208 = vadd.f32 %v4068, %v6207
        %v6209 = vpop.f32.mrb[0].mxu0
        %v6210 = vadd.f32 %v4072, %v6209
        %6211 = vmatprep.mubr.bf16.mxu0 %v3712
        %6212 = vmatmul.mubr.bf16.gmra.mrb[0].mxu0 %v3711
        %v6213 = vpop.f32.mrb[0].mxu0
        %v6214 = vadd.f32 %v4068, %v6213
        %v6215 = vpop.f32.mrb[0].mxu0
        %v6216 = vadd.f32 %v4072, %v6215
        %v6217 = vpop.f32.mrb[0].mxu0
        %v6218 = vadd.f32 %v4068, %v6217
        %v6219 = vpop.f32.mrb[0].mxu0
        %v6220 = vadd.f32 %v4072, %v6219
        %6221 = vmatprep.mubr.bf16.mxu0 %v3720
        %6222 = vmatmul.mubr.bf16.gmra.mrb[0].mxu0 %v3719
        %v6223 = vpop.f32.mrb[0].mxu0
        %v6224 = vadd.f32 %v4068, %v6223
        %v6225 = vpop.f32.mrb[0].mxu0
        %v6226 = vadd.f32 %v4072, %v6225
        %v6227 = vpop.f32.mrb[0].mxu0
        %v6228 = vadd.f32 %v4068, %v6227
        %v6229 = vpop.f32.mrb[0].mxu0
        %v6230 = vadd.f32 %v4072, %v6229
        %6231 = vmatprep.mubr.bf16.mxu0 %v3728
        %6232 = vmatmul.mubr.bf16.gmra.mrb[0].mxu0 %v3727
        %v6233 = vpop.f32.mrb[0].mxu0
        %v6234 = vadd.f32 %v4068, %v6233
        %v6235 = vpop.f32.mrb[0].mxu0
        %v6236 = vadd.f32 %v4072, %v6235
        %v6237 = vpop.f32.mrb[0].mxu0
        %v6238 = vadd.f32 %v4068, %v6237
        %v6239 = vpop.f32.mrb[0].mxu0
        %v6240 = vadd.f32 %v4072, %v6239
        %6241 = vmatprep.mubr.bf16.mxu0 %v3736
        %6242 = vmatmul.mubr.bf16.gmra.mrb[0].mxu0 %v3735
        %v6243 = vpop.f32.mrb[0].mxu0
        %v6244 = vadd.f32 %v4068, %v6243
        %v6245 = vpop.f32.mrb[0].mxu0
        %v6246 = vadd.f32 %v4072, %v6245
        %v6247 = vpop.f32.mrb[0].mxu0
        %v6248 = vadd.f32 %v4068, %v6247
        %v6249 = vpop.f32.mrb[0].mxu0
        %v6250 = vadd.f32 %v4072, %v6249
        %6251 = vmatprep.mubr.bf16.mxu0 %v3744
        %6252 = vmatmul.mubr.bf16.gmra.mrb[0].mxu0 %v3743
        %v6253 = vpop.f32.mrb[0].mxu0
        %v6254 = vadd.f32 %v4068, %v6253
        %v6255 = vpop.f32.mrb[0].mxu0
        %v6256 = vadd.f32 %v4072, %v6255
        %v6257 = vpop.f32.mrb[0].mxu0
        %v6258 = vadd.f32 %v4068, %v6257
        %v6259 = vpop.f32.mrb[0].mxu0
        %v6260 = vadd.f32 %v4072, %v6259
        %6261 = vmatprep.mubr.bf16.mxu0 %v3752
        %6262 = vmatmul.mubr.bf16.gmra.mrb[0].mxu0 %v3751
        %v6263 = vpop.f32.mrb[0].mxu0
        %v6264 = vadd.f32 %v4068, %v6263
        %v6265 = vpop.f32.mrb[0].mxu0
        %v6266 = vadd.f32 %v4072, %v6265
        %v6267 = vpop.f32.mrb[0].mxu0
        %v6268 = vadd.f32 %v4068, %v6267
        %v6269 = vpop.f32.mrb[0].mxu0
        %v6270 = vadd.f32 %v4072, %v6269
        %6271 = vmatprep.mubr.bf16.mxu0 %v3760
        %6272 = vmatmul.mubr.bf16.gmra.mrb[0].mxu0 %v3759
        %v6273 = vpop.f32.mrb[0].mxu0
        %v6274 = vadd.f32 %v4068, %v6273
        %v6275 = vpop.f32.mrb[0].mxu0
        %v6276 = vadd.f32 %v4072, %v6275
        %v6277 = vpop.f32.mrb[0].mxu0
        %v6278 = vadd.f32 %v4068, %v6277
        %v6279 = vpop.f32.mrb[0].mxu0
        %v6280 = vadd.f32 %v4072, %v6279
        %6281 = vmatprep.mubr.bf16.mxu0 %v3768
        %6282 = vmatmul.mubr.bf16.gmra.mrb[0].mxu0 %v3767
        %v6283 = vpop.f32.mrb[0].mxu0
        %v6284 = vadd.f32 %v4068, %v6283
        %v6285 = vpop.f32.mrb[0].mxu0
        %v6286 = vadd.f32 %v4072, %v6285
        %v6287 = vpop.f32.mrb[0].mxu0
        %v6288 = vadd.f32 %v4068, %v6287
        %v6289 = vpop.f32.mrb[0].mxu0
        %v6290 = vadd.f32 %v4072, %v6289
        %6291 = vmatprep.mubr.bf16.mxu0 %v3776
        %6292 = vmatmul.mubr.bf16.gmra.mrb[0].mxu0 %v3775
        %v6293 = vpop.f32.mrb[0].mxu0
        %v6294 = vadd.f32 %v4068, %v6293
        %v6295 = vpop.f32.mrb[0].mxu0
        %v6296 = vadd.f32 %v4072, %v6295
        %v6297 = vpop.f32.mrb[0].mxu0
        %v6298 = vadd.f32 %v4068, %v6297
        %v6299 = vpop.f32.mrb[0].mxu0
        %v6300 = vadd.f32 %v4072, %v6299
        %6301 = vmatprep.mubr.bf16.mxu0 %v3784
        %6302 = vmatmul.mubr.bf16.gmra.mrb[0].mxu0 %v3783
        %v6303 = vpop.f32.mrb[0].mxu0
        %v6304 = vadd.f32 %v4068, %v6303
        %v6305 = vpop.f32.mrb[0].mxu0
        %v6306 = vadd.f32 %v4072, %v6305
        %v6307 = vpop.f32.mrb[0].mxu0
        %v6308 = vadd.f32 %v4068, %v6307
        %v6309 = vpop.f32.mrb[0].mxu0
        %v6310 = vadd.f32 %v4072, %v6309
        %6311 = vmatprep.mubr.bf16.mxu0 %v3792
        %6312 = vmatmul.mubr.bf16.gmra.mrb[0].mxu0 %v3791
        %v6313 = vpop.f32.mrb[0].mxu0
        %v6314 = vadd.f32 %v4068, %v6313
        %v6315 = vpop.f32.mrb[0].mxu0
        %v6316 = vadd.f32 %v4072, %v6315
        %v6317 = vpop.f32.mrb[0].mxu0
        %v6318 = vadd.f32 %v4068, %v6317
        %v6319 = vpop.f32.mrb[0].mxu0
        %v6320 = vadd.f32 %v4072, %v6319
        %6321 = vdwg.mxu0
        %6322 = vmatprep.subr.bf16.mxu0 %v4912
        %6323 = vmatpush1.bf16.msra.mxu0 %v4911
        %6324 = vmatprep.subr.bf16.mxu0 %v4916
        %6325 = vmatpush1.bf16.msra.mxu0 %v4915
        %6326 = vmatprep.subr.bf16.mxu0 %v4920
        %6327 = vmatpush1.bf16.msra.mxu0 %v4919
        %6328 = vmatprep.subr.bf16.mxu0 %v4924
        %6329 = vmatpush1.bf16.msra.mxu0 %v4923
        %6330 = vmatprep.subr.bf16.mxu0 %v4928
        %6331 = vmatpush1.bf16.msra.mxu0 %v4927
        %6332 = vmatprep.subr.bf16.mxu0 %v4932
        %6333 = vmatpush1.bf16.msra.mxu0 %v4931
        %6334 = vmatprep.subr.bf16.mxu0 %v4936
        %6335 = vmatpush1.bf16.msra.mxu0 %v4935
        %6336 = vmatprep.subr.bf16.mxu0 %v4940
        %6337 = vmatpush1.bf16.msra.mxu0 %v4939
        %6338 = vmatprep.subr.bf16.mxu0 %v4944
        %6339 = vmatpush1.bf16.msra.mxu0 %v4943
        %6340 = vmatprep.subr.bf16.mxu0 %v4948
        %6341 = vmatpush1.bf16.msra.mxu0 %v4947
        %6342 = vmatprep.subr.bf16.mxu0 %v4952
        %6343 = vmatpush1.bf16.msra.mxu0 %v4951
        %6344 = vmatprep.subr.bf16.mxu0 %v4956
        %6345 = vmatpush1.bf16.msra.mxu0 %v4955
        %6346 = vmatprep.subr.bf16.mxu0 %v4960
        %6347 = vmatpush1.bf16.msra.mxu0 %v4959
        %6348 = vmatprep.subr.bf16.mxu0 %v4964
        %6349 = vmatpush1.bf16.msra.mxu0 %v4963
        %6350 = vmatprep.subr.bf16.mxu0 %v4968
        %6351 = vmatpush1.bf16.msra.mxu0 %v4967
        %6352 = vmatprep.subr.bf16.mxu0 %v4972
        %6353 = vmatpush1.bf16.msra.mxu0 %v4971
        %6354 = vmatprep.mubr.bf16.mxu0 %v3674
        %6355 = vmatmul.mubr.bf16.gmra.mrb[0].mxu0 %v3673
        %v6356 = vpop.f32.mrb[0].mxu0
        %v6357 = vadd.f32 %v6164, %v6356
        %v6358 = vpop.f32.mrb[0].mxu0
        %v6359 = vadd.f32 %v6166, %v6358
        %v6360 = vpop.f32.mrb[0].mxu0
        %v6361 = vadd.f32 %v6168, %v6360
        %v6362 = vpop.f32.mrb[0].mxu0
        %v6363 = vadd.f32 %v6170, %v6362
        %6364 = vmatprep.mubr.bf16.mxu0 %v3682
        %6365 = vmatmul.mubr.bf16.gmra.mrb[0].mxu0 %v3681
        %v6366 = vpop.f32.mrb[0].mxu0
        %v6367 = vadd.f32 %v6174, %v6366
        %v6368 = vpop.f32.mrb[0].mxu0
        %v6369 = vadd.f32 %v6176, %v6368
        %v6370 = vpop.f32.mrb[0].mxu0
        %v6371 = vadd.f32 %v6178, %v6370
        %v6372 = vpop.f32.mrb[0].mxu0
        %v6373 = vadd.f32 %v6180, %v6372
        %6374 = vmatprep.mubr.bf16.mxu0 %v3690
        %6375 = vmatmul.mubr.bf16.gmra.mrb[0].mxu0 %v3689
        %v6376 = vpop.f32.mrb[0].mxu0
        %v6377 = vadd.f32 %v6184, %v6376
        %v6378 = vpop.f32.mrb[0].mxu0
        %v6379 = vadd.f32 %v6186, %v6378
        %v6380 = vpop.f32.mrb[0].mxu0
        %v6381 = vadd.f32 %v6188, %v6380
        %v6382 = vpop.f32.mrb[0].mxu0
        %v6383 = vadd.f32 %v6190, %v6382
        %6384 = vmatprep.mubr.bf16.mxu0 %v3698
        %6385 = vmatmul.mubr.bf16.gmra.mrb[0].mxu0 %v3697
        %v6386 = vpop.f32.mrb[0].mxu0
        %v6387 = vadd.f32 %v6194, %v6386
        %v6388 = vpop.f32.mrb[0].mxu0
        %v6389 = vadd.f32 %v6196, %v6388
        %v6390 = vpop.f32.mrb[0].mxu0
        %v6391 = vadd.f32 %v6198, %v6390
        %v6392 = vpop.f32.mrb[0].mxu0
        %v6393 = vadd.f32 %v6200, %v6392
        %6394 = vmatprep.mubr.bf16.mxu0 %v3706
        %6395 = vmatmul.mubr.bf16.gmra.mrb[0].mxu0 %v3705
        %v6396 = vpop.f32.mrb[0].mxu0
        %v6397 = vadd.f32 %v6204, %v6396
        %v6398 = vpop.f32.mrb[0].mxu0
        %v6399 = vadd.f32 %v6206, %v6398
        %v6400 = vpop.f32.mrb[0].mxu0
        %v6401 = vadd.f32 %v6208, %v6400
        %v6402 = vpop.f32.mrb[0].mxu0
        %v6403 = vadd.f32 %v6210, %v6402
        %6404 = vmatprep.mubr.bf16.mxu0 %v3714
        %6405 = vmatmul.mubr.bf16.gmra.mrb[0].mxu0 %v3713
        %v6406 = vpop.f32.mrb[0].mxu0
        %v6407 = vadd.f32 %v6214, %v6406
        %v6408 = vpop.f32.mrb[0].mxu0
        %v6409 = vadd.f32 %v6216, %v6408
        %v6410 = vpop.f32.mrb[0].mxu0
        %v6411 = vadd.f32 %v6218, %v6410
        %v6412 = vpop.f32.mrb[0].mxu0
        %v6413 = vadd.f32 %v6220, %v6412
        %6414 = vmatprep.mubr.bf16.mxu0 %v3722
        %6415 = vmatmul.mubr.bf16.gmra.mrb[0].mxu0 %v3721
        %v6416 = vpop.f32.mrb[0].mxu0
        %v6417 = vadd.f32 %v6224, %v6416
        %v6418 = vpop.f32.mrb[0].mxu0
        %v6419 = vadd.f32 %v6226, %v6418
        %v6420 = vpop.f32.mrb[0].mxu0
        %v6421 = vadd.f32 %v6228, %v6420
        %v6422 = vpop.f32.mrb[0].mxu0
        %v6423 = vadd.f32 %v6230, %v6422
        %6424 = vmatprep.mubr.bf16.mxu0 %v3730
        %6425 = vmatmul.mubr.bf16.gmra.mrb[0].mxu0 %v3729
        %v6426 = vpop.f32.mrb[0].mxu0
        %v6427 = vadd.f32 %v6234, %v6426
        %v6428 = vpop.f32.mrb[0].mxu0
        %v6429 = vadd.f32 %v6236, %v6428
        %v6430 = vpop.f32.mrb[0].mxu0
        %v6431 = vadd.f32 %v6238, %v6430
        %v6432 = vpop.f32.mrb[0].mxu0
        %v6433 = vadd.f32 %v6240, %v6432
        %6434 = vmatprep.mubr.bf16.mxu0 %v3738
        %6435 = vmatmul.mubr.bf16.gmra.mrb[0].mxu0 %v3737
        %v6436 = vpop.f32.mrb[0].mxu0
        %v6437 = vadd.f32 %v6244, %v6436
        %v6438 = vpop.f32.mrb[0].mxu0
        %v6439 = vadd.f32 %v6246, %v6438
        %v6440 = vpop.f32.mrb[0].mxu0
        %v6441 = vadd.f32 %v6248, %v6440
        %v6442 = vpop.f32.mrb[0].mxu0
        %v6443 = vadd.f32 %v6250, %v6442
        %6444 = vmatprep.mubr.bf16.mxu0 %v3746
        %6445 = vmatmul.mubr.bf16.gmra.mrb[0].mxu0 %v3745
        %v6446 = vpop.f32.mrb[0].mxu0
        %v6447 = vadd.f32 %v6254, %v6446
        %v6448 = vpop.f32.mrb[0].mxu0
        %v6449 = vadd.f32 %v6256, %v6448
        %v6450 = vpop.f32.mrb[0].mxu0
        %v6451 = vadd.f32 %v6258, %v6450
        %v6452 = vpop.f32.mrb[0].mxu0
        %v6453 = vadd.f32 %v6260, %v6452
        %6454 = vmatprep.mubr.bf16.mxu0 %v3754
        %6455 = vmatmul.mubr.bf16.gmra.mrb[0].mxu0 %v3753
        %v6456 = vpop.f32.mrb[0].mxu0
        %v6457 = vadd.f32 %v6264, %v6456
        %v6458 = vpop.f32.mrb[0].mxu0
        %v6459 = vadd.f32 %v6266, %v6458
        %v6460 = vpop.f32.mrb[0].mxu0
        %v6461 = vadd.f32 %v6268, %v6460
        %v6462 = vpop.f32.mrb[0].mxu0
        %v6463 = vadd.f32 %v6270, %v6462
        %6464 = vmatprep.mubr.bf16.mxu0 %v3762
        %6465 = vmatmul.mubr.bf16.gmra.mrb[0].mxu0 %v3761
        %v6466 = vpop.f32.mrb[0].mxu0
        %v6467 = vadd.f32 %v6274, %v6466
        %v6468 = vpop.f32.mrb[0].mxu0
        %v6469 = vadd.f32 %v6276, %v6468
        %v6470 = vpop.f32.mrb[0].mxu0
        %v6471 = vadd.f32 %v6278, %v6470
        %v6472 = vpop.f32.mrb[0].mxu0
        %v6473 = vadd.f32 %v6280, %v6472
        %6474 = vmatprep.mubr.bf16.mxu0 %v3770
        %6475 = vmatmul.mubr.bf16.gmra.mrb[0].mxu0 %v3769
        %v6476 = vpop.f32.mrb[0].mxu0
        %v6477 = vadd.f32 %v6284, %v6476
        %v6478 = vpop.f32.mrb[0].mxu0
        %v6479 = vadd.f32 %v6286, %v6478
        %v6480 = vpop.f32.mrb[0].mxu0
        %v6481 = vadd.f32 %v6288, %v6480
        %v6482 = vpop.f32.mrb[0].mxu0
        %v6483 = vadd.f32 %v6290, %v6482
        %6484 = vmatprep.mubr.bf16.mxu0 %v3778
        %6485 = vmatmul.mubr.bf16.gmra.mrb[0].mxu0 %v3777
        %v6486 = vpop.f32.mrb[0].mxu0
        %v6487 = vadd.f32 %v6294, %v6486
        %v6488 = vpop.f32.mrb[0].mxu0
        %v6489 = vadd.f32 %v6296, %v6488
        %v6490 = vpop.f32.mrb[0].mxu0
        %v6491 = vadd.f32 %v6298, %v6490
        %v6492 = vpop.f32.mrb[0].mxu0
        %v6493 = vadd.f32 %v6300, %v6492
        %6494 = vmatprep.mubr.bf16.mxu0 %v3786
        %6495 = vmatmul.mubr.bf16.gmra.mrb[0].mxu0 %v3785
        %v6496 = vpop.f32.mrb[0].mxu0
        %v6497 = vadd.f32 %v6304, %v6496
        %v6498 = vpop.f32.mrb[0].mxu0
        %v6499 = vadd.f32 %v6306, %v6498
        %v6500 = vpop.f32.mrb[0].mxu0
        %v6501 = vadd.f32 %v6308, %v6500
        %v6502 = vpop.f32.mrb[0].mxu0
        %v6503 = vadd.f32 %v6310, %v6502
        %6504 = vmatprep.mubr.bf16.mxu0 %v3794
        %6505 = vmatmul.mubr.bf16.gmra.mrb[0].mxu0 %v3793
        %v6506 = vpop.f32.mrb[0].mxu0
        %v6507 = vadd.f32 %v6314, %v6506
        %v6508 = vpop.f32.mrb[0].mxu0
        %v6509 = vadd.f32 %v6316, %v6508
        %v6510 = vpop.f32.mrb[0].mxu0
        %v6511 = vadd.f32 %v6318, %v6510
        %v6512 = vpop.f32.mrb[0].mxu0
        %v6513 = vadd.f32 %v6320, %v6512
        %6514 = vdwg.mxu0
        %6515 = vmatprep.subr.bf16.mxu0 %v4976
        %6516 = vmatpush1.bf16.msra.mxu0 %v4975
        %6517 = vmatprep.subr.bf16.mxu0 %v4980
        %6518 = vmatpush1.bf16.msra.mxu0 %v4979
        %6519 = vmatprep.subr.bf16.mxu0 %v4984
        %6520 = vmatpush1.bf16.msra.mxu0 %v4983
        %6521 = vmatprep.subr.bf16.mxu0 %v4988
        %6522 = vmatpush1.bf16.msra.mxu0 %v4987
        %6523 = vmatprep.subr.bf16.mxu0 %v4992
        %6524 = vmatpush1.bf16.msra.mxu0 %v4991
        %6525 = vmatprep.subr.bf16.mxu0 %v4996
        %6526 = vmatpush1.bf16.msra.mxu0 %v4995
        %6527 = vmatprep.subr.bf16.mxu0 %v5000
        %6528 = vmatpush1.bf16.msra.mxu0 %v4999
        %6529 = vmatprep.subr.bf16.mxu0 %v5004
        %6530 = vmatpush1.bf16.msra.mxu0 %v5003
        %6531 = vmatprep.subr.bf16.mxu0 %v5008
        %6532 = vmatpush1.bf16.msra.mxu0 %v5007
        %6533 = vmatprep.subr.bf16.mxu0 %v5012
        %6534 = vmatpush1.bf16.msra.mxu0 %v5011
        %6535 = vmatprep.subr.bf16.mxu0 %v5016
        %6536 = vmatpush1.bf16.msra.mxu0 %v5015
        %6537 = vmatprep.subr.bf16.mxu0 %v5020
        %6538 = vmatpush1.bf16.msra.mxu0 %v5019
        %6539 = vmatprep.subr.bf16.mxu0 %v5024
        %6540 = vmatpush1.bf16.msra.mxu0 %v5023
        %6541 = vmatprep.subr.bf16.mxu0 %v5028
        %6542 = vmatpush1.bf16.msra.mxu0 %v5027
        %6543 = vmatprep.subr.bf16.mxu0 %v5032
        %6544 = vmatpush1.bf16.msra.mxu0 %v5031
        %6545 = vmatprep.subr.bf16.mxu0 %v5036
        %6546 = vmatpush1.bf16.msra.mxu0 %v5035
        %6547 = vmatprep.mubr.bf16.mxu0 %v3676
        %6548 = vmatmul.mubr.bf16.gmra.mrb[0].mxu0 %v3675
        %v6549 = vpop.f32.mrb[0].mxu0
        %v6550 = vadd.f32 %v6357, %v6549
        %v6551 = vpop.f32.mrb[0].mxu0
        %v6552 = vadd.f32 %v6359, %v6551
        %v6553 = vpop.f32.mrb[0].mxu0
        %v6554 = vadd.f32 %v6361, %v6553
        %v6555 = vpop.f32.mrb[0].mxu0
        %v6556 = vadd.f32 %v6363, %v6555
        %6557 = vmatprep.mubr.bf16.mxu0 %v3684
        %6558 = vmatmul.mubr.bf16.gmra.mrb[0].mxu0 %v3683
        %v6559 = vpop.f32.mrb[0].mxu0
        %v6560 = vadd.f32 %v6367, %v6559
        %v6561 = vpop.f32.mrb[0].mxu0
        %v6562 = vadd.f32 %v6369, %v6561
        %v6563 = vpop.f32.mrb[0].mxu0
        %v6564 = vadd.f32 %v6371, %v6563
        %v6565 = vpop.f32.mrb[0].mxu0
        %v6566 = vadd.f32 %v6373, %v6565
        %6567 = vmatprep.mubr.bf16.mxu0 %v3692
        %6568 = vmatmul.mubr.bf16.gmra.mrb[0].mxu0 %v3691
        %v6569 = vpop.f32.mrb[0].mxu0
        %v6570 = vadd.f32 %v6377, %v6569
        %v6571 = vpop.f32.mrb[0].mxu0
        %v6572 = vadd.f32 %v6379, %v6571
        %v6573 = vpop.f32.mrb[0].mxu0
        %v6574 = vadd.f32 %v6381, %v6573
        %v6575 = vpop.f32.mrb[0].mxu0
        %v6576 = vadd.f32 %v6383, %v6575
        %6577 = vmatprep.mubr.bf16.mxu0 %v3700
        %6578 = vmatmul.mubr.bf16.gmra.mrb[0].mxu0 %v3699
        %v6579 = vpop.f32.mrb[0].mxu0
        %v6580 = vadd.f32 %v6387, %v6579
        %v6581 = vpop.f32.mrb[0].mxu0
        %v6582 = vadd.f32 %v6389, %v6581
        %v6583 = vpop.f32.mrb[0].mxu0
        %v6584 = vadd.f32 %v6391, %v6583
        %v6585 = vpop.f32.mrb[0].mxu0
        %v6586 = vadd.f32 %v6393, %v6585
        %6587 = vmatprep.mubr.bf16.mxu0 %v3708
        %6588 = vmatmul.mubr.bf16.gmra.mrb[0].mxu0 %v3707
        %v6589 = vpop.f32.mrb[0].mxu0
        %v6590 = vadd.f32 %v6397, %v6589
        %v6591 = vpop.f32.mrb[0].mxu0
        %v6592 = vadd.f32 %v6399, %v6591
        %v6593 = vpop.f32.mrb[0].mxu0
        %v6594 = vadd.f32 %v6401, %v6593
        %v6595 = vpop.f32.mrb[0].mxu0
        %v6596 = vadd.f32 %v6403, %v6595
        %6597 = vmatprep.mubr.bf16.mxu0 %v3716
        %6598 = vmatmul.mubr.bf16.gmra.mrb[0].mxu0 %v3715
        %v6599 = vpop.f32.mrb[0].mxu0
        %v6600 = vadd.f32 %v6407, %v6599
        %v6601 = vpop.f32.mrb[0].mxu0
        %v6602 = vadd.f32 %v6409, %v6601
        %v6603 = vpop.f32.mrb[0].mxu0
        %v6604 = vadd.f32 %v6411, %v6603
        %v6605 = vpop.f32.mrb[0].mxu0
        %v6606 = vadd.f32 %v6413, %v6605
        %6607 = vmatprep.mubr.bf16.mxu0 %v3724
        %6608 = vmatmul.mubr.bf16.gmra.mrb[0].mxu0 %v3723
        %v6609 = vpop.f32.mrb[0].mxu0
        %v6610 = vadd.f32 %v6417, %v6609
        %v6611 = vpop.f32.mrb[0].mxu0
        %v6612 = vadd.f32 %v6419, %v6611
        %v6613 = vpop.f32.mrb[0].mxu0
        %v6614 = vadd.f32 %v6421, %v6613
        %v6615 = vpop.f32.mrb[0].mxu0
        %v6616 = vadd.f32 %v6423, %v6615
        %6617 = vmatprep.mubr.bf16.mxu0 %v3732
        %6618 = vmatmul.mubr.bf16.gmra.mrb[0].mxu0 %v3731
        %v6619 = vpop.f32.mrb[0].mxu0
        %v6620 = vadd.f32 %v6427, %v6619
        %v6621 = vpop.f32.mrb[0].mxu0
        %v6622 = vadd.f32 %v6429, %v6621
        %v6623 = vpop.f32.mrb[0].mxu0
        %v6624 = vadd.f32 %v6431, %v6623
        %v6625 = vpop.f32.mrb[0].mxu0
        %v6626 = vadd.f32 %v6433, %v6625
        %6627 = vmatprep.mubr.bf16.mxu0 %v3740
        %6628 = vmatmul.mubr.bf16.gmra.mrb[0].mxu0 %v3739
        %v6629 = vpop.f32.mrb[0].mxu0
        %v6630 = vadd.f32 %v6437, %v6629
        %v6631 = vpop.f32.mrb[0].mxu0
        %v6632 = vadd.f32 %v6439, %v6631
        %v6633 = vpop.f32.mrb[0].mxu0
        %v6634 = vadd.f32 %v6441, %v6633
        %v6635 = vpop.f32.mrb[0].mxu0
        %v6636 = vadd.f32 %v6443, %v6635
        %6637 = vmatprep.mubr.bf16.mxu0 %v3748
        %6638 = vmatmul.mubr.bf16.gmra.mrb[0].mxu0 %v3747
        %v6639 = vpop.f32.mrb[0].mxu0
        %v6640 = vadd.f32 %v6447, %v6639
        %v6641 = vpop.f32.mrb[0].mxu0
        %v6642 = vadd.f32 %v6449, %v6641
        %v6643 = vpop.f32.mrb[0].mxu0
        %v6644 = vadd.f32 %v6451, %v6643
        %v6645 = vpop.f32.mrb[0].mxu0
        %v6646 = vadd.f32 %v6453, %v6645
        %6647 = vmatprep.mubr.bf16.mxu0 %v3756
        %6648 = vmatmul.mubr.bf16.gmra.mrb[0].mxu0 %v3755
        %v6649 = vpop.f32.mrb[0].mxu0
        %v6650 = vadd.f32 %v6457, %v6649
        %v6651 = vpop.f32.mrb[0].mxu0
        %v6652 = vadd.f32 %v6459, %v6651
        %v6653 = vpop.f32.mrb[0].mxu0
        %v6654 = vadd.f32 %v6461, %v6653
        %v6655 = vpop.f32.mrb[0].mxu0
        %v6656 = vadd.f32 %v6463, %v6655
        %6657 = vmatprep.mubr.bf16.mxu0 %v3764
        %6658 = vmatmul.mubr.bf16.gmra.mrb[0].mxu0 %v3763
        %v6659 = vpop.f32.mrb[0].mxu0
        %v6660 = vadd.f32 %v6467, %v6659
        %v6661 = vpop.f32.mrb[0].mxu0
        %v6662 = vadd.f32 %v6469, %v6661
        %v6663 = vpop.f32.mrb[0].mxu0
        %v6664 = vadd.f32 %v6471, %v6663
        %v6665 = vpop.f32.mrb[0].mxu0
        %v6666 = vadd.f32 %v6473, %v6665
        %6667 = vmatprep.mubr.bf16.mxu0 %v3772
        %6668 = vmatmul.mubr.bf16.gmra.mrb[0].mxu0 %v3771
        %v6669 = vpop.f32.mrb[0].mxu0
        %v6670 = vadd.f32 %v6477, %v6669
        %v6671 = vpop.f32.mrb[0].mxu0
        %v6672 = vadd.f32 %v6479, %v6671
        %v6673 = vpop.f32.mrb[0].mxu0
        %v6674 = vadd.f32 %v6481, %v6673
        %v6675 = vpop.f32.mrb[0].mxu0
        %v6676 = vadd.f32 %v6483, %v6675
        %6677 = vmatprep.mubr.bf16.mxu0 %v3780
        %6678 = vmatmul.mubr.bf16.gmra.mrb[0].mxu0 %v3779
        %v6679 = vpop.f32.mrb[0].mxu0
        %v6680 = vadd.f32 %v6487, %v6679
        %v6681 = vpop.f32.mrb[0].mxu0
        %v6682 = vadd.f32 %v6489, %v6681
        %v6683 = vpop.f32.mrb[0].mxu0
        %v6684 = vadd.f32 %v6491, %v6683
        %v6685 = vpop.f32.mrb[0].mxu0
        %v6686 = vadd.f32 %v6493, %v6685
        %6687 = vmatprep.mubr.bf16.mxu0 %v3788
        %6688 = vmatmul.mubr.bf16.gmra.mrb[0].mxu0 %v3787
        %v6689 = vpop.f32.mrb[0].mxu0
        %v6690 = vadd.f32 %v6497, %v6689
        %v6691 = vpop.f32.mrb[0].mxu0
        %v6692 = vadd.f32 %v6499, %v6691
        %v6693 = vpop.f32.mrb[0].mxu0
        %v6694 = vadd.f32 %v6501, %v6693
        %v6695 = vpop.f32.mrb[0].mxu0
        %v6696 = vadd.f32 %v6503, %v6695
        %6697 = vmatprep.mubr.bf16.mxu0 %v3796
        %6698 = vmatmul.mubr.bf16.gmra.mrb[0].mxu0 %v3795
        %v6699 = vpop.f32.mrb[0].mxu0
        %v6700 = vadd.f32 %v6507, %v6699
        %v6701 = vpop.f32.mrb[0].mxu0
        %v6702 = vadd.f32 %v6509, %v6701
        %v6703 = vpop.f32.mrb[0].mxu0
        %v6704 = vadd.f32 %v6511, %v6703
        %v6705 = vpop.f32.mrb[0].mxu0
        %v6706 = vadd.f32 %v6513, %v6705
        %6707 = vdwg.mxu0
        %6708 = vmatprep.subr.bf16.mxu0 %v5040
        %6709 = vmatpush1.bf16.msra.mxu0 %v5039
        %6710 = vmatprep.subr.bf16.mxu0 %v5044
        %6711 = vmatpush1.bf16.msra.mxu0 %v5043
        %6712 = vmatprep.subr.bf16.mxu0 %v5048
        %6713 = vmatpush1.bf16.msra.mxu0 %v5047
        %6714 = vmatprep.subr.bf16.mxu0 %v5052
        %6715 = vmatpush1.bf16.msra.mxu0 %v5051
        %6716 = vmatprep.subr.bf16.mxu0 %v5056
        %6717 = vmatpush1.bf16.msra.mxu0 %v5055
        %6718 = vmatprep.subr.bf16.mxu0 %v5060
        %6719 = vmatpush1.bf16.msra.mxu0 %v5059
        %6720 = vmatprep.subr.bf16.mxu0 %v5064
        %6721 = vmatpush1.bf16.msra.mxu0 %v5063
        %6722 = vmatprep.subr.bf16.mxu0 %v5068
        %6723 = vmatpush1.bf16.msra.mxu0 %v5067
        %6724 = vmatprep.subr.bf16.mxu0 %v5072
        %6725 = vmatpush1.bf16.msra.mxu0 %v5071
        %6726 = vmatprep.subr.bf16.mxu0 %v5076
        %6727 = vmatpush1.bf16.msra.mxu0 %v5075
        %6728 = vmatprep.subr.bf16.mxu0 %v5080
        %6729 = vmatpush1.bf16.msra.mxu0 %v5079
        %6730 = vmatprep.subr.bf16.mxu0 %v5084
        %6731 = vmatpush1.bf16.msra.mxu0 %v5083
        %6732 = vmatprep.subr.bf16.mxu0 %v5088
        %6733 = vmatpush1.bf16.msra.mxu0 %v5087
        %6734 = vmatprep.subr.bf16.mxu0 %v5092
        %6735 = vmatpush1.bf16.msra.mxu0 %v5091
        %6736 = vmatprep.subr.bf16.mxu0 %v5096
        %6737 = vmatpush1.bf16.msra.mxu0 %v5095
        %6738 = vmatprep.subr.bf16.mxu0 %v5100
        %6739 = vmatpush1.bf16.msra.mxu0 %v5099
        %6740 = vmatprep.mubr.bf16.mxu0 %v3678
        %6741 = vmatmul.mubr.bf16.gmra.mrb[0].mxu0 %v3677
        %v6742 = vpop.f32.mrb[0].mxu0
        %v6743 = vadd.f32 %v6550, %v6742
        %v6744 = vpop.f32.mrb[0].mxu0
        %v6745 = vadd.f32 %v6552, %v6744
        %v6746 = vpop.f32.mrb[0].mxu0
        %v6747 = vadd.f32 %v6554, %v6746
        %v6748 = vpop.f32.mrb[0].mxu0
        %v6749 = vadd.f32 %v6556, %v6748
        %6750 = vmatprep.mubr.bf16.mxu0 %v3686
        %6751 = vmatmul.mubr.bf16.gmra.mrb[0].mxu0 %v3685
        %v6752 = vpop.f32.mrb[0].mxu0
        %v6753 = vadd.f32 %v6560, %v6752
        %v6754 = vpop.f32.mrb[0].mxu0
        %v6755 = vadd.f32 %v6562, %v6754
        %v6756 = vpop.f32.mrb[0].mxu0
        %v6757 = vadd.f32 %v6564, %v6756
        %v6758 = vpop.f32.mrb[0].mxu0
        %v6759 = vadd.f32 %v6566, %v6758
        %6760 = vmatprep.mubr.bf16.mxu0 %v3694
        %6761 = vmatmul.mubr.bf16.gmra.mrb[0].mxu0 %v3693
        %v6762 = vpop.f32.mrb[0].mxu0
        %v6763 = vadd.f32 %v6570, %v6762
        %v6764 = vpop.f32.mrb[0].mxu0
        %v6765 = vadd.f32 %v6572, %v6764
        %v6766 = vpop.f32.mrb[0].mxu0
        %v6767 = vadd.f32 %v6574, %v6766
        %v6768 = vpop.f32.mrb[0].mxu0
        %v6769 = vadd.f32 %v6576, %v6768
        %6770 = vmatprep.mubr.bf16.mxu0 %v3702
        %6771 = vmatmul.mubr.bf16.gmra.mrb[0].mxu0 %v3701
        %v6772 = vpop.f32.mrb[0].mxu0
        %v6773 = vadd.f32 %v6580, %v6772
        %v6774 = vpop.f32.mrb[0].mxu0
        %v6775 = vadd.f32 %v6582, %v6774
        %v6776 = vpop.f32.mrb[0].mxu0
        %v6777 = vadd.f32 %v6584, %v6776
        %v6778 = vpop.f32.mrb[0].mxu0
        %v6779 = vadd.f32 %v6586, %v6778
        %6780 = vmatprep.mubr.bf16.mxu0 %v3710
        %6781 = vmatmul.mubr.bf16.gmra.mrb[0].mxu0 %v3709
        %v6782 = vpop.f32.mrb[0].mxu0
        %v6783 = vadd.f32 %v6590, %v6782
        %v6784 = vpop.f32.mrb[0].mxu0
        %v6785 = vadd.f32 %v6592, %v6784
        %v6786 = vpop.f32.mrb[0].mxu0
        %v6787 = vadd.f32 %v6594, %v6786
        %v6788 = vpop.f32.mrb[0].mxu0
        %v6789 = vadd.f32 %v6596, %v6788
        %6790 = vmatprep.mubr.bf16.mxu0 %v3718
        %6791 = vmatmul.mubr.bf16.gmra.mrb[0].mxu0 %v3717
        %v6792 = vpop.f32.mrb[0].mxu0
        %v6793 = vadd.f32 %v6600, %v6792
        %v6794 = vpop.f32.mrb[0].mxu0
        %v6795 = vadd.f32 %v6602, %v6794
        %v6796 = vpop.f32.mrb[0].mxu0
        %v6797 = vadd.f32 %v6604, %v6796
        %v6798 = vpop.f32.mrb[0].mxu0
        %v6799 = vadd.f32 %v6606, %v6798
        %6800 = vmatprep.mubr.bf16.mxu0 %v3726
        %6801 = vmatmul.mubr.bf16.gmra.mrb[0].mxu0 %v3725
        %v6802 = vpop.f32.mrb[0].mxu0
        %v6803 = vadd.f32 %v6610, %v6802
        %v6804 = vpop.f32.mrb[0].mxu0
        %v6805 = vadd.f32 %v6612, %v6804
        %v6806 = vpop.f32.mrb[0].mxu0
        %v6807 = vadd.f32 %v6614, %v6806
        %v6808 = vpop.f32.mrb[0].mxu0
        %v6809 = vadd.f32 %v6616, %v6808
        %6810 = vmatprep.mubr.bf16.mxu0 %v3734
        %6811 = vmatmul.mubr.bf16.gmra.mrb[0].mxu0 %v3733
        %v6812 = vpop.f32.mrb[0].mxu0
        %v6813 = vadd.f32 %v6620, %v6812
        %v6814 = vpop.f32.mrb[0].mxu0
        %v6815 = vadd.f32 %v6622, %v6814
        %v6816 = vpop.f32.mrb[0].mxu0
        %v6817 = vadd.f32 %v6624, %v6816
        %v6818 = vpop.f32.mrb[0].mxu0
        %v6819 = vadd.f32 %v6626, %v6818
        %6820 = vmatprep.mubr.bf16.mxu0 %v3742
        %6821 = vmatmul.mubr.bf16.gmra.mrb[0].mxu0 %v3741
        %v6822 = vpop.f32.mrb[0].mxu0
        %v6823 = vadd.f32 %v6630, %v6822
        %v6824 = vpop.f32.mrb[0].mxu0
        %v6825 = vadd.f32 %v6632, %v6824
        %v6826 = vpop.f32.mrb[0].mxu0
        %v6827 = vadd.f32 %v6634, %v6826
        %v6828 = vpop.f32.mrb[0].mxu0
        %v6829 = vadd.f32 %v6636, %v6828
        %6830 = vmatprep.mubr.bf16.mxu0 %v3750
        %6831 = vmatmul.mubr.bf16.gmra.mrb[0].mxu0 %v3749
        %v6832 = vpop.f32.mrb[0].mxu0
        %v6833 = vadd.f32 %v6640, %v6832
        %v6834 = vpop.f32.mrb[0].mxu0
        %v6835 = vadd.f32 %v6642, %v6834
        %v6836 = vpop.f32.mrb[0].mxu0
        %v6837 = vadd.f32 %v6644, %v6836
        %v6838 = vpop.f32.mrb[0].mxu0
        %v6839 = vadd.f32 %v6646, %v6838
        %6840 = vmatprep.mubr.bf16.mxu0 %v3758
        %6841 = vmatmul.mubr.bf16.gmra.mrb[0].mxu0 %v3757
        %v6842 = vpop.f32.mrb[0].mxu0
        %v6843 = vadd.f32 %v6650, %v6842
        %v6844 = vpop.f32.mrb[0].mxu0
        %v6845 = vadd.f32 %v6652, %v6844
        %v6846 = vpop.f32.mrb[0].mxu0
        %v6847 = vadd.f32 %v6654, %v6846
        %v6848 = vpop.f32.mrb[0].mxu0
        %v6849 = vadd.f32 %v6656, %v6848
        %6850 = vmatprep.mubr.bf16.mxu0 %v3766
        %6851 = vmatmul.mubr.bf16.gmra.mrb[0].mxu0 %v3765
        %v6852 = vpop.f32.mrb[0].mxu0
        %v6853 = vadd.f32 %v6660, %v6852
        %v6854 = vpop.f32.mrb[0].mxu0
        %v6855 = vadd.f32 %v6662, %v6854
        %v6856 = vpop.f32.mrb[0].mxu0
        %v6857 = vadd.f32 %v6664, %v6856
        %v6858 = vpop.f32.mrb[0].mxu0
        %v6859 = vadd.f32 %v6666, %v6858
        %6860 = vmatprep.mubr.bf16.mxu0 %v3774
        %6861 = vmatmul.mubr.bf16.gmra.mrb[0].mxu0 %v3773
        %v6862 = vpop.f32.mrb[0].mxu0
        %v6863 = vadd.f32 %v6670, %v6862
        %v6864 = vpop.f32.mrb[0].mxu0
        %v6865 = vadd.f32 %v6672, %v6864
        %v6866 = vpop.f32.mrb[0].mxu0
        %v6867 = vadd.f32 %v6674, %v6866
        %v6868 = vpop.f32.mrb[0].mxu0
        %v6869 = vadd.f32 %v6676, %v6868
        %6870 = vmatprep.mubr.bf16.mxu0 %v3782
        %6871 = vmatmul.mubr.bf16.gmra.mrb[0].mxu0 %v3781
        %v6872 = vpop.f32.mrb[0].mxu0
        %v6873 = vadd.f32 %v6680, %v6872
        %v6874 = vpop.f32.mrb[0].mxu0
        %v6875 = vadd.f32 %v6682, %v6874
        %v6876 = vpop.f32.mrb[0].mxu0
        %v6877 = vadd.f32 %v6684, %v6876
        %v6878 = vpop.f32.mrb[0].mxu0
        %v6879 = vadd.f32 %v6686, %v6878
        %6880 = vmatprep.mubr.bf16.mxu0 %v3790
        %6881 = vmatmul.mubr.bf16.gmra.mrb[0].mxu0 %v3789
        %v6882 = vpop.f32.mrb[0].mxu0
        %v6883 = vadd.f32 %v6690, %v6882
        %v6884 = vpop.f32.mrb[0].mxu0
        %v6885 = vadd.f32 %v6692, %v6884
        %v6886 = vpop.f32.mrb[0].mxu0
        %v6887 = vadd.f32 %v6694, %v6886
        %v6888 = vpop.f32.mrb[0].mxu0
        %v6889 = vadd.f32 %v6696, %v6888
        %6890 = vmatprep.mubr.bf16.mxu0 %v3798
        %6891 = vmatmul.mubr.bf16.gmra.mrb[0].mxu0 %v3797
        %v6892 = vpop.f32.mrb[0].mxu0
        %v6893 = vadd.f32 %v6700, %v6892
        %v6894 = vpop.f32.mrb[0].mxu0
        %v6895 = vadd.f32 %v6702, %v6894
        %v6896 = vpop.f32.mrb[0].mxu0
        %v6897 = vadd.f32 %v6704, %v6896
        %v6898 = vpop.f32.mrb[0].mxu0
        %v6899 = vadd.f32 %v6706, %v6898
        %6900 = vdwg.mxu0
        %v6901 = vmax.f32 %v5971, 0.0
        %v6902 = vmax.f32 %v5973, 0.0
        %v6903 = vmax.f32 %v6743, 0.0
        %v6904 = vmax.f32 %v6745, 0.0
        %v6905 = vmax.f32 %v5975, 0.0
        %v6906 = vmax.f32 %v5977, 0.0
        %v6907 = vmax.f32 %v6747, 0.0
        %v6908 = vmax.f32 %v6749, 0.0
        %v6909 = vmax.f32 %v5981, 0.0
        %v6910 = vmax.f32 %v5983, 0.0
        %v6911 = vmax.f32 %v6753, 0.0
        %v6912 = vmax.f32 %v6755, 0.0
        %v6913 = vmax.f32 %v5985, 0.0
        %v6914 = vmax.f32 %v5987, 0.0
        %v6915 = vmax.f32 %v6757, 0.0
        %v6916 = vmax.f32 %v6759, 0.0
        %v6917 = vmax.f32 %v5991, 0.0
        %v6918 = vmax.f32 %v5993, 0.0
        %v6919 = vmax.f32 %v6763, 0.0
        %v6920 = vmax.f32 %v6765, 0.0
        %v6921 = vmax.f32 %v5995, 0.0
        %v6922 = vmax.f32 %v5997, 0.0
        %v6923 = vmax.f32 %v6767, 0.0
        %v6924 = vmax.f32 %v6769, 0.0
        %v6925 = vmax.f32 %v6001, 0.0
        %v6926 = vmax.f32 %v6003, 0.0
        %v6927 = vmax.f32 %v6773, 0.0
        %v6928 = vmax.f32 %v6775, 0.0
        %v6929 = vmax.f32 %v6005, 0.0
        %v6930 = vmax.f32 %v6007, 0.0
        %v6931 = vmax.f32 %v6777, 0.0
        %v6932 = vmax.f32 %v6779, 0.0
        %v6933 = vmax.f32 %v6011, 0.0
        %v6934 = vmax.f32 %v6013, 0.0
        %v6935 = vmax.f32 %v6783, 0.0
        %v6936 = vmax.f32 %v6785, 0.0
        %v6937 = vmax.f32 %v6015, 0.0
        %v6938 = vmax.f32 %v6017, 0.0
        %v6939 = vmax.f32 %v6787, 0.0
        %v6940 = vmax.f32 %v6789, 0.0
        %v6941 = vmax.f32 %v6021, 0.0
        %v6942 = vmax.f32 %v6023, 0.0
        %v6943 = vmax.f32 %v6793, 0.0
        %v6944 = vmax.f32 %v6795, 0.0
        %v6945 = vmax.f32 %v6025, 0.0
        %v6946 = vmax.f32 %v6027, 0.0
        %v6947 = vmax.f32 %v6797, 0.0
        %v6948 = vmax.f32 %v6799, 0.0
        %v6949 = vmax.f32 %v6031, 0.0
        %v6950 = vmax.f32 %v6033, 0.0
        %v6951 = vmax.f32 %v6803, 0.0
        %v6952 = vmax.f32 %v6805, 0.0
        %v6953 = vmax.f32 %v6035, 0.0
        %v6954 = vmax.f32 %v6037, 0.0
        %v6955 = vmax.f32 %v6807, 0.0
        %v6956 = vmax.f32 %v6809, 0.0
        %v6957 = vmax.f32 %v6041, 0.0
        %v6958 = vmax.f32 %v6043, 0.0
        %v6959 = vmax.f32 %v6813, 0.0
        %v6960 = vmax.f32 %v6815, 0.0
        %v6961 = vmax.f32 %v6045, 0.0
        %v6962 = vmax.f32 %v6047, 0.0
        %v6963 = vmax.f32 %v6817, 0.0
        %v6964 = vmax.f32 %v6819, 0.0
        %v6965 = vmax.f32 %v6051, 0.0
        %v6966 = vmax.f32 %v6053, 0.0
        %v6967 = vmax.f32 %v6823, 0.0
        %v6968 = vmax.f32 %v6825, 0.0
        %v6969 = vmax.f32 %v6055, 0.0
        %v6970 = vmax.f32 %v6057, 0.0
        %v6971 = vmax.f32 %v6827, 0.0
        %v6972 = vmax.f32 %v6829, 0.0
        %v6973 = vmax.f32 %v6061, 0.0
        %v6974 = vmax.f32 %v6063, 0.0
        %v6975 = vmax.f32 %v6833, 0.0
        %v6976 = vmax.f32 %v6835, 0.0
        %v6977 = vmax.f32 %v6065, 0.0
        %v6978 = vmax.f32 %v6067, 0.0
        %v6979 = vmax.f32 %v6837, 0.0
        %v6980 = vmax.f32 %v6839, 0.0
        %v6981 = vmax.f32 %v6071, 0.0
        %v6982 = vmax.f32 %v6073, 0.0
        %v6983 = vmax.f32 %v6843, 0.0
        %v6984 = vmax.f32 %v6845, 0.0
        %v6985 = vmax.f32 %v6075, 0.0
        %v6986 = vmax.f32 %v6077, 0.0
        %v6987 = vmax.f32 %v6847, 0.0
        %v6988 = vmax.f32 %v6849, 0.0
        %v6989 = vmax.f32 %v6081, 0.0
        %v6990 = vmax.f32 %v6083, 0.0
        %v6991 = vmax.f32 %v6853, 0.0
        %v6992 = vmax.f32 %v6855, 0.0
        %v6993 = vmax.f32 %v6085, 0.0
        %v6994 = vmax.f32 %v6087, 0.0
        %v6995 = vmax.f32 %v6857, 0.0
        %v6996 = vmax.f32 %v6859, 0.0
        %v6997 = vmax.f32 %v6091, 0.0
        %v6998 = vmax.f32 %v6093, 0.0
        %v6999 = vmax.f32 %v6863, 0.0
        %v7000 = vmax.f32 %v6865, 0.0
        %v7001 = vmax.f32 %v6095, 0.0
        %v7002 = vmax.f32 %v6097, 0.0
        %v7003 = vmax.f32 %v6867, 0.0
        %v7004 = vmax.f32 %v6869, 0.0
        %v7005 = vmax.f32 %v6101, 0.0
        %v7006 = vmax.f32 %v6103, 0.0
        %v7007 = vmax.f32 %v6873, 0.0
        %v7008 = vmax.f32 %v6875, 0.0
        %v7009 = vmax.f32 %v6105, 0.0
        %v7010 = vmax.f32 %v6107, 0.0
        %v7011 = vmax.f32 %v6877, 0.0
        %v7012 = vmax.f32 %v6879, 0.0
        %v7013 = vmax.f32 %v6111, 0.0
        %v7014 = vmax.f32 %v6113, 0.0
        %v7015 = vmax.f32 %v6883, 0.0
        %v7016 = vmax.f32 %v6885, 0.0
        %v7017 = vmax.f32 %v6115, 0.0
        %v7018 = vmax.f32 %v6117, 0.0
        %v7019 = vmax.f32 %v6887, 0.0
        %v7020 = vmax.f32 %v6889, 0.0
        %v7021 = vmax.f32 %v6121, 0.0
        %v7022 = vmax.f32 %v6123, 0.0
        %v7023 = vmax.f32 %v6893, 0.0
        %v7024 = vmax.f32 %v6895, 0.0
        %v7025 = vmax.f32 %v6125, 0.0
        %v7026 = vmax.f32 %v6127, 0.0
        %v7027 = vmax.f32 %v6897, 0.0
        %v7028 = vmax.f32 %v6899, 0.0
        %v7029 = vpack.c.bf16 %v6905, %v6901
        %v7030 = vpack.c.bf16 %v6906, %v6902
        %v7031 = vpack.c.bf16 %v6907, %v6903
        %v7032 = vpack.c.bf16 %v6908, %v6904
        %v7033 = vpack.c.bf16 %v6913, %v6909
        %v7034 = vpack.c.bf16 %v6914, %v6910
        %v7035 = vpack.c.bf16 %v6915, %v6911
        %v7036 = vpack.c.bf16 %v6916, %v6912
        %v7037 = vpack.c.bf16 %v6921, %v6917
        %v7038 = vpack.c.bf16 %v6922, %v6918
        %v7039 = vpack.c.bf16 %v6923, %v6919
        %v7040 = vpack.c.bf16 %v6924, %v6920
        %v7041 = vpack.c.bf16 %v6929, %v6925
        %v7042 = vpack.c.bf16 %v6930, %v6926
        %v7043 = vpack.c.bf16 %v6931, %v6927
        %v7044 = vpack.c.bf16 %v6932, %v6928
        %v7045 = vpack.c.bf16 %v6937, %v6933
        %v7046 = vpack.c.bf16 %v6938, %v6934
        %v7047 = vpack.c.bf16 %v6939, %v6935
        %v7048 = vpack.c.bf16 %v6940, %v6936
        %v7049 = vpack.c.bf16 %v6945, %v6941
        %v7050 = vpack.c.bf16 %v6946, %v6942
        %v7051 = vpack.c.bf16 %v6947, %v6943
        %v7052 = vpack.c.bf16 %v6948, %v6944
        %v7053 = vpack.c.bf16 %v6953, %v6949
        %v7054 = vpack.c.bf16 %v6954, %v6950
        %v7055 = vpack.c.bf16 %v6955, %v6951
        %v7056 = vpack.c.bf16 %v6956, %v6952
        %v7057 = vpack.c.bf16 %v6961, %v6957
        %v7058 = vpack.c.bf16 %v6962, %v6958
        %v7059 = vpack.c.bf16 %v6963, %v6959
        %v7060 = vpack.c.bf16 %v6964, %v6960
        %v7061 = vpack.c.bf16 %v6969, %v6965
        %v7062 = vpack.c.bf16 %v6970, %v6966
        %v7063 = vpack.c.bf16 %v6971, %v6967
        %v7064 = vpack.c.bf16 %v6972, %v6968
        %v7065 = vpack.c.bf16 %v6977, %v6973
        %v7066 = vpack.c.bf16 %v6978, %v6974
        %v7067 = vpack.c.bf16 %v6979, %v6975
        %v7068 = vpack.c.bf16 %v6980, %v6976
        %v7069 = vpack.c.bf16 %v6985, %v6981
        %v7070 = vpack.c.bf16 %v6986, %v6982
        %v7071 = vpack.c.bf16 %v6987, %v6983
        %v7072 = vpack.c.bf16 %v6988, %v6984
        %v7073 = vpack.c.bf16 %v6993, %v6989
        %v7074 = vpack.c.bf16 %v6994, %v6990
        %v7075 = vpack.c.bf16 %v6995, %v6991
        %v7076 = vpack.c.bf16 %v6996, %v6992
        %v7077 = vpack.c.bf16 %v7001, %v6997
        %v7078 = vpack.c.bf16 %v7002, %v6998
        %v7079 = vpack.c.bf16 %v7003, %v6999
        %v7080 = vpack.c.bf16 %v7004, %v7000
        %v7081 = vpack.c.bf16 %v7009, %v7005
        %v7082 = vpack.c.bf16 %v7010, %v7006
        %v7083 = vpack.c.bf16 %v7011, %v7007
        %v7084 = vpack.c.bf16 %v7012, %v7008
        %v7085 = vpack.c.bf16 %v7017, %v7013
        %v7086 = vpack.c.bf16 %v7018, %v7014
        %v7087 = vpack.c.bf16 %v7019, %v7015
        %v7088 = vpack.c.bf16 %v7020, %v7016
        %v7089 = vpack.c.bf16 %v7025, %v7021
        %v7090 = vpack.c.bf16 %v7026, %v7022
        %v7091 = vpack.c.bf16 %v7027, %v7023
        %v7092 = vpack.c.bf16 %v7028, %v7024
        %v7093 = vld [vmem:[#allocation10] sm:$0xff]
        %v7094 = vld [vmem:[#allocation10 + $0x8] sm:$0xf]
        %v7095 = vld [vmem:[#allocation10 + $0xc] sm:$0xff]
        %v7096 = vld [vmem:[#allocation10 + $0x14] sm:$0xf]
        %v7097 = vld [vmem:[#allocation10 + $0x18] sm:$0xff]
        %v7098 = vld [vmem:[#allocation10 + $0x20] sm:$0xf]
        %v7099 = vld [vmem:[#allocation10 + $0x24] sm:$0xff]
        %v7100 = vld [vmem:[#allocation10 + $0x2c] sm:$0xf]
        %v7101 = vld [vmem:[#allocation10 + $0x30] sm:$0xff]
        %v7102 = vld [vmem:[#allocation10 + $0x38] sm:$0xf]
        %v7103 = vld [vmem:[#allocation10 + $0x3c] sm:$0xff]
        %v7104 = vld [vmem:[#allocation10 + $0x44] sm:$0xf]
        %v7105 = vld [vmem:[#allocation10 + $0x48] sm:$0xff]
        %v7106 = vld [vmem:[#allocation10 + $0x50] sm:$0xf]
        %v7107 = vld [vmem:[#allocation10 + $0x54] sm:$0xff]
        %v7108 = vld [vmem:[#allocation10 + $0x5c] sm:$0xf]
        %v7109 = vld [vmem:[#allocation10 + $0x60] sm:$0xff]
        %v7110 = vld [vmem:[#allocation10 + $0x68] sm:$0xf]
        %v7111 = vld [vmem:[#allocation10 + $0x6c] sm:$0xff]
        %v7112 = vld [vmem:[#allocation10 + $0x74] sm:$0xf]
        %v7113 = vld [vmem:[#allocation10 + $0x78] sm:$0xff]
        %v7114 = vld [vmem:[#allocation10 + $0x80] sm:$0xf]
        %v7115 = vld [vmem:[#allocation10 + $0x84] sm:$0xff]
        %v7116 = vld [vmem:[#allocation10 + $0x8c] sm:$0xf]
        %v7117 = vld [vmem:[#allocation10 + $0x90] sm:$0xff]
        %v7118 = vld [vmem:[#allocation10 + $0x98] sm:$0xf]
        %v7119 = vld [vmem:[#allocation10 + $0x9c] sm:$0xff]
        %v7120 = vld [vmem:[#allocation10 + $0xa4] sm:$0xf]
        %v7121 = vld [vmem:[#allocation10 + $0xa8] sm:$0xff]
        %v7122 = vld [vmem:[#allocation10 + $0xb0] sm:$0xf]
        %v7123 = vld [vmem:[#allocation10 + $0xb4] sm:$0xff]
        %v7124 = vld [vmem:[#allocation10 + $0xbc] sm:$0xf]
        %v7125 = vld [vmem:[#allocation10 + $0xc0] sm:$0xff]
        %v7126 = vld [vmem:[#allocation10 + $0xc8] sm:$0xf]
        %v7127 = vld [vmem:[#allocation10 + $0xcc] sm:$0xff]
        %v7128 = vld [vmem:[#allocation10 + $0xd4] sm:$0xf]
        %v7129 = vld [vmem:[#allocation10 + $0xd8] sm:$0xff]
        %v7130 = vld [vmem:[#allocation10 + $0xe0] sm:$0xf]
        %v7131 = vld [vmem:[#allocation10 + $0xe4] sm:$0xff]
        %v7132 = vld [vmem:[#allocation10 + $0xec] sm:$0xf]
        %v7133 = vld [vmem:[#allocation10 + $0xf0] sm:$0xff]
        %v7134 = vld [vmem:[#allocation10 + $0xf8] sm:$0xf]
        %v7135 = vld [vmem:[#allocation10 + $0xfc] sm:$0xff]
        %v7136 = vld [vmem:[#allocation10 + $0x104] sm:$0xf]
        %v7137 = vld [vmem:[#allocation10 + $0x108] sm:$0xff]
        %v7138 = vld [vmem:[#allocation10 + $0x110] sm:$0xf]
        %v7139 = vld [vmem:[#allocation10 + $0x114] sm:$0xff]
        %v7140 = vld [vmem:[#allocation10 + $0x11c] sm:$0xf]
        %v7141 = vld [vmem:[#allocation10 + $0x120] sm:$0xff]
        %v7142 = vld [vmem:[#allocation10 + $0x128] sm:$0xf]
        %v7143 = vld [vmem:[#allocation10 + $0x12c] sm:$0xff]
        %v7144 = vld [vmem:[#allocation10 + $0x134] sm:$0xf]
        %v7145 = vld [vmem:[#allocation10 + $0x138] sm:$0xff]
        %v7146 = vld [vmem:[#allocation10 + $0x140] sm:$0xf]
        %v7147 = vld [vmem:[#allocation10 + $0x144] sm:$0xff]
        %v7148 = vld [vmem:[#allocation10 + $0x14c] sm:$0xf]
        %v7149 = vld [vmem:[#allocation10 + $0x150] sm:$0xff]
        %v7150 = vld [vmem:[#allocation10 + $0x158] sm:$0xf]
        %v7151 = vld [vmem:[#allocation10 + $0x15c] sm:$0xff]
        %v7152 = vld [vmem:[#allocation10 + $0x164] sm:$0xf]
        %v7153 = vld [vmem:[#allocation10 + $0x168] sm:$0xff]
        %v7154 = vld [vmem:[#allocation10 + $0x170] sm:$0xf]
        %v7155 = vld [vmem:[#allocation10 + $0x174] sm:$0xff]
        %v7156 = vld [vmem:[#allocation10 + $0x17c] sm:$0xf]
        %v7157 = vld [vmem:[#allocation10 + $0x180] sm:$0xff]
        %v7158 = vld [vmem:[#allocation10 + $0x188] sm:$0xf]
        %v7159 = vld [vmem:[#allocation10 + $0x18c] sm:$0xff]
        %v7160 = vld [vmem:[#allocation10 + $0x194] sm:$0xf]
        %v7161 = vld [vmem:[#allocation10 + $0x198] sm:$0xff]
        %v7162 = vld [vmem:[#allocation10 + $0x1a0] sm:$0xf]
        %v7163 = vld [vmem:[#allocation10 + $0x1a4] sm:$0xff]
        %v7164 = vld [vmem:[#allocation10 + $0x1ac] sm:$0xf]
        %v7165 = vld [vmem:[#allocation10 + $0x1b0] sm:$0xff]
        %v7166 = vld [vmem:[#allocation10 + $0x1b8] sm:$0xf]
        %v7167 = vld [vmem:[#allocation10 + $0x1bc] sm:$0xff]
        %v7168 = vld [vmem:[#allocation10 + $0x1c4] sm:$0xf]
        %v7169 = vld [vmem:[#allocation10 + $0x1c8] sm:$0xff]
        %v7170 = vld [vmem:[#allocation10 + $0x1d0] sm:$0xf]
        %v7171 = vld [vmem:[#allocation10 + $0x1d4] sm:$0xff]
        %v7172 = vld [vmem:[#allocation10 + $0x1dc] sm:$0xf]
        %v7173 = vld [vmem:[#allocation10 + $0x1e0] sm:$0xff]
        %v7174 = vld [vmem:[#allocation10 + $0x1e8] sm:$0xf]
        %v7175 = vld [vmem:[#allocation10 + $0x1ec] sm:$0xff]
        %v7176 = vld [vmem:[#allocation10 + $0x1f4] sm:$0xf]
        %v7177 = vld [vmem:[#allocation10 + $0x1f8] sm:$0xff]
        %v7178 = vld [vmem:[#allocation10 + $0x200] sm:$0xf]
        %v7179 = vld [vmem:[#allocation10 + $0x204] sm:$0xff]
        %v7180 = vld [vmem:[#allocation10 + $0x20c] sm:$0xf]
        %v7181 = vld [vmem:[#allocation10 + $0x210] sm:$0xff]
        %v7182 = vld [vmem:[#allocation10 + $0x218] sm:$0xf]
        %v7183 = vld [vmem:[#allocation10 + $0x21c] sm:$0xff]
        %v7184 = vld [vmem:[#allocation10 + $0x224] sm:$0xf]
        %v7185 = vld [vmem:[#allocation10 + $0x228] sm:$0xff]
        %v7186 = vld [vmem:[#allocation10 + $0x230] sm:$0xf]
        %v7187 = vld [vmem:[#allocation10 + $0x234] sm:$0xff]
        %v7188 = vld [vmem:[#allocation10 + $0x23c] sm:$0xf]
        %v7189 = vld [vmem:[#allocation10 + $0x240] sm:$0xff]
        %v7190 = vld [vmem:[#allocation10 + $0x248] sm:$0xf]
        %v7191 = vld [vmem:[#allocation10 + $0x24c] sm:$0xff]
        %v7192 = vld [vmem:[#allocation10 + $0x254] sm:$0xf]
        %v7193 = vld [vmem:[#allocation10 + $0x258] sm:$0xff]
        %v7194 = vld [vmem:[#allocation10 + $0x260] sm:$0xf]
        %v7195 = vld [vmem:[#allocation10 + $0x264] sm:$0xff]
        %v7196 = vld [vmem:[#allocation10 + $0x26c] sm:$0xf]
        %v7197 = vld [vmem:[#allocation10 + $0x270] sm:$0xff]
        %v7198 = vld [vmem:[#allocation10 + $0x278] sm:$0xf]
        %v7199 = vld [vmem:[#allocation10 + $0x27c] sm:$0xff]
        %v7200 = vld [vmem:[#allocation10 + $0x284] sm:$0xf]
        %v7201 = vld [vmem:[#allocation10 + $0x288] sm:$0xff]
        %v7202 = vld [vmem:[#allocation10 + $0x290] sm:$0xf]
        %v7203 = vld [vmem:[#allocation10 + $0x294] sm:$0xff]
        %v7204 = vld [vmem:[#allocation10 + $0x29c] sm:$0xf]
        %v7205 = vld [vmem:[#allocation10 + $0x2a0] sm:$0xff]
        %v7206 = vld [vmem:[#allocation10 + $0x2a8] sm:$0xf]
        %v7207 = vld [vmem:[#allocation10 + $0x2ac] sm:$0xff]
        %v7208 = vld [vmem:[#allocation10 + $0x2b4] sm:$0xf]
        %v7209 = vld [vmem:[#allocation10 + $0x2b8] sm:$0xff]
        %v7210 = vld [vmem:[#allocation10 + $0x2c0] sm:$0xf]
        %v7211 = vld [vmem:[#allocation10 + $0x2c4] sm:$0xff]
        %v7212 = vld [vmem:[#allocation10 + $0x2cc] sm:$0xf]
        %v7213 = vld [vmem:[#allocation10 + $0x2d0] sm:$0xff]
        %v7214 = vld [vmem:[#allocation10 + $0x2d8] sm:$0xf]
        %v7215 = vld [vmem:[#allocation10 + $0x2dc] sm:$0xff]
        %v7216 = vld [vmem:[#allocation10 + $0x2e4] sm:$0xf]
        %v7217 = vld [vmem:[#allocation10 + $0x2e8] sm:$0xff]
        %v7218 = vld [vmem:[#allocation10 + $0x2f0] sm:$0xf]
        %v7219 = vld [vmem:[#allocation10 + $0x2f4] sm:$0xff]
        %v7220 = vld [vmem:[#allocation10 + $0x2fc] sm:$0xf]
        %v7221 = vld [vmem:[%s6] sm:$0x7]
        %v7223 = vlaneseq
        %v7224 = vshrl.u32 %v7223, 7
        %v7225 = vsub.s32 0, %v7224
        %v7226 = vrot.slane %v7221, %v7225
        %v7227 = vlaneseq
        %v7228 = vshrl.u32 %v7227, 7
        %v7229 = vsub.s32 1, %v7228
        %v7230 = vrot.slane %v7221, %v7229
        %v7231 = vlaneseq
        %v7232 = vshrl.u32 %v7231, 7
        %v7233 = vsub.s32 2, %v7232
        %v7234 = vrot.slane %v7221, %v7233
        %v7366 = vunpack.c.l.b16 %v7093
        %v7367 = vunpack.c.h.b16 %v7093
        %v7368 = vunpack.c.l.b16 %v7094
        %v7369 = vunpack.c.l.b16 %v7095
        %v7370 = vunpack.c.h.b16 %v7095
        %v7371 = vunpack.c.l.b16 %v7096
        %v7372 = vunpack.c.l.b16 %v7097
        %v7373 = vunpack.c.h.b16 %v7097
        %v7374 = vunpack.c.l.b16 %v7098
        %v7375 = vunpack.c.l.b16 %v7099
        %v7376 = vunpack.c.h.b16 %v7099
        %v7377 = vunpack.c.l.b16 %v7100
        %v7378 = vunpack.c.l.b16 %v7101
        %v7379 = vunpack.c.h.b16 %v7101
        %v7380 = vunpack.c.l.b16 %v7102
        %v7381 = vunpack.c.l.b16 %v7103
        %v7382 = vunpack.c.h.b16 %v7103
        %v7383 = vunpack.c.l.b16 %v7104
        %v7384 = vunpack.c.l.b16 %v7105
        %v7385 = vunpack.c.h.b16 %v7105
        %v7386 = vunpack.c.l.b16 %v7106
        %v7387 = vunpack.c.l.b16 %v7107
        %v7388 = vunpack.c.h.b16 %v7107
        %v7389 = vunpack.c.l.b16 %v7108
        %v7390 = vunpack.c.l.b16 %v7109
        %v7391 = vunpack.c.h.b16 %v7109
        %v7392 = vunpack.c.l.b16 %v7110
        %v7393 = vunpack.c.l.b16 %v7111
        %v7394 = vunpack.c.h.b16 %v7111
        %v7395 = vunpack.c.l.b16 %v7112
        %v7396 = vunpack.c.l.b16 %v7113
        %v7397 = vunpack.c.h.b16 %v7113
        %v7398 = vunpack.c.l.b16 %v7114
        %v7399 = vunpack.c.l.b16 %v7115
        %v7400 = vunpack.c.h.b16 %v7115
        %v7401 = vunpack.c.l.b16 %v7116
        %v7402 = vunpack.c.l.b16 %v7117
        %v7403 = vunpack.c.h.b16 %v7117
        %v7404 = vunpack.c.l.b16 %v7118
        %v7405 = vunpack.c.l.b16 %v7119
        %v7406 = vunpack.c.h.b16 %v7119
        %v7407 = vunpack.c.l.b16 %v7120
        %v7408 = vunpack.c.l.b16 %v7121
        %v7409 = vunpack.c.h.b16 %v7121
        %v7410 = vunpack.c.l.b16 %v7122
        %v7411 = vunpack.c.l.b16 %v7123
        %v7412 = vunpack.c.h.b16 %v7123
        %v7413 = vunpack.c.l.b16 %v7124
        %v7414 = vunpack.c.l.b16 %v7125
        %v7415 = vunpack.c.h.b16 %v7125
        %v7416 = vunpack.c.l.b16 %v7126
        %v7417 = vunpack.c.l.b16 %v7127
        %v7418 = vunpack.c.h.b16 %v7127
        %v7419 = vunpack.c.l.b16 %v7128
        %v7420 = vunpack.c.l.b16 %v7129
        %v7421 = vunpack.c.h.b16 %v7129
        %v7422 = vunpack.c.l.b16 %v7130
        %v7423 = vunpack.c.l.b16 %v7131
        %v7424 = vunpack.c.h.b16 %v7131
        %v7425 = vunpack.c.l.b16 %v7132
        %v7426 = vunpack.c.l.b16 %v7133
        %v7427 = vunpack.c.h.b16 %v7133
        %v7428 = vunpack.c.l.b16 %v7134
        %v7429 = vunpack.c.l.b16 %v7135
        %v7430 = vunpack.c.h.b16 %v7135
        %v7431 = vunpack.c.l.b16 %v7136
        %v7432 = vunpack.c.l.b16 %v7137
        %v7433 = vunpack.c.h.b16 %v7137
        %v7434 = vunpack.c.l.b16 %v7138
        %v7435 = vunpack.c.l.b16 %v7139
        %v7436 = vunpack.c.h.b16 %v7139
        %v7437 = vunpack.c.l.b16 %v7140
        %v7438 = vunpack.c.l.b16 %v7141
        %v7439 = vunpack.c.h.b16 %v7141
        %v7440 = vunpack.c.l.b16 %v7142
        %v7441 = vunpack.c.l.b16 %v7143
        %v7442 = vunpack.c.h.b16 %v7143
        %v7443 = vunpack.c.l.b16 %v7144
        %v7444 = vunpack.c.l.b16 %v7145
        %v7445 = vunpack.c.h.b16 %v7145
        %v7446 = vunpack.c.l.b16 %v7146
        %v7447 = vunpack.c.l.b16 %v7147
        %v7448 = vunpack.c.h.b16 %v7147
        %v7449 = vunpack.c.l.b16 %v7148
        %v7450 = vunpack.c.l.b16 %v7149
        %v7451 = vunpack.c.h.b16 %v7149
        %v7452 = vunpack.c.l.b16 %v7150
        %v7453 = vunpack.c.l.b16 %v7151
        %v7454 = vunpack.c.h.b16 %v7151
        %v7455 = vunpack.c.l.b16 %v7152
        %v7456 = vunpack.c.l.b16 %v7153
        %v7457 = vunpack.c.h.b16 %v7153
        %v7458 = vunpack.c.l.b16 %v7154
        %v7459 = vunpack.c.l.b16 %v7155
        %v7460 = vunpack.c.h.b16 %v7155
        %v7461 = vunpack.c.l.b16 %v7156
        %v7462 = vunpack.c.l.b16 %v7157
        %v7463 = vunpack.c.h.b16 %v7157
        %v7464 = vunpack.c.l.b16 %v7158
        %v7465 = vunpack.c.l.b16 %v7159
        %v7466 = vunpack.c.h.b16 %v7159
        %v7467 = vunpack.c.l.b16 %v7160
        %v7468 = vunpack.c.l.b16 %v7161
        %v7469 = vunpack.c.h.b16 %v7161
        %v7470 = vunpack.c.l.b16 %v7162
        %v7471 = vunpack.c.l.b16 %v7163
        %v7472 = vunpack.c.h.b16 %v7163
        %v7473 = vunpack.c.l.b16 %v7164
        %v7474 = vunpack.c.l.b16 %v7165
        %v7475 = vunpack.c.h.b16 %v7165
        %v7476 = vunpack.c.l.b16 %v7166
        %v7477 = vunpack.c.l.b16 %v7167
        %v7478 = vunpack.c.h.b16 %v7167
        %v7479 = vunpack.c.l.b16 %v7168
        %v7480 = vunpack.c.l.b16 %v7169
        %v7481 = vunpack.c.h.b16 %v7169
        %v7482 = vunpack.c.l.b16 %v7170
        %v7483 = vunpack.c.l.b16 %v7171
        %v7484 = vunpack.c.h.b16 %v7171
        %v7485 = vunpack.c.l.b16 %v7172
        %v7486 = vunpack.c.l.b16 %v7173
        %v7487 = vunpack.c.h.b16 %v7173
        %v7488 = vunpack.c.l.b16 %v7174
        %v7489 = vunpack.c.l.b16 %v7175
        %v7490 = vunpack.c.h.b16 %v7175
        %v7491 = vunpack.c.l.b16 %v7176
        %v7492 = vunpack.c.l.b16 %v7177
        %v7493 = vunpack.c.h.b16 %v7177
        %v7494 = vunpack.c.l.b16 %v7178
        %v7495 = vunpack.c.l.b16 %v7179
        %v7496 = vunpack.c.h.b16 %v7179
        %v7497 = vunpack.c.l.b16 %v7180
        %v7498 = vunpack.c.l.b16 %v7181
        %v7499 = vunpack.c.h.b16 %v7181
        %v7500 = vunpack.c.l.b16 %v7182
        %v7501 = vunpack.c.l.b16 %v7183
        %v7502 = vunpack.c.h.b16 %v7183
        %v7503 = vunpack.c.l.b16 %v7184
        %v7504 = vunpack.c.l.b16 %v7185
        %v7505 = vunpack.c.h.b16 %v7185
        %v7506 = vunpack.c.l.b16 %v7186
        %v7507 = vunpack.c.l.b16 %v7187
        %v7508 = vunpack.c.h.b16 %v7187
        %v7509 = vunpack.c.l.b16 %v7188
        %v7510 = vunpack.c.l.b16 %v7189
        %v7511 = vunpack.c.h.b16 %v7189
        %v7512 = vunpack.c.l.b16 %v7190
        %v7513 = vunpack.c.l.b16 %v7191
        %v7514 = vunpack.c.h.b16 %v7191
        %v7515 = vunpack.c.l.b16 %v7192
        %v7516 = vunpack.c.l.b16 %v7193
        %v7517 = vunpack.c.h.b16 %v7193
        %v7518 = vunpack.c.l.b16 %v7194
        %v7519 = vunpack.c.l.b16 %v7195
        %v7520 = vunpack.c.h.b16 %v7195
        %v7521 = vunpack.c.l.b16 %v7196
        %v7522 = vunpack.c.l.b16 %v7197
        %v7523 = vunpack.c.h.b16 %v7197
        %v7524 = vunpack.c.l.b16 %v7198
        %v7525 = vunpack.c.l.b16 %v7199
        %v7526 = vunpack.c.h.b16 %v7199
        %v7527 = vunpack.c.l.b16 %v7200
        %v7528 = vunpack.c.l.b16 %v7201
        %v7529 = vunpack.c.h.b16 %v7201
        %v7530 = vunpack.c.l.b16 %v7202
        %v7531 = vunpack.c.l.b16 %v7203
        %v7532 = vunpack.c.h.b16 %v7203
        %v7533 = vunpack.c.l.b16 %v7204
        %v7534 = vunpack.c.l.b16 %v7205
        %v7535 = vunpack.c.h.b16 %v7205
        %v7536 = vunpack.c.l.b16 %v7206
        %v7537 = vunpack.c.l.b16 %v7207
        %v7538 = vunpack.c.h.b16 %v7207
        %v7539 = vunpack.c.l.b16 %v7208
        %v7540 = vunpack.c.l.b16 %v7209
        %v7541 = vunpack.c.h.b16 %v7209
        %v7542 = vunpack.c.l.b16 %v7210
        %v7543 = vunpack.c.l.b16 %v7211
        %v7544 = vunpack.c.h.b16 %v7211
        %v7545 = vunpack.c.l.b16 %v7212
        %v7546 = vunpack.c.l.b16 %v7213
        %v7547 = vunpack.c.h.b16 %v7213
        %v7548 = vunpack.c.l.b16 %v7214
        %v7549 = vunpack.c.l.b16 %v7215
        %v7550 = vunpack.c.h.b16 %v7215
        %v7551 = vunpack.c.l.b16 %v7216
        %v7552 = vunpack.c.l.b16 %v7217
        %v7553 = vunpack.c.h.b16 %v7217
        %v7554 = vunpack.c.l.b16 %v7218
        %v7555 = vunpack.c.l.b16 %v7219
        %v7556 = vunpack.c.h.b16 %v7219
        %v7557 = vunpack.c.l.b16 %v7220
        %v7558 = vpack.c.b16 %v7369, %v7366
        %v7559 = vpack.c.b16 %v7370, %v7367
        %v7560 = vpack.c.b16 %v7371, %v7368
        %v7561 = vpack.c.b16 %v7375, %v7372
        %v7562 = vpack.c.b16 %v7376, %v7373
        %v7563 = vpack.c.b16 %v7377, %v7374
        %v7564 = vpack.c.b16 %v7381, %v7378
        %v7565 = vpack.c.b16 %v7382, %v7379
        %v7566 = vpack.c.b16 %v7383, %v7380
        %v7567 = vpack.c.b16 %v7387, %v7384
        %v7568 = vpack.c.b16 %v7388, %v7385
        %v7569 = vpack.c.b16 %v7389, %v7386
        %v7570 = vpack.c.b16 %v7393, %v7390
        %v7571 = vpack.c.b16 %v7394, %v7391
        %v7572 = vpack.c.b16 %v7395, %v7392
        %v7573 = vpack.c.b16 %v7399, %v7396
        %v7574 = vpack.c.b16 %v7400, %v7397
        %v7575 = vpack.c.b16 %v7401, %v7398
        %v7576 = vpack.c.b16 %v7405, %v7402
        %v7577 = vpack.c.b16 %v7406, %v7403
        %v7578 = vpack.c.b16 %v7407, %v7404
        %v7579 = vpack.c.b16 %v7411, %v7408
        %v7580 = vpack.c.b16 %v7412, %v7409
        %v7581 = vpack.c.b16 %v7413, %v7410
        %v7582 = vpack.c.b16 %v7417, %v7414
        %v7583 = vpack.c.b16 %v7418, %v7415
        %v7584 = vpack.c.b16 %v7419, %v7416
        %v7585 = vpack.c.b16 %v7423, %v7420
        %v7586 = vpack.c.b16 %v7424, %v7421
        %v7587 = vpack.c.b16 %v7425, %v7422
        %v7588 = vpack.c.b16 %v7429, %v7426
        %v7589 = vpack.c.b16 %v7430, %v7427
        %v7590 = vpack.c.b16 %v7431, %v7428
        %v7591 = vpack.c.b16 %v7435, %v7432
        %v7592 = vpack.c.b16 %v7436, %v7433
        %v7593 = vpack.c.b16 %v7437, %v7434
        %v7594 = vpack.c.b16 %v7441, %v7438
        %v7595 = vpack.c.b16 %v7442, %v7439
        %v7596 = vpack.c.b16 %v7443, %v7440
        %v7597 = vpack.c.b16 %v7447, %v7444
        %v7598 = vpack.c.b16 %v7448, %v7445
        %v7599 = vpack.c.b16 %v7449, %v7446
        %v7600 = vpack.c.b16 %v7453, %v7450
        %v7601 = vpack.c.b16 %v7454, %v7451
        %v7602 = vpack.c.b16 %v7455, %v7452
        %v7603 = vpack.c.b16 %v7459, %v7456
        %v7604 = vpack.c.b16 %v7460, %v7457
        %v7605 = vpack.c.b16 %v7461, %v7458
        %v7606 = vpack.c.b16 %v7465, %v7462
        %v7607 = vpack.c.b16 %v7466, %v7463
        %v7608 = vpack.c.b16 %v7467, %v7464
        %v7609 = vpack.c.b16 %v7471, %v7468
        %v7610 = vpack.c.b16 %v7472, %v7469
        %v7611 = vpack.c.b16 %v7473, %v7470
        %v7612 = vpack.c.b16 %v7477, %v7474
        %v7613 = vpack.c.b16 %v7478, %v7475
        %v7614 = vpack.c.b16 %v7479, %v7476
        %v7615 = vpack.c.b16 %v7483, %v7480
        %v7616 = vpack.c.b16 %v7484, %v7481
        %v7617 = vpack.c.b16 %v7485, %v7482
        %v7618 = vpack.c.b16 %v7489, %v7486
        %v7619 = vpack.c.b16 %v7490, %v7487
        %v7620 = vpack.c.b16 %v7491, %v7488
        %v7621 = vpack.c.b16 %v7495, %v7492
        %v7622 = vpack.c.b16 %v7496, %v7493
        %v7623 = vpack.c.b16 %v7497, %v7494
        %v7624 = vpack.c.b16 %v7501, %v7498
        %v7625 = vpack.c.b16 %v7502, %v7499
        %v7626 = vpack.c.b16 %v7503, %v7500
        %v7627 = vpack.c.b16 %v7507, %v7504
        %v7628 = vpack.c.b16 %v7508, %v7505
        %v7629 = vpack.c.b16 %v7509, %v7506
        %v7630 = vpack.c.b16 %v7513, %v7510
        %v7631 = vpack.c.b16 %v7514, %v7511
        %v7632 = vpack.c.b16 %v7515, %v7512
        %v7633 = vpack.c.b16 %v7519, %v7516
        %v7634 = vpack.c.b16 %v7520, %v7517
        %v7635 = vpack.c.b16 %v7521, %v7518
        %v7636 = vpack.c.b16 %v7525, %v7522
        %v7637 = vpack.c.b16 %v7526, %v7523
        %v7638 = vpack.c.b16 %v7527, %v7524
        %v7639 = vpack.c.b16 %v7531, %v7528
        %v7640 = vpack.c.b16 %v7532, %v7529
        %v7641 = vpack.c.b16 %v7533, %v7530
        %v7642 = vpack.c.b16 %v7537, %v7534
        %v7643 = vpack.c.b16 %v7538, %v7535
        %v7644 = vpack.c.b16 %v7539, %v7536
        %v7645 = vpack.c.b16 %v7543, %v7540
        %v7646 = vpack.c.b16 %v7544, %v7541
        %v7647 = vpack.c.b16 %v7545, %v7542
        %v7648 = vpack.c.b16 %v7549, %v7546
        %v7649 = vpack.c.b16 %v7550, %v7547
        %v7650 = vpack.c.b16 %v7551, %v7548
        %v7651 = vpack.c.b16 %v7555, %v7552
        %v7652 = vpack.c.b16 %v7556, %v7553
        %v7653 = vpack.c.b16 %v7557, %v7554
        %7750 = vmatprep.subr.bf16.mxu0 %v7559
        %7751 = vmatpush1.bf16.msra.mxu0 %v7558
        %7752 = vmatprep.subr.bf16.mxu0 %v7562
        %7753 = vmatpush1.bf16.msra.mxu0 %v7561
        %7754 = vmatprep.subr.bf16.mxu0 %v7565
        %7755 = vmatpush1.bf16.msra.mxu0 %v7564
        %7756 = vmatprep.subr.bf16.mxu0 %v7568
        %7757 = vmatpush1.bf16.msra.mxu0 %v7567
        %7758 = vmatprep.subr.bf16.mxu0 %v7571
        %7759 = vmatpush1.bf16.msra.mxu0 %v7570
        %7760 = vmatprep.subr.bf16.mxu0 %v7574
        %7761 = vmatpush1.bf16.msra.mxu0 %v7573
        %7762 = vmatprep.subr.bf16.mxu0 %v7577
        %7763 = vmatpush1.bf16.msra.mxu0 %v7576
        %7764 = vmatprep.subr.bf16.mxu0 %v7580
        %7765 = vmatpush1.bf16.msra.mxu0 %v7579
        %7766 = vmatprep.subr.bf16.mxu0 %v7583
        %7767 = vmatpush1.bf16.msra.mxu0 %v7582
        %7768 = vmatprep.subr.bf16.mxu0 %v7586
        %7769 = vmatpush1.bf16.msra.mxu0 %v7585
        %7770 = vmatprep.subr.bf16.mxu0 %v7589
        %7771 = vmatpush1.bf16.msra.mxu0 %v7588
        %7772 = vmatprep.subr.bf16.mxu0 %v7592
        %7773 = vmatpush1.bf16.msra.mxu0 %v7591
        %7774 = vmatprep.subr.bf16.mxu0 %v7595
        %7775 = vmatpush1.bf16.msra.mxu0 %v7594
        %7776 = vmatprep.subr.bf16.mxu0 %v7598
        %7777 = vmatpush1.bf16.msra.mxu0 %v7597
        %7778 = vmatprep.subr.bf16.mxu0 %v7601
        %7779 = vmatpush1.bf16.msra.mxu0 %v7600
        %7780 = vmatprep.subr.bf16.mxu0 %v7604
        %7781 = vmatpush1.bf16.msra.mxu0 %v7603
        %7782 = vmatprep.mubr.bf16.mxu0 %v7030
        %7783 = vmatmul.mubr.bf16.gmra.mrb[0].mxu0 %v7029
        %v7784 = vpop.f32.mrb[0].mxu0
        %v7785 = vadd.f32 %v7226, %v7784
        %v7786 = vpop.f32.mrb[0].mxu0
        %v7787 = vadd.f32 %v7230, %v7786
        %v7788 = vpop.f32.mrb[0].mxu0
        %v7789 = vadd.f32 %v7226, %v7788
        %v7790 = vpop.f32.mrb[0].mxu0
        %v7791 = vadd.f32 %v7230, %v7790
        %7792 = vmatprep.mubr.bf16.mxu0 %v7034
        %7793 = vmatmul.mubr.bf16.gmra.mrb[0].mxu0 %v7033
        %v7794 = vpop.f32.mrb[0].mxu0
        %v7795 = vadd.f32 %v7226, %v7794
        %v7796 = vpop.f32.mrb[0].mxu0
        %v7797 = vadd.f32 %v7230, %v7796
        %v7798 = vpop.f32.mrb[0].mxu0
        %v7799 = vadd.f32 %v7226, %v7798
        %v7800 = vpop.f32.mrb[0].mxu0
        %v7801 = vadd.f32 %v7230, %v7800
        %7802 = vmatprep.mubr.bf16.mxu0 %v7038
        %7803 = vmatmul.mubr.bf16.gmra.mrb[0].mxu0 %v7037
        %v7804 = vpop.f32.mrb[0].mxu0
        %v7805 = vadd.f32 %v7226, %v7804
        %v7806 = vpop.f32.mrb[0].mxu0
        %v7807 = vadd.f32 %v7230, %v7806
        %v7808 = vpop.f32.mrb[0].mxu0
        %v7809 = vadd.f32 %v7226, %v7808
        %v7810 = vpop.f32.mrb[0].mxu0
        %v7811 = vadd.f32 %v7230, %v7810
        %7812 = vmatprep.mubr.bf16.mxu0 %v7042
        %7813 = vmatmul.mubr.bf16.gmra.mrb[0].mxu0 %v7041
        %v7814 = vpop.f32.mrb[0].mxu0
        %v7815 = vadd.f32 %v7226, %v7814
        %v7816 = vpop.f32.mrb[0].mxu0
        %v7817 = vadd.f32 %v7230, %v7816
        %v7818 = vpop.f32.mrb[0].mxu0
        %v7819 = vadd.f32 %v7226, %v7818
        %v7820 = vpop.f32.mrb[0].mxu0
        %v7821 = vadd.f32 %v7230, %v7820
        %7822 = vmatprep.mubr.bf16.mxu0 %v7046
        %7823 = vmatmul.mubr.bf16.gmra.mrb[0].mxu0 %v7045
        %v7824 = vpop.f32.mrb[0].mxu0
        %v7825 = vadd.f32 %v7226, %v7824
        %v7826 = vpop.f32.mrb[0].mxu0
        %v7827 = vadd.f32 %v7230, %v7826
        %v7828 = vpop.f32.mrb[0].mxu0
        %v7829 = vadd.f32 %v7226, %v7828
        %v7830 = vpop.f32.mrb[0].mxu0
        %v7831 = vadd.f32 %v7230, %v7830
        %7832 = vmatprep.mubr.bf16.mxu0 %v7050
        %7833 = vmatmul.mubr.bf16.gmra.mrb[0].mxu0 %v7049
        %v7834 = vpop.f32.mrb[0].mxu0
        %v7835 = vadd.f32 %v7226, %v7834
        %v7836 = vpop.f32.mrb[0].mxu0
        %v7837 = vadd.f32 %v7230, %v7836
        %v7838 = vpop.f32.mrb[0].mxu0
        %v7839 = vadd.f32 %v7226, %v7838
        %v7840 = vpop.f32.mrb[0].mxu0
        %v7841 = vadd.f32 %v7230, %v7840
        %7842 = vmatprep.mubr.bf16.mxu0 %v7054
        %7843 = vmatmul.mubr.bf16.gmra.mrb[0].mxu0 %v7053
        %v7844 = vpop.f32.mrb[0].mxu0
        %v7845 = vadd.f32 %v7226, %v7844
        %v7846 = vpop.f32.mrb[0].mxu0
        %v7847 = vadd.f32 %v7230, %v7846
        %v7848 = vpop.f32.mrb[0].mxu0
        %v7849 = vadd.f32 %v7226, %v7848
        %v7850 = vpop.f32.mrb[0].mxu0
        %v7851 = vadd.f32 %v7230, %v7850
        %7852 = vmatprep.mubr.bf16.mxu0 %v7058
        %7853 = vmatmul.mubr.bf16.gmra.mrb[0].mxu0 %v7057
        %v7854 = vpop.f32.mrb[0].mxu0
        %v7855 = vadd.f32 %v7226, %v7854
        %v7856 = vpop.f32.mrb[0].mxu0
        %v7857 = vadd.f32 %v7230, %v7856
        %v7858 = vpop.f32.mrb[0].mxu0
        %v7859 = vadd.f32 %v7226, %v7858
        %v7860 = vpop.f32.mrb[0].mxu0
        %v7861 = vadd.f32 %v7230, %v7860
        %7862 = vmatprep.mubr.bf16.mxu0 %v7062
        %7863 = vmatmul.mubr.bf16.gmra.mrb[0].mxu0 %v7061
        %v7864 = vpop.f32.mrb[0].mxu0
        %v7865 = vadd.f32 %v7226, %v7864
        %v7866 = vpop.f32.mrb[0].mxu0
        %v7867 = vadd.f32 %v7230, %v7866
        %v7868 = vpop.f32.mrb[0].mxu0
        %v7869 = vadd.f32 %v7226, %v7868
        %v7870 = vpop.f32.mrb[0].mxu0
        %v7871 = vadd.f32 %v7230, %v7870
        %7872 = vmatprep.mubr.bf16.mxu0 %v7066
        %7873 = vmatmul.mubr.bf16.gmra.mrb[0].mxu0 %v7065
        %v7874 = vpop.f32.mrb[0].mxu0
        %v7875 = vadd.f32 %v7226, %v7874
        %v7876 = vpop.f32.mrb[0].mxu0
        %v7877 = vadd.f32 %v7230, %v7876
        %v7878 = vpop.f32.mrb[0].mxu0
        %v7879 = vadd.f32 %v7226, %v7878
        %v7880 = vpop.f32.mrb[0].mxu0
        %v7881 = vadd.f32 %v7230, %v7880
        %7882 = vmatprep.mubr.bf16.mxu0 %v7070
        %7883 = vmatmul.mubr.bf16.gmra.mrb[0].mxu0 %v7069
        %v7884 = vpop.f32.mrb[0].mxu0
        %v7885 = vadd.f32 %v7226, %v7884
        %v7886 = vpop.f32.mrb[0].mxu0
        %v7887 = vadd.f32 %v7230, %v7886
        %v7888 = vpop.f32.mrb[0].mxu0
        %v7889 = vadd.f32 %v7226, %v7888
        %v7890 = vpop.f32.mrb[0].mxu0
        %v7891 = vadd.f32 %v7230, %v7890
        %7892 = vmatprep.mubr.bf16.mxu0 %v7074
        %7893 = vmatmul.mubr.bf16.gmra.mrb[0].mxu0 %v7073
        %v7894 = vpop.f32.mrb[0].mxu0
        %v7895 = vadd.f32 %v7226, %v7894
        %v7896 = vpop.f32.mrb[0].mxu0
        %v7897 = vadd.f32 %v7230, %v7896
        %v7898 = vpop.f32.mrb[0].mxu0
        %v7899 = vadd.f32 %v7226, %v7898
        %v7900 = vpop.f32.mrb[0].mxu0
        %v7901 = vadd.f32 %v7230, %v7900
        %7902 = vmatprep.mubr.bf16.mxu0 %v7078
        %7903 = vmatmul.mubr.bf16.gmra.mrb[0].mxu0 %v7077
        %v7904 = vpop.f32.mrb[0].mxu0
        %v7905 = vadd.f32 %v7226, %v7904
        %v7906 = vpop.f32.mrb[0].mxu0
        %v7907 = vadd.f32 %v7230, %v7906
        %v7908 = vpop.f32.mrb[0].mxu0
        %v7909 = vadd.f32 %v7226, %v7908
        %v7910 = vpop.f32.mrb[0].mxu0
        %v7911 = vadd.f32 %v7230, %v7910
        %7912 = vmatprep.mubr.bf16.mxu0 %v7082
        %7913 = vmatmul.mubr.bf16.gmra.mrb[0].mxu0 %v7081
        %v7914 = vpop.f32.mrb[0].mxu0
        %v7915 = vadd.f32 %v7226, %v7914
        %v7916 = vpop.f32.mrb[0].mxu0
        %v7917 = vadd.f32 %v7230, %v7916
        %v7918 = vpop.f32.mrb[0].mxu0
        %v7919 = vadd.f32 %v7226, %v7918
        %v7920 = vpop.f32.mrb[0].mxu0
        %v7921 = vadd.f32 %v7230, %v7920
        %7922 = vmatprep.mubr.bf16.mxu0 %v7086
        %7923 = vmatmul.mubr.bf16.gmra.mrb[0].mxu0 %v7085
        %v7924 = vpop.f32.mrb[0].mxu0
        %v7925 = vadd.f32 %v7226, %v7924
        %v7926 = vpop.f32.mrb[0].mxu0
        %v7927 = vadd.f32 %v7230, %v7926
        %v7928 = vpop.f32.mrb[0].mxu0
        %v7929 = vadd.f32 %v7226, %v7928
        %v7930 = vpop.f32.mrb[0].mxu0
        %v7931 = vadd.f32 %v7230, %v7930
        %7932 = vmatprep.mubr.bf16.mxu0 %v7090
        %7933 = vmatmul.mubr.bf16.gmra.mrb[0].mxu0 %v7089
        %v7934 = vpop.f32.mrb[0].mxu0
        %v7935 = vadd.f32 %v7226, %v7934
        %v7936 = vpop.f32.mrb[0].mxu0
        %v7937 = vadd.f32 %v7230, %v7936
        %v7938 = vpop.f32.mrb[0].mxu0
        %v7939 = vadd.f32 %v7226, %v7938
        %v7940 = vpop.f32.mrb[0].mxu0
        %v7941 = vadd.f32 %v7230, %v7940
        %7942 = vdwg.mxu0
        %7943 = vmatprep.subr.bf16.mxu0 %v7607
        %7944 = vmatpush1.bf16.msra.mxu0 %v7606
        %7945 = vmatprep.subr.bf16.mxu0 %v7610
        %7946 = vmatpush1.bf16.msra.mxu0 %v7609
        %7947 = vmatprep.subr.bf16.mxu0 %v7613
        %7948 = vmatpush1.bf16.msra.mxu0 %v7612
        %7949 = vmatprep.subr.bf16.mxu0 %v7616
        %7950 = vmatpush1.bf16.msra.mxu0 %v7615
        %7951 = vmatprep.subr.bf16.mxu0 %v7619
        %7952 = vmatpush1.bf16.msra.mxu0 %v7618
        %7953 = vmatprep.subr.bf16.mxu0 %v7622
        %7954 = vmatpush1.bf16.msra.mxu0 %v7621
        %7955 = vmatprep.subr.bf16.mxu0 %v7625
        %7956 = vmatpush1.bf16.msra.mxu0 %v7624
        %7957 = vmatprep.subr.bf16.mxu0 %v7628
        %7958 = vmatpush1.bf16.msra.mxu0 %v7627
        %7959 = vmatprep.subr.bf16.mxu0 %v7631
        %7960 = vmatpush1.bf16.msra.mxu0 %v7630
        %7961 = vmatprep.subr.bf16.mxu0 %v7634
        %7962 = vmatpush1.bf16.msra.mxu0 %v7633
        %7963 = vmatprep.subr.bf16.mxu0 %v7637
        %7964 = vmatpush1.bf16.msra.mxu0 %v7636
        %7965 = vmatprep.subr.bf16.mxu0 %v7640
        %7966 = vmatpush1.bf16.msra.mxu0 %v7639
        %7967 = vmatprep.subr.bf16.mxu0 %v7643
        %7968 = vmatpush1.bf16.msra.mxu0 %v7642
        %7969 = vmatprep.subr.bf16.mxu0 %v7646
        %7970 = vmatpush1.bf16.msra.mxu0 %v7645
        %7971 = vmatprep.subr.bf16.mxu0 %v7649
        %7972 = vmatpush1.bf16.msra.mxu0 %v7648
        %7973 = vmatprep.subr.bf16.mxu0 %v7652
        %7974 = vmatpush1.bf16.msra.mxu0 %v7651
        %7975 = vmatprep.mubr.bf16.mxu0 %v7032
        %7976 = vmatmul.mubr.bf16.gmra.mrb[0].mxu0 %v7031
        %v7977 = vpop.f32.mrb[0].mxu0
        %v7978 = vadd.f32 %v7785, %v7977
        %v7979 = vpop.f32.mrb[0].mxu0
        %v7980 = vadd.f32 %v7787, %v7979
        %v7981 = vpop.f32.mrb[0].mxu0
        %v7982 = vadd.f32 %v7789, %v7981
        %v7983 = vpop.f32.mrb[0].mxu0
        %v7984 = vadd.f32 %v7791, %v7983
        %7985 = vmatprep.mubr.bf16.mxu0 %v7036
        %7986 = vmatmul.mubr.bf16.gmra.mrb[0].mxu0 %v7035
        %v7987 = vpop.f32.mrb[0].mxu0
        %v7988 = vadd.f32 %v7795, %v7987
        %v7989 = vpop.f32.mrb[0].mxu0
        %v7990 = vadd.f32 %v7797, %v7989
        %v7991 = vpop.f32.mrb[0].mxu0
        %v7992 = vadd.f32 %v7799, %v7991
        %v7993 = vpop.f32.mrb[0].mxu0
        %v7994 = vadd.f32 %v7801, %v7993
        %7995 = vmatprep.mubr.bf16.mxu0 %v7040
        %7996 = vmatmul.mubr.bf16.gmra.mrb[0].mxu0 %v7039
        %v7997 = vpop.f32.mrb[0].mxu0
        %v7998 = vadd.f32 %v7805, %v7997
        %v7999 = vpop.f32.mrb[0].mxu0
        %v8000 = vadd.f32 %v7807, %v7999
        %v8001 = vpop.f32.mrb[0].mxu0
        %v8002 = vadd.f32 %v7809, %v8001
        %v8003 = vpop.f32.mrb[0].mxu0
        %v8004 = vadd.f32 %v7811, %v8003
        %8005 = vmatprep.mubr.bf16.mxu0 %v7044
        %8006 = vmatmul.mubr.bf16.gmra.mrb[0].mxu0 %v7043
        %v8007 = vpop.f32.mrb[0].mxu0
        %v8008 = vadd.f32 %v7815, %v8007
        %v8009 = vpop.f32.mrb[0].mxu0
        %v8010 = vadd.f32 %v7817, %v8009
        %v8011 = vpop.f32.mrb[0].mxu0
        %v8012 = vadd.f32 %v7819, %v8011
        %v8013 = vpop.f32.mrb[0].mxu0
        %v8014 = vadd.f32 %v7821, %v8013
        %8015 = vmatprep.mubr.bf16.mxu0 %v7048
        %8016 = vmatmul.mubr.bf16.gmra.mrb[0].mxu0 %v7047
        %v8017 = vpop.f32.mrb[0].mxu0
        %v8018 = vadd.f32 %v7825, %v8017
        %v8019 = vpop.f32.mrb[0].mxu0
        %v8020 = vadd.f32 %v7827, %v8019
        %v8021 = vpop.f32.mrb[0].mxu0
        %v8022 = vadd.f32 %v7829, %v8021
        %v8023 = vpop.f32.mrb[0].mxu0
        %v8024 = vadd.f32 %v7831, %v8023
        %8025 = vmatprep.mubr.bf16.mxu0 %v7052
        %8026 = vmatmul.mubr.bf16.gmra.mrb[0].mxu0 %v7051
        %v8027 = vpop.f32.mrb[0].mxu0
        %v8028 = vadd.f32 %v7835, %v8027
        %v8029 = vpop.f32.mrb[0].mxu0
        %v8030 = vadd.f32 %v7837, %v8029
        %v8031 = vpop.f32.mrb[0].mxu0
        %v8032 = vadd.f32 %v7839, %v8031
        %v8033 = vpop.f32.mrb[0].mxu0
        %v8034 = vadd.f32 %v7841, %v8033
        %8035 = vmatprep.mubr.bf16.mxu0 %v7056
        %8036 = vmatmul.mubr.bf16.gmra.mrb[0].mxu0 %v7055
        %v8037 = vpop.f32.mrb[0].mxu0
        %v8038 = vadd.f32 %v7845, %v8037
        %v8039 = vpop.f32.mrb[0].mxu0
        %v8040 = vadd.f32 %v7847, %v8039
        %v8041 = vpop.f32.mrb[0].mxu0
        %v8042 = vadd.f32 %v7849, %v8041
        %v8043 = vpop.f32.mrb[0].mxu0
        %v8044 = vadd.f32 %v7851, %v8043
        %8045 = vmatprep.mubr.bf16.mxu0 %v7060
        %8046 = vmatmul.mubr.bf16.gmra.mrb[0].mxu0 %v7059
        %v8047 = vpop.f32.mrb[0].mxu0
        %v8048 = vadd.f32 %v7855, %v8047
        %v8049 = vpop.f32.mrb[0].mxu0
        %v8050 = vadd.f32 %v7857, %v8049
        %v8051 = vpop.f32.mrb[0].mxu0
        %v8052 = vadd.f32 %v7859, %v8051
        %v8053 = vpop.f32.mrb[0].mxu0
        %v8054 = vadd.f32 %v7861, %v8053
        %8055 = vmatprep.mubr.bf16.mxu0 %v7064
        %8056 = vmatmul.mubr.bf16.gmra.mrb[0].mxu0 %v7063
        %v8057 = vpop.f32.mrb[0].mxu0
        %v8058 = vadd.f32 %v7865, %v8057
        %v8059 = vpop.f32.mrb[0].mxu0
        %v8060 = vadd.f32 %v7867, %v8059
        %v8061 = vpop.f32.mrb[0].mxu0
        %v8062 = vadd.f32 %v7869, %v8061
        %v8063 = vpop.f32.mrb[0].mxu0
        %v8064 = vadd.f32 %v7871, %v8063
        %8065 = vmatprep.mubr.bf16.mxu0 %v7068
        %8066 = vmatmul.mubr.bf16.gmra.mrb[0].mxu0 %v7067
        %v8067 = vpop.f32.mrb[0].mxu0
        %v8068 = vadd.f32 %v7875, %v8067
        %v8069 = vpop.f32.mrb[0].mxu0
        %v8070 = vadd.f32 %v7877, %v8069
        %v8071 = vpop.f32.mrb[0].mxu0
        %v8072 = vadd.f32 %v7879, %v8071
        %v8073 = vpop.f32.mrb[0].mxu0
        %v8074 = vadd.f32 %v7881, %v8073
        %8075 = vmatprep.mubr.bf16.mxu0 %v7072
        %8076 = vmatmul.mubr.bf16.gmra.mrb[0].mxu0 %v7071
        %v8077 = vpop.f32.mrb[0].mxu0
        %v8078 = vadd.f32 %v7885, %v8077
        %v8079 = vpop.f32.mrb[0].mxu0
        %v8080 = vadd.f32 %v7887, %v8079
        %v8081 = vpop.f32.mrb[0].mxu0
        %v8082 = vadd.f32 %v7889, %v8081
        %v8083 = vpop.f32.mrb[0].mxu0
        %v8084 = vadd.f32 %v7891, %v8083
        %8085 = vmatprep.mubr.bf16.mxu0 %v7076
        %8086 = vmatmul.mubr.bf16.gmra.mrb[0].mxu0 %v7075
        %v8087 = vpop.f32.mrb[0].mxu0
        %v8088 = vadd.f32 %v7895, %v8087
        %v8089 = vpop.f32.mrb[0].mxu0
        %v8090 = vadd.f32 %v7897, %v8089
        %v8091 = vpop.f32.mrb[0].mxu0
        %v8092 = vadd.f32 %v7899, %v8091
        %v8093 = vpop.f32.mrb[0].mxu0
        %v8094 = vadd.f32 %v7901, %v8093
        %8095 = vmatprep.mubr.bf16.mxu0 %v7080
        %8096 = vmatmul.mubr.bf16.gmra.mrb[0].mxu0 %v7079
        %v8097 = vpop.f32.mrb[0].mxu0
        %v8098 = vadd.f32 %v7905, %v8097
        %v8099 = vpop.f32.mrb[0].mxu0
        %v8100 = vadd.f32 %v7907, %v8099
        %v8101 = vpop.f32.mrb[0].mxu0
        %v8102 = vadd.f32 %v7909, %v8101
        %v8103 = vpop.f32.mrb[0].mxu0
        %v8104 = vadd.f32 %v7911, %v8103
        %8105 = vmatprep.mubr.bf16.mxu0 %v7084
        %8106 = vmatmul.mubr.bf16.gmra.mrb[0].mxu0 %v7083
        %v8107 = vpop.f32.mrb[0].mxu0
        %v8108 = vadd.f32 %v7915, %v8107
        %v8109 = vpop.f32.mrb[0].mxu0
        %v8110 = vadd.f32 %v7917, %v8109
        %v8111 = vpop.f32.mrb[0].mxu0
        %v8112 = vadd.f32 %v7919, %v8111
        %v8113 = vpop.f32.mrb[0].mxu0
        %v8114 = vadd.f32 %v7921, %v8113
        %8115 = vmatprep.mubr.bf16.mxu0 %v7088
        %8116 = vmatmul.mubr.bf16.gmra.mrb[0].mxu0 %v7087
        %v8117 = vpop.f32.mrb[0].mxu0
        %v8118 = vadd.f32 %v7925, %v8117
        %v8119 = vpop.f32.mrb[0].mxu0
        %v8120 = vadd.f32 %v7927, %v8119
        %v8121 = vpop.f32.mrb[0].mxu0
        %v8122 = vadd.f32 %v7929, %v8121
        %v8123 = vpop.f32.mrb[0].mxu0
        %v8124 = vadd.f32 %v7931, %v8123
        %8125 = vmatprep.mubr.bf16.mxu0 %v7092
        %8126 = vmatmul.mubr.bf16.gmra.mrb[0].mxu0 %v7091
        %v8127 = vpop.f32.mrb[0].mxu0
        %v8128 = vadd.f32 %v7935, %v8127
        %v8129 = vpop.f32.mrb[0].mxu0
        %v8130 = vadd.f32 %v7937, %v8129
        %v8131 = vpop.f32.mrb[0].mxu0
        %v8132 = vadd.f32 %v7939, %v8131
        %v8133 = vpop.f32.mrb[0].mxu0
        %v8134 = vadd.f32 %v7941, %v8133
        %8135 = vdwg.mxu0
        %8136 = vmatprep.subr.bf16.mxu0 0
        %8137 = vmatpush1.bf16.msra.mxu0 %v7560
        %8138 = vmatprep.subr.bf16.mxu0 0
        %8139 = vmatpush1.bf16.msra.mxu0 %v7563
        %8140 = vmatprep.subr.bf16.mxu0 0
        %8141 = vmatpush1.bf16.msra.mxu0 %v7566
        %8142 = vmatprep.subr.bf16.mxu0 0
        %8143 = vmatpush1.bf16.msra.mxu0 %v7569
        %8144 = vmatprep.subr.bf16.mxu0 0
        %8145 = vmatpush1.bf16.msra.mxu0 %v7572
        %8146 = vmatprep.subr.bf16.mxu0 0
        %8147 = vmatpush1.bf16.msra.mxu0 %v7575
        %8148 = vmatprep.subr.bf16.mxu0 0
        %8149 = vmatpush1.bf16.msra.mxu0 %v7578
        %8150 = vmatprep.subr.bf16.mxu0 0
        %8151 = vmatpush1.bf16.msra.mxu0 %v7581
        %8152 = vmatprep.subr.bf16.mxu0 0
        %8153 = vmatpush1.bf16.msra.mxu0 %v7584
        %8154 = vmatprep.subr.bf16.mxu0 0
        %8155 = vmatpush1.bf16.msra.mxu0 %v7587
        %8156 = vmatprep.subr.bf16.mxu0 0
        %8157 = vmatpush1.bf16.msra.mxu0 %v7590
        %8158 = vmatprep.subr.bf16.mxu0 0
        %8159 = vmatpush1.bf16.msra.mxu0 %v7593
        %8160 = vmatprep.subr.bf16.mxu0 0
        %8161 = vmatpush1.bf16.msra.mxu0 %v7596
        %8162 = vmatprep.subr.bf16.mxu0 0
        %8163 = vmatpush1.bf16.msra.mxu0 %v7599
        %8164 = vmatprep.subr.bf16.mxu0 0
        %8165 = vmatpush1.bf16.msra.mxu0 %v7602
        %8166 = vmatprep.subr.bf16.mxu0 0
        %8167 = vmatpush1.bf16.msra.mxu0 %v7605
        %8168 = vmatprep.mubr.bf16.mxu0 %v7030
        %8169 = vmatmul.mubr.bf16.gmra.mrb[0].mxu0 %v7029
        %v8170 = vpop.f32.mrb[0].mxu0
        %v8171 = vadd.f32 %v7234, %v8170
        %v8172 = vpop.f32.mrb[0].mxu0
        %v8173 = vpop.f32.mrb[0].mxu0
        %v8174 = vadd.f32 %v7234, %v8173
        %v8175 = vpop.f32.mrb[0].mxu0
        %8176 = vmatprep.mubr.bf16.mxu0 %v7034
        %8177 = vmatmul.mubr.bf16.gmra.mrb[0].mxu0 %v7033
        %v8178 = vpop.f32.mrb[0].mxu0
        %v8179 = vadd.f32 %v7234, %v8178
        %v8180 = vpop.f32.mrb[0].mxu0
        %v8181 = vpop.f32.mrb[0].mxu0
        %v8182 = vadd.f32 %v7234, %v8181
        %v8183 = vpop.f32.mrb[0].mxu0
        %8184 = vmatprep.mubr.bf16.mxu0 %v7038
        %8185 = vmatmul.mubr.bf16.gmra.mrb[0].mxu0 %v7037
        %v8186 = vpop.f32.mrb[0].mxu0
        %v8187 = vadd.f32 %v7234, %v8186
        %v8188 = vpop.f32.mrb[0].mxu0
        %v8189 = vpop.f32.mrb[0].mxu0
        %v8190 = vadd.f32 %v7234, %v8189
        %v8191 = vpop.f32.mrb[0].mxu0
        %8192 = vmatprep.mubr.bf16.mxu0 %v7042
        %8193 = vmatmul.mubr.bf16.gmra.mrb[0].mxu0 %v7041
        %v8194 = vpop.f32.mrb[0].mxu0
        %v8195 = vadd.f32 %v7234, %v8194
        %v8196 = vpop.f32.mrb[0].mxu0
        %v8197 = vpop.f32.mrb[0].mxu0
        %v8198 = vadd.f32 %v7234, %v8197
        %v8199 = vpop.f32.mrb[0].mxu0
        %8200 = vmatprep.mubr.bf16.mxu0 %v7046
        %8201 = vmatmul.mubr.bf16.gmra.mrb[0].mxu0 %v7045
        %v8202 = vpop.f32.mrb[0].mxu0
        %v8203 = vadd.f32 %v7234, %v8202
        %v8204 = vpop.f32.mrb[0].mxu0
        %v8205 = vpop.f32.mrb[0].mxu0
        %v8206 = vadd.f32 %v7234, %v8205
        %v8207 = vpop.f32.mrb[0].mxu0
        %8208 = vmatprep.mubr.bf16.mxu0 %v7050
        %8209 = vmatmul.mubr.bf16.gmra.mrb[0].mxu0 %v7049
        %v8210 = vpop.f32.mrb[0].mxu0
        %v8211 = vadd.f32 %v7234, %v8210
        %v8212 = vpop.f32.mrb[0].mxu0
        %v8213 = vpop.f32.mrb[0].mxu0
        %v8214 = vadd.f32 %v7234, %v8213
        %v8215 = vpop.f32.mrb[0].mxu0
        %8216 = vmatprep.mubr.bf16.mxu0 %v7054
        %8217 = vmatmul.mubr.bf16.gmra.mrb[0].mxu0 %v7053
        %v8218 = vpop.f32.mrb[0].mxu0
        %v8219 = vadd.f32 %v7234, %v8218
        %v8220 = vpop.f32.mrb[0].mxu0
        %v8221 = vpop.f32.mrb[0].mxu0
        %v8222 = vadd.f32 %v7234, %v8221
        %v8223 = vpop.f32.mrb[0].mxu0
        %8224 = vmatprep.mubr.bf16.mxu0 %v7058
        %8225 = vmatmul.mubr.bf16.gmra.mrb[0].mxu0 %v7057
        %v8226 = vpop.f32.mrb[0].mxu0
        %v8227 = vadd.f32 %v7234, %v8226
        %v8228 = vpop.f32.mrb[0].mxu0
        %v8229 = vpop.f32.mrb[0].mxu0
        %v8230 = vadd.f32 %v7234, %v8229
        %v8231 = vpop.f32.mrb[0].mxu0
        %8232 = vmatprep.mubr.bf16.mxu0 %v7062
        %8233 = vmatmul.mubr.bf16.gmra.mrb[0].mxu0 %v7061
        %v8234 = vpop.f32.mrb[0].mxu0
        %v8235 = vadd.f32 %v7234, %v8234
        %v8236 = vpop.f32.mrb[0].mxu0
        %v8237 = vpop.f32.mrb[0].mxu0
        %v8238 = vadd.f32 %v7234, %v8237
        %v8239 = vpop.f32.mrb[0].mxu0
        %8240 = vmatprep.mubr.bf16.mxu0 %v7066
        %8241 = vmatmul.mubr.bf16.gmra.mrb[0].mxu0 %v7065
        %v8242 = vpop.f32.mrb[0].mxu0
        %v8243 = vadd.f32 %v7234, %v8242
        %v8244 = vpop.f32.mrb[0].mxu0
        %v8245 = vpop.f32.mrb[0].mxu0
        %v8246 = vadd.f32 %v7234, %v8245
        %v8247 = vpop.f32.mrb[0].mxu0
        %8248 = vmatprep.mubr.bf16.mxu0 %v7070
        %8249 = vmatmul.mubr.bf16.gmra.mrb[0].mxu0 %v7069
        %v8250 = vpop.f32.mrb[0].mxu0
        %v8251 = vadd.f32 %v7234, %v8250
        %v8252 = vpop.f32.mrb[0].mxu0
        %v8253 = vpop.f32.mrb[0].mxu0
        %v8254 = vadd.f32 %v7234, %v8253
        %v8255 = vpop.f32.mrb[0].mxu0
        %8256 = vmatprep.mubr.bf16.mxu0 %v7074
        %8257 = vmatmul.mubr.bf16.gmra.mrb[0].mxu0 %v7073
        %v8258 = vpop.f32.mrb[0].mxu0
        %v8259 = vadd.f32 %v7234, %v8258
        %v8260 = vpop.f32.mrb[0].mxu0
        %v8261 = vpop.f32.mrb[0].mxu0
        %v8262 = vadd.f32 %v7234, %v8261
        %v8263 = vpop.f32.mrb[0].mxu0
        %8264 = vmatprep.mubr.bf16.mxu0 %v7078
        %8265 = vmatmul.mubr.bf16.gmra.mrb[0].mxu0 %v7077
        %v8266 = vpop.f32.mrb[0].mxu0
        %v8267 = vadd.f32 %v7234, %v8266
        %v8268 = vpop.f32.mrb[0].mxu0
        %v8269 = vpop.f32.mrb[0].mxu0
        %v8270 = vadd.f32 %v7234, %v8269
        %v8271 = vpop.f32.mrb[0].mxu0
        %8272 = vmatprep.mubr.bf16.mxu0 %v7082
        %8273 = vmatmul.mubr.bf16.gmra.mrb[0].mxu0 %v7081
        %v8274 = vpop.f32.mrb[0].mxu0
        %v8275 = vadd.f32 %v7234, %v8274
        %v8276 = vpop.f32.mrb[0].mxu0
        %v8277 = vpop.f32.mrb[0].mxu0
        %v8278 = vadd.f32 %v7234, %v8277
        %v8279 = vpop.f32.mrb[0].mxu0
        %8280 = vmatprep.mubr.bf16.mxu0 %v7086
        %8281 = vmatmul.mubr.bf16.gmra.mrb[0].mxu0 %v7085
        %v8282 = vpop.f32.mrb[0].mxu0
        %v8283 = vadd.f32 %v7234, %v8282
        %v8284 = vpop.f32.mrb[0].mxu0
        %v8285 = vpop.f32.mrb[0].mxu0
        %v8286 = vadd.f32 %v7234, %v8285
        %v8287 = vpop.f32.mrb[0].mxu0
        %8288 = vmatprep.mubr.bf16.mxu0 %v7090
        %8289 = vmatmul.mubr.bf16.gmra.mrb[0].mxu0 %v7089
        %v8290 = vpop.f32.mrb[0].mxu0
        %v8291 = vadd.f32 %v7234, %v8290
        %v8292 = vpop.f32.mrb[0].mxu0
        %v8293 = vpop.f32.mrb[0].mxu0
        %v8294 = vadd.f32 %v7234, %v8293
        %v8295 = vpop.f32.mrb[0].mxu0
        %8296 = vdwg.mxu0
        %8297 = vmatprep.subr.bf16.mxu0 0
        %8298 = vmatpush1.bf16.msra.mxu0 %v7608
        %8299 = vmatprep.subr.bf16.mxu0 0
        %8300 = vmatpush1.bf16.msra.mxu0 %v7611
        %8301 = vmatprep.subr.bf16.mxu0 0
        %8302 = vmatpush1.bf16.msra.mxu0 %v7614
        %8303 = vmatprep.subr.bf16.mxu0 0
        %8304 = vmatpush1.bf16.msra.mxu0 %v7617
        %8305 = vmatprep.subr.bf16.mxu0 0
        %8306 = vmatpush1.bf16.msra.mxu0 %v7620
        %8307 = vmatprep.subr.bf16.mxu0 0
        %8308 = vmatpush1.bf16.msra.mxu0 %v7623
        %8309 = vmatprep.subr.bf16.mxu0 0
        %8310 = vmatpush1.bf16.msra.mxu0 %v7626
        %8311 = vmatprep.subr.bf16.mxu0 0
        %8312 = vmatpush1.bf16.msra.mxu0 %v7629
        %8313 = vmatprep.subr.bf16.mxu0 0
        %8314 = vmatpush1.bf16.msra.mxu0 %v7632
        %8315 = vmatprep.subr.bf16.mxu0 0
        %8316 = vmatpush1.bf16.msra.mxu0 %v7635
        %8317 = vmatprep.subr.bf16.mxu0 0
        %8318 = vmatpush1.bf16.msra.mxu0 %v7638
        %8319 = vmatprep.subr.bf16.mxu0 0
        %8320 = vmatpush1.bf16.msra.mxu0 %v7641
        %8321 = vmatprep.subr.bf16.mxu0 0
        %8322 = vmatpush1.bf16.msra.mxu0 %v7644
        %8323 = vmatprep.subr.bf16.mxu0 0
        %8324 = vmatpush1.bf16.msra.mxu0 %v7647
        %8325 = vmatprep.subr.bf16.mxu0 0
        %8326 = vmatpush1.bf16.msra.mxu0 %v7650
        %8327 = vmatprep.subr.bf16.mxu0 0
        %8328 = vmatpush1.bf16.msra.mxu0 %v7653
        %8329 = vmatprep.mubr.bf16.mxu0 %v7032
        %8330 = vmatmul.mubr.bf16.gmra.mrb[0].mxu0 %v7031
        %v8331 = vpop.f32.mrb[0].mxu0
        %v8332 = vadd.f32 %v8171, %v8331
        %v8333 = vpop.f32.mrb[0].mxu0
        %v8334 = vpop.f32.mrb[0].mxu0
        %v8335 = vadd.f32 %v8174, %v8334
        %v8336 = vpop.f32.mrb[0].mxu0
        %8337 = vmatprep.mubr.bf16.mxu0 %v7036
        %8338 = vmatmul.mubr.bf16.gmra.mrb[0].mxu0 %v7035
        %v8339 = vpop.f32.mrb[0].mxu0
        %v8340 = vadd.f32 %v8179, %v8339
        %v8341 = vpop.f32.mrb[0].mxu0
        %v8342 = vpop.f32.mrb[0].mxu0
        %v8343 = vadd.f32 %v8182, %v8342
        %v8344 = vpop.f32.mrb[0].mxu0
        %8345 = vmatprep.mubr.bf16.mxu0 %v7040
        %8346 = vmatmul.mubr.bf16.gmra.mrb[0].mxu0 %v7039
        %v8347 = vpop.f32.mrb[0].mxu0
        %v8348 = vadd.f32 %v8187, %v8347
        %v8349 = vpop.f32.mrb[0].mxu0
        %v8350 = vpop.f32.mrb[0].mxu0
        %v8351 = vadd.f32 %v8190, %v8350
        %v8352 = vpop.f32.mrb[0].mxu0
        %8353 = vmatprep.mubr.bf16.mxu0 %v7044
        %8354 = vmatmul.mubr.bf16.gmra.mrb[0].mxu0 %v7043
        %v8355 = vpop.f32.mrb[0].mxu0
        %v8356 = vadd.f32 %v8195, %v8355
        %v8357 = vpop.f32.mrb[0].mxu0
        %v8358 = vpop.f32.mrb[0].mxu0
        %v8359 = vadd.f32 %v8198, %v8358
        %v8360 = vpop.f32.mrb[0].mxu0
        %8361 = vmatprep.mubr.bf16.mxu0 %v7048
        %8362 = vmatmul.mubr.bf16.gmra.mrb[0].mxu0 %v7047
        %v8363 = vpop.f32.mrb[0].mxu0
        %v8364 = vadd.f32 %v8203, %v8363
        %v8365 = vpop.f32.mrb[0].mxu0
        %v8366 = vpop.f32.mrb[0].mxu0
        %v8367 = vadd.f32 %v8206, %v8366
        %v8368 = vpop.f32.mrb[0].mxu0
        %8369 = vmatprep.mubr.bf16.mxu0 %v7052
        %8370 = vmatmul.mubr.bf16.gmra.mrb[0].mxu0 %v7051
        %v8371 = vpop.f32.mrb[0].mxu0
        %v8372 = vadd.f32 %v8211, %v8371
        %v8373 = vpop.f32.mrb[0].mxu0
        %v8374 = vpop.f32.mrb[0].mxu0
        %v8375 = vadd.f32 %v8214, %v8374
        %v8376 = vpop.f32.mrb[0].mxu0
        %8377 = vmatprep.mubr.bf16.mxu0 %v7056
        %8378 = vmatmul.mubr.bf16.gmra.mrb[0].mxu0 %v7055
        %v8379 = vpop.f32.mrb[0].mxu0
        %v8380 = vadd.f32 %v8219, %v8379
        %v8381 = vpop.f32.mrb[0].mxu0
        %v8382 = vpop.f32.mrb[0].mxu0
        %v8383 = vadd.f32 %v8222, %v8382
        %v8384 = vpop.f32.mrb[0].mxu0
        %8385 = vmatprep.mubr.bf16.mxu0 %v7060
        %8386 = vmatmul.mubr.bf16.gmra.mrb[0].mxu0 %v7059
        %v8387 = vpop.f32.mrb[0].mxu0
        %v8388 = vadd.f32 %v8227, %v8387
        %v8389 = vpop.f32.mrb[0].mxu0
        %v8390 = vpop.f32.mrb[0].mxu0
        %v8391 = vadd.f32 %v8230, %v8390
        %v8392 = vpop.f32.mrb[0].mxu0
        %8393 = vmatprep.mubr.bf16.mxu0 %v7064
        %8394 = vmatmul.mubr.bf16.gmra.mrb[0].mxu0 %v7063
        %v8395 = vpop.f32.mrb[0].mxu0
        %v8396 = vadd.f32 %v8235, %v8395
        %v8397 = vpop.f32.mrb[0].mxu0
        %v8398 = vpop.f32.mrb[0].mxu0
        %v8399 = vadd.f32 %v8238, %v8398
        %v8400 = vpop.f32.mrb[0].mxu0
        %8401 = vmatprep.mubr.bf16.mxu0 %v7068
        %8402 = vmatmul.mubr.bf16.gmra.mrb[0].mxu0 %v7067
        %v8403 = vpop.f32.mrb[0].mxu0
        %v8404 = vadd.f32 %v8243, %v8403
        %v8405 = vpop.f32.mrb[0].mxu0
        %v8406 = vpop.f32.mrb[0].mxu0
        %v8407 = vadd.f32 %v8246, %v8406
        %v8408 = vpop.f32.mrb[0].mxu0
        %8409 = vmatprep.mubr.bf16.mxu0 %v7072
        %8410 = vmatmul.mubr.bf16.gmra.mrb[0].mxu0 %v7071
        %v8411 = vpop.f32.mrb[0].mxu0
        %v8412 = vadd.f32 %v8251, %v8411
        %v8413 = vpop.f32.mrb[0].mxu0
        %v8414 = vpop.f32.mrb[0].mxu0
        %v8415 = vadd.f32 %v8254, %v8414
        %v8416 = vpop.f32.mrb[0].mxu0
        %8417 = vmatprep.mubr.bf16.mxu0 %v7076
        %8418 = vmatmul.mubr.bf16.gmra.mrb[0].mxu0 %v7075
        %v8419 = vpop.f32.mrb[0].mxu0
        %v8420 = vadd.f32 %v8259, %v8419
        %v8421 = vpop.f32.mrb[0].mxu0
        %v8422 = vpop.f32.mrb[0].mxu0
        %v8423 = vadd.f32 %v8262, %v8422
        %v8424 = vpop.f32.mrb[0].mxu0
        %8425 = vmatprep.mubr.bf16.mxu0 %v7080
        %8426 = vmatmul.mubr.bf16.gmra.mrb[0].mxu0 %v7079
        %v8427 = vpop.f32.mrb[0].mxu0
        %v8428 = vadd.f32 %v8267, %v8427
        %v8429 = vpop.f32.mrb[0].mxu0
        %v8430 = vpop.f32.mrb[0].mxu0
        %v8431 = vadd.f32 %v8270, %v8430
        %v8432 = vpop.f32.mrb[0].mxu0
        %8433 = vmatprep.mubr.bf16.mxu0 %v7084
        %8434 = vmatmul.mubr.bf16.gmra.mrb[0].mxu0 %v7083
        %v8435 = vpop.f32.mrb[0].mxu0
        %v8436 = vadd.f32 %v8275, %v8435
        %v8437 = vpop.f32.mrb[0].mxu0
        %v8438 = vpop.f32.mrb[0].mxu0
        %v8439 = vadd.f32 %v8278, %v8438
        %v8440 = vpop.f32.mrb[0].mxu0
        %8441 = vmatprep.mubr.bf16.mxu0 %v7088
        %8442 = vmatmul.mubr.bf16.gmra.mrb[0].mxu0 %v7087
        %v8443 = vpop.f32.mrb[0].mxu0
        %v8444 = vadd.f32 %v8283, %v8443
        %v8445 = vpop.f32.mrb[0].mxu0
        %v8446 = vpop.f32.mrb[0].mxu0
        %v8447 = vadd.f32 %v8286, %v8446
        %v8448 = vpop.f32.mrb[0].mxu0
        %8449 = vmatprep.mubr.bf16.mxu0 %v7092
        %8450 = vmatmul.mubr.bf16.gmra.mrb[0].mxu0 %v7091
        %v8451 = vpop.f32.mrb[0].mxu0
        %v8452 = vadd.f32 %v8291, %v8451
        %v8453 = vpop.f32.mrb[0].mxu0
        %v8454 = vpop.f32.mrb[0].mxu0
        %v8455 = vadd.f32 %v8294, %v8454
        %v8456 = vpop.f32.mrb[0].mxu0
        %8457 = vdwg.mxu0
        %v8458 = vpack.c.bf16 %v7982, %v7978
        %v8459 = vpack.c.bf16 %v7984, %v7980
        %v8460 = vpack.c.bf16 %v8335, %v8332
        %v8461 = vpack.c.bf16 %v7992, %v7988
        %v8462 = vpack.c.bf16 %v7994, %v7990
        %v8463 = vpack.c.bf16 %v8343, %v8340
        %v8464 = vpack.c.bf16 %v8002, %v7998
        %v8465 = vpack.c.bf16 %v8004, %v8000
        %v8466 = vpack.c.bf16 %v8351, %v8348
        %v8467 = vpack.c.bf16 %v8012, %v8008
        %v8468 = vpack.c.bf16 %v8014, %v8010
        %v8469 = vpack.c.bf16 %v8359, %v8356
        %v8470 = vpack.c.bf16 %v8022, %v8018
        %v8471 = vpack.c.bf16 %v8024, %v8020
        %v8472 = vpack.c.bf16 %v8367, %v8364
        %v8473 = vpack.c.bf16 %v8032, %v8028
        %v8474 = vpack.c.bf16 %v8034, %v8030
        %v8475 = vpack.c.bf16 %v8375, %v8372
        %v8476 = vpack.c.bf16 %v8042, %v8038
        %v8477 = vpack.c.bf16 %v8044, %v8040
        %v8478 = vpack.c.bf16 %v8383, %v8380
        %v8479 = vpack.c.bf16 %v8052, %v8048
        %v8480 = vpack.c.bf16 %v8054, %v8050
        %v8481 = vpack.c.bf16 %v8391, %v8388
        %v8482 = vpack.c.bf16 %v8062, %v8058
        %v8483 = vpack.c.bf16 %v8064, %v8060
        %v8484 = vpack.c.bf16 %v8399, %v8396
        %v8485 = vpack.c.bf16 %v8072, %v8068
        %v8486 = vpack.c.bf16 %v8074, %v8070
        %v8487 = vpack.c.bf16 %v8407, %v8404
        %v8488 = vpack.c.bf16 %v8082, %v8078
        %v8489 = vpack.c.bf16 %v8084, %v8080
        %v8490 = vpack.c.bf16 %v8415, %v8412
        %v8491 = vpack.c.bf16 %v8092, %v8088
        %v8492 = vpack.c.bf16 %v8094, %v8090
        %v8493 = vpack.c.bf16 %v8423, %v8420
        %v8494 = vpack.c.bf16 %v8102, %v8098
        %v8495 = vpack.c.bf16 %v8104, %v8100
        %v8496 = vpack.c.bf16 %v8431, %v8428
        %v8497 = vpack.c.bf16 %v8112, %v8108
        %v8498 = vpack.c.bf16 %v8114, %v8110
        %v8499 = vpack.c.bf16 %v8439, %v8436
        %v8500 = vpack.c.bf16 %v8122, %v8118
        %v8501 = vpack.c.bf16 %v8124, %v8120
        %v8502 = vpack.c.bf16 %v8447, %v8444
        %v8503 = vpack.c.bf16 %v8132, %v8128
        %v8504 = vpack.c.bf16 %v8134, %v8130
        %v8505 = vpack.c.bf16 %v8455, %v8452
        %v8554 = vunpack.c.l.b16 %v8458
        %v8555 = vunpack.c.l.b16 %v8459
        %v8556 = vunpack.c.l.b16 %v8460
        %v8557 = vunpack.c.h.b16 %v8458
        %v8558 = vunpack.c.h.b16 %v8459
        %v8559 = vunpack.c.h.b16 %v8460
        %v8560 = vunpack.c.l.b16 %v8461
        %v8561 = vunpack.c.l.b16 %v8462
        %v8562 = vunpack.c.l.b16 %v8463
        %v8563 = vunpack.c.h.b16 %v8461
        %v8564 = vunpack.c.h.b16 %v8462
        %v8565 = vunpack.c.h.b16 %v8463
        %v8566 = vunpack.c.l.b16 %v8464
        %v8567 = vunpack.c.l.b16 %v8465
        %v8568 = vunpack.c.l.b16 %v8466
        %v8569 = vunpack.c.h.b16 %v8464
        %v8570 = vunpack.c.h.b16 %v8465
        %v8571 = vunpack.c.h.b16 %v8466
        %v8572 = vunpack.c.l.b16 %v8467
        %v8573 = vunpack.c.l.b16 %v8468
        %v8574 = vunpack.c.l.b16 %v8469
        %v8575 = vunpack.c.h.b16 %v8467
        %v8576 = vunpack.c.h.b16 %v8468
        %v8577 = vunpack.c.h.b16 %v8469
        %v8578 = vunpack.c.l.b16 %v8470
        %v8579 = vunpack.c.l.b16 %v8471
        %v8580 = vunpack.c.l.b16 %v8472
        %v8581 = vunpack.c.h.b16 %v8470
        %v8582 = vunpack.c.h.b16 %v8471
        %v8583 = vunpack.c.h.b16 %v8472
        %v8584 = vunpack.c.l.b16 %v8473
        %v8585 = vunpack.c.l.b16 %v8474
        %v8586 = vunpack.c.l.b16 %v8475
        %v8587 = vunpack.c.h.b16 %v8473
        %v8588 = vunpack.c.h.b16 %v8474
        %v8589 = vunpack.c.h.b16 %v8475
        %v8590 = vunpack.c.l.b16 %v8476
        %v8591 = vunpack.c.l.b16 %v8477
        %v8592 = vunpack.c.l.b16 %v8478
        %v8593 = vunpack.c.h.b16 %v8476
        %v8594 = vunpack.c.h.b16 %v8477
        %v8595 = vunpack.c.h.b16 %v8478
        %v8596 = vunpack.c.l.b16 %v8479
        %v8597 = vunpack.c.l.b16 %v8480
        %v8598 = vunpack.c.l.b16 %v8481
        %v8599 = vunpack.c.h.b16 %v8479
        %v8600 = vunpack.c.h.b16 %v8480
        %v8601 = vunpack.c.h.b16 %v8481
        %v8602 = vunpack.c.l.b16 %v8482
        %v8603 = vunpack.c.l.b16 %v8483
        %v8604 = vunpack.c.l.b16 %v8484
        %v8605 = vunpack.c.h.b16 %v8482
        %v8606 = vunpack.c.h.b16 %v8483
        %v8607 = vunpack.c.h.b16 %v8484
        %v8608 = vunpack.c.l.b16 %v8485
        %v8609 = vunpack.c.l.b16 %v8486
        %v8610 = vunpack.c.l.b16 %v8487
        %v8611 = vunpack.c.h.b16 %v8485
        %v8612 = vunpack.c.h.b16 %v8486
        %v8613 = vunpack.c.h.b16 %v8487
        %v8614 = vunpack.c.l.b16 %v8488
        %v8615 = vunpack.c.l.b16 %v8489
        %v8616 = vunpack.c.l.b16 %v8490
        %v8617 = vunpack.c.h.b16 %v8488
        %v8618 = vunpack.c.h.b16 %v8489
        %v8619 = vunpack.c.h.b16 %v8490
        %v8620 = vunpack.c.l.b16 %v8491
        %v8621 = vunpack.c.l.b16 %v8492
        %v8622 = vunpack.c.l.b16 %v8493
        %v8623 = vunpack.c.h.b16 %v8491
        %v8624 = vunpack.c.h.b16 %v8492
        %v8625 = vunpack.c.h.b16 %v8493
        %v8626 = vunpack.c.l.b16 %v8494
        %v8627 = vunpack.c.l.b16 %v8495
        %v8628 = vunpack.c.l.b16 %v8496
        %v8629 = vunpack.c.h.b16 %v8494
        %v8630 = vunpack.c.h.b16 %v8495
        %v8631 = vunpack.c.h.b16 %v8496
        %v8632 = vunpack.c.l.b16 %v8497
        %v8633 = vunpack.c.l.b16 %v8498
        %v8634 = vunpack.c.l.b16 %v8499
        %v8635 = vunpack.c.h.b16 %v8497
        %v8636 = vunpack.c.h.b16 %v8498
        %v8637 = vunpack.c.h.b16 %v8499
        %v8638 = vunpack.c.l.b16 %v8500
        %v8639 = vunpack.c.l.b16 %v8501
        %v8640 = vunpack.c.l.b16 %v8502
        %v8641 = vunpack.c.h.b16 %v8500
        %v8642 = vunpack.c.h.b16 %v8501
        %v8643 = vunpack.c.h.b16 %v8502
        %v8644 = vunpack.c.l.b16 %v8503
        %v8645 = vunpack.c.l.b16 %v8504
        %v8646 = vunpack.c.l.b16 %v8505
        %v8647 = vunpack.c.h.b16 %v8503
        %v8648 = vunpack.c.h.b16 %v8504
        %v8649 = vunpack.c.h.b16 %v8505
        %v8650 = vpack.c.b16 %v8555, %v8554
        %v8651 = vpack.c.b16 %v8556, %v8556
        %v8652 = vpack.c.b16 %v8558, %v8557
        %v8653 = vpack.c.b16 %v8559, %v8559
        %v8654 = vpack.c.b16 %v8561, %v8560
        %v8655 = vpack.c.b16 %v8562, %v8562
        %v8656 = vpack.c.b16 %v8564, %v8563
        %v8657 = vpack.c.b16 %v8565, %v8565
        %v8658 = vpack.c.b16 %v8567, %v8566
        %v8659 = vpack.c.b16 %v8568, %v8568
        %v8660 = vpack.c.b16 %v8570, %v8569
        %v8661 = vpack.c.b16 %v8571, %v8571
        %v8662 = vpack.c.b16 %v8573, %v8572
        %v8663 = vpack.c.b16 %v8574, %v8574
        %v8664 = vpack.c.b16 %v8576, %v8575
        %v8665 = vpack.c.b16 %v8577, %v8577
        %v8666 = vpack.c.b16 %v8579, %v8578
        %v8667 = vpack.c.b16 %v8580, %v8580
        %v8668 = vpack.c.b16 %v8582, %v8581
        %v8669 = vpack.c.b16 %v8583, %v8583
        %v8670 = vpack.c.b16 %v8585, %v8584
        %v8671 = vpack.c.b16 %v8586, %v8586
        %v8672 = vpack.c.b16 %v8588, %v8587
        %v8673 = vpack.c.b16 %v8589, %v8589
        %v8674 = vpack.c.b16 %v8591, %v8590
        %v8675 = vpack.c.b16 %v8592, %v8592
        %v8676 = vpack.c.b16 %v8594, %v8593
        %v8677 = vpack.c.b16 %v8595, %v8595
        %v8678 = vpack.c.b16 %v8597, %v8596
        %v8679 = vpack.c.b16 %v8598, %v8598
        %v8680 = vpack.c.b16 %v8600, %v8599
        %v8681 = vpack.c.b16 %v8601, %v8601
        %v8682 = vpack.c.b16 %v8603, %v8602
        %v8683 = vpack.c.b16 %v8604, %v8604
        %v8684 = vpack.c.b16 %v8606, %v8605
        %v8685 = vpack.c.b16 %v8607, %v8607
        %v8686 = vpack.c.b16 %v8609, %v8608
        %v8687 = vpack.c.b16 %v8610, %v8610
        %v8688 = vpack.c.b16 %v8612, %v8611
        %v8689 = vpack.c.b16 %v8613, %v8613
        %v8690 = vpack.c.b16 %v8615, %v8614
        %v8691 = vpack.c.b16 %v8616, %v8616
        %v8692 = vpack.c.b16 %v8618, %v8617
        %v8693 = vpack.c.b16 %v8619, %v8619
        %v8694 = vpack.c.b16 %v8621, %v8620
        %v8695 = vpack.c.b16 %v8622, %v8622
        %v8696 = vpack.c.b16 %v8624, %v8623
        %v8697 = vpack.c.b16 %v8625, %v8625
        %v8698 = vpack.c.b16 %v8627, %v8626
        %v8699 = vpack.c.b16 %v8628, %v8628
        %v8700 = vpack.c.b16 %v8630, %v8629
        %v8701 = vpack.c.b16 %v8631, %v8631
        %v8702 = vpack.c.b16 %v8633, %v8632
        %v8703 = vpack.c.b16 %v8634, %v8634
        %v8704 = vpack.c.b16 %v8636, %v8635
        %v8705 = vpack.c.b16 %v8637, %v8637
        %v8706 = vpack.c.b16 %v8639, %v8638
        %v8707 = vpack.c.b16 %v8640, %v8640
        %v8708 = vpack.c.b16 %v8642, %v8641
        %v8709 = vpack.c.b16 %v8643, %v8643
        %v8710 = vpack.c.b16 %v8645, %v8644
        %v8711 = vpack.c.b16 %v8646, %v8646
        %v8712 = vpack.c.b16 %v8648, %v8647
        %v8713 = vpack.c.b16 %v8649, %v8649
        %8778 = vst [vmem:[%s353] sm:$0xff] %v8650
        %8779 = vst [vmem:[%s353 + $0x8] sm:$0xf] %v8651
        %8780 = vst [vmem:[%s353 + $0xc] sm:$0xff] %v8652
        %8781 = vst [vmem:[%s353 + $0x14] sm:$0xf] %v8653
        %8782 = vst [vmem:[%s353 + $0x18] sm:$0xff] %v8654
        %8783 = vst [vmem:[%s353 + $0x20] sm:$0xf] %v8655
        %8784 = vst [vmem:[%s353 + $0x24] sm:$0xff] %v8656
        %8785 = vst [vmem:[%s353 + $0x2c] sm:$0xf] %v8657
        %8786 = vst [vmem:[%s353 + $0x30] sm:$0xff] %v8658
        %8787 = vst [vmem:[%s353 + $0x38] sm:$0xf] %v8659
        %8788 = vst [vmem:[%s353 + $0x3c] sm:$0xff] %v8660
        %8789 = vst [vmem:[%s353 + $0x44] sm:$0xf] %v8661
        %8790 = vst [vmem:[%s353 + $0x48] sm:$0xff] %v8662
        %8791 = vst [vmem:[%s353 + $0x50] sm:$0xf] %v8663
        %8792 = vst [vmem:[%s353 + $0x54] sm:$0xff] %v8664
        %8793 = vst [vmem:[%s353 + $0x5c] sm:$0xf] %v8665
        %8794 = vst [vmem:[%s353 + $0x60] sm:$0xff] %v8666
        %8795 = vst [vmem:[%s353 + $0x68] sm:$0xf] %v8667
        %8796 = vst [vmem:[%s353 + $0x6c] sm:$0xff] %v8668
        %8797 = vst [vmem:[%s353 + $0x74] sm:$0xf] %v8669
        %8798 = vst [vmem:[%s353 + $0x78] sm:$0xff] %v8670
        %8799 = vst [vmem:[%s353 + $0x80] sm:$0xf] %v8671
        %8800 = vst [vmem:[%s353 + $0x84] sm:$0xff] %v8672
        %8801 = vst [vmem:[%s353 + $0x8c] sm:$0xf] %v8673
        %8802 = vst [vmem:[%s353 + $0x90] sm:$0xff] %v8674
        %8803 = vst [vmem:[%s353 + $0x98] sm:$0xf] %v8675
        %8804 = vst [vmem:[%s353 + $0x9c] sm:$0xff] %v8676
        %8805 = vst [vmem:[%s353 + $0xa4] sm:$0xf] %v8677
        %8806 = vst [vmem:[%s353 + $0xa8] sm:$0xff] %v8678
        %8807 = vst [vmem:[%s353 + $0xb0] sm:$0xf] %v8679
        %8808 = vst [vmem:[%s353 + $0xb4] sm:$0xff] %v8680
        %8809 = vst [vmem:[%s353 + $0xbc] sm:$0xf] %v8681
        %8810 = vst [vmem:[%s353 + $0xc0] sm:$0xff] %v8682
        %8811 = vst [vmem:[%s353 + $0xc8] sm:$0xf] %v8683
        %8812 = vst [vmem:[%s353 + $0xcc] sm:$0xff] %v8684
        %8813 = vst [vmem:[%s353 + $0xd4] sm:$0xf] %v8685
        %8814 = vst [vmem:[%s353 + $0xd8] sm:$0xff] %v8686
        %8815 = vst [vmem:[%s353 + $0xe0] sm:$0xf] %v8687
        %8816 = vst [vmem:[%s353 + $0xe4] sm:$0xff] %v8688
        %8817 = vst [vmem:[%s353 + $0xec] sm:$0xf] %v8689
        %8818 = vst [vmem:[%s353 + $0xf0] sm:$0xff] %v8690
        %8819 = vst [vmem:[%s353 + $0xf8] sm:$0xf] %v8691
        %8820 = vst [vmem:[%s353 + $0xfc] sm:$0xff] %v8692
        %8821 = vst [vmem:[%s353 + $0x104] sm:$0xf] %v8693
        %8822 = vst [vmem:[%s353 + $0x108] sm:$0xff] %v8694
        %8823 = vst [vmem:[%s353 + $0x110] sm:$0xf] %v8695
        %8824 = vst [vmem:[%s353 + $0x114] sm:$0xff] %v8696
        %8825 = vst [vmem:[%s353 + $0x11c] sm:$0xf] %v8697
        %8826 = vst [vmem:[%s353 + $0x120] sm:$0xff] %v8698
        %8827 = vst [vmem:[%s353 + $0x128] sm:$0xf] %v8699
        %8828 = vst [vmem:[%s353 + $0x12c] sm:$0xff] %v8700
        %8829 = vst [vmem:[%s353 + $0x134] sm:$0xf] %v8701
        %8830 = vst [vmem:[%s353 + $0x138] sm:$0xff] %v8702
        %8831 = vst [vmem:[%s353 + $0x140] sm:$0xf] %v8703
        %8832 = vst [vmem:[%s353 + $0x144] sm:$0xff] %v8704
        %8833 = vst [vmem:[%s353 + $0x14c] sm:$0xf] %v8705
        %8834 = vst [vmem:[%s353 + $0x150] sm:$0xff] %v8706
        %8835 = vst [vmem:[%s353 + $0x158] sm:$0xf] %v8707
        %8836 = vst [vmem:[%s353 + $0x15c] sm:$0xff] %v8708
        %8837 = vst [vmem:[%s353 + $0x164] sm:$0xf] %v8709
        %8838 = vst [vmem:[%s353 + $0x168] sm:$0xff] %v8710
        %8839 = vst [vmem:[%s353 + $0x170] sm:$0xf] %v8711
        %8840 = vst [vmem:[%s353 + $0x174] sm:$0xff] %v8712
        %8841 = vst [vmem:[%s353 + $0x17c] sm:$0xf] %v8713
        %s8842 = sand.u32 %s186, 1
        %s8843 = scalar_lea.sflag [#allocation4], %s8842
        %s8844 = sand.u32 %s186, 1
        %s8845 = smul.addr %s8844, 384
        %s8846 = scalar_lea.vmem [#allocation11], %s8845
        // Predicated region
        $region69: #{tpu_custom_call.1} parent=47 // pred_check
          %p8847 = pneg %p196
        $region70: #{tpu_custom_call.1} parent=47 // pred_check_branch
          %8849 = sbr.rel (%p8847) target = $region72
        $region71: #{tpu_custom_call.1} parent=47 // pred_region
          %s8850 = smul.u32 32, %s26
          %s8852 = ssub.s32 6144, 6144
          %8853 = vsyncadd %s8843, %s8852
          %s8854 = smul.addr %s8850, 3
          %s8855 = smul.addr %s8854, 64
          %s8856 = scalar_lea.hbm %s7, %s8855
          %s8857 = sshll.u32 %s8846, 4
          %s8858 = int_to_ptr.vmem [resolvable:$true] %s8857
          %8863 = dma.vmem_to_hbm [thread:$0]  %s8858, 6144, %s8856, %s8843, 192, 192, 12
        $region72: #{tpu_custom_call.1} parent=47 // pred_fallthru
          _
      $region48: #{tpu_custom_call.1} parent=5 // pred_fallthru
        _
      %p8864 = scmp.le.s32.totalorder 2, %s21
      // Predicated region
      $region73: #{tpu_custom_call.1} parent=5 // pred_check
        %p8865 = pneg %p8864
      $region74: #{tpu_custom_call.1} parent=5 // pred_check_branch
        %8867 = sbr.rel (%p8865) target = $region76
      $region75: #{tpu_custom_call.1} parent=5 // pred_region
        %s8868 = ssub.s32 %s21, 2
        // Predicated region
        $region77: #{tpu_custom_call.1} parent=75 // pred_check
          %p8869 = pneg %p202
        $region78: #{tpu_custom_call.1} parent=75 // pred_check_branch
          %8871 = sbr.rel (%p8869) target = $region80
        $region79: #{tpu_custom_call.1} parent=75 // pred_region
          %s8872 = sand.u32 %s187, 1
          %s8873 = scalar_lea.sflag [#allocation4], %s8872
          %s8874 = sand.u32 %s187, 1
          %s8875 = smul.addr %s8874, 384
          %s8876 = scalar_lea.vmem [#allocation11], %s8875
          %8877 = dma.done %s8873, 6144
        $region80: #{tpu_custom_call.1} parent=75 // pred_fallthru
          _
      $region76: #{tpu_custom_call.1} parent=5 // pred_fallthru
        _
    $region6: #{tpu_custom_call.1} parent=1 // loop_footer
      %s25 = sadd.s32 1, %s21
    $region7: #{tpu_custom_call.1} parent=1 // loop_footer_branch
      %20 = sbr.rel target = $region3
    $region8: #{tpu_custom_call.1} parent=1 // loop_exit
      _
    %8878 = vsyncpa [#allocation3], 1
    %s8879 = scalar_lea.sflag [#allocation3], 1
    %8880 = vsyncpa %s8879, 1
    %8881 = vsyncpa [#allocation6], 1
    %8882 = vsyncpa [#allocation9], 1
    %8883 = vsyncpa [#allocation4], 1
    %s8884 = scalar_lea.sflag [#allocation4], 1
    %8885 = vsyncpa %s8884, 1

</llo_original>
